<compile_context>
chip_gen: v6e
topology: v6e:2x2x1
jax: 0.10.0
libtpu: 0.0.40
codegen_flags: <defaults>
</compile_context>

<pallas_src>
import dataclasses
import functools

import jax
import jax.numpy as jnp
from jax.experimental import pallas as pl
from jax.experimental.pallas import tpu as pltpu


# MXU operand dtype. bf16 halves slab/weight traffic and doubles MXU rate on v6e/v7x
# (accumulation and the epilogue stay f32). Use jnp.float32 for full-f32 operands.
MATMUL_DTYPE = jnp.bfloat16


def _calculate_padding(kernel_size: int) -> int:
    if kernel_size % 2 == 0:
        raise RuntimeError("Padding cannot be calculated for kernel with even size.")
    return kernel_size // 2


def _deconv_padding(factor: int):
    paddings = {2: (4, 1), 3: (3, 0), 4: (3, 1), 8: (2, 3)}
    return paddings.get(factor, (3, 1))


def _round_up(v: int, m: int) -> int:
    return -(-v // m) * m


@dataclasses.dataclass(frozen=True)
class FSRCNNConfig:
    channels: int
    upscale_factor: int
    extraction_kernel_size: int = 5
    shrinkage_kernel_size: int = 1
    map_kernel_size: int = 3
    expansion_kernel_size: int = 1
    deconvolution_kernel_size: int = 9
    n_map_layers: int = 4
    n_dimension_filters: int = 56
    n_shrinkage_filters: int = 16


def _conv_layer_defs(cfg):
    """(name, cin, cin_padded, cout, kernel_size) for every Conv2d+PReLU layer."""
    d, s = cfg.n_dimension_filters, cfg.n_shrinkage_filters
    c_in_pad = _round_up(cfg.channels, 8)      # pad input channels to a sublane group
    defs = [("extract", cfg.channels, c_in_pad, d, cfg.extraction_kernel_size),
            ("shrink", d, d, s, cfg.shrinkage_kernel_size)]
    for i in range(cfg.n_map_layers):
        defs.append((f"map{i}", s, s, s, cfg.map_kernel_size))
    defs.append(("expand", s, s, d, cfg.expansion_kernel_size))
    return defs


def _deconv_phase_defs(cfg):
    """Sub-pixel (phase) decomposition of the ConvTranspose2d.

    Output pixel (st*m + ry, st*k + rx) of phase (ry, rx):
        out = b + sum_{ty,tx,ci} in[ci, m + dys[ty], k + dxs[tx]] * W[ci, :, kys[ty], kxs[tx]]
    i.e. each phase is a small correlation over the *un-dilated* feature map.
    """
    K = cfg.deconvolution_kernel_size
    st = cfg.upscale_factor
    pad, out_pad = _deconv_padding(st)
    phases = []
    for ry in range(st):
        kys = list(range((ry + pad) % st, K, st))
        dys = [(ry + pad) // st - t for t in range(len(kys))]
        for rx in range(st):
            kxs = list(range((rx + pad) % st, K, st))
            dxs = [(rx + pad) // st - t for t in range(len(kxs))]
            phases.append((dys, dxs, kys, kxs))
    return phases, pad, out_pad


def _geometry(cfg):
    """Static tap geometry shared by weight packing and the kernel."""
    defs = _conv_layer_defs(cfg)
    conv_taps = []
    for _n, _c, _cp, _co, k in defs:
        p = _calculate_padding(k)
        conv_taps.append(([i - p for i in range(k)], [j - p for j in range(k)]))
    phases, _pad, _out_pad = _deconv_phase_defs(cfg)
    u_dy = sorted({dy for dys, _dxs, _kys, _kxs in phases for dy in dys})
    u_dx = sorted({dx for _dys, dxs, _kys, _kxs in phases for dx in dxs})
    # Column pad P must cover the largest |dx| of any layer (conv or deconv union).
    col_pad = max([max(abs(d) for d in dxs) for _dys, dxs in conv_taps]
                  + [max(abs(d) for d in u_dx)])
    return defs, conv_taps, phases, u_dy, u_dx, col_pad


# ----------------------------------------------------------------------------
# Parameters (deterministic synthetic init, PyTorch layouts) + one-time packing
# ----------------------------------------------------------------------------
def init_fsrcnn_params(key, cfg):
    defs = _conv_layer_defs(cfg)
    keys = jax.random.split(key, len(defs) + 1)
    params = {}
    for (name, cin, _cinp, cout, k), kk in zip(defs, keys[:-1]):
        kw_, kb_ = jax.random.split(kk)
        std = (1.0 / (cin * k * k)) ** 0.5
        params[f"{name}_w"] = jax.random.normal(kw_, (cout, cin, k, k), jnp.float32) * std
        params[f"{name}_b"] = jax.random.normal(kb_, (cout,), jnp.float32) * std
        params[f"{name}_a"] = jnp.asarray(0.25, jnp.float32)   # nn.PReLU() default
    d = cfg.n_dimension_filters
    K = cfg.deconvolution_kernel_size
    kw_, kb_ = jax.random.split(keys[-1])
    std = (1.0 / (d * K * K)) ** 0.5
    params["deconv_w"] = jax.random.normal(kw_, (d, cfg.channels, K, K), jnp.float32) * std
    params["deconv_b"] = jax.random.normal(kb_, (cfg.channels,), jnp.float32) * std
    return params


def pack_fsrcnn_params(params, cfg):
    """One-time repack into kernel layout (im2col weights, fused deconv, packed biases).

    Conv layer:  (Cout, KH*KW*Cin_pad), element [co, (i*KW+j)*Cin + ci] = w_pt[co, ci, i, j]
    Deconv:      (st*st*C, T*d) over the union tap set (T = |u_dy|*|u_dx|), zero-filled
                 where a phase has no tap.
    Biases:      (c_max_pad, n_conv+1) f32; column per layer (deconv column is the bias
                 tiled over the st*st phases).
    """
    defs, _conv_taps, phases, u_dy, u_dx, _P = _geometry(cfg)
    d, C, st = cfg.n_dimension_filters, cfg.channels, cfg.upscale_factor
    ss_c = st * st * C

    def pack_conv(name, cin, cin_pad, cout, k):
        w = params[f"{name}_w"]                                  # (cout, cin, k, k)
        if cin_pad > cin:
            w = jnp.pad(w, ((0, 0), (0, cin_pad - cin), (0, 0), (0, 0)))
        return jnp.transpose(w, (0, 2, 3, 1)).reshape(cout, k * k * cin_pad)

    conv_ws = [pack_conv(*ldef) for ldef in defs]
    packed = {
        "w_extract": conv_ws[0].astype(MATMUL_DTYPE),
        "w_shrink": conv_ws[1].astype(MATMUL_DTYPE),
        "w_expand": conv_ws[-1].astype(MATMUL_DTYPE),
    }
    if cfg.n_map_layers > 0:
        packed["w_map"] = jnp.stack(conv_ws[2:2 + cfg.n_map_layers]).astype(MATMUL_DTYPE)
    else:
        s, km = cfg.n_shrinkage_filters, cfg.map_kernel_size
        packed["w_map"] = jnp.zeros((1, s, km * km * s), MATMUL_DTYPE)

    # Fused deconv: all st*st sub-pixel phases stacked along Cout over the union taps.
    wtp = jnp.transpose(params["deconv_w"], (1, 2, 3, 0))        # (C, K, K, d)
    rows = []
    for dys, dxs, kys, kxs in phases:
        blocks = []
        for dy in u_dy:
            for dx in u_dx:
                if dy in dys and dx in dxs:
                    blocks.append(wtp[:, kys[dys.index(dy)], kxs[dxs.index(dx)], :])
                else:
                    blocks.append(jnp.zeros((C, d), jnp.float32))
        rows.append(jnp.concatenate(blocks, axis=1))             # (C, T*d)
    packed["w_deconv"] = jnp.concatenate(rows, axis=0).astype(MATMUL_DTYPE)

    # All biases in ONE small VMEM operand (column slice per layer broadcasts over lanes).
    n_rows = _round_up(max([ldef[3] for ldef in defs] + [ss_c]), 8)
    cols = []
    for name, _cin, _cp, cout, _k in defs:
        cols.append(jnp.pad(params[f"{name}_b"], (0, n_rows - cout)))
    cols.append(jnp.pad(jnp.tile(params["deconv_b"], st * st), (0, n_rows - ss_c)))
    packed["biases"] = jnp.stack(cols, axis=1).astype(jnp.float32)   # (n_rows, n_conv+1)

    packed["alphas"] = jnp.stack(
        [params[f"{name}_a"] for name, *_ in defs]).astype(jnp.float32)
    return packed


# ----------------------------------------------------------------------------
# Fused Pallas kernel
# ----------------------------------------------------------------------------
def _make_fsrcnn_kernel(cfg, H, W):
    defs, conv_taps, _phases, u_dy, u_dx, P = _geometry(cfg)
    st = cfg.upscale_factor
    C = cfg.channels
    d = cfg.n_dimension_filters
    ss_c = st * st * C
    n_map = cfg.n_map_layers
    n_conv = len(defs)

    Wp = W + 2 * P                  # column-padded image row width (zeros at the pads)
    HWp = H * Wp                    # flattened spatial lane extent
    c_in_pad = defs[0][2]
    c_max = max(max(l[2], l[3]) for l in defs)

    # Lane margin for shifted tap loads: must cover the largest flattened tap offset
    # and is 128-aligned so the interior activation store stays lane-aligned.
    max_off = 0
    for dys, dxs in conv_taps + [(u_dy, u_dx)]:
        for dy in dys:
            for dx in dxs:
                max_off = max(max_off, abs(dy * Wp + dx))
    margin = max(_round_up(max_off, 128), 128)
    assert margin >= max_off, "margin must cover the largest flattened tap offset"
    scr_w = margin + _round_up(HWp, 128) + margin
    scr_shape = (c_max, scr_w)

    def kernel(x_ref, alpha_ref, colmask_ref, w_ext_ref, w_shr_ref, w_map_ref,
               w_exp_ref, w_dec_ref, b_ref, o_ref, act):
        # Zero ONLY the margin bands: the interior is always overwritten before it is
        # read, and its zero pad-columns arrive pre-padded from the host input layout.
        act[:, 0:margin] = jnp.zeros((c_max, margin), jnp.float32)
        act[:, margin + HWp:] = jnp.zeros((c_max, scr_w - margin - HWp), jnp.float32)
        act[0:c_in_pad, margin:margin + HWp] = x_ref[0].astype(jnp.float32)

        col_keep = colmask_ref[...]        # (1, HWp): 1.0 at real columns, 0.0 at pads

        def slab(cin, dys, dxs):
            # im2col slab: each (dy, dx) tap is a static lane-shifted slice of the
            # margin-padded scratch. Row OOB -> zero margins; column OOB -> zero pad
            # columns, so no per-piece masking is needed. Cast once per layer.
            pieces = [act[0:cin, margin + dy * Wp + dx: margin + dy * Wp + dx + HWp]
                      for dy in dys for dx in dxs]
            s = pieces[0] if len(pieces) == 1 else jnp.concatenate(pieces, axis=0)
            return s.astype(MATMUL_DTYPE)

        def conv_prelu(w, li, cin, cout, dys, dxs):
            # ONE MXU matmul per layer: (Cout, KH*KW*Cin) @ (KH*KW*Cin, H*Wp), f32 acc.
            y = jnp.dot(w, slab(cin, dys, dxs), preferred_element_type=jnp.float32)
            y = y + b_ref[0:cout, li:li + 1]
            y = jnp.where(y >= 0.0, y, alpha_ref[li] * y)      # scalar PReLU
            y = y * col_keep                                   # re-zero pad columns
            act[0:cout, margin:margin + HWp] = y

        # extract -> shrink -> map x n -> expand.
        conv_prelu(w_ext_ref[...], 0, c_in_pad, defs[0][3], *conv_taps[0])
        conv_prelu(w_shr_ref[...], 1, defs[0][3], defs[1][3], *conv_taps[1])
        s_f = defs[1][3]
        for mi in range(n_map):
            conv_prelu(w_map_ref[mi], 2 + mi, s_f, s_f, *conv_taps[2 + mi])
        conv_prelu(w_exp_ref[...], 2 + n_map, s_f, d, *conv_taps[2 + n_map])

        # Fused sub-pixel ConvTranspose2d: all st*st phases in ONE matmul with
        # M = st*st*C over the union tap set; one dense output store.
        y = jnp.dot(w_dec_ref[...], slab(d, u_dy, u_dx),
                    preferred_element_type=jnp.float32)
        y = y + b_ref[0:ss_c, n_conv:n_conv + 1]
        o_ref[0] = y.astype(o_ref.dtype)

    return kernel, scr_shape, P, Wp, HWp


def fsrcnn_forward(x_nchw, packed, *, cfg):
    N, C, H, W = x_nchw.shape
    if C != cfg.channels:
        raise ValueError(f"expected {cfg.channels} input channels, got {C}")
    st = cfg.upscale_factor
    K = cfg.deconvolution_kernel_size
    pad, out_pad = _deconv_padding(st)
    h_out = (H - 1) * st - 2 * pad + K + out_pad
    w_out = (W - 1) * st - 2 * pad + K + out_pad
    if h_out != st * H or w_out != st * W:
        # TODO(synk): deconv configs whose output != upscale*input need per-phase sizes.
        raise NotImplementedError("phase-decomposed deconv assumes out = upscale * in")

    kernel, scr_shape, P, Wp, HWp = _make_fsrcnn_kernel(cfg, H, W)
    c_in_pad = _round_up(C, 8)
    ss_c = st * st * C

    # Host-side prep: pad channels to a sublane group, pad columns with P zeros each
    # side, and flatten rows onto the lane axis -> (N, Cpad, H*Wp).
    x = x_nchw.astype(jnp.float32)
    x = jnp.pad(x, ((0, 0), (0, c_in_pad - C), (0, 0), (P, P)))
    x = x.reshape(N, c_in_pad, HWp)

    # Column-keep mask (1.0 real column / 0.0 pad column), built once outside the kernel.
    col = jnp.arange(HWp, dtype=jnp.int32) % Wp
    col_keep = ((col >= P) & (col < P + W)).astype(jnp.float32).reshape(1, HWp)

    operands = (x, packed["alphas"], col_keep, packed["w_extract"], packed["w_shrink"],
                packed["w_map"], packed["w_expand"], packed["w_deconv"], packed["biases"])

    def full_spec(a):
        zeros = (0,) * a.ndim
        return pl.BlockSpec(a.shape, lambda n, _z=zeros: _z)

    in_specs = [
        pl.BlockSpec((1, c_in_pad, HWp), lambda n: (n, 0, 0)),
        pl.BlockSpec(memory_space=pltpu.MemorySpace.SMEM),       # PReLU alphas (scalars)
    ] + [full_spec(a) for a in operands[2:]]

    out = pl.pallas_call(
        kernel,
        out_shape=jax.ShapeDtypeStruct((N, ss_c, HWp), jnp.float32),
        grid_spec=pltpu.PrefetchScalarGridSpec(
            num_scalar_prefetch=0,
            grid=(N,),
            in_specs=in_specs,
            out_specs=pl.BlockSpec((1, ss_c, HWp), lambda n: (n, 0, 0)),
            scratch_shapes=[pltpu.VMEM(scr_shape, jnp.float32)],
        ),
        # Batch axis 'parallel' -> images are sharded across the two v7x TensorCores.
        compiler_params=pltpu.CompilerParams(
            dimension_semantics=("parallel",),
        ),
    )(*operands)

    # Strip the column pads and interleave the st*st sub-pixel phases back to NCHW.
    out = out.reshape(N, st, st, C, H, Wp)[..., P:P + W]
    out = jnp.transpose(out, (0, 3, 4, 1, 5, 2))
    return out.reshape(N, C, H * st, W * st)


# ----------------------------------------------------------------------------
# Pure-XLA reference (numerical self-check)
# ----------------------------------------------------------------------------
def fsrcnn_reference(x_nchw, params, *, cfg):
    prec = jax.lax.Precision.HIGHEST

    def conv(x, w, b, padding):
        y = jax.lax.conv_general_dilated(
            x, w, window_strides=(1, 1),
            padding=[(padding, padding), (padding, padding)],
            dimension_numbers=("NCHW", "OIHW", "NCHW"), precision=prec)
        return y + b.reshape(1, -1, 1, 1)

    x = x_nchw.astype(jnp.float32)
    for name, _cin, _cinp, _cout, k in _conv_layer_defs(cfg):
        y = conv(x, params[f"{name}_w"], params[f"{name}_b"], _calculate_padding(k))
        a = params[f"{name}_a"]
        x = jnp.where(y >= 0, y, a * y)

    st = cfg.upscale_factor
    K = cfg.deconvolution_kernel_size
    pad, out_pad = _deconv_padding(st)
    wt = params["deconv_w"]                                     # (Cin, Cout, K, K)
    w_conv = jnp.transpose(jnp.flip(wt, (2, 3)), (1, 0, 2, 3))  # (Cout, Cin, K, K)
    lo, hi = K - 1 - pad, K - 1 - pad + out_pad
    y = jax.lax.conv_general_dilated(
        x, w_conv, window_strides=(1, 1), padding=[(lo, hi), (lo, hi)],
        lhs_dilation=(st, st),
        dimension_numbers=("NCHW", "OIHW", "NCHW"), precision=prec)
    return y + params["deconv_b"].reshape(1, -1, 1, 1)


# ----------------------------------------------------------------------------
if __name__ == "__main__":
    channels, upscale = 3, 2
    batch, H, W = 2, 16, 16

    key = jax.random.PRNGKey(0)
    k_in, k_par = jax.random.split(key)
    x = jax.random.normal(k_in, (batch, channels, H, W), jnp.float32)

    cfg = FSRCNNConfig(channels=channels, upscale_factor=upscale)
    params = init_fsrcnn_params(k_par, cfg)
    packed = pack_fsrcnn_params(params, cfg)

    fwd = jax.jit(functools.partial(fsrcnn_forward, cfg=cfg))
    out = jax.block_until_ready(fwd(x, packed))

    expected = (batch, channels, H * upscale, W * upscale)
    assert out.shape == expected, f"bad output shape {out.shape} != {expected}"
    assert bool(jnp.all(jnp.isfinite(out))), "non-finite output"

    # Numerical self-check vs. a pure-XLA f32/HIGHEST implementation of the module.
    ref = jax.block_until_ready(
        jax.jit(functools.partial(fsrcnn_reference, cfg=cfg))(x, params))
    max_err = float(jnp.max(jnp.abs(out - ref)))
    rel_rms = float(jnp.sqrt(jnp.mean((out - ref) ** 2) /
                             (jnp.mean(ref ** 2) + 1e-12)))
    if jnp.dtype(MATMUL_DTYPE) == jnp.dtype(jnp.bfloat16):
        max_tol, rel_tol = 1e-1, 7.5e-2     # 7 layers of bf16-operand matmuls
    else:
        max_tol, rel_tol = 2e-3, 5e-4       # all-f32 operands
    assert max_err < max_tol and rel_rms < rel_tol, (
        f"mismatch vs reference: max abs err {max_err}, rel rms {rel_rms}")

    print("KERNEL_OK")
</pallas_src>

<mosaic_0001>
module attributes {stable_mosaic.version = 11 : i64} {
  func.func @kernel(%arg0: i32, %arg1: memref<1x8x320xf32, #tpu.memory_space<vmem>>, %arg2: memref<7xf32, #tpu.memory_space<smem>>, %arg3: memref<1x320xf32, #tpu.memory_space<vmem>>, %arg4: memref<56x200xbf16, #tpu.memory_space<vmem>>, %arg5: memref<16x56xbf16, #tpu.memory_space<vmem>>, %arg6: memref<4x16x144xbf16, #tpu.memory_space<vmem>>, %arg7: memref<56x16xbf16, #tpu.memory_space<vmem>>, %arg8: memref<12x1400xbf16, #tpu.memory_space<vmem>>, %arg9: memref<56x8xf32, #tpu.memory_space<vmem>>, %arg10: memref<1x12x320xf32, #tpu.memory_space<vmem>>, %arg11: memref<56x640xf32, #tpu.memory_space<vmem>>) attributes {dimension_semantics = [#tpu.dimension_semantics<parallel>], iteration_bounds = array<i64: 2>, scalar_prefetch = 0 : i64, scratch_operands = 1 : i64, tpu.core_type = #tpu.core_type<tc>, window_params = [{transform_indices = @transform_0, window_bounds = array<i64: 1, 8, 320>}, {transform_indices = @transform_1, window_bounds = array<i64: 7>}, {pipeline_mode = #tpu.pipeline_mode<synchronous>, transform_indices = @transform_2, window_bounds = array<i64: 1, 320>}, {pipeline_mode = #tpu.pipeline_mode<synchronous>, transform_indices = @transform_3, window_bounds = array<i64: 56, 200>}, {pipeline_mode = #tpu.pipeline_mode<synchronous>, transform_indices = @transform_4, window_bounds = array<i64: 16, 56>}, {pipeline_mode = #tpu.pipeline_mode<synchronous>, transform_indices = @transform_5, window_bounds = array<i64: 4, 16, 144>}, {pipeline_mode = #tpu.pipeline_mode<synchronous>, transform_indices = @transform_6, window_bounds = array<i64: 56, 16>}, {pipeline_mode = #tpu.pipeline_mode<synchronous>, transform_indices = @transform_7, window_bounds = array<i64: 12, 1400>}, {pipeline_mode = #tpu.pipeline_mode<synchronous>, transform_indices = @transform_8, window_bounds = array<i64: 56, 8>}, {transform_indices = @transform_9, window_bounds = array<i64: 1, 12, 320>}]} {
    %cst = arith.constant 0.000000e+00 : f32
    %0 = vector.broadcast %cst : f32 to vector<56x128xf32>
    %c0 = arith.constant 0 : index
    %c0_0 = arith.constant 0 : index
    %1 = vector.load %arg11[%c0, %c0_0] : memref<56x640xf32, #tpu.memory_space<vmem>>, vector<56x128xf32>
    tpu.vector_store %arg11[%c0, %c0_0], %0 {strides = array<i32>} : memref<56x640xf32, #tpu.memory_space<vmem>>, vector<56x128xf32>,
    %cst_1 = arith.constant 0.000000e+00 : f32
    %2 = vector.broadcast %cst_1 : f32 to vector<56x192xf32>
    %c0_2 = arith.constant 0 : index
    %c448 = arith.constant 448 : index
    %3 = vector.load %arg11[%c0_2, %c448] : memref<56x640xf32, #tpu.memory_space<vmem>>, vector<56x192xf32>
    tpu.vector_store %arg11[%c0_2, %c448], %2 {strides = array<i32>} : memref<56x640xf32, #tpu.memory_space<vmem>>, vector<56x192xf32>,
    %c0_3 = arith.constant 0 : index
    %c0_4 = arith.constant 0 : index
    %c0_5 = arith.constant 0 : index
    %4 = vector.load %arg1[%c0_3, %c0_4, %c0_5] : memref<1x8x320xf32, #tpu.memory_space<vmem>>, vector<1x8x320xf32>
    %5 = vector.shape_cast %4 : vector<1x8x320xf32> to vector<8x320xf32>
    %c0_6 = arith.constant 0 : index
    %c128 = arith.constant 128 : index
    %6 = vector.load %arg11[%c0_6, %c128] : memref<56x640xf32, #tpu.memory_space<vmem>>, vector<8x320xf32>
    tpu.vector_store %arg11[%c0_6, %c128], %5 {strides = array<i32>} : memref<56x640xf32, #tpu.memory_space<vmem>>, vector<8x320xf32>,
    %c0_7 = arith.constant 0 : index
    %c0_8 = arith.constant 0 : index
    %7 = vector.load %arg3[%c0_7, %c0_8] : memref<1x320xf32, #tpu.memory_space<vmem>>, vector<1x320xf32>
    %c0_9 = arith.constant 0 : index
    %c0_10 = arith.constant 0 : index
    %8 = vector.load %arg4[%c0_9, %c0_10] : memref<56x200xbf16, #tpu.memory_space<vmem>>, vector<56x200xbf16>
    %c0_11 = arith.constant 0 : index
    %c86 = arith.constant 86 : index
    %9 = vector.load %arg11[%c0_11, %c86] : memref<56x640xf32, #tpu.memory_space<vmem>>, vector<8x320xf32>
    %c0_12 = arith.constant 0 : index
    %c87 = arith.constant 87 : index
    %10 = vector.load %arg11[%c0_12, %c87] : memref<56x640xf32, #tpu.memory_space<vmem>>, vector<8x320xf32>
    %c0_13 = arith.constant 0 : index
    %c88 = arith.constant 88 : index
    %11 = vector.load %arg11[%c0_13, %c88] : memref<56x640xf32, #tpu.memory_space<vmem>>, vector<8x320xf32>
    %c0_14 = arith.constant 0 : index
    %c89 = arith.constant 89 : index
    %12 = vector.load %arg11[%c0_14, %c89] : memref<56x640xf32, #tpu.memory_space<vmem>>, vector<8x320xf32>
    %c0_15 = arith.constant 0 : index
    %c90 = arith.constant 90 : index
    %13 = vector.load %arg11[%c0_15, %c90] : memref<56x640xf32, #tpu.memory_space<vmem>>, vector<8x320xf32>
    %c0_16 = arith.constant 0 : index
    %c106 = arith.constant 106 : index
    %14 = vector.load %arg11[%c0_16, %c106] : memref<56x640xf32, #tpu.memory_space<vmem>>, vector<8x320xf32>
    %c0_17 = arith.constant 0 : index
    %c107 = arith.constant 107 : index
    %15 = vector.load %arg11[%c0_17, %c107] : memref<56x640xf32, #tpu.memory_space<vmem>>, vector<8x320xf32>
    %c0_18 = arith.constant 0 : index
    %c108 = arith.constant 108 : index
    %16 = vector.load %arg11[%c0_18, %c108] : memref<56x640xf32, #tpu.memory_space<vmem>>, vector<8x320xf32>
    %c0_19 = arith.constant 0 : index
    %c109 = arith.constant 109 : index
    %17 = vector.load %arg11[%c0_19, %c109] : memref<56x640xf32, #tpu.memory_space<vmem>>, vector<8x320xf32>
    %c0_20 = arith.constant 0 : index
    %c110 = arith.constant 110 : index
    %18 = vector.load %arg11[%c0_20, %c110] : memref<56x640xf32, #tpu.memory_space<vmem>>, vector<8x320xf32>
    %c0_21 = arith.constant 0 : index
    %c126 = arith.constant 126 : index
    %19 = vector.load %arg11[%c0_21, %c126] : memref<56x640xf32, #tpu.memory_space<vmem>>, vector<8x320xf32>
    %c0_22 = arith.constant 0 : index
    %c127 = arith.constant 127 : index
    %20 = vector.load %arg11[%c0_22, %c127] : memref<56x640xf32, #tpu.memory_space<vmem>>, vector<8x320xf32>
    %c0_23 = arith.constant 0 : index
    %c128_24 = arith.constant 128 : index
    %21 = vector.load %arg11[%c0_23, %c128_24] : memref<56x640xf32, #tpu.memory_space<vmem>>, vector<8x320xf32>
    %c0_25 = arith.constant 0 : index
    %c129 = arith.constant 129 : index
    %22 = vector.load %arg11[%c0_25, %c129] : memref<56x640xf32, #tpu.memory_space<vmem>>, vector<8x320xf32>
    %c0_26 = arith.constant 0 : index
    %c130 = arith.constant 130 : index
    %23 = vector.load %arg11[%c0_26, %c130] : memref<56x640xf32, #tpu.memory_space<vmem>>, vector<8x320xf32>
    %c0_27 = arith.constant 0 : index
    %c146 = arith.constant 146 : index
    %24 = vector.load %arg11[%c0_27, %c146] : memref<56x640xf32, #tpu.memory_space<vmem>>, vector<8x320xf32>
    %c0_28 = arith.constant 0 : index
    %c147 = arith.constant 147 : index
    %25 = vector.load %arg11[%c0_28, %c147] : memref<56x640xf32, #tpu.memory_space<vmem>>, vector<8x320xf32>
    %c0_29 = arith.constant 0 : index
    %c148 = arith.constant 148 : index
    %26 = vector.load %arg11[%c0_29, %c148] : memref<56x640xf32, #tpu.memory_space<vmem>>, vector<8x320xf32>
    %c0_30 = arith.constant 0 : index
    %c149 = arith.constant 149 : index
    %27 = vector.load %arg11[%c0_30, %c149] : memref<56x640xf32, #tpu.memory_space<vmem>>, vector<8x320xf32>
    %c0_31 = arith.constant 0 : index
    %c150 = arith.constant 150 : index
    %28 = vector.load %arg11[%c0_31, %c150] : memref<56x640xf32, #tpu.memory_space<vmem>>, vector<8x320xf32>
    %c0_32 = arith.constant 0 : index
    %c166 = arith.constant 166 : index
    %29 = vector.load %arg11[%c0_32, %c166] : memref<56x640xf32, #tpu.memory_space<vmem>>, vector<8x320xf32>
    %c0_33 = arith.constant 0 : index
    %c167 = arith.constant 167 : index
    %30 = vector.load %arg11[%c0_33, %c167] : memref<56x640xf32, #tpu.memory_space<vmem>>, vector<8x320xf32>
    %c0_34 = arith.constant 0 : index
    %c168 = arith.constant 168 : index
    %31 = vector.load %arg11[%c0_34, %c168] : memref<56x640xf32, #tpu.memory_space<vmem>>, vector<8x320xf32>
    %c0_35 = arith.constant 0 : index
    %c169 = arith.constant 169 : index
    %32 = vector.load %arg11[%c0_35, %c169] : memref<56x640xf32, #tpu.memory_space<vmem>>, vector<8x320xf32>
    %c0_36 = arith.constant 0 : index
    %c170 = arith.constant 170 : index
    %33 = vector.load %arg11[%c0_36, %c170] : memref<56x640xf32, #tpu.memory_space<vmem>>, vector<8x320xf32>
    %34 = tpu.concatenate %9, %10, %11, %12, %13, %14, %15, %16, %17, %18, %19, %20, %21, %22, %23, %24 in 0 : vector<8x320xf32>, vector<8x320xf32>, vector<8x320xf32>, vector<8x320xf32>, vector<8x320xf32>, vector<8x320xf32>, vector<8x320xf32>, vector<8x320xf32>, vector<8x320xf32>, vector<8x320xf32>, vector<8x320xf32>, vector<8x320xf32>, vector<8x320xf32>, vector<8x320xf32>, vector<8x320xf32>, vector<8x320xf32> -> vector<128x320xf32>
    %35 = tpu.concatenate %25, %26, %27, %28, %29, %30, %31, %32, %33 in 0 : vector<8x320xf32>, vector<8x320xf32>, vector<8x320xf32>, vector<8x320xf32>, vector<8x320xf32>, vector<8x320xf32>, vector<8x320xf32>, vector<8x320xf32>, vector<8x320xf32> -> vector<72x320xf32>
    %36 = tpu.concatenate %34, %35 in 0 : vector<128x320xf32>, vector<72x320xf32> -> vector<200x320xf32>
    %37 = arith.truncf %36 : vector<200x320xf32> to vector<200x320xbf16>
    %cst_37 = arith.constant dense<0.000000e+00> : vector<56x320xf32>
    %38 = tpu.matmul %8, %37, %cst_37 {dimension_numbers = #tpu.dot_dimension_numbers<[1], [0], [0], [1], [0, 0, 1, 1], [], []>} : vector<56x200xbf16>, vector<200x320xbf16>, vector<56x320xf32> -> vector<56x320xf32>
    %c0_38 = arith.constant 0 : index
    %c0_39 = arith.constant 0 : index
    %39 = vector.load %arg9[%c0_38, %c0_39] : memref<56x8xf32, #tpu.memory_space<vmem>>, vector<56x1xf32>
    %40 = vector.broadcast %39 : vector<56x1xf32> to vector<56x320xf32>
    %41 = arith.addf %38, %40 : vector<56x320xf32>
    %cst_40 = arith.constant 0.000000e+00 : f32
    %42 = vector.broadcast %cst_40 : f32 to vector<56x320xf32>
    %43 = arith.cmpf oge, %41, %42 : vector<56x320xf32>
    %c0_41 = arith.constant 0 : index
    %44 = memref.load %arg2[%c0_41] : memref<7xf32, #tpu.memory_space<smem>>
    %45 = vector.broadcast %44 : f32 to vector<56x320xf32>
    %46 = arith.mulf %45, %41 : vector<56x320xf32>
    %47 = arith.select %43, %41, %46 : vector<56x320xi1>, vector<56x320xf32>
    %48 = vector.broadcast %7 : vector<1x320xf32> to vector<56x320xf32>
    %49 = arith.mulf %47, %48 : vector<56x320xf32>
    %c0_42 = arith.constant 0 : index
    %c128_43 = arith.constant 128 : index
    %50 = vector.load %arg11[%c0_42, %c128_43] : memref<56x640xf32, #tpu.memory_space<vmem>>, vector<56x320xf32>
    tpu.vector_store %arg11[%c0_42, %c128_43], %49 {strides = array<i32>} : memref<56x640xf32, #tpu.memory_space<vmem>>, vector<56x320xf32>,
    %c0_44 = arith.constant 0 : index
    %c0_45 = arith.constant 0 : index
    %51 = vector.load %arg5[%c0_44, %c0_45] : memref<16x56xbf16, #tpu.memory_space<vmem>>, vector<16x56xbf16>
    %c0_46 = arith.constant 0 : index
    %c128_47 = arith.constant 128 : index
    %52 = vector.load %arg11[%c0_46, %c128_47] : memref<56x640xf32, #tpu.memory_space<vmem>>, vector<56x320xf32>
    %53 = arith.truncf %52 : vector<56x320xf32> to vector<56x320xbf16>
    %cst_48 = arith.constant dense<0.000000e+00> : vector<16x320xf32>
    %54 = tpu.matmul %51, %53, %cst_48 {dimension_numbers = #tpu.dot_dimension_numbers<[1], [0], [0], [1], [0, 0, 1, 1], [], []>} : vector<16x56xbf16>, vector<56x320xbf16>, vector<16x320xf32> -> vector<16x320xf32>
    %c0_49 = arith.constant 0 : index
    %c1 = arith.constant 1 : index
    %55 = vector.load %arg9[%c0_49, %c1] : memref<56x8xf32, #tpu.memory_space<vmem>>, vector<16x1xf32>
    %56 = vector.broadcast %55 : vector<16x1xf32> to vector<16x320xf32>
    %57 = arith.addf %54, %56 : vector<16x320xf32>
    %cst_50 = arith.constant 0.000000e+00 : f32
    %58 = vector.broadcast %cst_50 : f32 to vector<16x320xf32>
    %59 = arith.cmpf oge, %57, %58 : vector<16x320xf32>
    %c1_51 = arith.constant 1 : index
    %60 = memref.load %arg2[%c1_51] : memref<7xf32, #tpu.memory_space<smem>>
    %61 = vector.broadcast %60 : f32 to vector<16x320xf32>
    %62 = arith.mulf %61, %57 : vector<16x320xf32>
    %63 = arith.select %59, %57, %62 : vector<16x320xi1>, vector<16x320xf32>
    %64 = vector.broadcast %7 : vector<1x320xf32> to vector<16x320xf32>
    %65 = arith.mulf %63, %64 : vector<16x320xf32>
    %c0_52 = arith.constant 0 : index
    %c128_53 = arith.constant 128 : index
    %66 = vector.load %arg11[%c0_52, %c128_53] : memref<56x640xf32, #tpu.memory_space<vmem>>, vector<16x320xf32>
    tpu.vector_store %arg11[%c0_52, %c128_53], %65 {strides = array<i32>} : memref<56x640xf32, #tpu.memory_space<vmem>>, vector<16x320xf32>,
    %c0_54 = arith.constant 0 : index
    %c0_55 = arith.constant 0 : index
    %c0_56 = arith.constant 0 : index
    %67 = vector.load %arg6[%c0_54, %c0_55, %c0_56] : memref<4x16x144xbf16, #tpu.memory_space<vmem>>, vector<1x16x144xbf16>
    %68 = vector.shape_cast %67 : vector<1x16x144xbf16> to vector<16x144xbf16>
    %c0_57 = arith.constant 0 : index
    %c107_58 = arith.constant 107 : index
    %69 = vector.load %arg11[%c0_57, %c107_58] : memref<56x640xf32, #tpu.memory_space<vmem>>, vector<16x320xf32>
    %c0_59 = arith.constant 0 : index
    %c108_60 = arith.constant 108 : index
    %70 = vector.load %arg11[%c0_59, %c108_60] : memref<56x640xf32, #tpu.memory_space<vmem>>, vector<16x320xf32>
    %c0_61 = arith.constant 0 : index
    %c109_62 = arith.constant 109 : index
    %71 = vector.load %arg11[%c0_61, %c109_62] : memref<56x640xf32, #tpu.memory_space<vmem>>, vector<16x320xf32>
    %c0_63 = arith.constant 0 : index
    %c127_64 = arith.constant 127 : index
    %72 = vector.load %arg11[%c0_63, %c127_64] : memref<56x640xf32, #tpu.memory_space<vmem>>, vector<16x320xf32>
    %c0_65 = arith.constant 0 : index
    %c128_66 = arith.constant 128 : index
    %73 = vector.load %arg11[%c0_65, %c128_66] : memref<56x640xf32, #tpu.memory_space<vmem>>, vector<16x320xf32>
    %c0_67 = arith.constant 0 : index
    %c129_68 = arith.constant 129 : index
    %74 = vector.load %arg11[%c0_67, %c129_68] : memref<56x640xf32, #tpu.memory_space<vmem>>, vector<16x320xf32>
    %c0_69 = arith.constant 0 : index
    %c147_70 = arith.constant 147 : index
    %75 = vector.load %arg11[%c0_69, %c147_70] : memref<56x640xf32, #tpu.memory_space<vmem>>, vector<16x320xf32>
    %c0_71 = arith.constant 0 : index
    %c148_72 = arith.constant 148 : index
    %76 = vector.load %arg11[%c0_71, %c148_72] : memref<56x640xf32, #tpu.memory_space<vmem>>, vector<16x320xf32>
    %c0_73 = arith.constant 0 : index
    %c149_74 = arith.constant 149 : index
    %77 = vector.load %arg11[%c0_73, %c149_74] : memref<56x640xf32, #tpu.memory_space<vmem>>, vector<16x320xf32>
    %78 = tpu.concatenate %69, %70, %71, %72, %73, %74, %75, %76, %77 in 0 : vector<16x320xf32>, vector<16x320xf32>, vector<16x320xf32>, vector<16x320xf32>, vector<16x320xf32>, vector<16x320xf32>, vector<16x320xf32>, vector<16x320xf32>, vector<16x320xf32> -> vector<144x320xf32>
    %79 = arith.truncf %78 : vector<144x320xf32> to vector<144x320xbf16>
    %cst_75 = arith.constant dense<0.000000e+00> : vector<16x320xf32>
    %80 = tpu.matmul %68, %79, %cst_75 {dimension_numbers = #tpu.dot_dimension_numbers<[1], [0], [0], [1], [0, 0, 1, 1], [], []>} : vector<16x144xbf16>, vector<144x320xbf16>, vector<16x320xf32> -> vector<16x320xf32>
    %c0_76 = arith.constant 0 : index
    %c2 = arith.constant 2 : index
    %81 = vector.load %arg9[%c0_76, %c2] : memref<56x8xf32, #tpu.memory_space<vmem>>, vector<16x1xf32>
    %82 = vector.broadcast %81 : vector<16x1xf32> to vector<16x320xf32>
    %83 = arith.addf %80, %82 : vector<16x320xf32>
    %cst_77 = arith.constant 0.000000e+00 : f32
    %84 = vector.broadcast %cst_77 : f32 to vector<16x320xf32>
    %85 = arith.cmpf oge, %83, %84 : vector<16x320xf32>
    %c2_78 = arith.constant 2 : index
    %86 = memref.load %arg2[%c2_78] : memref<7xf32, #tpu.memory_space<smem>>
    %87 = vector.broadcast %86 : f32 to vector<16x320xf32>
    %88 = arith.mulf %87, %83 : vector<16x320xf32>
    %89 = arith.select %85, %83, %88 : vector<16x320xi1>, vector<16x320xf32>
    %90 = vector.broadcast %7 : vector<1x320xf32> to vector<16x320xf32>
    %91 = arith.mulf %89, %90 : vector<16x320xf32>
    %c0_79 = arith.constant 0 : index
    %c128_80 = arith.constant 128 : index
    %92 = vector.load %arg11[%c0_79, %c128_80] : memref<56x640xf32, #tpu.memory_space<vmem>>, vector<16x320xf32>
    tpu.vector_store %arg11[%c0_79, %c128_80], %91 {strides = array<i32>} : memref<56x640xf32, #tpu.memory_space<vmem>>, vector<16x320xf32>,
    %c1_81 = arith.constant 1 : index
    %c0_82 = arith.constant 0 : index
    %c0_83 = arith.constant 0 : index
    %93 = vector.load %arg6[%c1_81, %c0_82, %c0_83] : memref<4x16x144xbf16, #tpu.memory_space<vmem>>, vector<1x16x144xbf16>
    %94 = vector.shape_cast %93 : vector<1x16x144xbf16> to vector<16x144xbf16>
    %c0_84 = arith.constant 0 : index
    %c107_85 = arith.constant 107 : index
    %95 = vector.load %arg11[%c0_84, %c107_85] : memref<56x640xf32, #tpu.memory_space<vmem>>, vector<16x320xf32>
    %c0_86 = arith.constant 0 : index
    %c108_87 = arith.constant 108 : index
    %96 = vector.load %arg11[%c0_86, %c108_87] : memref<56x640xf32, #tpu.memory_space<vmem>>, vector<16x320xf32>
    %c0_88 = arith.constant 0 : index
    %c109_89 = arith.constant 109 : index
    %97 = vector.load %arg11[%c0_88, %c109_89] : memref<56x640xf32, #tpu.memory_space<vmem>>, vector<16x320xf32>
    %c0_90 = arith.constant 0 : index
    %c127_91 = arith.constant 127 : index
    %98 = vector.load %arg11[%c0_90, %c127_91] : memref<56x640xf32, #tpu.memory_space<vmem>>, vector<16x320xf32>
    %c0_92 = arith.constant 0 : index
    %c128_93 = arith.constant 128 : index
    %99 = vector.load %arg11[%c0_92, %c128_93] : memref<56x640xf32, #tpu.memory_space<vmem>>, vector<16x320xf32>
    %c0_94 = arith.constant 0 : index
    %c129_95 = arith.constant 129 : index
    %100 = vector.load %arg11[%c0_94, %c129_95] : memref<56x640xf32, #tpu.memory_space<vmem>>, vector<16x320xf32>
    %c0_96 = arith.constant 0 : index
    %c147_97 = arith.constant 147 : index
    %101 = vector.load %arg11[%c0_96, %c147_97] : memref<56x640xf32, #tpu.memory_space<vmem>>, vector<16x320xf32>
    %c0_98 = arith.constant 0 : index
    %c148_99 = arith.constant 148 : index
    %102 = vector.load %arg11[%c0_98, %c148_99] : memref<56x640xf32, #tpu.memory_space<vmem>>, vector<16x320xf32>
    %c0_100 = arith.constant 0 : index
    %c149_101 = arith.constant 149 : index
    %103 = vector.load %arg11[%c0_100, %c149_101] : memref<56x640xf32, #tpu.memory_space<vmem>>, vector<16x320xf32>
    %104 = tpu.concatenate %95, %96, %97, %98, %99, %100, %101, %102, %103 in 0 : vector<16x320xf32>, vector<16x320xf32>, vector<16x320xf32>, vector<16x320xf32>, vector<16x320xf32>, vector<16x320xf32>, vector<16x320xf32>, vector<16x320xf32>, vector<16x320xf32> -> vector<144x320xf32>
    %105 = arith.truncf %104 : vector<144x320xf32> to vector<144x320xbf16>
    %cst_102 = arith.constant dense<0.000000e+00> : vector<16x320xf32>
    %106 = tpu.matmul %94, %105, %cst_102 {dimension_numbers = #tpu.dot_dimension_numbers<[1], [0], [0], [1], [0, 0, 1, 1], [], []>} : vector<16x144xbf16>, vector<144x320xbf16>, vector<16x320xf32> -> vector<16x320xf32>
    %c0_103 = arith.constant 0 : index
    %c3 = arith.constant 3 : index
    %107 = vector.load %arg9[%c0_103, %c3] : memref<56x8xf32, #tpu.memory_space<vmem>>, vector<16x1xf32>
    %108 = vector.broadcast %107 : vector<16x1xf32> to vector<16x320xf32>
    %109 = arith.addf %106, %108 : vector<16x320xf32>
    %cst_104 = arith.constant 0.000000e+00 : f32
    %110 = vector.broadcast %cst_104 : f32 to vector<16x320xf32>
    %111 = arith.cmpf oge, %109, %110 : vector<16x320xf32>
    %c3_105 = arith.constant 3 : index
    %112 = memref.load %arg2[%c3_105] : memref<7xf32, #tpu.memory_space<smem>>
    %113 = vector.broadcast %112 : f32 to vector<16x320xf32>
    %114 = arith.mulf %113, %109 : vector<16x320xf32>
    %115 = arith.select %111, %109, %114 : vector<16x320xi1>, vector<16x320xf32>
    %116 = vector.broadcast %7 : vector<1x320xf32> to vector<16x320xf32>
    %117 = arith.mulf %115, %116 : vector<16x320xf32>
    %c0_106 = arith.constant 0 : index
    %c128_107 = arith.constant 128 : index
    %118 = vector.load %arg11[%c0_106, %c128_107] : memref<56x640xf32, #tpu.memory_space<vmem>>, vector<16x320xf32>
    tpu.vector_store %arg11[%c0_106, %c128_107], %117 {strides = array<i32>} : memref<56x640xf32, #tpu.memory_space<vmem>>, vector<16x320xf32>,
    %c2_108 = arith.constant 2 : index
    %c0_109 = arith.constant 0 : index
    %c0_110 = arith.constant 0 : index
    %119 = vector.load %arg6[%c2_108, %c0_109, %c0_110] : memref<4x16x144xbf16, #tpu.memory_space<vmem>>, vector<1x16x144xbf16>
    %120 = vector.shape_cast %119 : vector<1x16x144xbf16> to vector<16x144xbf16>
    %c0_111 = arith.constant 0 : index
    %c107_112 = arith.constant 107 : index
    %121 = vector.load %arg11[%c0_111, %c107_112] : memref<56x640xf32, #tpu.memory_space<vmem>>, vector<16x320xf32>
    %c0_113 = arith.constant 0 : index
    %c108_114 = arith.constant 108 : index
    %122 = vector.load %arg11[%c0_113, %c108_114] : memref<56x640xf32, #tpu.memory_space<vmem>>, vector<16x320xf32>
    %c0_115 = arith.constant 0 : index
    %c109_116 = arith.constant 109 : index
    %123 = vector.load %arg11[%c0_115, %c109_116] : memref<56x640xf32, #tpu.memory_space<vmem>>, vector<16x320xf32>
    %c0_117 = arith.constant 0 : index
    %c127_118 = arith.constant 127 : index
    %124 = vector.load %arg11[%c0_117, %c127_118] : memref<56x640xf32, #tpu.memory_space<vmem>>, vector<16x320xf32>
    %c0_119 = arith.constant 0 : index
    %c128_120 = arith.constant 128 : index
    %125 = vector.load %arg11[%c0_119, %c128_120] : memref<56x640xf32, #tpu.memory_space<vmem>>, vector<16x320xf32>
    %c0_121 = arith.constant 0 : index
    %c129_122 = arith.constant 129 : index
    %126 = vector.load %arg11[%c0_121, %c129_122] : memref<56x640xf32, #tpu.memory_space<vmem>>, vector<16x320xf32>
    %c0_123 = arith.constant 0 : index
    %c147_124 = arith.constant 147 : index
    %127 = vector.load %arg11[%c0_123, %c147_124] : memref<56x640xf32, #tpu.memory_space<vmem>>, vector<16x320xf32>
    %c0_125 = arith.constant 0 : index
    %c148_126 = arith.constant 148 : index
    %128 = vector.load %arg11[%c0_125, %c148_126] : memref<56x640xf32, #tpu.memory_space<vmem>>, vector<16x320xf32>
    %c0_127 = arith.constant 0 : index
    %c149_128 = arith.constant 149 : index
    %129 = vector.load %arg11[%c0_127, %c149_128] : memref<56x640xf32, #tpu.memory_space<vmem>>, vector<16x320xf32>
    %130 = tpu.concatenate %121, %122, %123, %124, %125, %126, %127, %128, %129 in 0 : vector<16x320xf32>, vector<16x320xf32>, vector<16x320xf32>, vector<16x320xf32>, vector<16x320xf32>, vector<16x320xf32>, vector<16x320xf32>, vector<16x320xf32>, vector<16x320xf32> -> vector<144x320xf32>
    %131 = arith.truncf %130 : vector<144x320xf32> to vector<144x320xbf16>
    %cst_129 = arith.constant dense<0.000000e+00> : vector<16x320xf32>
    %132 = tpu.matmul %120, %131, %cst_129 {dimension_numbers = #tpu.dot_dimension_numbers<[1], [0], [0], [1], [0, 0, 1, 1], [], []>} : vector<16x144xbf16>, vector<144x320xbf16>, vector<16x320xf32> -> vector<16x320xf32>
    %c0_130 = arith.constant 0 : index
    %c4 = arith.constant 4 : index
    %133 = vector.load %arg9[%c0_130, %c4] : memref<56x8xf32, #tpu.memory_space<vmem>>, vector<16x1xf32>
    %134 = vector.broadcast %133 : vector<16x1xf32> to vector<16x320xf32>
    %135 = arith.addf %132, %134 : vector<16x320xf32>
    %cst_131 = arith.constant 0.000000e+00 : f32
    %136 = vector.broadcast %cst_131 : f32 to vector<16x320xf32>
    %137 = arith.cmpf oge, %135, %136 : vector<16x320xf32>
    %c4_132 = arith.constant 4 : index
    %138 = memref.load %arg2[%c4_132] : memref<7xf32, #tpu.memory_space<smem>>
    %139 = vector.broadcast %138 : f32 to vector<16x320xf32>
    %140 = arith.mulf %139, %135 : vector<16x320xf32>
    %141 = arith.select %137, %135, %140 : vector<16x320xi1>, vector<16x320xf32>
    %142 = vector.broadcast %7 : vector<1x320xf32> to vector<16x320xf32>
    %143 = arith.mulf %141, %142 : vector<16x320xf32>
    %c0_133 = arith.constant 0 : index
    %c128_134 = arith.constant 128 : index
    %144 = vector.load %arg11[%c0_133, %c128_134] : memref<56x640xf32, #tpu.memory_space<vmem>>, vector<16x320xf32>
    tpu.vector_store %arg11[%c0_133, %c128_134], %143 {strides = array<i32>} : memref<56x640xf32, #tpu.memory_space<vmem>>, vector<16x320xf32>,
    %c3_135 = arith.constant 3 : index
    %c0_136 = arith.constant 0 : index
    %c0_137 = arith.constant 0 : index
    %145 = vector.load %arg6[%c3_135, %c0_136, %c0_137] : memref<4x16x144xbf16, #tpu.memory_space<vmem>>, vector<1x16x144xbf16>
    %146 = vector.shape_cast %145 : vector<1x16x144xbf16> to vector<16x144xbf16>
    %c0_138 = arith.constant 0 : index
    %c107_139 = arith.constant 107 : index
    %147 = vector.load %arg11[%c0_138, %c107_139] : memref<56x640xf32, #tpu.memory_space<vmem>>, vector<16x320xf32>
    %c0_140 = arith.constant 0 : index
    %c108_141 = arith.constant 108 : index
    %148 = vector.load %arg11[%c0_140, %c108_141] : memref<56x640xf32, #tpu.memory_space<vmem>>, vector<16x320xf32>
    %c0_142 = arith.constant 0 : index
    %c109_143 = arith.constant 109 : index
    %149 = vector.load %arg11[%c0_142, %c109_143] : memref<56x640xf32, #tpu.memory_space<vmem>>, vector<16x320xf32>
    %c0_144 = arith.constant 0 : index
    %c127_145 = arith.constant 127 : index
    %150 = vector.load %arg11[%c0_144, %c127_145] : memref<56x640xf32, #tpu.memory_space<vmem>>, vector<16x320xf32>
    %c0_146 = arith.constant 0 : index
    %c128_147 = arith.constant 128 : index
    %151 = vector.load %arg11[%c0_146, %c128_147] : memref<56x640xf32, #tpu.memory_space<vmem>>, vector<16x320xf32>
    %c0_148 = arith.constant 0 : index
    %c129_149 = arith.constant 129 : index
    %152 = vector.load %arg11[%c0_148, %c129_149] : memref<56x640xf32, #tpu.memory_space<vmem>>, vector<16x320xf32>
    %c0_150 = arith.constant 0 : index
    %c147_151 = arith.constant 147 : index
    %153 = vector.load %arg11[%c0_150, %c147_151] : memref<56x640xf32, #tpu.memory_space<vmem>>, vector<16x320xf32>
    %c0_152 = arith.constant 0 : index
    %c148_153 = arith.constant 148 : index
    %154 = vector.load %arg11[%c0_152, %c148_153] : memref<56x640xf32, #tpu.memory_space<vmem>>, vector<16x320xf32>
    %c0_154 = arith.constant 0 : index
    %c149_155 = arith.constant 149 : index
    %155 = vector.load %arg11[%c0_154, %c149_155] : memref<56x640xf32, #tpu.memory_space<vmem>>, vector<16x320xf32>
    %156 = tpu.concatenate %147, %148, %149, %150, %151, %152, %153, %154, %155 in 0 : vector<16x320xf32>, vector<16x320xf32>, vector<16x320xf32>, vector<16x320xf32>, vector<16x320xf32>, vector<16x320xf32>, vector<16x320xf32>, vector<16x320xf32>, vector<16x320xf32> -> vector<144x320xf32>
    %157 = arith.truncf %156 : vector<144x320xf32> to vector<144x320xbf16>
    %cst_156 = arith.constant dense<0.000000e+00> : vector<16x320xf32>
    %158 = tpu.matmul %146, %157, %cst_156 {dimension_numbers = #tpu.dot_dimension_numbers<[1], [0], [0], [1], [0, 0, 1, 1], [], []>} : vector<16x144xbf16>, vector<144x320xbf16>, vector<16x320xf32> -> vector<16x320xf32>
    %c0_157 = arith.constant 0 : index
    %c5 = arith.constant 5 : index
    %159 = vector.load %arg9[%c0_157, %c5] : memref<56x8xf32, #tpu.memory_space<vmem>>, vector<16x1xf32>
    %160 = vector.broadcast %159 : vector<16x1xf32> to vector<16x320xf32>
    %161 = arith.addf %158, %160 : vector<16x320xf32>
    %cst_158 = arith.constant 0.000000e+00 : f32
    %162 = vector.broadcast %cst_158 : f32 to vector<16x320xf32>
    %163 = arith.cmpf oge, %161, %162 : vector<16x320xf32>
    %c5_159 = arith.constant 5 : index
    %164 = memref.load %arg2[%c5_159] : memref<7xf32, #tpu.memory_space<smem>>
    %165 = vector.broadcast %164 : f32 to vector<16x320xf32>
    %166 = arith.mulf %165, %161 : vector<16x320xf32>
    %167 = arith.select %163, %161, %166 : vector<16x320xi1>, vector<16x320xf32>
    %168 = vector.broadcast %7 : vector<1x320xf32> to vector<16x320xf32>
    %169 = arith.mulf %167, %168 : vector<16x320xf32>
    %c0_160 = arith.constant 0 : index
    %c128_161 = arith.constant 128 : index
    %170 = vector.load %arg11[%c0_160, %c128_161] : memref<56x640xf32, #tpu.memory_space<vmem>>, vector<16x320xf32>
    tpu.vector_store %arg11[%c0_160, %c128_161], %169 {strides = array<i32>} : memref<56x640xf32, #tpu.memory_space<vmem>>, vector<16x320xf32>,
    %c0_162 = arith.constant 0 : index
    %c0_163 = arith.constant 0 : index
    %171 = vector.load %arg7[%c0_162, %c0_163] : memref<56x16xbf16, #tpu.memory_space<vmem>>, vector<56x16xbf16>
    %c0_164 = arith.constant 0 : index
    %c128_165 = arith.constant 128 : index
    %172 = vector.load %arg11[%c0_164, %c128_165] : memref<56x640xf32, #tpu.memory_space<vmem>>, vector<16x320xf32>
    %173 = arith.truncf %172 : vector<16x320xf32> to vector<16x320xbf16>
    %cst_166 = arith.constant dense<0.000000e+00> : vector<56x320xf32>
    %174 = tpu.matmul %171, %173, %cst_166 {dimension_numbers = #tpu.dot_dimension_numbers<[1], [0], [0], [1], [0, 0, 1, 1], [], []>} : vector<56x16xbf16>, vector<16x320xbf16>, vector<56x320xf32> -> vector<56x320xf32>
    %c0_167 = arith.constant 0 : index
    %c6 = arith.constant 6 : index
    %175 = vector.load %arg9[%c0_167, %c6] : memref<56x8xf32, #tpu.memory_space<vmem>>, vector<56x1xf32>
    %176 = vector.broadcast %175 : vector<56x1xf32> to vector<56x320xf32>
    %177 = arith.addf %174, %176 : vector<56x320xf32>
    %cst_168 = arith.constant 0.000000e+00 : f32
    %178 = vector.broadcast %cst_168 : f32 to vector<56x320xf32>
    %179 = arith.cmpf oge, %177, %178 : vector<56x320xf32>
    %c6_169 = arith.constant 6 : index
    %180 = memref.load %arg2[%c6_169] : memref<7xf32, #tpu.memory_space<smem>>
    %181 = vector.broadcast %180 : f32 to vector<56x320xf32>
    %182 = arith.mulf %181, %177 : vector<56x320xf32>
    %183 = arith.select %179, %177, %182 : vector<56x320xi1>, vector<56x320xf32>
    %184 = vector.broadcast %7 : vector<1x320xf32> to vector<56x320xf32>
    %185 = arith.mulf %183, %184 : vector<56x320xf32>
    %c0_170 = arith.constant 0 : index
    %c128_171 = arith.constant 128 : index
    %186 = vector.load %arg11[%c0_170, %c128_171] : memref<56x640xf32, #tpu.memory_space<vmem>>, vector<56x320xf32>
    tpu.vector_store %arg11[%c0_170, %c128_171], %185 {strides = array<i32>} : memref<56x640xf32, #tpu.memory_space<vmem>>, vector<56x320xf32>,
    %c0_172 = arith.constant 0 : index
    %c0_173 = arith.constant 0 : index
    %187 = vector.load %arg8[%c0_172, %c0_173] : memref<12x1400xbf16, #tpu.memory_space<vmem>>, vector<12x1400xbf16>
    %c0_174 = arith.constant 0 : index
    %c86_175 = arith.constant 86 : index
    %188 = vector.load %arg11[%c0_174, %c86_175] : memref<56x640xf32, #tpu.memory_space<vmem>>, vector<56x320xf32>
    %c0_176 = arith.constant 0 : index
    %c87_177 = arith.constant 87 : index
    %189 = vector.load %arg11[%c0_176, %c87_177] : memref<56x640xf32, #tpu.memory_space<vmem>>, vector<56x320xf32>
    %c0_178 = arith.constant 0 : index
    %c88_179 = arith.constant 88 : index
    %190 = vector.load %arg11[%c0_178, %c88_179] : memref<56x640xf32, #tpu.memory_space<vmem>>, vector<56x320xf32>
    %c0_180 = arith.constant 0 : index
    %c89_181 = arith.constant 89 : index
    %191 = vector.load %arg11[%c0_180, %c89_181] : memref<56x640xf32, #tpu.memory_space<vmem>>, vector<56x320xf32>
    %c0_182 = arith.constant 0 : index
    %c90_183 = arith.constant 90 : index
    %192 = vector.load %arg11[%c0_182, %c90_183] : memref<56x640xf32, #tpu.memory_space<vmem>>, vector<56x320xf32>
    %c0_184 = arith.constant 0 : index
    %c106_185 = arith.constant 106 : index
    %193 = vector.load %arg11[%c0_184, %c106_185] : memref<56x640xf32, #tpu.memory_space<vmem>>, vector<56x320xf32>
    %c0_186 = arith.constant 0 : index
    %c107_187 = arith.constant 107 : index
    %194 = vector.load %arg11[%c0_186, %c107_187] : memref<56x640xf32, #tpu.memory_space<vmem>>, vector<56x320xf32>
    %c0_188 = arith.constant 0 : index
    %c108_189 = arith.constant 108 : index
    %195 = vector.load %arg11[%c0_188, %c108_189] : memref<56x640xf32, #tpu.memory_space<vmem>>, vector<56x320xf32>
    %c0_190 = arith.constant 0 : index
    %c109_191 = arith.constant 109 : index
    %196 = vector.load %arg11[%c0_190, %c109_191] : memref<56x640xf32, #tpu.memory_space<vmem>>, vector<56x320xf32>
    %c0_192 = arith.constant 0 : index
    %c110_193 = arith.constant 110 : index
    %197 = vector.load %arg11[%c0_192, %c110_193] : memref<56x640xf32, #tpu.memory_space<vmem>>, vector<56x320xf32>
    %c0_194 = arith.constant 0 : index
    %c126_195 = arith.constant 126 : index
    %198 = vector.load %arg11[%c0_194, %c126_195] : memref<56x640xf32, #tpu.memory_space<vmem>>, vector<56x320xf32>
    %c0_196 = arith.constant 0 : index
    %c127_197 = arith.constant 127 : index
    %199 = vector.load %arg11[%c0_196, %c127_197] : memref<56x640xf32, #tpu.memory_space<vmem>>, vector<56x320xf32>
    %c0_198 = arith.constant 0 : index
    %c128_199 = arith.constant 128 : index
    %200 = vector.load %arg11[%c0_198, %c128_199] : memref<56x640xf32, #tpu.memory_space<vmem>>, vector<56x320xf32>
    %c0_200 = arith.constant 0 : index
    %c129_201 = arith.constant 129 : index
    %201 = vector.load %arg11[%c0_200, %c129_201] : memref<56x640xf32, #tpu.memory_space<vmem>>, vector<56x320xf32>
    %c0_202 = arith.constant 0 : index
    %c130_203 = arith.constant 130 : index
    %202 = vector.load %arg11[%c0_202, %c130_203] : memref<56x640xf32, #tpu.memory_space<vmem>>, vector<56x320xf32>
    %c0_204 = arith.constant 0 : index
    %c146_205 = arith.constant 146 : index
    %203 = vector.load %arg11[%c0_204, %c146_205] : memref<56x640xf32, #tpu.memory_space<vmem>>, vector<56x320xf32>
    %c0_206 = arith.constant 0 : index
    %c147_207 = arith.constant 147 : index
    %204 = vector.load %arg11[%c0_206, %c147_207] : memref<56x640xf32, #tpu.memory_space<vmem>>, vector<56x320xf32>
    %c0_208 = arith.constant 0 : index
    %c148_209 = arith.constant 148 : index
    %205 = vector.load %arg11[%c0_208, %c148_209] : memref<56x640xf32, #tpu.memory_space<vmem>>, vector<56x320xf32>
    %c0_210 = arith.constant 0 : index
    %c149_211 = arith.constant 149 : index
    %206 = vector.load %arg11[%c0_210, %c149_211] : memref<56x640xf32, #tpu.memory_space<vmem>>, vector<56x320xf32>
    %c0_212 = arith.constant 0 : index
    %c150_213 = arith.constant 150 : index
    %207 = vector.load %arg11[%c0_212, %c150_213] : memref<56x640xf32, #tpu.memory_space<vmem>>, vector<56x320xf32>
    %c0_214 = arith.constant 0 : index
    %c166_215 = arith.constant 166 : index
    %208 = vector.load %arg11[%c0_214, %c166_215] : memref<56x640xf32, #tpu.memory_space<vmem>>, vector<56x320xf32>
    %c0_216 = arith.constant 0 : index
    %c167_217 = arith.constant 167 : index
    %209 = vector.load %arg11[%c0_216, %c167_217] : memref<56x640xf32, #tpu.memory_space<vmem>>, vector<56x320xf32>
    %c0_218 = arith.constant 0 : index
    %c168_219 = arith.constant 168 : index
    %210 = vector.load %arg11[%c0_218, %c168_219] : memref<56x640xf32, #tpu.memory_space<vmem>>, vector<56x320xf32>
    %c0_220 = arith.constant 0 : index
    %c169_221 = arith.constant 169 : index
    %211 = vector.load %arg11[%c0_220, %c169_221] : memref<56x640xf32, #tpu.memory_space<vmem>>, vector<56x320xf32>
    %c0_222 = arith.constant 0 : index
    %c170_223 = arith.constant 170 : index
    %212 = vector.load %arg11[%c0_222, %c170_223] : memref<56x640xf32, #tpu.memory_space<vmem>>, vector<56x320xf32>
    %213 = tpu.concatenate %188, %189, %190, %191, %192, %193, %194, %195, %196, %197, %198, %199, %200, %201, %202, %203 in 0 : vector<56x320xf32>, vector<56x320xf32>, vector<56x320xf32>, vector<56x320xf32>, vector<56x320xf32>, vector<56x320xf32>, vector<56x320xf32>, vector<56x320xf32>, vector<56x320xf32>, vector<56x320xf32>, vector<56x320xf32>, vector<56x320xf32>, vector<56x320xf32>, vector<56x320xf32>, vector<56x320xf32>, vector<56x320xf32> -> vector<896x320xf32>
    %214 = tpu.concatenate %204, %205, %206, %207, %208, %209, %210, %211, %212 in 0 : vector<56x320xf32>, vector<56x320xf32>, vector<56x320xf32>, vector<56x320xf32>, vector<56x320xf32>, vector<56x320xf32>, vector<56x320xf32>, vector<56x320xf32>, vector<56x320xf32> -> vector<504x320xf32>
    %215 = tpu.concatenate %213, %214 in 0 : vector<896x320xf32>, vector<504x320xf32> -> vector<1400x320xf32>
    %216 = arith.truncf %215 : vector<1400x320xf32> to vector<1400x320xbf16>
    %cst_224 = arith.constant dense<0.000000e+00> : vector<12x320xf32>
    %217 = tpu.matmul %187, %216, %cst_224 {dimension_numbers = #tpu.dot_dimension_numbers<[1], [0], [0], [1], [0, 0, 1, 1], [], []>} : vector<12x1400xbf16>, vector<1400x320xbf16>, vector<12x320xf32> -> vector<12x320xf32>
    %c0_225 = arith.constant 0 : index
    %c7 = arith.constant 7 : index
    %218 = vector.load %arg9[%c0_225, %c7] : memref<56x8xf32, #tpu.memory_space<vmem>>, vector<12x1xf32>
    %219 = vector.broadcast %218 : vector<12x1xf32> to vector<12x320xf32>
    %220 = arith.addf %217, %219 : vector<12x320xf32>
    %c0_226 = arith.constant 0 : index
    %c0_227 = arith.constant 0 : index
    %c0_228 = arith.constant 0 : index
    %221 = vector.load %arg10[%c0_226, %c0_227, %c0_228] : memref<1x12x320xf32, #tpu.memory_space<vmem>>, vector<1x12x320xf32>
    %222 = vector.shape_cast %221 : vector<1x12x320xf32> to vector<12x320xf32>
    %223 = vector.shape_cast %220 : vector<12x320xf32> to vector<1x12x320xf32>
    tpu.vector_store %arg10[%c0_226, %c0_227, %c0_228], %223 {strides = array<i32>} : memref<1x12x320xf32, #tpu.memory_space<vmem>>, vector<1x12x320xf32>,
    return
  }
  func.func @transform_0(%arg0: i32) -> (i32, i32, i32) {
    %c0_i32 = arith.constant 0 : i32
    %c0_i32_0 = arith.constant 0 : i32
    %c0_i32_1 = arith.constant 0 : i32
    return %arg0, %c0_i32, %c0_i32_0 : i32, i32, i32
  }
  func.func @transform_1(%arg0: i32) -> i32 {
    %c0_i32 = arith.constant 0 : i32
    %c0_i32_0 = arith.constant 0 : i32
    return %c0_i32 : i32
  }
  func.func @transform_2(%arg0: i32) -> (i32, i32) {
    %c0_i32 = arith.constant 0 : i32
    %c0_i32_0 = arith.constant 0 : i32
    %c0_i32_1 = arith.constant 0 : i32
    return %c0_i32, %c0_i32_0 : i32, i32
  }
  func.func @transform_3(%arg0: i32) -> (i32, i32) {
    %c0_i32 = arith.constant 0 : i32
    %c0_i32_0 = arith.constant 0 : i32
    %c0_i32_1 = arith.constant 0 : i32
    return %c0_i32, %c0_i32_0 : i32, i32
  }
  func.func @transform_4(%arg0: i32) -> (i32, i32) {
    %c0_i32 = arith.constant 0 : i32
    %c0_i32_0 = arith.constant 0 : i32
    %c0_i32_1 = arith.constant 0 : i32
    return %c0_i32, %c0_i32_0 : i32, i32
  }
  func.func @transform_5(%arg0: i32) -> (i32, i32, i32) {
    %c0_i32 = arith.constant 0 : i32
    %c0_i32_0 = arith.constant 0 : i32
    %c0_i32_1 = arith.constant 0 : i32
    %c0_i32_2 = arith.constant 0 : i32
    return %c0_i32, %c0_i32_0, %c0_i32_1 : i32, i32, i32
  }
  func.func @transform_6(%arg0: i32) -> (i32, i32) {
    %c0_i32 = arith.constant 0 : i32
    %c0_i32_0 = arith.constant 0 : i32
    %c0_i32_1 = arith.constant 0 : i32
    return %c0_i32, %c0_i32_0 : i32, i32
  }
  func.func @transform_7(%arg0: i32) -> (i32, i32) {
    %c0_i32 = arith.constant 0 : i32
    %c0_i32_0 = arith.constant 0 : i32
    %c0_i32_1 = arith.constant 0 : i32
    return %c0_i32, %c0_i32_0 : i32, i32
  }
  func.func @transform_8(%arg0: i32) -> (i32, i32) {
    %c0_i32 = arith.constant 0 : i32
    %c0_i32_0 = arith.constant 0 : i32
    %c0_i32_1 = arith.constant 0 : i32
    return %c0_i32, %c0_i32_0 : i32, i32
  }
  func.func @transform_9(%arg0: i32) -> (i32, i32, i32) {
    %c0_i32 = arith.constant 0 : i32
    %c0_i32_0 = arith.constant 0 : i32
    %c0_i32_1 = arith.constant 0 : i32
    return %arg0, %c0_i32, %c0_i32_0 : i32, i32, i32
  }
}

</mosaic_0001>

<llo_original>
// kernel: fsrcnn_forward.1
$region0: #{fsrcnn_forward.1}
  #allocation0 [shape = 'u32[]', space=smem, size = 0x4, offset = 0x4, fixed_abs, tag = 'smem constant byte address 0x4 - core index']
  #allocation1 [shape = 'u32[144,128]{1,0:T(1,128)}', space=vmem, size = 0x12000, scoped, tag = 'internal scratch']
  #allocation2 [shape = 'f32[56,640]{1,0:T(8,128)}', space=vmem, size = 0x23000, scoped, tag = 'scratch operand']
  %s0 = inlined_call_operand.vmem [shape: f32[2,8,320], index: 0, kind: input, shape index: {}]
  %s1 = inlined_call_operand.hbm [shape: f32[7], index: 1, kind: input, shape index: {}]
  %s2 = inlined_call_operand.vmem [shape: f32[1,320], index: 2, kind: input, shape index: {}]
  %s3 = inlined_call_operand.hbm [shape: bf16[56,200], index: 3, kind: input, shape index: {}]
  %s4 = inlined_call_operand.hbm [shape: bf16[16,56], index: 4, kind: input, shape index: {}]
  %s5 = inlined_call_operand.hbm [shape: bf16[4,16,144], index: 5, kind: input, shape index: {}]
  %s6 = inlined_call_operand.vmem [shape: bf16[56,16], index: 6, kind: input, shape index: {}]
  %s7 = inlined_call_operand.hbm [shape: bf16[12,1400], index: 7, kind: input, shape index: {}]
  %s8 = inlined_call_operand.vmem [shape: f32[56,8], index: 8, kind: input, shape index: {}]
  %s9 = inlined_call_operand.vmem [shape: f32[2,12,320], index: 9, kind: output, shape index: {}]
  %s10 = sld [smem:[#allocation0]]
  $region89: #{fsrcnn_forward.1} parent=0
    _
  %s12 = ssub.s32 1, %s10
  %s13 = scalar_select 0, %s12, %s10
  $region1: #{fsrcnn_forward.1} parent=0
    #allocation3 [shape = 'u8[512]{0}', space=smem, size = 0x200, scoped, tag = 'input window, operand 1, single buffered']
    #allocation4 [shape = 's32[2]{0}', space=sflag, size = 0x8, scoped, tag = 'scoped memory for fsrcnn_forward.1']
    #allocation5 [shape = 's32[2]{0}', space=sflag, size = 0x8, scoped, tag = 'scoped memory for fsrcnn_forward.1']
    #allocation6 [shape = 'u8[28672]{0}', space=vmem, size = 0x7000, scoped, tag = 'input window, operand 3, single buffered']
    #allocation7 [shape = 'u8[4096]{0}', space=vmem, size = 0x1000, scoped, tag = 'input window, operand 4, single buffered']
    #allocation8 [shape = 's32[1]{0}', space=sflag, size = 0x4, scoped, tag = 'scoped memory for fsrcnn_forward.1']
    #allocation9 [shape = 'u8[32768]{0}', space=vmem, size = 0x8000, scoped, tag = 'input window, operand 5, single buffered']
    #allocation10 [shape = 'u8[45056]{0}', space=vmem, size = 0xb000, scoped, tag = 'input window, operand 7, single buffered']
    #allocation11 [shape = 's32[1]{0}', space=sflag, size = 0x4, scoped, tag = 'scoped memory for fsrcnn_forward.1']
    %14 = vsyncpa [#allocation5], 0
    %15 = vsyncpa [#allocation4], 0
    %16 = vsyncpa [#allocation8], 0
    %17 = vsyncpa [#allocation11], 0
    loop: start=0, step=1, limit=4
    $region2: #{fsrcnn_forward.1} parent=1 // loop_pre_header
      _
    $region3: #{fsrcnn_forward.1} parent=1 // loop_header
      %s19 = sphi 0, %s23
      %p20 = scmp.ge.s32.totalorder %s19, 4
      %s29 = sphi 0, %s31
      %s32 = sphi 0, %s29
      %s33 = sphi 0, %s32
      %s49 = sphi 0, %s33
      %s53 = sphi 0, %s53
      %s55 = sphi 0, %s53
      %s56 = sphi 0, %s55
      %s70 = sphi 0, %s56
      %s74 = sphi 0, %s74
      %s76 = sphi 0, %s74
      %s77 = sphi 0, %s76
      %s91 = sphi 0, %s77
      %s95 = sphi 0, %s95
      %s97 = sphi 0, %s95
      %s98 = sphi 0, %s97
      %s112 = sphi 0, %s98
      %s116 = sphi 0, %s116
      %s118 = sphi 0, %s116
      %s119 = sphi 0, %s118
      %s133 = sphi 0, %s119
      %s137 = sphi 0, %s137
      %s139 = sphi 0, %s137
      %s140 = sphi 0, %s139
      %s154 = sphi 0, %s140
      %s158 = sphi 0, %s158
      %s160 = sphi 0, %s158
      %s161 = sphi 0, %s160
      %s175 = sphi 0, %s161
      %s179 = sphi 0, %s179
      %s181 = sphi 0, %s179
      %s182 = sphi 0, %s181
      %s196 = sphi 0, %s182
      %s200 = sphi 0, %s200
      %s202 = sphi 0, %s200
      %s203 = sphi 0, %s202
      %s217 = sphi 0, %s203
      %s223 = sphi 0, %s225
      %s226 = sphi 0, %s223
      %s227 = sphi 0, %s226
      %s243 = sphi 0, %s227
    $region4: #{fsrcnn_forward.1} parent=1 // loop_header_branch
      %22 = sbr.rel (%p20) target = $region8
    $region5: #{fsrcnn_forward.1} parent=1 // loop_body
      %s24 = ssub.s32 %s19, 1
      %s25 = ssub.s32 %s19, 2
      %s26 = sadd.s32 %s19, 1
      %s27 = ssub.s32 %s19, %s26
      %p28 = scmp.eq.s32.totalorder %s27, 0
      %s30 = sadd.s32 %s29, 1
      %s31 = scalar_select %p28, %s29, %s30
      %p34 = pneg %p28
      %p35 = scmp.eq.s32.totalorder %s19, 1
      %p36 = por %p34, %p35
      %p37 = scmp.ne.s32.totalorder %s29, %s32
      %p38 = scmp.eq.s32.totalorder %s19, 0
      %p39 = por %p37, %p38
      %p40 = scmp.ne.s32.totalorder %s29, %s32
      %p41 = scmp.eq.s32.totalorder %s24, 1
      %p42 = por %p40, %p41
      %p43 = scmp.ne.s32.totalorder %s32, %s33
      %p44 = scmp.eq.s32.totalorder %s24, 0
      %p45 = por %p43, %p44
      %p46 = scmp.ne.s32.totalorder %s32, %s33
      %p47 = scmp.eq.s32.totalorder %s25, 1
      %p48 = por %p46, %p47
      %p50 = scmp.ne.s32.totalorder %s33, %s49
      %p51 = scmp.eq.s32.totalorder %s25, 0
      %p52 = por %p50, %p51
      %s54 = sadd.s32 %s53, 1
      %p57 = scmp.eq.s32.totalorder %s19, 1
      %p58 = scmp.ne.s32.totalorder %s53, %s55
      %p59 = scmp.eq.s32.totalorder %s19, 0
      %p60 = por %p58, %p59
      %p61 = scmp.ne.s32.totalorder %s53, %s55
      %p62 = scmp.eq.s32.totalorder %s24, 1
      %p63 = por %p61, %p62
      %p64 = scmp.ne.s32.totalorder %s55, %s56
      %p65 = scmp.eq.s32.totalorder %s24, 0
      %p66 = por %p64, %p65
      %p67 = scmp.ne.s32.totalorder %s55, %s56
      %p68 = scmp.eq.s32.totalorder %s25, 1
      %p69 = por %p67, %p68
      %p71 = scmp.ne.s32.totalorder %s56, %s70
      %p72 = scmp.eq.s32.totalorder %s25, 0
      %p73 = por %p71, %p72
      %s75 = sadd.s32 %s74, 1
      %p78 = scmp.eq.s32.totalorder %s19, 1
      %p79 = scmp.ne.s32.totalorder %s74, %s76
      %p80 = scmp.eq.s32.totalorder %s19, 0
      %p81 = por %p79, %p80
      %p82 = scmp.ne.s32.totalorder %s74, %s76
      %p83 = scmp.eq.s32.totalorder %s24, 1
      %p84 = por %p82, %p83
      %p85 = scmp.ne.s32.totalorder %s76, %s77
      %p86 = scmp.eq.s32.totalorder %s24, 0
      %p87 = por %p85, %p86
      %p88 = scmp.ne.s32.totalorder %s76, %s77
      %p89 = scmp.eq.s32.totalorder %s25, 1
      %p90 = por %p88, %p89
      %p92 = scmp.ne.s32.totalorder %s77, %s91
      %p93 = scmp.eq.s32.totalorder %s25, 0
      %p94 = por %p92, %p93
      %s96 = sadd.s32 %s95, 1
      %p99 = scmp.eq.s32.totalorder %s19, 1
      %p100 = scmp.ne.s32.totalorder %s95, %s97
      %p101 = scmp.eq.s32.totalorder %s19, 0
      %p102 = por %p100, %p101
      %p103 = scmp.ne.s32.totalorder %s95, %s97
      %p104 = scmp.eq.s32.totalorder %s24, 1
      %p105 = por %p103, %p104
      %p106 = scmp.ne.s32.totalorder %s97, %s98
      %p107 = scmp.eq.s32.totalorder %s24, 0
      %p108 = por %p106, %p107
      %p109 = scmp.ne.s32.totalorder %s97, %s98
      %p110 = scmp.eq.s32.totalorder %s25, 1
      %p111 = por %p109, %p110
      %p113 = scmp.ne.s32.totalorder %s98, %s112
      %p114 = scmp.eq.s32.totalorder %s25, 0
      %p115 = por %p113, %p114
      %s117 = sadd.s32 %s116, 1
      %p120 = scmp.eq.s32.totalorder %s19, 1
      %p121 = scmp.ne.s32.totalorder %s116, %s118
      %p122 = scmp.eq.s32.totalorder %s19, 0
      %p123 = por %p121, %p122
      %p124 = scmp.ne.s32.totalorder %s116, %s118
      %p125 = scmp.eq.s32.totalorder %s24, 1
      %p126 = por %p124, %p125
      %p127 = scmp.ne.s32.totalorder %s118, %s119
      %p128 = scmp.eq.s32.totalorder %s24, 0
      %p129 = por %p127, %p128
      %p130 = scmp.ne.s32.totalorder %s118, %s119
      %p131 = scmp.eq.s32.totalorder %s25, 1
      %p132 = por %p130, %p131
      %p134 = scmp.ne.s32.totalorder %s119, %s133
      %p135 = scmp.eq.s32.totalorder %s25, 0
      %p136 = por %p134, %p135
      %s138 = sadd.s32 %s137, 1
      %p141 = scmp.eq.s32.totalorder %s19, 1
      %p142 = scmp.ne.s32.totalorder %s137, %s139
      %p143 = scmp.eq.s32.totalorder %s19, 0
      %p144 = por %p142, %p143
      %p145 = scmp.ne.s32.totalorder %s137, %s139
      %p146 = scmp.eq.s32.totalorder %s24, 1
      %p147 = por %p145, %p146
      %p148 = scmp.ne.s32.totalorder %s139, %s140
      %p149 = scmp.eq.s32.totalorder %s24, 0
      %p150 = por %p148, %p149
      %p151 = scmp.ne.s32.totalorder %s139, %s140
      %p152 = scmp.eq.s32.totalorder %s25, 1
      %p153 = por %p151, %p152
      %p155 = scmp.ne.s32.totalorder %s140, %s154
      %p156 = scmp.eq.s32.totalorder %s25, 0
      %p157 = por %p155, %p156
      %s159 = sadd.s32 %s158, 1
      %p162 = scmp.eq.s32.totalorder %s19, 1
      %p163 = scmp.ne.s32.totalorder %s158, %s160
      %p164 = scmp.eq.s32.totalorder %s19, 0
      %p165 = por %p163, %p164
      %p166 = scmp.ne.s32.totalorder %s158, %s160
      %p167 = scmp.eq.s32.totalorder %s24, 1
      %p168 = por %p166, %p167
      %p169 = scmp.ne.s32.totalorder %s160, %s161
      %p170 = scmp.eq.s32.totalorder %s24, 0
      %p171 = por %p169, %p170
      %p172 = scmp.ne.s32.totalorder %s160, %s161
      %p173 = scmp.eq.s32.totalorder %s25, 1
      %p174 = por %p172, %p173
      %p176 = scmp.ne.s32.totalorder %s161, %s175
      %p177 = scmp.eq.s32.totalorder %s25, 0
      %p178 = por %p176, %p177
      %s180 = sadd.s32 %s179, 1
      %p183 = scmp.eq.s32.totalorder %s19, 1
      %p184 = scmp.ne.s32.totalorder %s179, %s181
      %p185 = scmp.eq.s32.totalorder %s19, 0
      %p186 = por %p184, %p185
      %p187 = scmp.ne.s32.totalorder %s179, %s181
      %p188 = scmp.eq.s32.totalorder %s24, 1
      %p189 = por %p187, %p188
      %p190 = scmp.ne.s32.totalorder %s181, %s182
      %p191 = scmp.eq.s32.totalorder %s24, 0
      %p192 = por %p190, %p191
      %p193 = scmp.ne.s32.totalorder %s181, %s182
      %p194 = scmp.eq.s32.totalorder %s25, 1
      %p195 = por %p193, %p194
      %p197 = scmp.ne.s32.totalorder %s182, %s196
      %p198 = scmp.eq.s32.totalorder %s25, 0
      %p199 = por %p197, %p198
      %s201 = sadd.s32 %s200, 1
      %p204 = scmp.eq.s32.totalorder %s19, 1
      %p205 = scmp.ne.s32.totalorder %s200, %s202
      %p206 = scmp.eq.s32.totalorder %s19, 0
      %p207 = por %p205, %p206
      %p208 = scmp.ne.s32.totalorder %s200, %s202
      %p209 = scmp.eq.s32.totalorder %s24, 1
      %p210 = por %p208, %p209
      %p211 = scmp.ne.s32.totalorder %s202, %s203
      %p212 = scmp.eq.s32.totalorder %s24, 0
      %p213 = por %p211, %p212
      %p214 = scmp.ne.s32.totalorder %s202, %s203
      %p215 = scmp.eq.s32.totalorder %s25, 1
      %p216 = por %p214, %p215
      %p218 = scmp.ne.s32.totalorder %s203, %s217
      %p219 = scmp.eq.s32.totalorder %s25, 0
      %p220 = por %p218, %p219
      %s221 = ssub.s32 %s19, %s26
      %p222 = scmp.eq.s32.totalorder %s221, 0
      %s224 = sadd.s32 %s223, 1
      %s225 = scalar_select %p222, %s223, %s224
      %p228 = pneg %p222
      %p229 = scmp.eq.s32.totalorder %s19, 1
      %p230 = por %p228, %p229
      %p231 = scmp.ne.s32.totalorder %s223, %s226
      %p232 = scmp.eq.s32.totalorder %s19, 0
      %p233 = por %p231, %p232
      %p234 = scmp.ne.s32.totalorder %s223, %s226
      %p235 = scmp.eq.s32.totalorder %s24, 1
      %p236 = por %p234, %p235
      %p237 = scmp.ne.s32.totalorder %s226, %s227
      %p238 = scmp.eq.s32.totalorder %s24, 0
      %p239 = por %p237, %p238
      %p240 = scmp.ne.s32.totalorder %s226, %s227
      %p241 = scmp.eq.s32.totalorder %s25, 1
      %p242 = por %p240, %p241
      %p244 = scmp.ne.s32.totalorder %s227, %s243
      %p245 = scmp.eq.s32.totalorder %s25, 0
      %p246 = por %p244, %p245
      %p247 = scmp.le.s32.totalorder 1, %s19
      %p248 = scmp.lt.s32.totalorder %s19, 3
      %p249 = pnand %p247, %p248
      %p250 = pneg %p249
      // Predicated region
      $region9: #{fsrcnn_forward.1} parent=5 // pred_check
        _
      $region10: #{fsrcnn_forward.1} parent=5 // pred_check_branch
        %252 = sbr.rel (%p249) target = $region12
      $region11: #{fsrcnn_forward.1} parent=5 // pred_region
        %s253 = ssub.s32 %s19, 1
        // Predicated region
        $region13: #{fsrcnn_forward.1} parent=11 // pred_check
          %p254 = pneg %p66
        $region14: #{fsrcnn_forward.1} parent=11 // pred_check_branch
          %256 = sbr.rel (%p254) target = $region16
        $region15: #{fsrcnn_forward.1} parent=11 // pred_region
          %s258 = ssub.s32 16, 16
          %259 = vsyncadd [#allocation5], %s258
          %262 = dma.hbm_to_smem %s1, 16, [#allocation3], [#allocation5]
        $region16: #{fsrcnn_forward.1} parent=11 // pred_fallthru
          _
        // Predicated region
        $region17: #{fsrcnn_forward.1} parent=11 // pred_check
          %p263 = pneg %p87
        $region18: #{fsrcnn_forward.1} parent=11 // pred_check_branch
          %265 = sbr.rel (%p263) target = $region20
        $region19: #{fsrcnn_forward.1} parent=11 // pred_region
          _
        $region20: #{fsrcnn_forward.1} parent=11 // pred_fallthru
          _
        // Predicated region
        $region21: #{fsrcnn_forward.1} parent=11 // pred_check
          %p266 = pneg %p108
        $region22: #{fsrcnn_forward.1} parent=11 // pred_check_branch
          %268 = sbr.rel (%p266) target = $region24
        $region23: #{fsrcnn_forward.1} parent=11 // pred_region
          %s270 = ssub.s32 896, 896
          %271 = vsyncadd [#allocation4], %s270
          %s272 = sshll.u32 [#allocation6], 4
          %s273 = int_to_ptr.vmem [resolvable:$true] %s272
          %278 = dma.hbm_to_vmem [thread:$0]  %s3, 896, %s273, [#allocation4], 128, 128, 8
        $region24: #{fsrcnn_forward.1} parent=11 // pred_fallthru
          _
        // Predicated region
        $region25: #{fsrcnn_forward.1} parent=11 // pred_check
          %p279 = pneg %p129
        $region26: #{fsrcnn_forward.1} parent=11 // pred_check_branch
          %281 = sbr.rel (%p279) target = $region28
        $region27: #{fsrcnn_forward.1} parent=11 // pred_region
          %s283 = ssub.s32 128, 128
          %284 = vsyncadd [#allocation8], %s283
          %s285 = sshll.u32 [#allocation7], 4
          %s286 = int_to_ptr.vmem [resolvable:$true] %s285
          %291 = dma.hbm_to_vmem [thread:$0]  %s4, 128, %s286, [#allocation8], 64, 64, 4
        $region28: #{fsrcnn_forward.1} parent=11 // pred_fallthru
          _
        // Predicated region
        $region29: #{fsrcnn_forward.1} parent=11 // pred_check
          %p292 = pneg %p150
        $region30: #{fsrcnn_forward.1} parent=11 // pred_check_branch
          %294 = sbr.rel (%p292) target = $region32
        $region31: #{fsrcnn_forward.1} parent=11 // pred_region
          %s296 = ssub.s32 1024, 1024
          %297 = vsyncadd [#allocation8], %s296
          %s298 = sshll.u32 [#allocation9], 4
          %s299 = int_to_ptr.vmem [resolvable:$true] %s298
          %304 = dma.hbm_to_vmem [thread:$0]  %s5, 1024, %s299, [#allocation8], 128, 128, 8
        $region32: #{fsrcnn_forward.1} parent=11 // pred_fallthru
          _
        // Predicated region
        $region33: #{fsrcnn_forward.1} parent=11 // pred_check
          %p305 = pneg %p171
        $region34: #{fsrcnn_forward.1} parent=11 // pred_check_branch
          %307 = sbr.rel (%p305) target = $region36
        $region35: #{fsrcnn_forward.1} parent=11 // pred_region
          _
        $region36: #{fsrcnn_forward.1} parent=11 // pred_fallthru
          _
        // Predicated region
        $region37: #{fsrcnn_forward.1} parent=11 // pred_check
          %p308 = pneg %p192
        $region38: #{fsrcnn_forward.1} parent=11 // pred_check_branch
          %310 = sbr.rel (%p308) target = $region40
        $region39: #{fsrcnn_forward.1} parent=11 // pred_region
          %s312 = ssub.s32 1408, 1408
          %313 = vsyncadd [#allocation11], %s312
          %s314 = sshll.u32 [#allocation10], 4
          %s315 = int_to_ptr.vmem [resolvable:$true] %s314
          %320 = dma.hbm_to_vmem [thread:$0]  %s7, 1408, %s315, [#allocation11], 704, 704, 44
        $region40: #{fsrcnn_forward.1} parent=11 // pred_fallthru
          _
        // Predicated region
        $region41: #{fsrcnn_forward.1} parent=11 // pred_check
          %p321 = pneg %p213
        $region42: #{fsrcnn_forward.1} parent=11 // pred_check_branch
          %323 = sbr.rel (%p321) target = $region44
        $region43: #{fsrcnn_forward.1} parent=11 // pred_region
          _
        $region44: #{fsrcnn_forward.1} parent=11 // pred_fallthru
          _
      $region12: #{fsrcnn_forward.1} parent=5 // pred_fallthru
        _
      %p324 = scmp.lt.s32.totalorder %s19, 2
      // Predicated region
      $region45: #{fsrcnn_forward.1} parent=5 // pred_check
        %p325 = pneg %p324
      $region46: #{fsrcnn_forward.1} parent=5 // pred_check_branch
        %327 = sbr.rel (%p325) target = $region48
      $region47: #{fsrcnn_forward.1} parent=5 // pred_region
        // Predicated region
        $region49: #{fsrcnn_forward.1} parent=47 // pred_check
          %p328 = pneg %p39
        $region50: #{fsrcnn_forward.1} parent=47 // pred_check_branch
          %330 = sbr.rel (%p328) target = $region52
        $region51: #{fsrcnn_forward.1} parent=47 // pred_region
          %p331 = scmp.lt.s32.totalorder %s19, 1
          %s332 = scalar_select %p331, %s19, 1
          %s333 = smul.addr %s332, 3
          %s334 = smul.addr %s333, 8
          %s335 = scalar_lea.vmem %s0, %s334
        $region52: #{fsrcnn_forward.1} parent=47 // pred_fallthru
          _
      $region48: #{fsrcnn_forward.1} parent=5 // pred_fallthru
        _
      %p336 = scmp.le.s32.totalorder 1, %s19
      %p337 = scmp.lt.s32.totalorder %s19, 3
      %p338 = pnand %p336, %p337
      %p339 = pneg %p338
      // Predicated region
      $region53: #{fsrcnn_forward.1} parent=5 // pred_check
        _
      $region54: #{fsrcnn_forward.1} parent=5 // pred_check_branch
        %341 = sbr.rel (%p338) target = $region56
      $region55: #{fsrcnn_forward.1} parent=5 // pred_region
        %s342 = ssub.s32 %s19, 1
        // Predicated region
        $region57: #{fsrcnn_forward.1} parent=55 // pred_check
          %p343 = pneg %p66
        $region58: #{fsrcnn_forward.1} parent=55 // pred_check_branch
          %345 = sbr.rel (%p343) target = $region60
        $region59: #{fsrcnn_forward.1} parent=55 // pred_region
          %346 = dma.done [#allocation5], 16
        $region60: #{fsrcnn_forward.1} parent=55 // pred_fallthru
          _
        // Predicated region
        $region61: #{fsrcnn_forward.1} parent=55 // pred_check
          %p347 = pneg %p108
        $region62: #{fsrcnn_forward.1} parent=55 // pred_check_branch
          %349 = sbr.rel (%p347) target = $region64
        $region63: #{fsrcnn_forward.1} parent=55 // pred_region
          %350 = dma.done [#allocation4], 896
        $region64: #{fsrcnn_forward.1} parent=55 // pred_fallthru
          _
        // Predicated region
        $region65: #{fsrcnn_forward.1} parent=55 // pred_check
          %p351 = pneg %p129
        $region66: #{fsrcnn_forward.1} parent=55 // pred_check_branch
          %353 = sbr.rel (%p351) target = $region68
        $region67: #{fsrcnn_forward.1} parent=55 // pred_region
          %354 = dma.done [#allocation8], 128
        $region68: #{fsrcnn_forward.1} parent=55 // pred_fallthru
          _
        // Predicated region
        $region69: #{fsrcnn_forward.1} parent=55 // pred_check
          %p355 = pneg %p150
        $region70: #{fsrcnn_forward.1} parent=55 // pred_check_branch
          %357 = sbr.rel (%p355) target = $region72
        $region71: #{fsrcnn_forward.1} parent=55 // pred_region
          %358 = dma.done [#allocation8], 1024
        $region72: #{fsrcnn_forward.1} parent=55 // pred_fallthru
          _
        // Predicated region
        $region73: #{fsrcnn_forward.1} parent=55 // pred_check
          %p359 = pneg %p192
        $region74: #{fsrcnn_forward.1} parent=55 // pred_check_branch
          %361 = sbr.rel (%p359) target = $region76
        $region75: #{fsrcnn_forward.1} parent=55 // pred_region
          %362 = dma.done [#allocation11], 1408
        $region76: #{fsrcnn_forward.1} parent=55 // pred_fallthru
          _
        %363 = sfence
        %p364 = scmp.lt.s32.totalorder %s24, 1
        %s365 = scalar_select %p364, %s24, 1
        %s366 = smul.addr %s365, 3
        %s367 = smul.addr %s366, 8
        %s368 = scalar_lea.vmem %s0, %s367
        %p369 = pneg %p45
        %p370 = pneg %p42
        %p371 = pneg %p66
        %p372 = pneg %p63
        %p373 = pneg %p87
        %p374 = pneg %p84
        %p375 = pneg %p108
        %p376 = pneg %p105
        %p377 = pneg %p129
        %p378 = pneg %p126
        %p379 = pneg %p150
        %p380 = pneg %p147
        %p381 = pneg %p171
        %p382 = pneg %p168
        %p383 = pneg %p192
        %p384 = pneg %p189
        %p385 = pneg %p213
        %p386 = pneg %p210
        %p387 = pneg %p239
        %p388 = pneg %p236
        %p389 = scmp.lt.s32.totalorder %s24, 1
        %s390 = scalar_select %p389, %s24, 1
        %s391 = smul.addr %s390, 6
        %s392 = smul.addr %s391, 8
        %s393 = scalar_lea.vmem %s9, %s392
        %p394 = scmp.lt.s32.totalorder %s24, 1
        %s395 = scalar_select %p394, %s24, 1
        %s396 = smul.addr %s395, 3
        %s397 = smul.addr %s396, 8
        %s398 = scalar_lea.vmem %s0, %s397
        %p399 = scmp.lt.s32.totalorder %s24, 1
        %s400 = scalar_select %p399, %s24, 1
        %s401 = smul.addr %s400, 6
        %s402 = smul.addr %s401, 8
        %s403 = scalar_lea.vmem %s9, %s402
        %405 = vst [vmem:[#allocation2] sm:$0xff] 0.0
        %406 = vst [vmem:[#allocation2 + $0x28] sm:$0xff] 0.0
        %407 = vst [vmem:[#allocation2 + $0x50] sm:$0xff] 0.0
        %408 = vst [vmem:[#allocation2 + $0x78] sm:$0xff] 0.0
        %409 = vst [vmem:[#allocation2 + $0xa0] sm:$0xff] 0.0
        %410 = vst [vmem:[#allocation2 + $0xc8] sm:$0xff] 0.0
        %411 = vst [vmem:[#allocation2 + $0xf0] sm:$0xff] 0.0
        %vm412 = vcmask 1048064
        %413 = vst.msk [vmem:[#allocation2 + $0x18] sm:$0xff] %vm412, 0.0
        %414 = vst [vmem:[#allocation2 + $0x20] sm:$0xff] 0.0
        %415 = vst.msk [vmem:[#allocation2 + $0x40] sm:$0xff] %vm412, 0.0
        %416 = vst [vmem:[#allocation2 + $0x48] sm:$0xff] 0.0
        %417 = vst.msk [vmem:[#allocation2 + $0x68] sm:$0xff] %vm412, 0.0
        %418 = vst [vmem:[#allocation2 + $0x70] sm:$0xff] 0.0
        %419 = vst.msk [vmem:[#allocation2 + $0x90] sm:$0xff] %vm412, 0.0
        %420 = vst [vmem:[#allocation2 + $0x98] sm:$0xff] 0.0
        %421 = vst.msk [vmem:[#allocation2 + $0xb8] sm:$0xff] %vm412, 0.0
        %422 = vst [vmem:[#allocation2 + $0xc0] sm:$0xff] 0.0
        %423 = vst.msk [vmem:[#allocation2 + $0xe0] sm:$0xff] %vm412, 0.0
        %424 = vst [vmem:[#allocation2 + $0xe8] sm:$0xff] 0.0
        %425 = vst.msk [vmem:[#allocation2 + $0x108] sm:$0xff] %vm412, 0.0
        %426 = vst [vmem:[#allocation2 + $0x110] sm:$0xff] 0.0
        %v427 = vld [vmem:[%s398] sm:$0xff]
        %v428 = vld [vmem:[%s398 + $0x8] sm:$0xff]
        %v429 = vld [vmem:[%s398 + $0x10] sm:$0xff]
        %430 = vst [vmem:[#allocation2 + $0x8] sm:$0xff] %v427
        %431 = vst [vmem:[#allocation2 + $0x10] sm:$0xff] %v428
        %vm432 = vcmask 523264
        %433 = vst.msk [vmem:[#allocation2 + $0x18] sm:$0xff] %vm432, %v429
        %v434 = vld [vmem:[%s2] sm:$0x7]
        %v435 = vld [vmem:[#allocation6] sm:$0xff]
        %v436 = vld [vmem:[#allocation6 + $0x8] sm:$0xff]
        %v437 = vld [vmem:[#allocation6 + $0x10] sm:$0xff]
        %v438 = vld [vmem:[#allocation6 + $0x18] sm:$0xff]
        %v439 = vld [vmem:[#allocation6 + $0x20] sm:$0xff]
        %v440 = vld [vmem:[#allocation6 + $0x28] sm:$0xff]
        %v441 = vld [vmem:[#allocation6 + $0x30] sm:$0xff]
        %v442 = vld [vmem:[#allocation2] sm:$0xff]
        %v443 = vld [vmem:[#allocation2 + $0x8] sm:$0xff]
        %v444 = vld [vmem:[#allocation2 + $0x10] sm:$0xff]
        %v445 = vld [vmem:[#allocation2 + $0x18] sm:$0xff]
        %450 = vrot.lane.b32.xlu0 %v442, 127
        %v451 = vpop.permute.xlu0 %450
        %452 = vrot.lane.b32.xlu0 %v443, 127
        %v453 = vpop.permute.xlu0 %452
        %454 = vrot.lane.b32.xlu0 %v444, 127
        %v455 = vpop.permute.xlu0 %454
        %456 = vrot.lane.b32.xlu0 %v445, 127
        %v457 = vpop.permute.xlu0 %456
        %vm458 = vcmask 1039360
        %v459 = vsel %vm458, %v451, %v453
        %v460 = vsel %vm458, %v453, %v455
        %v461 = vsel %vm458, %v455, %v457
        %466 = vrot.lane.b32.xlu0 %v442, 126
        %v467 = vpop.permute.xlu0 %466
        %468 = vrot.lane.b32.xlu0 %v443, 126
        %v469 = vpop.permute.xlu0 %468
        %470 = vrot.lane.b32.xlu0 %v444, 126
        %v471 = vpop.permute.xlu0 %470
        %472 = vrot.lane.b32.xlu0 %v445, 126
        %v473 = vpop.permute.xlu0 %472
        %vm474 = vcmask 1031168
        %v475 = vsel %vm474, %v467, %v469
        %v476 = vsel %vm474, %v469, %v471
        %v477 = vsel %vm474, %v471, %v473
        %482 = vrot.lane.b32.xlu0 %v442, 125
        %v483 = vpop.permute.xlu0 %482
        %484 = vrot.lane.b32.xlu0 %v443, 125
        %v485 = vpop.permute.xlu0 %484
        %486 = vrot.lane.b32.xlu0 %v444, 125
        %v487 = vpop.permute.xlu0 %486
        %488 = vrot.lane.b32.xlu0 %v445, 125
        %v489 = vpop.permute.xlu0 %488
        %vm490 = vcmask 1022976
        %v491 = vsel %vm490, %v483, %v485
        %v492 = vsel %vm490, %v485, %v487
        %v493 = vsel %vm490, %v487, %v489
        %498 = vrot.lane.b32.xlu0 %v442, 124
        %v499 = vpop.permute.xlu0 %498
        %500 = vrot.lane.b32.xlu0 %v443, 124
        %v501 = vpop.permute.xlu0 %500
        %502 = vrot.lane.b32.xlu0 %v444, 124
        %v503 = vpop.permute.xlu0 %502
        %504 = vrot.lane.b32.xlu0 %v445, 124
        %v505 = vpop.permute.xlu0 %504
        %vm506 = vcmask 1014784
        %v507 = vsel %vm506, %v499, %v501
        %v508 = vsel %vm506, %v501, %v503
        %v509 = vsel %vm506, %v503, %v505
        %514 = vrot.lane.b32.xlu0 %v442, 108
        %v515 = vpop.permute.xlu0 %514
        %516 = vrot.lane.b32.xlu0 %v443, 108
        %v517 = vpop.permute.xlu0 %516
        %518 = vrot.lane.b32.xlu0 %v444, 108
        %v519 = vpop.permute.xlu0 %518
        %520 = vrot.lane.b32.xlu0 %v445, 108
        %v521 = vpop.permute.xlu0 %520
        %vm522 = vcmask 883712
        %v523 = vsel %vm522, %v515, %v517
        %v524 = vsel %vm522, %v517, %v519
        %v525 = vsel %vm522, %v519, %v521
        %530 = vrot.lane.b32.xlu0 %v442, 107
        %v531 = vpop.permute.xlu0 %530
        %532 = vrot.lane.b32.xlu0 %v443, 107
        %v533 = vpop.permute.xlu0 %532
        %534 = vrot.lane.b32.xlu0 %v444, 107
        %v535 = vpop.permute.xlu0 %534
        %536 = vrot.lane.b32.xlu0 %v445, 107
        %v537 = vpop.permute.xlu0 %536
        %vm538 = vcmask 875520
        %v539 = vsel %vm538, %v531, %v533
        %v540 = vsel %vm538, %v533, %v535
        %v541 = vsel %vm538, %v535, %v537
        %546 = vrot.lane.b32.xlu0 %v442, 106
        %v547 = vpop.permute.xlu0 %546
        %548 = vrot.lane.b32.xlu0 %v443, 106
        %v549 = vpop.permute.xlu0 %548
        %550 = vrot.lane.b32.xlu0 %v444, 106
        %v551 = vpop.permute.xlu0 %550
        %552 = vrot.lane.b32.xlu0 %v445, 106
        %v553 = vpop.permute.xlu0 %552
        %vm554 = vcmask 867328
        %v555 = vsel %vm554, %v547, %v549
        %v556 = vsel %vm554, %v549, %v551
        %v557 = vsel %vm554, %v551, %v553
        %562 = vrot.lane.b32.xlu0 %v442, 105
        %v563 = vpop.permute.xlu0 %562
        %564 = vrot.lane.b32.xlu0 %v443, 105
        %v565 = vpop.permute.xlu0 %564
        %566 = vrot.lane.b32.xlu0 %v444, 105
        %v567 = vpop.permute.xlu0 %566
        %568 = vrot.lane.b32.xlu0 %v445, 105
        %v569 = vpop.permute.xlu0 %568
        %vm570 = vcmask 859136
        %v571 = vsel %vm570, %v563, %v565
        %v572 = vsel %vm570, %v565, %v567
        %v573 = vsel %vm570, %v567, %v569
        %578 = vrot.lane.b32.xlu0 %v442, 104
        %v579 = vpop.permute.xlu0 %578
        %580 = vrot.lane.b32.xlu0 %v443, 104
        %v581 = vpop.permute.xlu0 %580
        %582 = vrot.lane.b32.xlu0 %v444, 104
        %v583 = vpop.permute.xlu0 %582
        %584 = vrot.lane.b32.xlu0 %v445, 104
        %v585 = vpop.permute.xlu0 %584
        %vm586 = vcmask 850944
        %v587 = vsel %vm586, %v579, %v581
        %v588 = vsel %vm586, %v581, %v583
        %v589 = vsel %vm586, %v583, %v585
        %594 = vrot.lane.b32.xlu0 %v442, 88
        %v595 = vpop.permute.xlu0 %594
        %596 = vrot.lane.b32.xlu0 %v443, 88
        %v597 = vpop.permute.xlu0 %596
        %598 = vrot.lane.b32.xlu0 %v444, 88
        %v599 = vpop.permute.xlu0 %598
        %600 = vrot.lane.b32.xlu0 %v445, 88
        %v601 = vpop.permute.xlu0 %600
        %vm602 = vcmask 719872
        %v603 = vsel %vm602, %v595, %v597
        %v604 = vsel %vm602, %v597, %v599
        %v605 = vsel %vm602, %v599, %v601
        %610 = vrot.lane.b32.xlu0 %v442, 87
        %v611 = vpop.permute.xlu0 %610
        %612 = vrot.lane.b32.xlu0 %v443, 87
        %v613 = vpop.permute.xlu0 %612
        %614 = vrot.lane.b32.xlu0 %v444, 87
        %v615 = vpop.permute.xlu0 %614
        %616 = vrot.lane.b32.xlu0 %v445, 87
        %v617 = vpop.permute.xlu0 %616
        %vm618 = vcmask 711680
        %v619 = vsel %vm618, %v611, %v613
        %v620 = vsel %vm618, %v613, %v615
        %v621 = vsel %vm618, %v615, %v617
        %626 = vrot.lane.b32.xlu0 %v443, 86
        %v627 = vpop.permute.xlu0 %626
        %628 = vrot.lane.b32.xlu0 %v444, 86
        %v629 = vpop.permute.xlu0 %628
        %630 = vrot.lane.b32.xlu0 %v445, 86
        %v631 = vpop.permute.xlu0 %630
        %vm632 = vcmask 703488
        %v633 = vsel %vm632, %v627, %v629
        %v634 = vsel %vm632, %v629, %v631
        %639 = vrot.lane.b32.xlu0 %v443, 85
        %v640 = vpop.permute.xlu0 %639
        %641 = vrot.lane.b32.xlu0 %v444, 85
        %v642 = vpop.permute.xlu0 %641
        %643 = vrot.lane.b32.xlu0 %v445, 85
        %v644 = vpop.permute.xlu0 %643
        %vm645 = vcmask 695296
        %v646 = vsel %vm645, %v640, %v642
        %v647 = vsel %vm645, %v642, %v644
        %652 = vrot.lane.b32.xlu0 %v443, 84
        %v653 = vpop.permute.xlu0 %652
        %654 = vrot.lane.b32.xlu0 %v444, 84
        %v655 = vpop.permute.xlu0 %654
        %656 = vrot.lane.b32.xlu0 %v445, 84
        %v657 = vpop.permute.xlu0 %656
        %vm658 = vcmask 687104
        %v659 = vsel %vm658, %v653, %v655
        %v660 = vsel %vm658, %v655, %v657
        %665 = vrot.lane.b32.xlu0 %v443, 68
        %v666 = vpop.permute.xlu0 %665
        %667 = vrot.lane.b32.xlu0 %v444, 68
        %v668 = vpop.permute.xlu0 %667
        %669 = vrot.lane.b32.xlu0 %v445, 68
        %v670 = vpop.permute.xlu0 %669
        %vm671 = vcmask 556032
        %v672 = vsel %vm671, %v666, %v668
        %v673 = vsel %vm671, %v668, %v670
        %678 = vrot.lane.b32.xlu0 %v443, 109
        %v679 = vpop.permute.xlu0 %678
        %680 = vrot.lane.b32.xlu0 %v444, 109
        %v681 = vpop.permute.xlu0 %680
        %682 = vrot.lane.b32.xlu0 %v445, 109
        %v683 = vpop.permute.xlu0 %682
        %vm684 = vcmask 891904
        %v685 = vsel %vm684, %v679, %v681
        %v686 = vsel %vm684, %v681, %v683
        %687 = vrot.lane.b32.xlu0 %v443, 67
        %v688 = vpop.permute.xlu0 %687
        %689 = vrot.lane.b32.xlu0 %v444, 67
        %v690 = vpop.permute.xlu0 %689
        %691 = vrot.lane.b32.xlu0 %v445, 67
        %v692 = vpop.permute.xlu0 %691
        %693 = vrot.lane.b32.xlu0 %v460, 67
        %v694 = vpop.permute.xlu0 %693
        %695 = vrot.lane.b32.xlu0 %v461, 67
        %v696 = vpop.permute.xlu0 %695
        %697 = vrot.lane.b32.xlu0 %v457, 67
        %v698 = vpop.permute.xlu0 %697
        %699 = vrot.lane.b32.xlu0 %v476, 67
        %v700 = vpop.permute.xlu0 %699
        %701 = vrot.lane.b32.xlu0 %v477, 67
        %v702 = vpop.permute.xlu0 %701
        %703 = vrot.lane.b32.xlu0 %v473, 67
        %v704 = vpop.permute.xlu0 %703
        %705 = vrot.lane.b32.xlu0 %v492, 67
        %v706 = vpop.permute.xlu0 %705
        %707 = vrot.lane.b32.xlu0 %v493, 67
        %v708 = vpop.permute.xlu0 %707
        %709 = vrot.lane.b32.xlu0 %v489, 67
        %v710 = vpop.permute.xlu0 %709
        %711 = vrot.lane.b32.xlu0 %v685, 67
        %v712 = vpop.permute.xlu0 %711
        %713 = vrot.lane.b32.xlu0 %v686, 67
        %v714 = vpop.permute.xlu0 %713
        %715 = vrot.lane.b32.xlu0 %v683, 67
        %v716 = vpop.permute.xlu0 %715
        %717 = vrot.lane.b32.xlu0 %v524, 67
        %v718 = vpop.permute.xlu0 %717
        %719 = vrot.lane.b32.xlu0 %v525, 67
        %v720 = vpop.permute.xlu0 %719
        %721 = vrot.lane.b32.xlu0 %v521, 67
        %v722 = vpop.permute.xlu0 %721
        %723 = vrot.lane.b32.xlu0 %v540, 67
        %v724 = vpop.permute.xlu0 %723
        %725 = vrot.lane.b32.xlu0 %v541, 67
        %v726 = vpop.permute.xlu0 %725
        %727 = vrot.lane.b32.xlu0 %v537, 67
        %v728 = vpop.permute.xlu0 %727
        %729 = vrot.lane.b32.xlu0 %v556, 67
        %v730 = vpop.permute.xlu0 %729
        %731 = vrot.lane.b32.xlu0 %v557, 67
        %v732 = vpop.permute.xlu0 %731
        %733 = vrot.lane.b32.xlu0 %v553, 67
        %v734 = vpop.permute.xlu0 %733
        %735 = vrot.lane.b32.xlu0 %v572, 67
        %v736 = vpop.permute.xlu0 %735
        %737 = vrot.lane.b32.xlu0 %v573, 67
        %v738 = vpop.permute.xlu0 %737
        %739 = vrot.lane.b32.xlu0 %v569, 67
        %v740 = vpop.permute.xlu0 %739
        %vm741 = vcmask 547840
        %v742 = vsel %vm741, %v688, %v690
        %v743 = vsel %vm741, %v690, %v692
        %v744 = vsel %vm741, %v694, %v696
        %v745 = vsel %vm741, %v696, %v698
        %v746 = vsel %vm741, %v700, %v702
        %v747 = vsel %vm741, %v702, %v704
        %v748 = vsel %vm741, %v706, %v708
        %v749 = vsel %vm741, %v708, %v710
        %v750 = vsel %vm741, %v712, %v714
        %v751 = vsel %vm741, %v714, %v716
        %v752 = vsel %vm741, %v718, %v720
        %v753 = vsel %vm741, %v720, %v722
        %v754 = vsel %vm741, %v724, %v726
        %v755 = vsel %vm741, %v726, %v728
        %v756 = vsel %vm741, %v730, %v732
        %v757 = vsel %vm741, %v732, %v734
        %v758 = vsel %vm741, %v736, %v738
        %v759 = vsel %vm741, %v738, %v740
        %v796 = vpack.c.bf16 %v459, %v442
        %v797 = vpack.c.bf16 %v460, %v443
        %v798 = vpack.c.bf16 %v461, %v444
        %v799 = vpack.c.bf16 %v457, %v445
        %v800 = vpack.c.bf16 %v491, %v475
        %v801 = vpack.c.bf16 %v492, %v476
        %v802 = vpack.c.bf16 %v493, %v477
        %v803 = vpack.c.bf16 %v489, %v473
        %v804 = vpack.c.bf16 %v523, %v507
        %v805 = vpack.c.bf16 %v524, %v508
        %v806 = vpack.c.bf16 %v525, %v509
        %v807 = vpack.c.bf16 %v521, %v505
        %v808 = vpack.c.bf16 %v555, %v539
        %v809 = vpack.c.bf16 %v556, %v540
        %v810 = vpack.c.bf16 %v557, %v541
        %v811 = vpack.c.bf16 %v553, %v537
        %v812 = vpack.c.bf16 %v587, %v571
        %v813 = vpack.c.bf16 %v588, %v572
        %v814 = vpack.c.bf16 %v589, %v573
        %v815 = vpack.c.bf16 %v585, %v569
        %v816 = vpack.c.bf16 %v619, %v603
        %v817 = vpack.c.bf16 %v620, %v604
        %v818 = vpack.c.bf16 %v621, %v605
        %v819 = vpack.c.bf16 %v617, %v601
        %v820 = vpack.c.bf16 %v640, %v627
        %v821 = vpack.c.bf16 %v646, %v633
        %v822 = vpack.c.bf16 %v647, %v634
        %v823 = vpack.c.bf16 %v644, %v631
        %v824 = vpack.c.bf16 %v666, %v653
        %v825 = vpack.c.bf16 %v672, %v659
        %v826 = vpack.c.bf16 %v673, %v660
        %v827 = vpack.c.bf16 %v670, %v657
        %v828 = vpack.c.bf16 %v694, %v688
        %v829 = vpack.c.bf16 %v744, %v742
        %v830 = vpack.c.bf16 %v745, %v743
        %v831 = vpack.c.bf16 %v698, %v692
        %v832 = vpack.c.bf16 %v706, %v700
        %v833 = vpack.c.bf16 %v748, %v746
        %v834 = vpack.c.bf16 %v749, %v747
        %v835 = vpack.c.bf16 %v710, %v704
        %v836 = vpack.c.bf16 %v718, %v712
        %v837 = vpack.c.bf16 %v752, %v750
        %v838 = vpack.c.bf16 %v753, %v751
        %v839 = vpack.c.bf16 %v722, %v716
        %v840 = vpack.c.bf16 %v730, %v724
        %v841 = vpack.c.bf16 %v756, %v754
        %v842 = vpack.c.bf16 %v757, %v755
        %v843 = vpack.c.bf16 %v734, %v728
        %v844 = vpack.c.bf16 %v736, %v736
        %v845 = vpack.c.bf16 %v758, %v758
        %v846 = vpack.c.bf16 %v759, %v759
        %v847 = vpack.c.bf16 %v740, %v740
        %v848 = vld [vmem:[%s8] sm:$0xff]
        %v849 = vld [vmem:[%s8 + $0x8] sm:$0xff]
        %v850 = vld [vmem:[%s8 + $0x10] sm:$0xff]
        %v851 = vld [vmem:[%s8 + $0x18] sm:$0xff]
        %v852 = vld [vmem:[%s8 + $0x20] sm:$0xff]
        %v853 = vld [vmem:[%s8 + $0x28] sm:$0xff]
        %v854 = vld [vmem:[%s8 + $0x30] sm:$0xff]
        %856 = vset.pattern.permute.xlu0 0
        %857 = vperm.xlu0 %856, %v848
        %v858 = vpop.permute.xlu0 %857
        %861 = vset.pattern.permute.xlu0 0
        %862 = vperm.xlu0 %861, %v849
        %v863 = vpop.permute.xlu0 %862
        %866 = vset.pattern.permute.xlu0 0
        %867 = vperm.xlu0 %866, %v850
        %v868 = vpop.permute.xlu0 %867
        %871 = vset.pattern.permute.xlu0 0
        %872 = vperm.xlu0 %871, %v851
        %v873 = vpop.permute.xlu0 %872
        %876 = vset.pattern.permute.xlu0 0
        %877 = vperm.xlu0 %876, %v852
        %v878 = vpop.permute.xlu0 %877
        %881 = vset.pattern.permute.xlu0 0
        %882 = vperm.xlu0 %881, %v853
        %v883 = vpop.permute.xlu0 %882
        %886 = vset.pattern.permute.xlu0 0
        %887 = vperm.xlu0 %886, %v854
        %v888 = vpop.permute.xlu0 %887
        %v897 = vunpack.c.l.b16 %v435
        %v898 = vunpack.c.h.b16 %v435
        %v899 = vunpack.c.l.b16 %v436
        %v900 = vunpack.c.h.b16 %v436
        %v901 = vunpack.c.l.b16 %v437
        %v902 = vunpack.c.h.b16 %v437
        %v903 = vunpack.c.l.b16 %v438
        %v904 = vunpack.c.h.b16 %v438
        %v905 = vunpack.c.l.b16 %v439
        %v906 = vunpack.c.h.b16 %v439
        %v907 = vunpack.c.l.b16 %v440
        %v908 = vunpack.c.h.b16 %v440
        %v909 = vunpack.c.l.b16 %v441
        %v910 = vunpack.c.h.b16 %v441
        %v911 = vpack.c.b16 %v899, %v897
        %v912 = vpack.c.b16 %v900, %v898
        %v913 = vpack.c.b16 %v903, %v901
        %v914 = vpack.c.b16 %v904, %v902
        %v915 = vpack.c.b16 %v907, %v905
        %v916 = vpack.c.b16 %v908, %v906
        %v917 = vpack.c.b16 %v909, %v909
        %v918 = vpack.c.b16 %v910, %v910
        %975 = vrot.lane.b32.xlu0 %v796, 42
        %v976 = vpop.permute.xlu0 %975
        %977 = vrot.lane.b32.xlu0 %v797, 42
        %v978 = vpop.permute.xlu0 %977
        %979 = vrot.lane.b32.xlu0 %v798, 42
        %v980 = vpop.permute.xlu0 %979
        %981 = vrot.lane.b32.xlu0 %v799, 42
        %v982 = vpop.permute.xlu0 %981
        %983 = vrot.lane.b32.xlu0 %v800, 42
        %v984 = vpop.permute.xlu0 %983
        %985 = vrot.lane.b32.xlu0 %v801, 42
        %v986 = vpop.permute.xlu0 %985
        %987 = vrot.lane.b32.xlu0 %v802, 42
        %v988 = vpop.permute.xlu0 %987
        %989 = vrot.lane.b32.xlu0 %v803, 42
        %v990 = vpop.permute.xlu0 %989
        %991 = vrot.lane.b32.xlu0 %v804, 42
        %v992 = vpop.permute.xlu0 %991
        %993 = vrot.lane.b32.xlu0 %v805, 42
        %v994 = vpop.permute.xlu0 %993
        %995 = vrot.lane.b32.xlu0 %v806, 42
        %v996 = vpop.permute.xlu0 %995
        %997 = vrot.lane.b32.xlu0 %v807, 42
        %v998 = vpop.permute.xlu0 %997
        %999 = vrot.lane.b32.xlu0 %v808, 42
        %v1000 = vpop.permute.xlu0 %999
        %1001 = vrot.lane.b32.xlu0 %v809, 42
        %v1002 = vpop.permute.xlu0 %1001
        %1003 = vrot.lane.b32.xlu0 %v810, 42
        %v1004 = vpop.permute.xlu0 %1003
        %1005 = vrot.lane.b32.xlu0 %v811, 42
        %v1006 = vpop.permute.xlu0 %1005
        %1007 = vrot.lane.b32.xlu0 %v812, 42
        %v1008 = vpop.permute.xlu0 %1007
        %1009 = vrot.lane.b32.xlu0 %v813, 42
        %v1010 = vpop.permute.xlu0 %1009
        %1011 = vrot.lane.b32.xlu0 %v814, 42
        %v1012 = vpop.permute.xlu0 %1011
        %1013 = vrot.lane.b32.xlu0 %v815, 42
        %v1014 = vpop.permute.xlu0 %1013
        %1015 = vrot.lane.b32.xlu0 %v816, 42
        %v1016 = vpop.permute.xlu0 %1015
        %1017 = vrot.lane.b32.xlu0 %v817, 42
        %v1018 = vpop.permute.xlu0 %1017
        %1019 = vrot.lane.b32.xlu0 %v818, 42
        %v1020 = vpop.permute.xlu0 %1019
        %1021 = vrot.lane.b32.xlu0 %v819, 42
        %v1022 = vpop.permute.xlu0 %1021
        %1023 = vrot.lane.b32.xlu0 %v820, 42
        %v1024 = vpop.permute.xlu0 %1023
        %1025 = vrot.lane.b32.xlu0 %v821, 42
        %v1026 = vpop.permute.xlu0 %1025
        %1027 = vrot.lane.b32.xlu0 %v822, 42
        %v1028 = vpop.permute.xlu0 %1027
        %1029 = vrot.lane.b32.xlu0 %v823, 42
        %v1030 = vpop.permute.xlu0 %1029
        %1031 = vrot.lane.b32.xlu0 %v824, 42
        %v1032 = vpop.permute.xlu0 %1031
        %1033 = vrot.lane.b32.xlu0 %v825, 42
        %v1034 = vpop.permute.xlu0 %1033
        %1035 = vrot.lane.b32.xlu0 %v826, 42
        %v1036 = vpop.permute.xlu0 %1035
        %1037 = vrot.lane.b32.xlu0 %v827, 42
        %v1038 = vpop.permute.xlu0 %1037
        %1039 = vrot.lane.b32.xlu0 %v828, 42
        %v1040 = vpop.permute.xlu0 %1039
        %1041 = vrot.lane.b32.xlu0 %v829, 42
        %v1042 = vpop.permute.xlu0 %1041
        %1043 = vrot.lane.b32.xlu0 %v830, 42
        %v1044 = vpop.permute.xlu0 %1043
        %1045 = vrot.lane.b32.xlu0 %v831, 42
        %v1046 = vpop.permute.xlu0 %1045
        %1047 = vrot.lane.b32.xlu0 %v832, 42
        %v1048 = vpop.permute.xlu0 %1047
        %1049 = vrot.lane.b32.xlu0 %v833, 42
        %v1050 = vpop.permute.xlu0 %1049
        %1051 = vrot.lane.b32.xlu0 %v834, 42
        %v1052 = vpop.permute.xlu0 %1051
        %1053 = vrot.lane.b32.xlu0 %v835, 42
        %v1054 = vpop.permute.xlu0 %1053
        %1055 = vrot.lane.b32.xlu0 %v836, 42
        %v1056 = vpop.permute.xlu0 %1055
        %1057 = vrot.lane.b32.xlu0 %v837, 42
        %v1058 = vpop.permute.xlu0 %1057
        %1059 = vrot.lane.b32.xlu0 %v838, 42
        %v1060 = vpop.permute.xlu0 %1059
        %1061 = vrot.lane.b32.xlu0 %v839, 42
        %v1062 = vpop.permute.xlu0 %1061
        %1063 = vrot.lane.b32.xlu0 %v840, 42
        %v1064 = vpop.permute.xlu0 %1063
        %1065 = vrot.lane.b32.xlu0 %v841, 42
        %v1066 = vpop.permute.xlu0 %1065
        %1067 = vrot.lane.b32.xlu0 %v842, 42
        %v1068 = vpop.permute.xlu0 %1067
        %1069 = vrot.lane.b32.xlu0 %v843, 42
        %v1070 = vpop.permute.xlu0 %1069
        %1071 = vrot.lane.b32.xlu0 %v844, 42
        %v1072 = vpop.permute.xlu0 %1071
        %1073 = vrot.lane.b32.xlu0 %v845, 42
        %v1074 = vpop.permute.xlu0 %1073
        %1075 = vrot.lane.b32.xlu0 %v846, 42
        %v1076 = vpop.permute.xlu0 %1075
        %1077 = vrot.lane.b32.xlu0 %v847, 42
        %v1078 = vpop.permute.xlu0 %1077
        %vm1079 = vcmask 343040
        %v1080 = vsel %vm1079, %v976, %v978
        %v1081 = vsel %vm1079, %v978, %v980
        %v1082 = vsel %vm1079, %v980, %v982
        %v1083 = vsel %vm1079, %v984, %v986
        %v1084 = vsel %vm1079, %v986, %v988
        %v1085 = vsel %vm1079, %v988, %v990
        %v1086 = vsel %vm1079, %v992, %v994
        %v1087 = vsel %vm1079, %v994, %v996
        %v1088 = vsel %vm1079, %v996, %v998
        %v1089 = vsel %vm1079, %v1000, %v1002
        %v1090 = vsel %vm1079, %v1002, %v1004
        %v1091 = vsel %vm1079, %v1004, %v1006
        %v1092 = vsel %vm1079, %v1008, %v1010
        %v1093 = vsel %vm1079, %v1010, %v1012
        %v1094 = vsel %vm1079, %v1012, %v1014
        %v1095 = vsel %vm1079, %v1016, %v1018
        %v1096 = vsel %vm1079, %v1018, %v1020
        %v1097 = vsel %vm1079, %v1020, %v1022
        %v1098 = vsel %vm1079, %v1024, %v1026
        %v1099 = vsel %vm1079, %v1026, %v1028
        %v1100 = vsel %vm1079, %v1028, %v1030
        %v1101 = vsel %vm1079, %v1032, %v1034
        %v1102 = vsel %vm1079, %v1034, %v1036
        %v1103 = vsel %vm1079, %v1036, %v1038
        %v1104 = vsel %vm1079, %v1040, %v1042
        %v1105 = vsel %vm1079, %v1042, %v1044
        %v1106 = vsel %vm1079, %v1044, %v1046
        %v1107 = vsel %vm1079, %v1048, %v1050
        %v1108 = vsel %vm1079, %v1050, %v1052
        %v1109 = vsel %vm1079, %v1052, %v1054
        %v1110 = vsel %vm1079, %v1056, %v1058
        %v1111 = vsel %vm1079, %v1058, %v1060
        %v1112 = vsel %vm1079, %v1060, %v1062
        %v1113 = vsel %vm1079, %v1064, %v1066
        %v1114 = vsel %vm1079, %v1066, %v1068
        %v1115 = vsel %vm1079, %v1068, %v1070
        %v1116 = vsel %vm1079, %v1072, %v1074
        %v1117 = vsel %vm1079, %v1074, %v1076
        %v1118 = vsel %vm1079, %v1076, %v1078
        %vm1155 = vcmask 588800
        %v1157 = vsel %vm1155, %v912, 0
        %v1160 = vsel %vm1155, %v914, 0
        %v1163 = vsel %vm1155, %v916, 0
        %v1166 = vsel %vm1155, %v918, 0
        %vm1168 = vcmask 1043456
        %v1170 = vsel %vm1168, %v1116, 0
        %v1173 = vsel %vm1168, %v1117, 0
        %v1176 = vsel %vm1168, %v1118, 0
        %1178 = vmatprep.subr.bf16.mxu0 %v1102
        %1179 = vmatpush1.bf16.msra.mxu0 %v1101
        %1180 = vmatprep.subr.bf16.mxu0 %v1099
        %1181 = vmatpush1.bf16.msra.mxu0 %v1098
        %1182 = vmatprep.subr.bf16.mxu0 %v1096
        %1183 = vmatpush1.bf16.msra.mxu0 %v1095
        %1184 = vmatprep.subr.bf16.mxu0 %v1093
        %1185 = vmatpush1.bf16.msra.mxu0 %v1092
        %1186 = vmatprep.subr.bf16.mxu0 %v1090
        %1187 = vmatpush1.bf16.msra.mxu0 %v1089
        %1188 = vmatprep.subr.bf16.mxu0 %v1087
        %1189 = vmatpush1.bf16.msra.mxu0 %v1086
        %1190 = vmatprep.subr.bf16.mxu0 %v1084
        %1191 = vmatpush1.bf16.msra.mxu0 %v1083
        %1192 = vmatprep.subr.bf16.mxu0 %v1081
        %1193 = vmatpush1.bf16.msra.mxu0 %v1080
        %1194 = vmatprep.subr.bf16.mxu0 0
        %1195 = vmatpush2.bf16.msra.mxu0 0
        %1196 = vmatprep.subr.bf16.mxu0 0
        %1197 = vmatpush2.bf16.msra.mxu0 0
        %1198 = vmatprep.subr.bf16.mxu0 0
        %1199 = vmatpush2.bf16.msra.mxu0 0
        %1200 = vmatprep.subr.bf16.mxu0 %v1173
        %1201 = vmatpush2.bf16.msra.mxu0 %v1170
        %1202 = vmatprep.subr.bf16.mxu0 %v1114
        %1203 = vmatpush2.bf16.msra.mxu0 %v1113
        %1204 = vmatprep.subr.bf16.mxu0 %v1111
        %1205 = vmatpush2.bf16.msra.mxu0 %v1110
        %1206 = vmatprep.subr.bf16.mxu0 %v1108
        %1207 = vmatpush2.bf16.msra.mxu0 %v1107
        %1208 = vmatprep.subr.bf16.mxu0 %v1105
        %1209 = vmatpush2.bf16.msra.mxu0 %v1104
        %1210 = vmatprep.mubr.bf16.mxu0 %v1157
        %1211 = vmatmul.mubr.bf16.gmra.mxu0 %v911
        %v1212 = vpop.f32.mrf.mxu0
        %v1213 = vadd.f32 %v858, %v1212
        %v1214 = vpop.f32.mrf.mxu0
        %v1215 = vadd.f32 %v858, %v1214
        %v1216 = vpop.f32.mrf.mxu0
        %v1217 = vadd.f32 %v863, %v1216
        %v1218 = vpop.f32.mrf.mxu0
        %v1219 = vadd.f32 %v863, %v1218
        %1220 = vmatprep.mubr.bf16.mxu0 %v1160
        %1221 = vmatmul.mubr.bf16.gmra.mxu0 %v913
        %v1222 = vpop.f32.mrf.mxu0
        %v1223 = vadd.f32 %v868, %v1222
        %v1224 = vpop.f32.mrf.mxu0
        %v1225 = vadd.f32 %v868, %v1224
        %v1226 = vpop.f32.mrf.mxu0
        %v1227 = vadd.f32 %v873, %v1226
        %v1228 = vpop.f32.mrf.mxu0
        %v1229 = vadd.f32 %v873, %v1228
        %1230 = vmatprep.mubr.bf16.mxu0 %v1163
        %1231 = vmatmul.mubr.bf16.gmra.mxu0 %v915
        %v1232 = vpop.f32.mrf.mxu0
        %v1233 = vadd.f32 %v878, %v1232
        %v1234 = vpop.f32.mrf.mxu0
        %v1235 = vadd.f32 %v878, %v1234
        %v1236 = vpop.f32.mrf.mxu0
        %v1237 = vadd.f32 %v883, %v1236
        %v1238 = vpop.f32.mrf.mxu0
        %v1239 = vadd.f32 %v883, %v1238
        %1240 = vmatprep.mubr.bf16.mxu0 %v1166
        %1241 = vmatmul.mubr.bf16.gmra.mxu0 %v917
        %v1242 = vpop.f32.mrf.mxu0
        %v1243 = vadd.f32 %v888, %v1242
        %v1244 = vpop.f32.mrf.mxu0
        %v1245 = vadd.f32 %v888, %v1244
        %v1246 = vpop.f32.mrf.mxu0
        %v1247 = vpop.f32.mrf.mxu0
        %1248 = vdwg.mxu0
        %1249 = vmatprep.subr.bf16.mxu0 0
        %1250 = vmatpush1.bf16.msra.mxu0 %v1103
        %1251 = vmatprep.subr.bf16.mxu0 0
        %1252 = vmatpush1.bf16.msra.mxu0 %v1100
        %1253 = vmatprep.subr.bf16.mxu0 0
        %1254 = vmatpush1.bf16.msra.mxu0 %v1097
        %1255 = vmatprep.subr.bf16.mxu0 0
        %1256 = vmatpush1.bf16.msra.mxu0 %v1094
        %1257 = vmatprep.subr.bf16.mxu0 0
        %1258 = vmatpush1.bf16.msra.mxu0 %v1091
        %1259 = vmatprep.subr.bf16.mxu0 0
        %1260 = vmatpush1.bf16.msra.mxu0 %v1088
        %1261 = vmatprep.subr.bf16.mxu0 0
        %1262 = vmatpush1.bf16.msra.mxu0 %v1085
        %1263 = vmatprep.subr.bf16.mxu0 0
        %1264 = vmatpush1.bf16.msra.mxu0 %v1082
        %1265 = vmatprep.subr.bf16.mxu0 0
        %1266 = vmatpush2.bf16.msra.mxu0 0
        %1267 = vmatprep.subr.bf16.mxu0 0
        %1268 = vmatpush2.bf16.msra.mxu0 0
        %1269 = vmatprep.subr.bf16.mxu0 0
        %1270 = vmatpush2.bf16.msra.mxu0 0
        %1271 = vmatprep.subr.bf16.mxu0 0
        %1272 = vmatpush2.bf16.msra.mxu0 %v1176
        %1273 = vmatprep.subr.bf16.mxu0 0
        %1274 = vmatpush2.bf16.msra.mxu0 %v1115
        %1275 = vmatprep.subr.bf16.mxu0 0
        %1276 = vmatpush2.bf16.msra.mxu0 %v1112
        %1277 = vmatprep.subr.bf16.mxu0 0
        %1278 = vmatpush2.bf16.msra.mxu0 %v1109
        %1279 = vmatprep.subr.bf16.mxu0 0
        %1280 = vmatpush2.bf16.msra.mxu0 %v1106
        %1281 = vmatprep.mubr.bf16.mxu0 %v1157
        %1282 = vmatmul.mubr.bf16.gmra.mxu0 %v911
        %v1283 = vpop.f32.mrf.mxu0
        %v1284 = vadd.f32 %v858, %v1283
        %v1285 = vpop.f32.mrf.mxu0
        %v1286 = vpop.f32.mrf.mxu0
        %v1287 = vadd.f32 %v863, %v1286
        %v1288 = vpop.f32.mrf.mxu0
        %1289 = vmatprep.mubr.bf16.mxu0 %v1160
        %1290 = vmatmul.mubr.bf16.gmra.mxu0 %v913
        %v1291 = vpop.f32.mrf.mxu0
        %v1292 = vadd.f32 %v868, %v1291
        %v1293 = vpop.f32.mrf.mxu0
        %v1294 = vpop.f32.mrf.mxu0
        %v1295 = vadd.f32 %v873, %v1294
        %v1296 = vpop.f32.mrf.mxu0
        %1297 = vmatprep.mubr.bf16.mxu0 %v1163
        %1298 = vmatmul.mubr.bf16.gmra.mxu0 %v915
        %v1299 = vpop.f32.mrf.mxu0
        %v1300 = vadd.f32 %v878, %v1299
        %v1301 = vpop.f32.mrf.mxu0
        %v1302 = vpop.f32.mrf.mxu0
        %v1303 = vadd.f32 %v883, %v1302
        %v1304 = vpop.f32.mrf.mxu0
        %1305 = vmatprep.mubr.bf16.mxu0 %v1166
        %1306 = vmatmul.mubr.bf16.gmra.mxu0 %v917
        %v1307 = vpop.f32.mrf.mxu0
        %v1308 = vadd.f32 %v888, %v1307
        %v1309 = vpop.f32.mrf.mxu0
        %v1310 = vpop.f32.mrf.mxu0
        %v1311 = vpop.f32.mrf.mxu0
        %1312 = vdwg.mxu0
        %vm1313 = vcmp.ge.f32.partialorder %v1213, 0.0
        %vm1314 = vcmp.ge.f32.partialorder %v1215, 0.0
        %vm1315 = vcmp.ge.f32.partialorder %v1284, 0.0
        %vm1316 = vcmp.ge.f32.partialorder %v1217, 0.0
        %vm1317 = vcmp.ge.f32.partialorder %v1219, 0.0
        %vm1318 = vcmp.ge.f32.partialorder %v1287, 0.0
        %vm1319 = vcmp.ge.f32.partialorder %v1223, 0.0
        %vm1320 = vcmp.ge.f32.partialorder %v1225, 0.0
        %vm1321 = vcmp.ge.f32.partialorder %v1292, 0.0
        %vm1322 = vcmp.ge.f32.partialorder %v1227, 0.0
        %vm1323 = vcmp.ge.f32.partialorder %v1229, 0.0
        %vm1324 = vcmp.ge.f32.partialorder %v1295, 0.0
        %vm1325 = vcmp.ge.f32.partialorder %v1233, 0.0
        %vm1326 = vcmp.ge.f32.partialorder %v1235, 0.0
        %vm1327 = vcmp.ge.f32.partialorder %v1300, 0.0
        %vm1328 = vcmp.ge.f32.partialorder %v1237, 0.0
        %vm1329 = vcmp.ge.f32.partialorder %v1239, 0.0
        %vm1330 = vcmp.ge.f32.partialorder %v1303, 0.0
        %vm1331 = vcmp.ge.f32.partialorder %v1243, 0.0
        %vm1332 = vcmp.ge.f32.partialorder %v1245, 0.0
        %vm1333 = vcmp.ge.f32.partialorder %v1308, 0.0
        %s1334 = sld [smem:[#allocation3]]
        %v1335 = vstv %s1334
        %v1336 = vmul.f32 %v1335, %v1213
        %v1337 = vmul.f32 %v1335, %v1215
        %v1338 = vmul.f32 %v1335, %v1284
        %v1339 = vmul.f32 %v1335, %v1217
        %v1340 = vmul.f32 %v1335, %v1219
        %v1341 = vmul.f32 %v1335, %v1287
        %v1342 = vmul.f32 %v1335, %v1223
        %v1343 = vmul.f32 %v1335, %v1225
        %v1344 = vmul.f32 %v1335, %v1292
        %v1345 = vmul.f32 %v1335, %v1227
        %v1346 = vmul.f32 %v1335, %v1229
        %v1347 = vmul.f32 %v1335, %v1295
        %v1348 = vmul.f32 %v1335, %v1233
        %v1349 = vmul.f32 %v1335, %v1235
        %v1350 = vmul.f32 %v1335, %v1300
        %v1351 = vmul.f32 %v1335, %v1237
        %v1352 = vmul.f32 %v1335, %v1239
        %v1353 = vmul.f32 %v1335, %v1303
        %v1354 = vmul.f32 %v1335, %v1243
        %v1355 = vmul.f32 %v1335, %v1245
        %v1356 = vmul.f32 %v1335, %v1308
        %v1357 = vsel %vm1313, %v1213, %v1336
        %v1358 = vsel %vm1314, %v1215, %v1337
        %v1359 = vsel %vm1315, %v1284, %v1338
        %v1360 = vsel %vm1316, %v1217, %v1339
        %v1361 = vsel %vm1317, %v1219, %v1340
        %v1362 = vsel %vm1318, %v1287, %v1341
        %v1363 = vsel %vm1319, %v1223, %v1342
        %v1364 = vsel %vm1320, %v1225, %v1343
        %v1365 = vsel %vm1321, %v1292, %v1344
        %v1366 = vsel %vm1322, %v1227, %v1345
        %v1367 = vsel %vm1323, %v1229, %v1346
        %v1368 = vsel %vm1324, %v1295, %v1347
        %v1369 = vsel %vm1325, %v1233, %v1348
        %v1370 = vsel %vm1326, %v1235, %v1349
        %v1371 = vsel %vm1327, %v1300, %v1350
        %v1372 = vsel %vm1328, %v1237, %v1351
        %v1373 = vsel %vm1329, %v1239, %v1352
        %v1374 = vsel %vm1330, %v1303, %v1353
        %v1375 = vsel %vm1331, %v1243, %v1354
        %v1376 = vsel %vm1332, %v1245, %v1355
        %v1377 = vsel %vm1333, %v1308, %v1356
        %v1379 = vlaneseq
        %v1380 = vshrl.u32 %v1379, 7
        %v1381 = vsub.s32 0, %v1380
        %v1382 = vrot.slane %v434, %v1381
        %v1383 = vlaneseq
        %v1384 = vshrl.u32 %v1383, 7
        %v1385 = vsub.s32 1, %v1384
        %v1386 = vrot.slane %v434, %v1385
        %v1387 = vlaneseq
        %v1388 = vshrl.u32 %v1387, 7
        %v1389 = vsub.s32 2, %v1388
        %v1390 = vrot.slane %v434, %v1389
        %v1394 = vmul.f32 %v1357, %v1382
        %v1395 = vmul.f32 %v1358, %v1386
        %v1396 = vmul.f32 %v1359, %v1390
        %v1397 = vmul.f32 %v1360, %v1382
        %v1398 = vmul.f32 %v1361, %v1386
        %v1399 = vmul.f32 %v1362, %v1390
        %v1400 = vmul.f32 %v1363, %v1382
        %v1401 = vmul.f32 %v1364, %v1386
        %v1402 = vmul.f32 %v1365, %v1390
        %v1403 = vmul.f32 %v1366, %v1382
        %v1404 = vmul.f32 %v1367, %v1386
        %v1405 = vmul.f32 %v1368, %v1390
        %v1406 = vmul.f32 %v1369, %v1382
        %v1407 = vmul.f32 %v1370, %v1386
        %v1408 = vmul.f32 %v1371, %v1390
        %v1409 = vmul.f32 %v1372, %v1382
        %v1410 = vmul.f32 %v1373, %v1386
        %v1411 = vmul.f32 %v1374, %v1390
        %v1412 = vmul.f32 %v1375, %v1382
        %v1413 = vmul.f32 %v1376, %v1386
        %v1414 = vmul.f32 %v1377, %v1390
        %1415 = vst [vmem:[#allocation2 + $0x8] sm:$0xff] %v1394
        %1416 = vst [vmem:[#allocation2 + $0x10] sm:$0xff] %v1395
        %1417 = vst.msk [vmem:[#allocation2 + $0x18] sm:$0xff] %vm432, %v1396
        %1418 = vst [vmem:[#allocation2 + $0x30] sm:$0xff] %v1397
        %1419 = vst [vmem:[#allocation2 + $0x38] sm:$0xff] %v1398
        %1420 = vst.msk [vmem:[#allocation2 + $0x40] sm:$0xff] %vm432, %v1399
        %1421 = vst [vmem:[#allocation2 + $0x58] sm:$0xff] %v1400
        %1422 = vst [vmem:[#allocation2 + $0x60] sm:$0xff] %v1401
        %1423 = vst.msk [vmem:[#allocation2 + $0x68] sm:$0xff] %vm432, %v1402
        %1424 = vst [vmem:[#allocation2 + $0x80] sm:$0xff] %v1403
        %1425 = vst [vmem:[#allocation2 + $0x88] sm:$0xff] %v1404
        %1426 = vst.msk [vmem:[#allocation2 + $0x90] sm:$0xff] %vm432, %v1405
        %1427 = vst [vmem:[#allocation2 + $0xa8] sm:$0xff] %v1406
        %1428 = vst [vmem:[#allocation2 + $0xb0] sm:$0xff] %v1407
        %1429 = vst.msk [vmem:[#allocation2 + $0xb8] sm:$0xff] %vm432, %v1408
        %1430 = vst [vmem:[#allocation2 + $0xd0] sm:$0xff] %v1409
        %1431 = vst [vmem:[#allocation2 + $0xd8] sm:$0xff] %v1410
        %1432 = vst.msk [vmem:[#allocation2 + $0xe0] sm:$0xff] %vm432, %v1411
        %1433 = vst [vmem:[#allocation2 + $0xf8] sm:$0xff] %v1412
        %1434 = vst [vmem:[#allocation2 + $0x100] sm:$0xff] %v1413
        %1435 = vst.msk [vmem:[#allocation2 + $0x108] sm:$0xff] %vm432, %v1414
        %v1436 = vld [vmem:[#allocation7] sm:$0xf]
        %v1437 = vld [vmem:[#allocation7 + $0x4] sm:$0xf]
        %v1438 = vld [vmem:[#allocation2 + $0x8] sm:$0xff]
        %v1439 = vld [vmem:[#allocation2 + $0x10] sm:$0xff]
        %v1440 = vld [vmem:[#allocation2 + $0x18] sm:$0xff]
        %v1441 = vld [vmem:[#allocation2 + $0x30] sm:$0xff]
        %v1442 = vld [vmem:[#allocation2 + $0x38] sm:$0xff]
        %v1443 = vld [vmem:[#allocation2 + $0x40] sm:$0xff]
        %v1444 = vld [vmem:[#allocation2 + $0x58] sm:$0xff]
        %v1445 = vld [vmem:[#allocation2 + $0x60] sm:$0xff]
        %v1446 = vld [vmem:[#allocation2 + $0x68] sm:$0xff]
        %v1447 = vld [vmem:[#allocation2 + $0x80] sm:$0xff]
        %v1448 = vld [vmem:[#allocation2 + $0x88] sm:$0xff]
        %v1449 = vld [vmem:[#allocation2 + $0x90] sm:$0xff]
        %v1450 = vld [vmem:[#allocation2 + $0xa8] sm:$0xff]
        %v1451 = vld [vmem:[#allocation2 + $0xb0] sm:$0xff]
        %v1452 = vld [vmem:[#allocation2 + $0xb8] sm:$0xff]
        %v1453 = vld [vmem:[#allocation2 + $0xd0] sm:$0xff]
        %v1454 = vld [vmem:[#allocation2 + $0xd8] sm:$0xff]
        %v1455 = vld [vmem:[#allocation2 + $0xe0] sm:$0xff]
        %v1456 = vld [vmem:[#allocation2 + $0xf8] sm:$0xff]
        %v1457 = vld [vmem:[#allocation2 + $0x100] sm:$0xff]
        %v1458 = vld [vmem:[#allocation2 + $0x108] sm:$0xff]
        %v1459 = vpack.c.bf16 %v1441, %v1438
        %v1460 = vpack.c.bf16 %v1442, %v1439
        %v1461 = vpack.c.bf16 %v1443, %v1440
        %v1462 = vpack.c.bf16 %v1447, %v1444
        %v1463 = vpack.c.bf16 %v1448, %v1445
        %v1464 = vpack.c.bf16 %v1449, %v1446
        %v1465 = vpack.c.bf16 %v1453, %v1450
        %v1466 = vpack.c.bf16 %v1454, %v1451
        %v1467 = vpack.c.bf16 %v1455, %v1452
        %v1468 = vpack.c.bf16 %v1456, %v1456
        %v1469 = vpack.c.bf16 %v1457, %v1457
        %v1470 = vpack.c.bf16 %v1458, %v1458
        %v1471 = vld [vmem:[%s8] sm:$0xff]
        %v1472 = vld [vmem:[%s8 + $0x8] sm:$0xff]
        %1474 = vset.pattern.permute.xlu0 1
        %1475 = vperm.xlu0 %1474, %v1471
        %v1476 = vpop.permute.xlu0 %1475
        %1479 = vset.pattern.permute.xlu0 1
        %1480 = vperm.xlu0 %1479, %v1472
        %v1481 = vpop.permute.xlu0 %1480
        %v1485 = vunpack.c.l.b16 %v1436
        %v1486 = vunpack.c.l.b16 %v1437
        %v1487 = vpack.c.b16 %v1486, %v1485
        %vm1488 = vcmask 457728
        %v1490 = vsel %vm1488, %v1487, 0
        %v1493 = vsel %vm1168, %v1468, 0
        %v1496 = vsel %vm1168, %v1469, 0
        %v1499 = vsel %vm1168, %v1470, 0
        %1501 = vmatprep.subr.bf16.mxu0 0
        %1502 = vmatpush1.bf16.msra.mxu0 0
        %1503 = vmatprep.subr.bf16.mxu0 0
        %1504 = vmatpush1.bf16.msra.mxu0 0
        %1505 = vmatprep.subr.bf16.mxu0 0
        %1506 = vmatpush1.bf16.msra.mxu0 0
        %1507 = vmatprep.subr.bf16.mxu0 0
        %1508 = vmatpush1.bf16.msra.mxu0 0
        %1509 = vmatprep.subr.bf16.mxu0 %v1496
        %1510 = vmatpush1.bf16.msra.mxu0 %v1493
        %1511 = vmatprep.subr.bf16.mxu0 %v1466
        %1512 = vmatpush1.bf16.msra.mxu0 %v1465
        %1513 = vmatprep.subr.bf16.mxu0 %v1463
        %1514 = vmatpush1.bf16.msra.mxu0 %v1462
        %1515 = vmatprep.subr.bf16.mxu0 %v1460
        %1516 = vmatpush1.bf16.msra.mxu0 %v1459
        %1517 = vmatprep.subr.bf16.mxu0 0
        %1518 = vmatpush2.bf16.msra.mxu0 0
        %1519 = vmatprep.subr.bf16.mxu0 0
        %1520 = vmatpush2.bf16.msra.mxu0 0
        %1521 = vmatprep.subr.bf16.mxu0 0
        %1522 = vmatpush2.bf16.msra.mxu0 0
        %1523 = vmatprep.subr.bf16.mxu0 0
        %1524 = vmatpush2.bf16.msra.mxu0 0
        %1525 = vmatprep.subr.bf16.mxu0 0
        %1526 = vmatpush2.bf16.msra.mxu0 0
        %1527 = vmatprep.subr.bf16.mxu0 0
        %1528 = vmatpush2.bf16.msra.mxu0 0
        %1529 = vmatprep.subr.bf16.mxu0 0
        %1530 = vmatpush2.bf16.msra.mxu0 0
        %1531 = vmatprep.subr.bf16.mxu0 0
        %1532 = vmatpush2.bf16.msra.mxu0 0
        %1533 = vmatprep.mubr.bf16.mxu0 0
        %1534 = vmatmul.mubr.bf16.gmra.mxu0 %v1490
        %v1535 = vpop.f32.mrf.mxu0
        %v1536 = vadd.f32 %v1476, %v1535
        %v1537 = vpop.f32.mrf.mxu0
        %v1538 = vadd.f32 %v1476, %v1537
        %v1539 = vpop.f32.mrf.mxu0
        %v1540 = vadd.f32 %v1481, %v1539
        %v1541 = vpop.f32.mrf.mxu0
        %v1542 = vadd.f32 %v1481, %v1541
        %1543 = vdwg.mxu0
        %1544 = vmatprep.subr.bf16.mxu0 0
        %1545 = vmatpush1.bf16.msra.mxu0 0
        %1546 = vmatprep.subr.bf16.mxu0 0
        %1547 = vmatpush1.bf16.msra.mxu0 0
        %1548 = vmatprep.subr.bf16.mxu0 0
        %1549 = vmatpush1.bf16.msra.mxu0 0
        %1550 = vmatprep.subr.bf16.mxu0 0
        %1551 = vmatpush1.bf16.msra.mxu0 0
        %1552 = vmatprep.subr.bf16.mxu0 0
        %1553 = vmatpush1.bf16.msra.mxu0 %v1499
        %1554 = vmatprep.subr.bf16.mxu0 0
        %1555 = vmatpush1.bf16.msra.mxu0 %v1467
        %1556 = vmatprep.subr.bf16.mxu0 0
        %1557 = vmatpush1.bf16.msra.mxu0 %v1464
        %1558 = vmatprep.subr.bf16.mxu0 0
        %1559 = vmatpush1.bf16.msra.mxu0 %v1461
        %1560 = vmatprep.subr.bf16.mxu0 0
        %1561 = vmatpush2.bf16.msra.mxu0 0
        %1562 = vmatprep.subr.bf16.mxu0 0
        %1563 = vmatpush2.bf16.msra.mxu0 0
        %1564 = vmatprep.subr.bf16.mxu0 0
        %1565 = vmatpush2.bf16.msra.mxu0 0
        %1566 = vmatprep.subr.bf16.mxu0 0
        %1567 = vmatpush2.bf16.msra.mxu0 0
        %1568 = vmatprep.subr.bf16.mxu0 0
        %1569 = vmatpush2.bf16.msra.mxu0 0
        %1570 = vmatprep.subr.bf16.mxu0 0
        %1571 = vmatpush2.bf16.msra.mxu0 0
        %1572 = vmatprep.subr.bf16.mxu0 0
        %1573 = vmatpush2.bf16.msra.mxu0 0
        %1574 = vmatprep.subr.bf16.mxu0 0
        %1575 = vmatpush2.bf16.msra.mxu0 0
        %1576 = vmatprep.mubr.bf16.mxu0 0
        %1577 = vmatmul.mubr.bf16.gmra.mxu0 %v1490
        %v1578 = vpop.f32.mrf.mxu0
        %v1579 = vadd.f32 %v1476, %v1578
        %v1580 = vpop.f32.mrf.mxu0
        %v1581 = vpop.f32.mrf.mxu0
        %v1582 = vadd.f32 %v1481, %v1581
        %v1583 = vpop.f32.mrf.mxu0
        %1584 = vdwg.mxu0
        %vm1585 = vcmp.ge.f32.partialorder %v1536, 0.0
        %vm1586 = vcmp.ge.f32.partialorder %v1538, 0.0
        %vm1587 = vcmp.ge.f32.partialorder %v1579, 0.0
        %vm1588 = vcmp.ge.f32.partialorder %v1540, 0.0
        %vm1589 = vcmp.ge.f32.partialorder %v1542, 0.0
        %vm1590 = vcmp.ge.f32.partialorder %v1582, 0.0
        %s1591 = sld [smem:[#allocation3 + $0x1]]
        %v1592 = vstv %s1591
        %v1593 = vmul.f32 %v1592, %v1536
        %v1594 = vmul.f32 %v1592, %v1538
        %v1595 = vmul.f32 %v1592, %v1579
        %v1596 = vmul.f32 %v1592, %v1540
        %v1597 = vmul.f32 %v1592, %v1542
        %v1598 = vmul.f32 %v1592, %v1582
        %v1599 = vsel %vm1585, %v1536, %v1593
        %v1600 = vsel %vm1586, %v1538, %v1594
        %v1601 = vsel %vm1587, %v1579, %v1595
        %v1602 = vsel %vm1588, %v1540, %v1596
        %v1603 = vsel %vm1589, %v1542, %v1597
        %v1604 = vsel %vm1590, %v1582, %v1598
        %v1605 = vmul.f32 %v1599, %v1382
        %v1606 = vmul.f32 %v1600, %v1386
        %v1607 = vmul.f32 %v1601, %v1390
        %v1608 = vmul.f32 %v1602, %v1382
        %v1609 = vmul.f32 %v1603, %v1386
        %v1610 = vmul.f32 %v1604, %v1390
        %1611 = vst [vmem:[#allocation2 + $0x8] sm:$0xff] %v1605
        %1612 = vst [vmem:[#allocation2 + $0x10] sm:$0xff] %v1606
        %1613 = vst.msk [vmem:[#allocation2 + $0x18] sm:$0xff] %vm432, %v1607
        %1614 = vst [vmem:[#allocation2 + $0x30] sm:$0xff] %v1608
        %1615 = vst [vmem:[#allocation2 + $0x38] sm:$0xff] %v1609
        %1616 = vst.msk [vmem:[#allocation2 + $0x40] sm:$0xff] %vm432, %v1610
        %v1617 = vld [vmem:[#allocation9] sm:$0xff]
        %v1618 = vld [vmem:[#allocation9 + $0x8] sm:$0xff]
        %v1619 = vld [vmem:[#allocation2] sm:$0xff]
        %v1620 = vld [vmem:[#allocation2 + $0x8] sm:$0xff]
        %v1621 = vld [vmem:[#allocation2 + $0x10] sm:$0xff]
        %v1622 = vld [vmem:[#allocation2 + $0x18] sm:$0xff]
        %v1623 = vld [vmem:[#allocation2 + $0x28] sm:$0xff]
        %v1624 = vld [vmem:[#allocation2 + $0x30] sm:$0xff]
        %v1625 = vld [vmem:[#allocation2 + $0x38] sm:$0xff]
        %v1626 = vld [vmem:[#allocation2 + $0x40] sm:$0xff]
        %1635 = vrot.lane.b32.xlu0 %v1619, 127
        %v1636 = vpop.permute.xlu0 %1635
        %1637 = vrot.lane.b32.xlu0 %v1620, 127
        %v1638 = vpop.permute.xlu0 %1637
        %1639 = vrot.lane.b32.xlu0 %v1621, 127
        %v1640 = vpop.permute.xlu0 %1639
        %1641 = vrot.lane.b32.xlu0 %v1622, 127
        %v1642 = vpop.permute.xlu0 %1641
        %1643 = vrot.lane.b32.xlu0 %v1623, 127
        %v1644 = vpop.permute.xlu0 %1643
        %1645 = vrot.lane.b32.xlu0 %v1624, 127
        %v1646 = vpop.permute.xlu0 %1645
        %1647 = vrot.lane.b32.xlu0 %v1625, 127
        %v1648 = vpop.permute.xlu0 %1647
        %1649 = vrot.lane.b32.xlu0 %v1626, 127
        %v1650 = vpop.permute.xlu0 %1649
        %v1651 = vsel %vm458, %v1636, %v1638
        %v1652 = vsel %vm458, %v1638, %v1640
        %v1653 = vsel %vm458, %v1640, %v1642
        %v1654 = vsel %vm458, %v1644, %v1646
        %v1655 = vsel %vm458, %v1646, %v1648
        %v1656 = vsel %vm458, %v1648, %v1650
        %1665 = vrot.lane.b32.xlu0 %v1619, 126
        %v1666 = vpop.permute.xlu0 %1665
        %1667 = vrot.lane.b32.xlu0 %v1620, 126
        %v1668 = vpop.permute.xlu0 %1667
        %1669 = vrot.lane.b32.xlu0 %v1621, 126
        %v1670 = vpop.permute.xlu0 %1669
        %1671 = vrot.lane.b32.xlu0 %v1622, 126
        %v1672 = vpop.permute.xlu0 %1671
        %1673 = vrot.lane.b32.xlu0 %v1623, 126
        %v1674 = vpop.permute.xlu0 %1673
        %1675 = vrot.lane.b32.xlu0 %v1624, 126
        %v1676 = vpop.permute.xlu0 %1675
        %1677 = vrot.lane.b32.xlu0 %v1625, 126
        %v1678 = vpop.permute.xlu0 %1677
        %1679 = vrot.lane.b32.xlu0 %v1626, 126
        %v1680 = vpop.permute.xlu0 %1679
        %v1681 = vsel %vm474, %v1666, %v1668
        %v1682 = vsel %vm474, %v1668, %v1670
        %v1683 = vsel %vm474, %v1670, %v1672
        %v1684 = vsel %vm474, %v1674, %v1676
        %v1685 = vsel %vm474, %v1676, %v1678
        %v1686 = vsel %vm474, %v1678, %v1680
        %1695 = vrot.lane.b32.xlu0 %v1619, 108
        %v1696 = vpop.permute.xlu0 %1695
        %1697 = vrot.lane.b32.xlu0 %v1620, 108
        %v1698 = vpop.permute.xlu0 %1697
        %1699 = vrot.lane.b32.xlu0 %v1621, 108
        %v1700 = vpop.permute.xlu0 %1699
        %1701 = vrot.lane.b32.xlu0 %v1622, 108
        %v1702 = vpop.permute.xlu0 %1701
        %1703 = vrot.lane.b32.xlu0 %v1623, 108
        %v1704 = vpop.permute.xlu0 %1703
        %1705 = vrot.lane.b32.xlu0 %v1624, 108
        %v1706 = vpop.permute.xlu0 %1705
        %1707 = vrot.lane.b32.xlu0 %v1625, 108
        %v1708 = vpop.permute.xlu0 %1707
        %1709 = vrot.lane.b32.xlu0 %v1626, 108
        %v1710 = vpop.permute.xlu0 %1709
        %v1711 = vsel %vm522, %v1696, %v1698
        %v1712 = vsel %vm522, %v1698, %v1700
        %v1713 = vsel %vm522, %v1700, %v1702
        %v1714 = vsel %vm522, %v1704, %v1706
        %v1715 = vsel %vm522, %v1706, %v1708
        %v1716 = vsel %vm522, %v1708, %v1710
        %1725 = vrot.lane.b32.xlu0 %v1620, 107
        %v1726 = vpop.permute.xlu0 %1725
        %1727 = vrot.lane.b32.xlu0 %v1621, 107
        %v1728 = vpop.permute.xlu0 %1727
        %1729 = vrot.lane.b32.xlu0 %v1622, 107
        %v1730 = vpop.permute.xlu0 %1729
        %1731 = vrot.lane.b32.xlu0 %v1624, 107
        %v1732 = vpop.permute.xlu0 %1731
        %1733 = vrot.lane.b32.xlu0 %v1625, 107
        %v1734 = vpop.permute.xlu0 %1733
        %1735 = vrot.lane.b32.xlu0 %v1626, 107
        %v1736 = vpop.permute.xlu0 %1735
        %v1737 = vsel %vm538, %v1726, %v1728
        %v1738 = vsel %vm538, %v1728, %v1730
        %v1739 = vsel %vm538, %v1732, %v1734
        %v1740 = vsel %vm538, %v1734, %v1736
        %1749 = vrot.lane.b32.xlu0 %v1620, 106
        %v1750 = vpop.permute.xlu0 %1749
        %1751 = vrot.lane.b32.xlu0 %v1621, 106
        %v1752 = vpop.permute.xlu0 %1751
        %1753 = vrot.lane.b32.xlu0 %v1622, 106
        %v1754 = vpop.permute.xlu0 %1753
        %1755 = vrot.lane.b32.xlu0 %v1624, 106
        %v1756 = vpop.permute.xlu0 %1755
        %1757 = vrot.lane.b32.xlu0 %v1625, 106
        %v1758 = vpop.permute.xlu0 %1757
        %1759 = vrot.lane.b32.xlu0 %v1626, 106
        %v1760 = vpop.permute.xlu0 %1759
        %v1761 = vsel %vm554, %v1750, %v1752
        %v1762 = vsel %vm554, %v1752, %v1754
        %v1763 = vsel %vm554, %v1756, %v1758
        %v1764 = vsel %vm554, %v1758, %v1760
        %1773 = vrot.lane.b32.xlu0 %v1620, 88
        %v1774 = vpop.permute.xlu0 %1773
        %1775 = vrot.lane.b32.xlu0 %v1621, 88
        %v1776 = vpop.permute.xlu0 %1775
        %1777 = vrot.lane.b32.xlu0 %v1622, 88
        %v1778 = vpop.permute.xlu0 %1777
        %1779 = vrot.lane.b32.xlu0 %v1624, 88
        %v1780 = vpop.permute.xlu0 %1779
        %1781 = vrot.lane.b32.xlu0 %v1625, 88
        %v1782 = vpop.permute.xlu0 %1781
        %1783 = vrot.lane.b32.xlu0 %v1626, 88
        %v1784 = vpop.permute.xlu0 %1783
        %v1785 = vsel %vm602, %v1774, %v1776
        %v1786 = vsel %vm602, %v1776, %v1778
        %v1787 = vsel %vm602, %v1780, %v1782
        %v1788 = vsel %vm602, %v1782, %v1784
        %1797 = vrot.lane.b32.xlu0 %v1620, 87
        %v1798 = vpop.permute.xlu0 %1797
        %1799 = vrot.lane.b32.xlu0 %v1621, 87
        %v1800 = vpop.permute.xlu0 %1799
        %1801 = vrot.lane.b32.xlu0 %v1622, 87
        %v1802 = vpop.permute.xlu0 %1801
        %1803 = vrot.lane.b32.xlu0 %v1624, 87
        %v1804 = vpop.permute.xlu0 %1803
        %1805 = vrot.lane.b32.xlu0 %v1625, 87
        %v1806 = vpop.permute.xlu0 %1805
        %1807 = vrot.lane.b32.xlu0 %v1626, 87
        %v1808 = vpop.permute.xlu0 %1807
        %v1809 = vsel %vm618, %v1798, %v1800
        %v1810 = vsel %vm618, %v1800, %v1802
        %v1811 = vsel %vm618, %v1804, %v1806
        %v1812 = vsel %vm618, %v1806, %v1808
        %1821 = vrot.lane.b32.xlu0 %v1620, 86
        %v1822 = vpop.permute.xlu0 %1821
        %1823 = vrot.lane.b32.xlu0 %v1621, 86
        %v1824 = vpop.permute.xlu0 %1823
        %1825 = vrot.lane.b32.xlu0 %v1622, 86
        %v1826 = vpop.permute.xlu0 %1825
        %1827 = vrot.lane.b32.xlu0 %v1624, 86
        %v1828 = vpop.permute.xlu0 %1827
        %1829 = vrot.lane.b32.xlu0 %v1625, 86
        %v1830 = vpop.permute.xlu0 %1829
        %1831 = vrot.lane.b32.xlu0 %v1626, 86
        %v1832 = vpop.permute.xlu0 %1831
        %v1833 = vsel %vm632, %v1822, %v1824
        %v1834 = vsel %vm632, %v1824, %v1826
        %v1835 = vsel %vm632, %v1828, %v1830
        %v1836 = vsel %vm632, %v1830, %v1832
        %v1845 = vpack.c.bf16 %v1623, %v1619
        %v1846 = vpack.c.bf16 %v1624, %v1620
        %v1847 = vpack.c.bf16 %v1625, %v1621
        %v1848 = vpack.c.bf16 %v1626, %v1622
        %v1849 = vpack.c.bf16 %v1654, %v1651
        %v1850 = vpack.c.bf16 %v1655, %v1652
        %v1851 = vpack.c.bf16 %v1656, %v1653
        %v1852 = vpack.c.bf16 %v1650, %v1642
        %v1853 = vpack.c.bf16 %v1684, %v1681
        %v1854 = vpack.c.bf16 %v1685, %v1682
        %v1855 = vpack.c.bf16 %v1686, %v1683
        %v1856 = vpack.c.bf16 %v1680, %v1672
        %v1857 = vpack.c.bf16 %v1714, %v1711
        %v1858 = vpack.c.bf16 %v1715, %v1712
        %v1859 = vpack.c.bf16 %v1716, %v1713
        %v1860 = vpack.c.bf16 %v1710, %v1702
        %v1861 = vpack.c.bf16 %v1732, %v1726
        %v1862 = vpack.c.bf16 %v1739, %v1737
        %v1863 = vpack.c.bf16 %v1740, %v1738
        %v1864 = vpack.c.bf16 %v1736, %v1730
        %v1865 = vpack.c.bf16 %v1756, %v1750
        %v1866 = vpack.c.bf16 %v1763, %v1761
        %v1867 = vpack.c.bf16 %v1764, %v1762
        %v1868 = vpack.c.bf16 %v1760, %v1754
        %v1869 = vpack.c.bf16 %v1780, %v1774
        %v1870 = vpack.c.bf16 %v1787, %v1785
        %v1871 = vpack.c.bf16 %v1788, %v1786
        %v1872 = vpack.c.bf16 %v1784, %v1778
        %v1873 = vpack.c.bf16 %v1804, %v1798
        %v1874 = vpack.c.bf16 %v1811, %v1809
        %v1875 = vpack.c.bf16 %v1812, %v1810
        %v1876 = vpack.c.bf16 %v1808, %v1802
        %v1877 = vpack.c.bf16 %v1828, %v1822
        %v1878 = vpack.c.bf16 %v1835, %v1833
        %v1879 = vpack.c.bf16 %v1836, %v1834
        %v1880 = vpack.c.bf16 %v1832, %v1826
        %v1881 = vld [vmem:[%s8] sm:$0xff]
        %v1882 = vld [vmem:[%s8 + $0x8] sm:$0xff]
        %1884 = vset.pattern.permute.xlu0 2
        %1885 = vperm.xlu0 %1884, %v1881
        %v1886 = vpop.permute.xlu0 %1885
        %1889 = vset.pattern.permute.xlu0 2
        %1890 = vperm.xlu0 %1889, %v1882
        %v1891 = vpop.permute.xlu0 %1890
        %v1895 = vunpack.c.l.b16 %v1617
        %v1896 = vunpack.c.h.b16 %v1617
        %v1897 = vunpack.c.l.b16 %v1618
        %v1898 = vunpack.c.h.b16 %v1618
        %v1899 = vpack.c.b16 %v1897, %v1895
        %v1900 = vpack.c.b16 %v1898, %v1896
        %1938 = vrot.lane.b32.xlu0 %v1845, 21
        %v1939 = vpop.permute.xlu0 %1938
        %1940 = vrot.lane.b32.xlu0 %v1846, 21
        %v1941 = vpop.permute.xlu0 %1940
        %1942 = vrot.lane.b32.xlu0 %v1847, 21
        %v1943 = vpop.permute.xlu0 %1942
        %1944 = vrot.lane.b32.xlu0 %v1848, 21
        %v1945 = vpop.permute.xlu0 %1944
        %1946 = vrot.lane.b32.xlu0 %v1849, 21
        %v1947 = vpop.permute.xlu0 %1946
        %1948 = vrot.lane.b32.xlu0 %v1850, 21
        %v1949 = vpop.permute.xlu0 %1948
        %1950 = vrot.lane.b32.xlu0 %v1851, 21
        %v1951 = vpop.permute.xlu0 %1950
        %1952 = vrot.lane.b32.xlu0 %v1852, 21
        %v1953 = vpop.permute.xlu0 %1952
        %1954 = vrot.lane.b32.xlu0 %v1853, 21
        %v1955 = vpop.permute.xlu0 %1954
        %1956 = vrot.lane.b32.xlu0 %v1854, 21
        %v1957 = vpop.permute.xlu0 %1956
        %1958 = vrot.lane.b32.xlu0 %v1855, 21
        %v1959 = vpop.permute.xlu0 %1958
        %1960 = vrot.lane.b32.xlu0 %v1856, 21
        %v1961 = vpop.permute.xlu0 %1960
        %1962 = vrot.lane.b32.xlu0 %v1857, 21
        %v1963 = vpop.permute.xlu0 %1962
        %1964 = vrot.lane.b32.xlu0 %v1858, 21
        %v1965 = vpop.permute.xlu0 %1964
        %1966 = vrot.lane.b32.xlu0 %v1859, 21
        %v1967 = vpop.permute.xlu0 %1966
        %1968 = vrot.lane.b32.xlu0 %v1860, 21
        %v1969 = vpop.permute.xlu0 %1968
        %1970 = vrot.lane.b32.xlu0 %v1861, 21
        %v1971 = vpop.permute.xlu0 %1970
        %1972 = vrot.lane.b32.xlu0 %v1862, 21
        %v1973 = vpop.permute.xlu0 %1972
        %1974 = vrot.lane.b32.xlu0 %v1863, 21
        %v1975 = vpop.permute.xlu0 %1974
        %1976 = vrot.lane.b32.xlu0 %v1864, 21
        %v1977 = vpop.permute.xlu0 %1976
        %1978 = vrot.lane.b32.xlu0 %v1865, 21
        %v1979 = vpop.permute.xlu0 %1978
        %1980 = vrot.lane.b32.xlu0 %v1866, 21
        %v1981 = vpop.permute.xlu0 %1980
        %1982 = vrot.lane.b32.xlu0 %v1867, 21
        %v1983 = vpop.permute.xlu0 %1982
        %1984 = vrot.lane.b32.xlu0 %v1868, 21
        %v1985 = vpop.permute.xlu0 %1984
        %1986 = vrot.lane.b32.xlu0 %v1869, 21
        %v1987 = vpop.permute.xlu0 %1986
        %1988 = vrot.lane.b32.xlu0 %v1870, 21
        %v1989 = vpop.permute.xlu0 %1988
        %1990 = vrot.lane.b32.xlu0 %v1871, 21
        %v1991 = vpop.permute.xlu0 %1990
        %1992 = vrot.lane.b32.xlu0 %v1872, 21
        %v1993 = vpop.permute.xlu0 %1992
        %1994 = vrot.lane.b32.xlu0 %v1873, 21
        %v1995 = vpop.permute.xlu0 %1994
        %1996 = vrot.lane.b32.xlu0 %v1874, 21
        %v1997 = vpop.permute.xlu0 %1996
        %1998 = vrot.lane.b32.xlu0 %v1875, 21
        %v1999 = vpop.permute.xlu0 %1998
        %2000 = vrot.lane.b32.xlu0 %v1876, 21
        %v2001 = vpop.permute.xlu0 %2000
        %2002 = vrot.lane.b32.xlu0 %v1877, 21
        %v2003 = vpop.permute.xlu0 %2002
        %2004 = vrot.lane.b32.xlu0 %v1878, 21
        %v2005 = vpop.permute.xlu0 %2004
        %2006 = vrot.lane.b32.xlu0 %v1879, 21
        %v2007 = vpop.permute.xlu0 %2006
        %2008 = vrot.lane.b32.xlu0 %v1880, 21
        %v2009 = vpop.permute.xlu0 %2008
        %vm2010 = vcmask 171008
        %v2011 = vsel %vm2010, %v1939, %v1941
        %v2012 = vsel %vm2010, %v1941, %v1943
        %v2013 = vsel %vm2010, %v1943, %v1945
        %v2014 = vsel %vm2010, %v1947, %v1949
        %v2015 = vsel %vm2010, %v1949, %v1951
        %v2016 = vsel %vm2010, %v1951, %v1953
        %v2017 = vsel %vm2010, %v1955, %v1957
        %v2018 = vsel %vm2010, %v1957, %v1959
        %v2019 = vsel %vm2010, %v1959, %v1961
        %v2020 = vsel %vm2010, %v1963, %v1965
        %v2021 = vsel %vm2010, %v1965, %v1967
        %v2022 = vsel %vm2010, %v1967, %v1969
        %v2023 = vsel %vm2010, %v1971, %v1973
        %v2024 = vsel %vm2010, %v1973, %v1975
        %v2025 = vsel %vm2010, %v1975, %v1977
        %v2026 = vsel %vm2010, %v1979, %v1981
        %v2027 = vsel %vm2010, %v1981, %v1983
        %v2028 = vsel %vm2010, %v1983, %v1985
        %v2029 = vsel %vm2010, %v1987, %v1989
        %v2030 = vsel %vm2010, %v1989, %v1991
        %v2031 = vsel %vm2010, %v1991, %v1993
        %v2032 = vsel %vm2010, %v1995, %v1997
        %v2033 = vsel %vm2010, %v1997, %v1999
        %v2034 = vsel %vm2010, %v1999, %v2001
        %v2035 = vsel %vm2010, %v2003, %v2005
        %v2036 = vsel %vm2010, %v2005, %v2007
        %v2037 = vsel %vm2010, %v2007, %v2009
        %vm2065 = vcmask 130048
        %v2067 = vsel %vm2065, %v1900, 0
        %2069 = vmatprep.subr.bf16.mxu0 %v2033
        %2070 = vmatpush1.bf16.msra.mxu0 %v2032
        %2071 = vmatprep.subr.bf16.mxu0 %v2030
        %2072 = vmatpush1.bf16.msra.mxu0 %v2029
        %2073 = vmatprep.subr.bf16.mxu0 %v2027
        %2074 = vmatpush1.bf16.msra.mxu0 %v2026
        %2075 = vmatprep.subr.bf16.mxu0 %v2024
        %2076 = vmatpush1.bf16.msra.mxu0 %v2023
        %2077 = vmatprep.subr.bf16.mxu0 %v2021
        %2078 = vmatpush1.bf16.msra.mxu0 %v2020
        %2079 = vmatprep.subr.bf16.mxu0 %v2018
        %2080 = vmatpush1.bf16.msra.mxu0 %v2017
        %2081 = vmatprep.subr.bf16.mxu0 %v2015
        %2082 = vmatpush1.bf16.msra.mxu0 %v2014
        %2083 = vmatprep.subr.bf16.mxu0 %v2012
        %2084 = vmatpush1.bf16.msra.mxu0 %v2011
        %2085 = vmatprep.subr.bf16.mxu0 0
        %2086 = vmatpush2.bf16.msra.mxu0 0
        %2087 = vmatprep.subr.bf16.mxu0 0
        %2088 = vmatpush2.bf16.msra.mxu0 0
        %2089 = vmatprep.subr.bf16.mxu0 0
        %2090 = vmatpush2.bf16.msra.mxu0 0
        %2091 = vmatprep.subr.bf16.mxu0 0
        %2092 = vmatpush2.bf16.msra.mxu0 0
        %2093 = vmatprep.subr.bf16.mxu0 0
        %2094 = vmatpush2.bf16.msra.mxu0 0
        %2095 = vmatprep.subr.bf16.mxu0 0
        %2096 = vmatpush2.bf16.msra.mxu0 0
        %2097 = vmatprep.subr.bf16.mxu0 0
        %2098 = vmatpush2.bf16.msra.mxu0 0
        %2099 = vmatprep.subr.bf16.mxu0 %v2036
        %2100 = vmatpush2.bf16.msra.mxu0 %v2035
        %2101 = vmatprep.mubr.bf16.mxu0 %v2067
        %2102 = vmatmul.mubr.bf16.gmra.mxu0 %v1899
        %v2103 = vpop.f32.mrf.mxu0
        %v2104 = vadd.f32 %v1886, %v2103
        %v2105 = vpop.f32.mrf.mxu0
        %v2106 = vadd.f32 %v1886, %v2105
        %v2107 = vpop.f32.mrf.mxu0
        %v2108 = vadd.f32 %v1891, %v2107
        %v2109 = vpop.f32.mrf.mxu0
        %v2110 = vadd.f32 %v1891, %v2109
        %2111 = vdwg.mxu0
        %2112 = vmatprep.subr.bf16.mxu0 0
        %2113 = vmatpush1.bf16.msra.mxu0 %v2034
        %2114 = vmatprep.subr.bf16.mxu0 0
        %2115 = vmatpush1.bf16.msra.mxu0 %v2031
        %2116 = vmatprep.subr.bf16.mxu0 0
        %2117 = vmatpush1.bf16.msra.mxu0 %v2028
        %2118 = vmatprep.subr.bf16.mxu0 0
        %2119 = vmatpush1.bf16.msra.mxu0 %v2025
        %2120 = vmatprep.subr.bf16.mxu0 0
        %2121 = vmatpush1.bf16.msra.mxu0 %v2022
        %2122 = vmatprep.subr.bf16.mxu0 0
        %2123 = vmatpush1.bf16.msra.mxu0 %v2019
        %2124 = vmatprep.subr.bf16.mxu0 0
        %2125 = vmatpush1.bf16.msra.mxu0 %v2016
        %2126 = vmatprep.subr.bf16.mxu0 0
        %2127 = vmatpush1.bf16.msra.mxu0 %v2013
        %2128 = vmatprep.subr.bf16.mxu0 0
        %2129 = vmatpush2.bf16.msra.mxu0 0
        %2130 = vmatprep.subr.bf16.mxu0 0
        %2131 = vmatpush2.bf16.msra.mxu0 0
        %2132 = vmatprep.subr.bf16.mxu0 0
        %2133 = vmatpush2.bf16.msra.mxu0 0
        %2134 = vmatprep.subr.bf16.mxu0 0
        %2135 = vmatpush2.bf16.msra.mxu0 0
        %2136 = vmatprep.subr.bf16.mxu0 0
        %2137 = vmatpush2.bf16.msra.mxu0 0
        %2138 = vmatprep.subr.bf16.mxu0 0
        %2139 = vmatpush2.bf16.msra.mxu0 0
        %2140 = vmatprep.subr.bf16.mxu0 0
        %2141 = vmatpush2.bf16.msra.mxu0 0
        %2142 = vmatprep.subr.bf16.mxu0 0
        %2143 = vmatpush2.bf16.msra.mxu0 %v2037
        %2144 = vmatprep.mubr.bf16.mxu0 %v2067
        %2145 = vmatmul.mubr.bf16.gmra.mxu0 %v1899
        %v2146 = vpop.f32.mrf.mxu0
        %v2147 = vadd.f32 %v1886, %v2146
        %v2148 = vpop.f32.mrf.mxu0
        %v2149 = vpop.f32.mrf.mxu0
        %v2150 = vadd.f32 %v1891, %v2149
        %v2151 = vpop.f32.mrf.mxu0
        %2152 = vdwg.mxu0
        %vm2153 = vcmp.ge.f32.partialorder %v2104, 0.0
        %vm2154 = vcmp.ge.f32.partialorder %v2106, 0.0
        %vm2155 = vcmp.ge.f32.partialorder %v2147, 0.0
        %vm2156 = vcmp.ge.f32.partialorder %v2108, 0.0
        %vm2157 = vcmp.ge.f32.partialorder %v2110, 0.0
        %vm2158 = vcmp.ge.f32.partialorder %v2150, 0.0
        %s2159 = sld [smem:[#allocation3 + $0x2]]
        %v2160 = vstv %s2159
        %v2161 = vmul.f32 %v2160, %v2104
        %v2162 = vmul.f32 %v2160, %v2106
        %v2163 = vmul.f32 %v2160, %v2147
        %v2164 = vmul.f32 %v2160, %v2108
        %v2165 = vmul.f32 %v2160, %v2110
        %v2166 = vmul.f32 %v2160, %v2150
        %v2167 = vsel %vm2153, %v2104, %v2161
        %v2168 = vsel %vm2154, %v2106, %v2162
        %v2169 = vsel %vm2155, %v2147, %v2163
        %v2170 = vsel %vm2156, %v2108, %v2164
        %v2171 = vsel %vm2157, %v2110, %v2165
        %v2172 = vsel %vm2158, %v2150, %v2166
        %v2173 = vmul.f32 %v2167, %v1382
        %v2174 = vmul.f32 %v2168, %v1386
        %v2175 = vmul.f32 %v2169, %v1390
        %v2176 = vmul.f32 %v2170, %v1382
        %v2177 = vmul.f32 %v2171, %v1386
        %v2178 = vmul.f32 %v2172, %v1390
        %2179 = vst [vmem:[#allocation2 + $0x8] sm:$0xff] %v2173
        %2180 = vst [vmem:[#allocation2 + $0x10] sm:$0xff] %v2174
        %2181 = vst.msk [vmem:[#allocation2 + $0x18] sm:$0xff] %vm432, %v2175
        %2182 = vst [vmem:[#allocation2 + $0x30] sm:$0xff] %v2176
        %2183 = vst [vmem:[#allocation2 + $0x38] sm:$0xff] %v2177
        %2184 = vst.msk [vmem:[#allocation2 + $0x40] sm:$0xff] %vm432, %v2178
        %s2185 = scalar_lea.vmem [#allocation9], 16
        %v2186 = vld [vmem:[%s2185] sm:$0xff]
        %v2187 = vld [vmem:[%s2185 + $0x8] sm:$0xff]
        %v2188 = vld [vmem:[#allocation2] sm:$0xff]
        %v2189 = vld [vmem:[#allocation2 + $0x8] sm:$0xff]
        %v2190 = vld [vmem:[#allocation2 + $0x10] sm:$0xff]
        %v2191 = vld [vmem:[#allocation2 + $0x18] sm:$0xff]
        %v2192 = vld [vmem:[#allocation2 + $0x28] sm:$0xff]
        %v2193 = vld [vmem:[#allocation2 + $0x30] sm:$0xff]
        %v2194 = vld [vmem:[#allocation2 + $0x38] sm:$0xff]
        %v2195 = vld [vmem:[#allocation2 + $0x40] sm:$0xff]
        %2204 = vrot.lane.b32.xlu0 %v2188, 127
        %v2205 = vpop.permute.xlu0 %2204
        %2206 = vrot.lane.b32.xlu0 %v2189, 127
        %v2207 = vpop.permute.xlu0 %2206
        %2208 = vrot.lane.b32.xlu0 %v2190, 127
        %v2209 = vpop.permute.xlu0 %2208
        %2210 = vrot.lane.b32.xlu0 %v2191, 127
        %v2211 = vpop.permute.xlu0 %2210
        %2212 = vrot.lane.b32.xlu0 %v2192, 127
        %v2213 = vpop.permute.xlu0 %2212
        %2214 = vrot.lane.b32.xlu0 %v2193, 127
        %v2215 = vpop.permute.xlu0 %2214
        %2216 = vrot.lane.b32.xlu0 %v2194, 127
        %v2217 = vpop.permute.xlu0 %2216
        %2218 = vrot.lane.b32.xlu0 %v2195, 127
        %v2219 = vpop.permute.xlu0 %2218
        %v2220 = vsel %vm458, %v2205, %v2207
        %v2221 = vsel %vm458, %v2207, %v2209
        %v2222 = vsel %vm458, %v2209, %v2211
        %v2223 = vsel %vm458, %v2213, %v2215
        %v2224 = vsel %vm458, %v2215, %v2217
        %v2225 = vsel %vm458, %v2217, %v2219
        %2234 = vrot.lane.b32.xlu0 %v2188, 126
        %v2235 = vpop.permute.xlu0 %2234
        %2236 = vrot.lane.b32.xlu0 %v2189, 126
        %v2237 = vpop.permute.xlu0 %2236
        %2238 = vrot.lane.b32.xlu0 %v2190, 126
        %v2239 = vpop.permute.xlu0 %2238
        %2240 = vrot.lane.b32.xlu0 %v2191, 126
        %v2241 = vpop.permute.xlu0 %2240
        %2242 = vrot.lane.b32.xlu0 %v2192, 126
        %v2243 = vpop.permute.xlu0 %2242
        %2244 = vrot.lane.b32.xlu0 %v2193, 126
        %v2245 = vpop.permute.xlu0 %2244
        %2246 = vrot.lane.b32.xlu0 %v2194, 126
        %v2247 = vpop.permute.xlu0 %2246
        %2248 = vrot.lane.b32.xlu0 %v2195, 126
        %v2249 = vpop.permute.xlu0 %2248
        %v2250 = vsel %vm474, %v2235, %v2237
        %v2251 = vsel %vm474, %v2237, %v2239
        %v2252 = vsel %vm474, %v2239, %v2241
        %v2253 = vsel %vm474, %v2243, %v2245
        %v2254 = vsel %vm474, %v2245, %v2247
        %v2255 = vsel %vm474, %v2247, %v2249
        %2264 = vrot.lane.b32.xlu0 %v2188, 108
        %v2265 = vpop.permute.xlu0 %2264
        %2266 = vrot.lane.b32.xlu0 %v2189, 108
        %v2267 = vpop.permute.xlu0 %2266
        %2268 = vrot.lane.b32.xlu0 %v2190, 108
        %v2269 = vpop.permute.xlu0 %2268
        %2270 = vrot.lane.b32.xlu0 %v2191, 108
        %v2271 = vpop.permute.xlu0 %2270
        %2272 = vrot.lane.b32.xlu0 %v2192, 108
        %v2273 = vpop.permute.xlu0 %2272
        %2274 = vrot.lane.b32.xlu0 %v2193, 108
        %v2275 = vpop.permute.xlu0 %2274
        %2276 = vrot.lane.b32.xlu0 %v2194, 108
        %v2277 = vpop.permute.xlu0 %2276
        %2278 = vrot.lane.b32.xlu0 %v2195, 108
        %v2279 = vpop.permute.xlu0 %2278
        %v2280 = vsel %vm522, %v2265, %v2267
        %v2281 = vsel %vm522, %v2267, %v2269
        %v2282 = vsel %vm522, %v2269, %v2271
        %v2283 = vsel %vm522, %v2273, %v2275
        %v2284 = vsel %vm522, %v2275, %v2277
        %v2285 = vsel %vm522, %v2277, %v2279
        %2294 = vrot.lane.b32.xlu0 %v2189, 107
        %v2295 = vpop.permute.xlu0 %2294
        %2296 = vrot.lane.b32.xlu0 %v2190, 107
        %v2297 = vpop.permute.xlu0 %2296
        %2298 = vrot.lane.b32.xlu0 %v2191, 107
        %v2299 = vpop.permute.xlu0 %2298
        %2300 = vrot.lane.b32.xlu0 %v2193, 107
        %v2301 = vpop.permute.xlu0 %2300
        %2302 = vrot.lane.b32.xlu0 %v2194, 107
        %v2303 = vpop.permute.xlu0 %2302
        %2304 = vrot.lane.b32.xlu0 %v2195, 107
        %v2305 = vpop.permute.xlu0 %2304
        %v2306 = vsel %vm538, %v2295, %v2297
        %v2307 = vsel %vm538, %v2297, %v2299
        %v2308 = vsel %vm538, %v2301, %v2303
        %v2309 = vsel %vm538, %v2303, %v2305
        %2318 = vrot.lane.b32.xlu0 %v2189, 106
        %v2319 = vpop.permute.xlu0 %2318
        %2320 = vrot.lane.b32.xlu0 %v2190, 106
        %v2321 = vpop.permute.xlu0 %2320
        %2322 = vrot.lane.b32.xlu0 %v2191, 106
        %v2323 = vpop.permute.xlu0 %2322
        %2324 = vrot.lane.b32.xlu0 %v2193, 106
        %v2325 = vpop.permute.xlu0 %2324
        %2326 = vrot.lane.b32.xlu0 %v2194, 106
        %v2327 = vpop.permute.xlu0 %2326
        %2328 = vrot.lane.b32.xlu0 %v2195, 106
        %v2329 = vpop.permute.xlu0 %2328
        %v2330 = vsel %vm554, %v2319, %v2321
        %v2331 = vsel %vm554, %v2321, %v2323
        %v2332 = vsel %vm554, %v2325, %v2327
        %v2333 = vsel %vm554, %v2327, %v2329
        %2342 = vrot.lane.b32.xlu0 %v2189, 88
        %v2343 = vpop.permute.xlu0 %2342
        %2344 = vrot.lane.b32.xlu0 %v2190, 88
        %v2345 = vpop.permute.xlu0 %2344
        %2346 = vrot.lane.b32.xlu0 %v2191, 88
        %v2347 = vpop.permute.xlu0 %2346
        %2348 = vrot.lane.b32.xlu0 %v2193, 88
        %v2349 = vpop.permute.xlu0 %2348
        %2350 = vrot.lane.b32.xlu0 %v2194, 88
        %v2351 = vpop.permute.xlu0 %2350
        %2352 = vrot.lane.b32.xlu0 %v2195, 88
        %v2353 = vpop.permute.xlu0 %2352
        %v2354 = vsel %vm602, %v2343, %v2345
        %v2355 = vsel %vm602, %v2345, %v2347
        %v2356 = vsel %vm602, %v2349, %v2351
        %v2357 = vsel %vm602, %v2351, %v2353
        %2366 = vrot.lane.b32.xlu0 %v2189, 87
        %v2367 = vpop.permute.xlu0 %2366
        %2368 = vrot.lane.b32.xlu0 %v2190, 87
        %v2369 = vpop.permute.xlu0 %2368
        %2370 = vrot.lane.b32.xlu0 %v2191, 87
        %v2371 = vpop.permute.xlu0 %2370
        %2372 = vrot.lane.b32.xlu0 %v2193, 87
        %v2373 = vpop.permute.xlu0 %2372
        %2374 = vrot.lane.b32.xlu0 %v2194, 87
        %v2375 = vpop.permute.xlu0 %2374
        %2376 = vrot.lane.b32.xlu0 %v2195, 87
        %v2377 = vpop.permute.xlu0 %2376
        %v2378 = vsel %vm618, %v2367, %v2369
        %v2379 = vsel %vm618, %v2369, %v2371
        %v2380 = vsel %vm618, %v2373, %v2375
        %v2381 = vsel %vm618, %v2375, %v2377
        %2390 = vrot.lane.b32.xlu0 %v2189, 86
        %v2391 = vpop.permute.xlu0 %2390
        %2392 = vrot.lane.b32.xlu0 %v2190, 86
        %v2393 = vpop.permute.xlu0 %2392
        %2394 = vrot.lane.b32.xlu0 %v2191, 86
        %v2395 = vpop.permute.xlu0 %2394
        %2396 = vrot.lane.b32.xlu0 %v2193, 86
        %v2397 = vpop.permute.xlu0 %2396
        %2398 = vrot.lane.b32.xlu0 %v2194, 86
        %v2399 = vpop.permute.xlu0 %2398
        %2400 = vrot.lane.b32.xlu0 %v2195, 86
        %v2401 = vpop.permute.xlu0 %2400
        %v2402 = vsel %vm632, %v2391, %v2393
        %v2403 = vsel %vm632, %v2393, %v2395
        %v2404 = vsel %vm632, %v2397, %v2399
        %v2405 = vsel %vm632, %v2399, %v2401
        %v2414 = vpack.c.bf16 %v2192, %v2188
        %v2415 = vpack.c.bf16 %v2193, %v2189
        %v2416 = vpack.c.bf16 %v2194, %v2190
        %v2417 = vpack.c.bf16 %v2195, %v2191
        %v2418 = vpack.c.bf16 %v2223, %v2220
        %v2419 = vpack.c.bf16 %v2224, %v2221
        %v2420 = vpack.c.bf16 %v2225, %v2222
        %v2421 = vpack.c.bf16 %v2219, %v2211
        %v2422 = vpack.c.bf16 %v2253, %v2250
        %v2423 = vpack.c.bf16 %v2254, %v2251
        %v2424 = vpack.c.bf16 %v2255, %v2252
        %v2425 = vpack.c.bf16 %v2249, %v2241
        %v2426 = vpack.c.bf16 %v2283, %v2280
        %v2427 = vpack.c.bf16 %v2284, %v2281
        %v2428 = vpack.c.bf16 %v2285, %v2282
        %v2429 = vpack.c.bf16 %v2279, %v2271
        %v2430 = vpack.c.bf16 %v2301, %v2295
        %v2431 = vpack.c.bf16 %v2308, %v2306
        %v2432 = vpack.c.bf16 %v2309, %v2307
        %v2433 = vpack.c.bf16 %v2305, %v2299
        %v2434 = vpack.c.bf16 %v2325, %v2319
        %v2435 = vpack.c.bf16 %v2332, %v2330
        %v2436 = vpack.c.bf16 %v2333, %v2331
        %v2437 = vpack.c.bf16 %v2329, %v2323
        %v2438 = vpack.c.bf16 %v2349, %v2343
        %v2439 = vpack.c.bf16 %v2356, %v2354
        %v2440 = vpack.c.bf16 %v2357, %v2355
        %v2441 = vpack.c.bf16 %v2353, %v2347
        %v2442 = vpack.c.bf16 %v2373, %v2367
        %v2443 = vpack.c.bf16 %v2380, %v2378
        %v2444 = vpack.c.bf16 %v2381, %v2379
        %v2445 = vpack.c.bf16 %v2377, %v2371
        %v2446 = vpack.c.bf16 %v2397, %v2391
        %v2447 = vpack.c.bf16 %v2404, %v2402
        %v2448 = vpack.c.bf16 %v2405, %v2403
        %v2449 = vpack.c.bf16 %v2401, %v2395
        %v2450 = vld [vmem:[%s8] sm:$0xff]
        %v2451 = vld [vmem:[%s8 + $0x8] sm:$0xff]
        %2453 = vset.pattern.permute.xlu0 3
        %2454 = vperm.xlu0 %2453, %v2450
        %v2455 = vpop.permute.xlu0 %2454
        %2458 = vset.pattern.permute.xlu0 3
        %2459 = vperm.xlu0 %2458, %v2451
        %v2460 = vpop.permute.xlu0 %2459
        %v2464 = vunpack.c.l.b16 %v2186
        %v2465 = vunpack.c.h.b16 %v2186
        %v2466 = vunpack.c.l.b16 %v2187
        %v2467 = vunpack.c.h.b16 %v2187
        %v2468 = vpack.c.b16 %v2466, %v2464
        %v2469 = vpack.c.b16 %v2467, %v2465
        %2507 = vrot.lane.b32.xlu0 %v2414, 21
        %v2508 = vpop.permute.xlu0 %2507
        %2509 = vrot.lane.b32.xlu0 %v2415, 21
        %v2510 = vpop.permute.xlu0 %2509
        %2511 = vrot.lane.b32.xlu0 %v2416, 21
        %v2512 = vpop.permute.xlu0 %2511
        %2513 = vrot.lane.b32.xlu0 %v2417, 21
        %v2514 = vpop.permute.xlu0 %2513
        %2515 = vrot.lane.b32.xlu0 %v2418, 21
        %v2516 = vpop.permute.xlu0 %2515
        %2517 = vrot.lane.b32.xlu0 %v2419, 21
        %v2518 = vpop.permute.xlu0 %2517
        %2519 = vrot.lane.b32.xlu0 %v2420, 21
        %v2520 = vpop.permute.xlu0 %2519
        %2521 = vrot.lane.b32.xlu0 %v2421, 21
        %v2522 = vpop.permute.xlu0 %2521
        %2523 = vrot.lane.b32.xlu0 %v2422, 21
        %v2524 = vpop.permute.xlu0 %2523
        %2525 = vrot.lane.b32.xlu0 %v2423, 21
        %v2526 = vpop.permute.xlu0 %2525
        %2527 = vrot.lane.b32.xlu0 %v2424, 21
        %v2528 = vpop.permute.xlu0 %2527
        %2529 = vrot.lane.b32.xlu0 %v2425, 21
        %v2530 = vpop.permute.xlu0 %2529
        %2531 = vrot.lane.b32.xlu0 %v2426, 21
        %v2532 = vpop.permute.xlu0 %2531
        %2533 = vrot.lane.b32.xlu0 %v2427, 21
        %v2534 = vpop.permute.xlu0 %2533
        %2535 = vrot.lane.b32.xlu0 %v2428, 21
        %v2536 = vpop.permute.xlu0 %2535
        %2537 = vrot.lane.b32.xlu0 %v2429, 21
        %v2538 = vpop.permute.xlu0 %2537
        %2539 = vrot.lane.b32.xlu0 %v2430, 21
        %v2540 = vpop.permute.xlu0 %2539
        %2541 = vrot.lane.b32.xlu0 %v2431, 21
        %v2542 = vpop.permute.xlu0 %2541
        %2543 = vrot.lane.b32.xlu0 %v2432, 21
        %v2544 = vpop.permute.xlu0 %2543
        %2545 = vrot.lane.b32.xlu0 %v2433, 21
        %v2546 = vpop.permute.xlu0 %2545
        %2547 = vrot.lane.b32.xlu0 %v2434, 21
        %v2548 = vpop.permute.xlu0 %2547
        %2549 = vrot.lane.b32.xlu0 %v2435, 21
        %v2550 = vpop.permute.xlu0 %2549
        %2551 = vrot.lane.b32.xlu0 %v2436, 21
        %v2552 = vpop.permute.xlu0 %2551
        %2553 = vrot.lane.b32.xlu0 %v2437, 21
        %v2554 = vpop.permute.xlu0 %2553
        %2555 = vrot.lane.b32.xlu0 %v2438, 21
        %v2556 = vpop.permute.xlu0 %2555
        %2557 = vrot.lane.b32.xlu0 %v2439, 21
        %v2558 = vpop.permute.xlu0 %2557
        %2559 = vrot.lane.b32.xlu0 %v2440, 21
        %v2560 = vpop.permute.xlu0 %2559
        %2561 = vrot.lane.b32.xlu0 %v2441, 21
        %v2562 = vpop.permute.xlu0 %2561
        %2563 = vrot.lane.b32.xlu0 %v2442, 21
        %v2564 = vpop.permute.xlu0 %2563
        %2565 = vrot.lane.b32.xlu0 %v2443, 21
        %v2566 = vpop.permute.xlu0 %2565
        %2567 = vrot.lane.b32.xlu0 %v2444, 21
        %v2568 = vpop.permute.xlu0 %2567
        %2569 = vrot.lane.b32.xlu0 %v2445, 21
        %v2570 = vpop.permute.xlu0 %2569
        %2571 = vrot.lane.b32.xlu0 %v2446, 21
        %v2572 = vpop.permute.xlu0 %2571
        %2573 = vrot.lane.b32.xlu0 %v2447, 21
        %v2574 = vpop.permute.xlu0 %2573
        %2575 = vrot.lane.b32.xlu0 %v2448, 21
        %v2576 = vpop.permute.xlu0 %2575
        %2577 = vrot.lane.b32.xlu0 %v2449, 21
        %v2578 = vpop.permute.xlu0 %2577
        %v2579 = vsel %vm2010, %v2508, %v2510
        %v2580 = vsel %vm2010, %v2510, %v2512
        %v2581 = vsel %vm2010, %v2512, %v2514
        %v2582 = vsel %vm2010, %v2516, %v2518
        %v2583 = vsel %vm2010, %v2518, %v2520
        %v2584 = vsel %vm2010, %v2520, %v2522
        %v2585 = vsel %vm2010, %v2524, %v2526
        %v2586 = vsel %vm2010, %v2526, %v2528
        %v2587 = vsel %vm2010, %v2528, %v2530
        %v2588 = vsel %vm2010, %v2532, %v2534
        %v2589 = vsel %vm2010, %v2534, %v2536
        %v2590 = vsel %vm2010, %v2536, %v2538
        %v2591 = vsel %vm2010, %v2540, %v2542
        %v2592 = vsel %vm2010, %v2542, %v2544
        %v2593 = vsel %vm2010, %v2544, %v2546
        %v2594 = vsel %vm2010, %v2548, %v2550
        %v2595 = vsel %vm2010, %v2550, %v2552
        %v2596 = vsel %vm2010, %v2552, %v2554
        %v2597 = vsel %vm2010, %v2556, %v2558
        %v2598 = vsel %vm2010, %v2558, %v2560
        %v2599 = vsel %vm2010, %v2560, %v2562
        %v2600 = vsel %vm2010, %v2564, %v2566
        %v2601 = vsel %vm2010, %v2566, %v2568
        %v2602 = vsel %vm2010, %v2568, %v2570
        %v2603 = vsel %vm2010, %v2572, %v2574
        %v2604 = vsel %vm2010, %v2574, %v2576
        %v2605 = vsel %vm2010, %v2576, %v2578
        %v2634 = vsel %vm2065, %v2469, 0
        %2636 = vmatprep.subr.bf16.mxu0 %v2601
        %2637 = vmatpush1.bf16.msra.mxu0 %v2600
        %2638 = vmatprep.subr.bf16.mxu0 %v2598
        %2639 = vmatpush1.bf16.msra.mxu0 %v2597
        %2640 = vmatprep.subr.bf16.mxu0 %v2595
        %2641 = vmatpush1.bf16.msra.mxu0 %v2594
        %2642 = vmatprep.subr.bf16.mxu0 %v2592
        %2643 = vmatpush1.bf16.msra.mxu0 %v2591
        %2644 = vmatprep.subr.bf16.mxu0 %v2589
        %2645 = vmatpush1.bf16.msra.mxu0 %v2588
        %2646 = vmatprep.subr.bf16.mxu0 %v2586
        %2647 = vmatpush1.bf16.msra.mxu0 %v2585
        %2648 = vmatprep.subr.bf16.mxu0 %v2583
        %2649 = vmatpush1.bf16.msra.mxu0 %v2582
        %2650 = vmatprep.subr.bf16.mxu0 %v2580
        %2651 = vmatpush1.bf16.msra.mxu0 %v2579
        %2652 = vmatprep.subr.bf16.mxu0 0
        %2653 = vmatpush2.bf16.msra.mxu0 0
        %2654 = vmatprep.subr.bf16.mxu0 0
        %2655 = vmatpush2.bf16.msra.mxu0 0
        %2656 = vmatprep.subr.bf16.mxu0 0
        %2657 = vmatpush2.bf16.msra.mxu0 0
        %2658 = vmatprep.subr.bf16.mxu0 0
        %2659 = vmatpush2.bf16.msra.mxu0 0
        %2660 = vmatprep.subr.bf16.mxu0 0
        %2661 = vmatpush2.bf16.msra.mxu0 0
        %2662 = vmatprep.subr.bf16.mxu0 0
        %2663 = vmatpush2.bf16.msra.mxu0 0
        %2664 = vmatprep.subr.bf16.mxu0 0
        %2665 = vmatpush2.bf16.msra.mxu0 0
        %2666 = vmatprep.subr.bf16.mxu0 %v2604
        %2667 = vmatpush2.bf16.msra.mxu0 %v2603
        %2668 = vmatprep.mubr.bf16.mxu0 %v2634
        %2669 = vmatmul.mubr.bf16.gmra.mxu0 %v2468
        %v2670 = vpop.f32.mrf.mxu0
        %v2671 = vadd.f32 %v2455, %v2670
        %v2672 = vpop.f32.mrf.mxu0
        %v2673 = vadd.f32 %v2455, %v2672
        %v2674 = vpop.f32.mrf.mxu0
        %v2675 = vadd.f32 %v2460, %v2674
        %v2676 = vpop.f32.mrf.mxu0
        %v2677 = vadd.f32 %v2460, %v2676
        %2678 = vdwg.mxu0
        %2679 = vmatprep.subr.bf16.mxu0 0
        %2680 = vmatpush1.bf16.msra.mxu0 %v2602
        %2681 = vmatprep.subr.bf16.mxu0 0
        %2682 = vmatpush1.bf16.msra.mxu0 %v2599
        %2683 = vmatprep.subr.bf16.mxu0 0
        %2684 = vmatpush1.bf16.msra.mxu0 %v2596
        %2685 = vmatprep.subr.bf16.mxu0 0
        %2686 = vmatpush1.bf16.msra.mxu0 %v2593
        %2687 = vmatprep.subr.bf16.mxu0 0
        %2688 = vmatpush1.bf16.msra.mxu0 %v2590
        %2689 = vmatprep.subr.bf16.mxu0 0
        %2690 = vmatpush1.bf16.msra.mxu0 %v2587
        %2691 = vmatprep.subr.bf16.mxu0 0
        %2692 = vmatpush1.bf16.msra.mxu0 %v2584
        %2693 = vmatprep.subr.bf16.mxu0 0
        %2694 = vmatpush1.bf16.msra.mxu0 %v2581
        %2695 = vmatprep.subr.bf16.mxu0 0
        %2696 = vmatpush2.bf16.msra.mxu0 0
        %2697 = vmatprep.subr.bf16.mxu0 0
        %2698 = vmatpush2.bf16.msra.mxu0 0
        %2699 = vmatprep.subr.bf16.mxu0 0
        %2700 = vmatpush2.bf16.msra.mxu0 0
        %2701 = vmatprep.subr.bf16.mxu0 0
        %2702 = vmatpush2.bf16.msra.mxu0 0
        %2703 = vmatprep.subr.bf16.mxu0 0
        %2704 = vmatpush2.bf16.msra.mxu0 0
        %2705 = vmatprep.subr.bf16.mxu0 0
        %2706 = vmatpush2.bf16.msra.mxu0 0
        %2707 = vmatprep.subr.bf16.mxu0 0
        %2708 = vmatpush2.bf16.msra.mxu0 0
        %2709 = vmatprep.subr.bf16.mxu0 0
        %2710 = vmatpush2.bf16.msra.mxu0 %v2605
        %2711 = vmatprep.mubr.bf16.mxu0 %v2634
        %2712 = vmatmul.mubr.bf16.gmra.mxu0 %v2468
        %v2713 = vpop.f32.mrf.mxu0
        %v2714 = vadd.f32 %v2455, %v2713
        %v2715 = vpop.f32.mrf.mxu0
        %v2716 = vpop.f32.mrf.mxu0
        %v2717 = vadd.f32 %v2460, %v2716
        %v2718 = vpop.f32.mrf.mxu0
        %2719 = vdwg.mxu0
        %vm2720 = vcmp.ge.f32.partialorder %v2671, 0.0
        %vm2721 = vcmp.ge.f32.partialorder %v2673, 0.0
        %vm2722 = vcmp.ge.f32.partialorder %v2714, 0.0
        %vm2723 = vcmp.ge.f32.partialorder %v2675, 0.0
        %vm2724 = vcmp.ge.f32.partialorder %v2677, 0.0
        %vm2725 = vcmp.ge.f32.partialorder %v2717, 0.0
        %s2726 = sld [smem:[#allocation3 + $0x3]]
        %v2727 = vstv %s2726
        %v2728 = vmul.f32 %v2727, %v2671
        %v2729 = vmul.f32 %v2727, %v2673
        %v2730 = vmul.f32 %v2727, %v2714
        %v2731 = vmul.f32 %v2727, %v2675
        %v2732 = vmul.f32 %v2727, %v2677
        %v2733 = vmul.f32 %v2727, %v2717
        %v2734 = vsel %vm2720, %v2671, %v2728
        %v2735 = vsel %vm2721, %v2673, %v2729
        %v2736 = vsel %vm2722, %v2714, %v2730
        %v2737 = vsel %vm2723, %v2675, %v2731
        %v2738 = vsel %vm2724, %v2677, %v2732
        %v2739 = vsel %vm2725, %v2717, %v2733
        %v2740 = vmul.f32 %v2734, %v1382
        %v2741 = vmul.f32 %v2735, %v1386
        %v2742 = vmul.f32 %v2736, %v1390
        %v2743 = vmul.f32 %v2737, %v1382
        %v2744 = vmul.f32 %v2738, %v1386
        %v2745 = vmul.f32 %v2739, %v1390
        %2746 = vst [vmem:[#allocation2 + $0x8] sm:$0xff] %v2740
        %2747 = vst [vmem:[#allocation2 + $0x10] sm:$0xff] %v2741
        %2748 = vst.msk [vmem:[#allocation2 + $0x18] sm:$0xff] %vm432, %v2742
        %2749 = vst [vmem:[#allocation2 + $0x30] sm:$0xff] %v2743
        %2750 = vst [vmem:[#allocation2 + $0x38] sm:$0xff] %v2744
        %2751 = vst.msk [vmem:[#allocation2 + $0x40] sm:$0xff] %vm432, %v2745
        %s2752 = scalar_lea.vmem [#allocation9], 32
        %v2753 = vld [vmem:[%s2752] sm:$0xff]
        %v2754 = vld [vmem:[%s2752 + $0x8] sm:$0xff]
        %v2755 = vld [vmem:[#allocation2] sm:$0xff]
        %v2756 = vld [vmem:[#allocation2 + $0x8] sm:$0xff]
        %v2757 = vld [vmem:[#allocation2 + $0x10] sm:$0xff]
        %v2758 = vld [vmem:[#allocation2 + $0x18] sm:$0xff]
        %v2759 = vld [vmem:[#allocation2 + $0x28] sm:$0xff]
        %v2760 = vld [vmem:[#allocation2 + $0x30] sm:$0xff]
        %v2761 = vld [vmem:[#allocation2 + $0x38] sm:$0xff]
        %v2762 = vld [vmem:[#allocation2 + $0x40] sm:$0xff]
        %2771 = vrot.lane.b32.xlu0 %v2755, 127
        %v2772 = vpop.permute.xlu0 %2771
        %2773 = vrot.lane.b32.xlu0 %v2756, 127
        %v2774 = vpop.permute.xlu0 %2773
        %2775 = vrot.lane.b32.xlu0 %v2757, 127
        %v2776 = vpop.permute.xlu0 %2775
        %2777 = vrot.lane.b32.xlu0 %v2758, 127
        %v2778 = vpop.permute.xlu0 %2777
        %2779 = vrot.lane.b32.xlu0 %v2759, 127
        %v2780 = vpop.permute.xlu0 %2779
        %2781 = vrot.lane.b32.xlu0 %v2760, 127
        %v2782 = vpop.permute.xlu0 %2781
        %2783 = vrot.lane.b32.xlu0 %v2761, 127
        %v2784 = vpop.permute.xlu0 %2783
        %2785 = vrot.lane.b32.xlu0 %v2762, 127
        %v2786 = vpop.permute.xlu0 %2785
        %v2787 = vsel %vm458, %v2772, %v2774
        %v2788 = vsel %vm458, %v2774, %v2776
        %v2789 = vsel %vm458, %v2776, %v2778
        %v2790 = vsel %vm458, %v2780, %v2782
        %v2791 = vsel %vm458, %v2782, %v2784
        %v2792 = vsel %vm458, %v2784, %v2786
        %2801 = vrot.lane.b32.xlu0 %v2755, 126
        %v2802 = vpop.permute.xlu0 %2801
        %2803 = vrot.lane.b32.xlu0 %v2756, 126
        %v2804 = vpop.permute.xlu0 %2803
        %2805 = vrot.lane.b32.xlu0 %v2757, 126
        %v2806 = vpop.permute.xlu0 %2805
        %2807 = vrot.lane.b32.xlu0 %v2758, 126
        %v2808 = vpop.permute.xlu0 %2807
        %2809 = vrot.lane.b32.xlu0 %v2759, 126
        %v2810 = vpop.permute.xlu0 %2809
        %2811 = vrot.lane.b32.xlu0 %v2760, 126
        %v2812 = vpop.permute.xlu0 %2811
        %2813 = vrot.lane.b32.xlu0 %v2761, 126
        %v2814 = vpop.permute.xlu0 %2813
        %2815 = vrot.lane.b32.xlu0 %v2762, 126
        %v2816 = vpop.permute.xlu0 %2815
        %v2817 = vsel %vm474, %v2802, %v2804
        %v2818 = vsel %vm474, %v2804, %v2806
        %v2819 = vsel %vm474, %v2806, %v2808
        %v2820 = vsel %vm474, %v2810, %v2812
        %v2821 = vsel %vm474, %v2812, %v2814
        %v2822 = vsel %vm474, %v2814, %v2816
        %2831 = vrot.lane.b32.xlu0 %v2755, 108
        %v2832 = vpop.permute.xlu0 %2831
        %2833 = vrot.lane.b32.xlu0 %v2756, 108
        %v2834 = vpop.permute.xlu0 %2833
        %2835 = vrot.lane.b32.xlu0 %v2757, 108
        %v2836 = vpop.permute.xlu0 %2835
        %2837 = vrot.lane.b32.xlu0 %v2758, 108
        %v2838 = vpop.permute.xlu0 %2837
        %2839 = vrot.lane.b32.xlu0 %v2759, 108
        %v2840 = vpop.permute.xlu0 %2839
        %2841 = vrot.lane.b32.xlu0 %v2760, 108
        %v2842 = vpop.permute.xlu0 %2841
        %2843 = vrot.lane.b32.xlu0 %v2761, 108
        %v2844 = vpop.permute.xlu0 %2843
        %2845 = vrot.lane.b32.xlu0 %v2762, 108
        %v2846 = vpop.permute.xlu0 %2845
        %v2847 = vsel %vm522, %v2832, %v2834
        %v2848 = vsel %vm522, %v2834, %v2836
        %v2849 = vsel %vm522, %v2836, %v2838
        %v2850 = vsel %vm522, %v2840, %v2842
        %v2851 = vsel %vm522, %v2842, %v2844
        %v2852 = vsel %vm522, %v2844, %v2846
        %2861 = vrot.lane.b32.xlu0 %v2756, 107
        %v2862 = vpop.permute.xlu0 %2861
        %2863 = vrot.lane.b32.xlu0 %v2757, 107
        %v2864 = vpop.permute.xlu0 %2863
        %2865 = vrot.lane.b32.xlu0 %v2758, 107
        %v2866 = vpop.permute.xlu0 %2865
        %2867 = vrot.lane.b32.xlu0 %v2760, 107
        %v2868 = vpop.permute.xlu0 %2867
        %2869 = vrot.lane.b32.xlu0 %v2761, 107
        %v2870 = vpop.permute.xlu0 %2869
        %2871 = vrot.lane.b32.xlu0 %v2762, 107
        %v2872 = vpop.permute.xlu0 %2871
        %v2873 = vsel %vm538, %v2862, %v2864
        %v2874 = vsel %vm538, %v2864, %v2866
        %v2875 = vsel %vm538, %v2868, %v2870
        %v2876 = vsel %vm538, %v2870, %v2872
        %2885 = vrot.lane.b32.xlu0 %v2756, 106
        %v2886 = vpop.permute.xlu0 %2885
        %2887 = vrot.lane.b32.xlu0 %v2757, 106
        %v2888 = vpop.permute.xlu0 %2887
        %2889 = vrot.lane.b32.xlu0 %v2758, 106
        %v2890 = vpop.permute.xlu0 %2889
        %2891 = vrot.lane.b32.xlu0 %v2760, 106
        %v2892 = vpop.permute.xlu0 %2891
        %2893 = vrot.lane.b32.xlu0 %v2761, 106
        %v2894 = vpop.permute.xlu0 %2893
        %2895 = vrot.lane.b32.xlu0 %v2762, 106
        %v2896 = vpop.permute.xlu0 %2895
        %v2897 = vsel %vm554, %v2886, %v2888
        %v2898 = vsel %vm554, %v2888, %v2890
        %v2899 = vsel %vm554, %v2892, %v2894
        %v2900 = vsel %vm554, %v2894, %v2896
        %2909 = vrot.lane.b32.xlu0 %v2756, 88
        %v2910 = vpop.permute.xlu0 %2909
        %2911 = vrot.lane.b32.xlu0 %v2757, 88
        %v2912 = vpop.permute.xlu0 %2911
        %2913 = vrot.lane.b32.xlu0 %v2758, 88
        %v2914 = vpop.permute.xlu0 %2913
        %2915 = vrot.lane.b32.xlu0 %v2760, 88
        %v2916 = vpop.permute.xlu0 %2915
        %2917 = vrot.lane.b32.xlu0 %v2761, 88
        %v2918 = vpop.permute.xlu0 %2917
        %2919 = vrot.lane.b32.xlu0 %v2762, 88
        %v2920 = vpop.permute.xlu0 %2919
        %v2921 = vsel %vm602, %v2910, %v2912
        %v2922 = vsel %vm602, %v2912, %v2914
        %v2923 = vsel %vm602, %v2916, %v2918
        %v2924 = vsel %vm602, %v2918, %v2920
        %2933 = vrot.lane.b32.xlu0 %v2756, 87
        %v2934 = vpop.permute.xlu0 %2933
        %2935 = vrot.lane.b32.xlu0 %v2757, 87
        %v2936 = vpop.permute.xlu0 %2935
        %2937 = vrot.lane.b32.xlu0 %v2758, 87
        %v2938 = vpop.permute.xlu0 %2937
        %2939 = vrot.lane.b32.xlu0 %v2760, 87
        %v2940 = vpop.permute.xlu0 %2939
        %2941 = vrot.lane.b32.xlu0 %v2761, 87
        %v2942 = vpop.permute.xlu0 %2941
        %2943 = vrot.lane.b32.xlu0 %v2762, 87
        %v2944 = vpop.permute.xlu0 %2943
        %v2945 = vsel %vm618, %v2934, %v2936
        %v2946 = vsel %vm618, %v2936, %v2938
        %v2947 = vsel %vm618, %v2940, %v2942
        %v2948 = vsel %vm618, %v2942, %v2944
        %2957 = vrot.lane.b32.xlu0 %v2756, 86
        %v2958 = vpop.permute.xlu0 %2957
        %2959 = vrot.lane.b32.xlu0 %v2757, 86
        %v2960 = vpop.permute.xlu0 %2959
        %2961 = vrot.lane.b32.xlu0 %v2758, 86
        %v2962 = vpop.permute.xlu0 %2961
        %2963 = vrot.lane.b32.xlu0 %v2760, 86
        %v2964 = vpop.permute.xlu0 %2963
        %2965 = vrot.lane.b32.xlu0 %v2761, 86
        %v2966 = vpop.permute.xlu0 %2965
        %2967 = vrot.lane.b32.xlu0 %v2762, 86
        %v2968 = vpop.permute.xlu0 %2967
        %v2969 = vsel %vm632, %v2958, %v2960
        %v2970 = vsel %vm632, %v2960, %v2962
        %v2971 = vsel %vm632, %v2964, %v2966
        %v2972 = vsel %vm632, %v2966, %v2968
        %v2981 = vpack.c.bf16 %v2759, %v2755
        %v2982 = vpack.c.bf16 %v2760, %v2756
        %v2983 = vpack.c.bf16 %v2761, %v2757
        %v2984 = vpack.c.bf16 %v2762, %v2758
        %v2985 = vpack.c.bf16 %v2790, %v2787
        %v2986 = vpack.c.bf16 %v2791, %v2788
        %v2987 = vpack.c.bf16 %v2792, %v2789
        %v2988 = vpack.c.bf16 %v2786, %v2778
        %v2989 = vpack.c.bf16 %v2820, %v2817
        %v2990 = vpack.c.bf16 %v2821, %v2818
        %v2991 = vpack.c.bf16 %v2822, %v2819
        %v2992 = vpack.c.bf16 %v2816, %v2808
        %v2993 = vpack.c.bf16 %v2850, %v2847
        %v2994 = vpack.c.bf16 %v2851, %v2848
        %v2995 = vpack.c.bf16 %v2852, %v2849
        %v2996 = vpack.c.bf16 %v2846, %v2838
        %v2997 = vpack.c.bf16 %v2868, %v2862
        %v2998 = vpack.c.bf16 %v2875, %v2873
        %v2999 = vpack.c.bf16 %v2876, %v2874
        %v3000 = vpack.c.bf16 %v2872, %v2866
        %v3001 = vpack.c.bf16 %v2892, %v2886
        %v3002 = vpack.c.bf16 %v2899, %v2897
        %v3003 = vpack.c.bf16 %v2900, %v2898
        %v3004 = vpack.c.bf16 %v2896, %v2890
        %v3005 = vpack.c.bf16 %v2916, %v2910
        %v3006 = vpack.c.bf16 %v2923, %v2921
        %v3007 = vpack.c.bf16 %v2924, %v2922
        %v3008 = vpack.c.bf16 %v2920, %v2914
        %v3009 = vpack.c.bf16 %v2940, %v2934
        %v3010 = vpack.c.bf16 %v2947, %v2945
        %v3011 = vpack.c.bf16 %v2948, %v2946
        %v3012 = vpack.c.bf16 %v2944, %v2938
        %v3013 = vpack.c.bf16 %v2964, %v2958
        %v3014 = vpack.c.bf16 %v2971, %v2969
        %v3015 = vpack.c.bf16 %v2972, %v2970
        %v3016 = vpack.c.bf16 %v2968, %v2962
        %v3017 = vld [vmem:[%s8] sm:$0xff]
        %v3018 = vld [vmem:[%s8 + $0x8] sm:$0xff]
        %3020 = vset.pattern.permute.xlu0 4
        %3021 = vperm.xlu0 %3020, %v3017
        %v3022 = vpop.permute.xlu0 %3021
        %3025 = vset.pattern.permute.xlu0 4
        %3026 = vperm.xlu0 %3025, %v3018
        %v3027 = vpop.permute.xlu0 %3026
        %v3031 = vunpack.c.l.b16 %v2753
        %v3032 = vunpack.c.h.b16 %v2753
        %v3033 = vunpack.c.l.b16 %v2754
        %v3034 = vunpack.c.h.b16 %v2754
        %v3035 = vpack.c.b16 %v3033, %v3031
        %v3036 = vpack.c.b16 %v3034, %v3032
        %3074 = vrot.lane.b32.xlu0 %v2981, 21
        %v3075 = vpop.permute.xlu0 %3074
        %3076 = vrot.lane.b32.xlu0 %v2982, 21
        %v3077 = vpop.permute.xlu0 %3076
        %3078 = vrot.lane.b32.xlu0 %v2983, 21
        %v3079 = vpop.permute.xlu0 %3078
        %3080 = vrot.lane.b32.xlu0 %v2984, 21
        %v3081 = vpop.permute.xlu0 %3080
        %3082 = vrot.lane.b32.xlu0 %v2985, 21
        %v3083 = vpop.permute.xlu0 %3082
        %3084 = vrot.lane.b32.xlu0 %v2986, 21
        %v3085 = vpop.permute.xlu0 %3084
        %3086 = vrot.lane.b32.xlu0 %v2987, 21
        %v3087 = vpop.permute.xlu0 %3086
        %3088 = vrot.lane.b32.xlu0 %v2988, 21
        %v3089 = vpop.permute.xlu0 %3088
        %3090 = vrot.lane.b32.xlu0 %v2989, 21
        %v3091 = vpop.permute.xlu0 %3090
        %3092 = vrot.lane.b32.xlu0 %v2990, 21
        %v3093 = vpop.permute.xlu0 %3092
        %3094 = vrot.lane.b32.xlu0 %v2991, 21
        %v3095 = vpop.permute.xlu0 %3094
        %3096 = vrot.lane.b32.xlu0 %v2992, 21
        %v3097 = vpop.permute.xlu0 %3096
        %3098 = vrot.lane.b32.xlu0 %v2993, 21
        %v3099 = vpop.permute.xlu0 %3098
        %3100 = vrot.lane.b32.xlu0 %v2994, 21
        %v3101 = vpop.permute.xlu0 %3100
        %3102 = vrot.lane.b32.xlu0 %v2995, 21
        %v3103 = vpop.permute.xlu0 %3102
        %3104 = vrot.lane.b32.xlu0 %v2996, 21
        %v3105 = vpop.permute.xlu0 %3104
        %3106 = vrot.lane.b32.xlu0 %v2997, 21
        %v3107 = vpop.permute.xlu0 %3106
        %3108 = vrot.lane.b32.xlu0 %v2998, 21
        %v3109 = vpop.permute.xlu0 %3108
        %3110 = vrot.lane.b32.xlu0 %v2999, 21
        %v3111 = vpop.permute.xlu0 %3110
        %3112 = vrot.lane.b32.xlu0 %v3000, 21
        %v3113 = vpop.permute.xlu0 %3112
        %3114 = vrot.lane.b32.xlu0 %v3001, 21
        %v3115 = vpop.permute.xlu0 %3114
        %3116 = vrot.lane.b32.xlu0 %v3002, 21
        %v3117 = vpop.permute.xlu0 %3116
        %3118 = vrot.lane.b32.xlu0 %v3003, 21
        %v3119 = vpop.permute.xlu0 %3118
        %3120 = vrot.lane.b32.xlu0 %v3004, 21
        %v3121 = vpop.permute.xlu0 %3120
        %3122 = vrot.lane.b32.xlu0 %v3005, 21
        %v3123 = vpop.permute.xlu0 %3122
        %3124 = vrot.lane.b32.xlu0 %v3006, 21
        %v3125 = vpop.permute.xlu0 %3124
        %3126 = vrot.lane.b32.xlu0 %v3007, 21
        %v3127 = vpop.permute.xlu0 %3126
        %3128 = vrot.lane.b32.xlu0 %v3008, 21
        %v3129 = vpop.permute.xlu0 %3128
        %3130 = vrot.lane.b32.xlu0 %v3009, 21
        %v3131 = vpop.permute.xlu0 %3130
        %3132 = vrot.lane.b32.xlu0 %v3010, 21
        %v3133 = vpop.permute.xlu0 %3132
        %3134 = vrot.lane.b32.xlu0 %v3011, 21
        %v3135 = vpop.permute.xlu0 %3134
        %3136 = vrot.lane.b32.xlu0 %v3012, 21
        %v3137 = vpop.permute.xlu0 %3136
        %3138 = vrot.lane.b32.xlu0 %v3013, 21
        %v3139 = vpop.permute.xlu0 %3138
        %3140 = vrot.lane.b32.xlu0 %v3014, 21
        %v3141 = vpop.permute.xlu0 %3140
        %3142 = vrot.lane.b32.xlu0 %v3015, 21
        %v3143 = vpop.permute.xlu0 %3142
        %3144 = vrot.lane.b32.xlu0 %v3016, 21
        %v3145 = vpop.permute.xlu0 %3144
        %v3146 = vsel %vm2010, %v3075, %v3077
        %v3147 = vsel %vm2010, %v3077, %v3079
        %v3148 = vsel %vm2010, %v3079, %v3081
        %v3149 = vsel %vm2010, %v3083, %v3085
        %v3150 = vsel %vm2010, %v3085, %v3087
        %v3151 = vsel %vm2010, %v3087, %v3089
        %v3152 = vsel %vm2010, %v3091, %v3093
        %v3153 = vsel %vm2010, %v3093, %v3095
        %v3154 = vsel %vm2010, %v3095, %v3097
        %v3155 = vsel %vm2010, %v3099, %v3101
        %v3156 = vsel %vm2010, %v3101, %v3103
        %v3157 = vsel %vm2010, %v3103, %v3105
        %v3158 = vsel %vm2010, %v3107, %v3109
        %v3159 = vsel %vm2010, %v3109, %v3111
        %v3160 = vsel %vm2010, %v3111, %v3113
        %v3161 = vsel %vm2010, %v3115, %v3117
        %v3162 = vsel %vm2010, %v3117, %v3119
        %v3163 = vsel %vm2010, %v3119, %v3121
        %v3164 = vsel %vm2010, %v3123, %v3125
        %v3165 = vsel %vm2010, %v3125, %v3127
        %v3166 = vsel %vm2010, %v3127, %v3129
        %v3167 = vsel %vm2010, %v3131, %v3133
        %v3168 = vsel %vm2010, %v3133, %v3135
        %v3169 = vsel %vm2010, %v3135, %v3137
        %v3170 = vsel %vm2010, %v3139, %v3141
        %v3171 = vsel %vm2010, %v3141, %v3143
        %v3172 = vsel %vm2010, %v3143, %v3145
        %v3201 = vsel %vm2065, %v3036, 0
        %3203 = vmatprep.subr.bf16.mxu0 %v3168
        %3204 = vmatpush1.bf16.msra.mxu0 %v3167
        %3205 = vmatprep.subr.bf16.mxu0 %v3165
        %3206 = vmatpush1.bf16.msra.mxu0 %v3164
        %3207 = vmatprep.subr.bf16.mxu0 %v3162
        %3208 = vmatpush1.bf16.msra.mxu0 %v3161
        %3209 = vmatprep.subr.bf16.mxu0 %v3159
        %3210 = vmatpush1.bf16.msra.mxu0 %v3158
        %3211 = vmatprep.subr.bf16.mxu0 %v3156
        %3212 = vmatpush1.bf16.msra.mxu0 %v3155
        %3213 = vmatprep.subr.bf16.mxu0 %v3153
        %3214 = vmatpush1.bf16.msra.mxu0 %v3152
        %3215 = vmatprep.subr.bf16.mxu0 %v3150
        %3216 = vmatpush1.bf16.msra.mxu0 %v3149
        %3217 = vmatprep.subr.bf16.mxu0 %v3147
        %3218 = vmatpush1.bf16.msra.mxu0 %v3146
        %3219 = vmatprep.subr.bf16.mxu0 0
        %3220 = vmatpush2.bf16.msra.mxu0 0
        %3221 = vmatprep.subr.bf16.mxu0 0
        %3222 = vmatpush2.bf16.msra.mxu0 0
        %3223 = vmatprep.subr.bf16.mxu0 0
        %3224 = vmatpush2.bf16.msra.mxu0 0
        %3225 = vmatprep.subr.bf16.mxu0 0
        %3226 = vmatpush2.bf16.msra.mxu0 0
        %3227 = vmatprep.subr.bf16.mxu0 0
        %3228 = vmatpush2.bf16.msra.mxu0 0
        %3229 = vmatprep.subr.bf16.mxu0 0
        %3230 = vmatpush2.bf16.msra.mxu0 0
        %3231 = vmatprep.subr.bf16.mxu0 0
        %3232 = vmatpush2.bf16.msra.mxu0 0
        %3233 = vmatprep.subr.bf16.mxu0 %v3171
        %3234 = vmatpush2.bf16.msra.mxu0 %v3170
        %3235 = vmatprep.mubr.bf16.mxu0 %v3201
        %3236 = vmatmul.mubr.bf16.gmra.mxu0 %v3035
        %v3237 = vpop.f32.mrf.mxu0
        %v3238 = vadd.f32 %v3022, %v3237
        %v3239 = vpop.f32.mrf.mxu0
        %v3240 = vadd.f32 %v3022, %v3239
        %v3241 = vpop.f32.mrf.mxu0
        %v3242 = vadd.f32 %v3027, %v3241
        %v3243 = vpop.f32.mrf.mxu0
        %v3244 = vadd.f32 %v3027, %v3243
        %3245 = vdwg.mxu0
        %3246 = vmatprep.subr.bf16.mxu0 0
        %3247 = vmatpush1.bf16.msra.mxu0 %v3169
        %3248 = vmatprep.subr.bf16.mxu0 0
        %3249 = vmatpush1.bf16.msra.mxu0 %v3166
        %3250 = vmatprep.subr.bf16.mxu0 0
        %3251 = vmatpush1.bf16.msra.mxu0 %v3163
        %3252 = vmatprep.subr.bf16.mxu0 0
        %3253 = vmatpush1.bf16.msra.mxu0 %v3160
        %3254 = vmatprep.subr.bf16.mxu0 0
        %3255 = vmatpush1.bf16.msra.mxu0 %v3157
        %3256 = vmatprep.subr.bf16.mxu0 0
        %3257 = vmatpush1.bf16.msra.mxu0 %v3154
        %3258 = vmatprep.subr.bf16.mxu0 0
        %3259 = vmatpush1.bf16.msra.mxu0 %v3151
        %3260 = vmatprep.subr.bf16.mxu0 0
        %3261 = vmatpush1.bf16.msra.mxu0 %v3148
        %3262 = vmatprep.subr.bf16.mxu0 0
        %3263 = vmatpush2.bf16.msra.mxu0 0
        %3264 = vmatprep.subr.bf16.mxu0 0
        %3265 = vmatpush2.bf16.msra.mxu0 0
        %3266 = vmatprep.subr.bf16.mxu0 0
        %3267 = vmatpush2.bf16.msra.mxu0 0
        %3268 = vmatprep.subr.bf16.mxu0 0
        %3269 = vmatpush2.bf16.msra.mxu0 0
        %3270 = vmatprep.subr.bf16.mxu0 0
        %3271 = vmatpush2.bf16.msra.mxu0 0
        %3272 = vmatprep.subr.bf16.mxu0 0
        %3273 = vmatpush2.bf16.msra.mxu0 0
        %3274 = vmatprep.subr.bf16.mxu0 0
        %3275 = vmatpush2.bf16.msra.mxu0 0
        %3276 = vmatprep.subr.bf16.mxu0 0
        %3277 = vmatpush2.bf16.msra.mxu0 %v3172
        %3278 = vmatprep.mubr.bf16.mxu0 %v3201
        %3279 = vmatmul.mubr.bf16.gmra.mxu0 %v3035
        %v3280 = vpop.f32.mrf.mxu0
        %v3281 = vadd.f32 %v3022, %v3280
        %v3282 = vpop.f32.mrf.mxu0
        %v3283 = vpop.f32.mrf.mxu0
        %v3284 = vadd.f32 %v3027, %v3283
        %v3285 = vpop.f32.mrf.mxu0
        %3286 = vdwg.mxu0
        %vm3287 = vcmp.ge.f32.partialorder %v3238, 0.0
        %vm3288 = vcmp.ge.f32.partialorder %v3240, 0.0
        %vm3289 = vcmp.ge.f32.partialorder %v3281, 0.0
        %vm3290 = vcmp.ge.f32.partialorder %v3242, 0.0
        %vm3291 = vcmp.ge.f32.partialorder %v3244, 0.0
        %vm3292 = vcmp.ge.f32.partialorder %v3284, 0.0
        %s3293 = sld [smem:[#allocation3 + $0x4]]
        %v3294 = vstv %s3293
        %v3295 = vmul.f32 %v3294, %v3238
        %v3296 = vmul.f32 %v3294, %v3240
        %v3297 = vmul.f32 %v3294, %v3281
        %v3298 = vmul.f32 %v3294, %v3242
        %v3299 = vmul.f32 %v3294, %v3244
        %v3300 = vmul.f32 %v3294, %v3284
        %v3301 = vsel %vm3287, %v3238, %v3295
        %v3302 = vsel %vm3288, %v3240, %v3296
        %v3303 = vsel %vm3289, %v3281, %v3297
        %v3304 = vsel %vm3290, %v3242, %v3298
        %v3305 = vsel %vm3291, %v3244, %v3299
        %v3306 = vsel %vm3292, %v3284, %v3300
        %v3307 = vmul.f32 %v3301, %v1382
        %v3308 = vmul.f32 %v3302, %v1386
        %v3309 = vmul.f32 %v3303, %v1390
        %v3310 = vmul.f32 %v3304, %v1382
        %v3311 = vmul.f32 %v3305, %v1386
        %v3312 = vmul.f32 %v3306, %v1390
        %3313 = vst [vmem:[#allocation2 + $0x8] sm:$0xff] %v3307
        %3314 = vst [vmem:[#allocation2 + $0x10] sm:$0xff] %v3308
        %3315 = vst.msk [vmem:[#allocation2 + $0x18] sm:$0xff] %vm432, %v3309
        %3316 = vst [vmem:[#allocation2 + $0x30] sm:$0xff] %v3310
        %3317 = vst [vmem:[#allocation2 + $0x38] sm:$0xff] %v3311
        %3318 = vst.msk [vmem:[#allocation2 + $0x40] sm:$0xff] %vm432, %v3312
        %s3319 = scalar_lea.vmem [#allocation9], 48
        %v3320 = vld [vmem:[%s3319] sm:$0xff]
        %v3321 = vld [vmem:[%s3319 + $0x8] sm:$0xff]
        %v3322 = vld [vmem:[#allocation2] sm:$0xff]
        %v3323 = vld [vmem:[#allocation2 + $0x8] sm:$0xff]
        %v3324 = vld [vmem:[#allocation2 + $0x10] sm:$0xff]
        %v3325 = vld [vmem:[#allocation2 + $0x18] sm:$0xff]
        %v3326 = vld [vmem:[#allocation2 + $0x28] sm:$0xff]
        %v3327 = vld [vmem:[#allocation2 + $0x30] sm:$0xff]
        %v3328 = vld [vmem:[#allocation2 + $0x38] sm:$0xff]
        %v3329 = vld [vmem:[#allocation2 + $0x40] sm:$0xff]
        %3338 = vrot.lane.b32.xlu0 %v3322, 127
        %v3339 = vpop.permute.xlu0 %3338
        %3340 = vrot.lane.b32.xlu0 %v3323, 127
        %v3341 = vpop.permute.xlu0 %3340
        %3342 = vrot.lane.b32.xlu0 %v3324, 127
        %v3343 = vpop.permute.xlu0 %3342
        %3344 = vrot.lane.b32.xlu0 %v3325, 127
        %v3345 = vpop.permute.xlu0 %3344
        %3346 = vrot.lane.b32.xlu0 %v3326, 127
        %v3347 = vpop.permute.xlu0 %3346
        %3348 = vrot.lane.b32.xlu0 %v3327, 127
        %v3349 = vpop.permute.xlu0 %3348
        %3350 = vrot.lane.b32.xlu0 %v3328, 127
        %v3351 = vpop.permute.xlu0 %3350
        %3352 = vrot.lane.b32.xlu0 %v3329, 127
        %v3353 = vpop.permute.xlu0 %3352
        %v3354 = vsel %vm458, %v3339, %v3341
        %v3355 = vsel %vm458, %v3341, %v3343
        %v3356 = vsel %vm458, %v3343, %v3345
        %v3357 = vsel %vm458, %v3347, %v3349
        %v3358 = vsel %vm458, %v3349, %v3351
        %v3359 = vsel %vm458, %v3351, %v3353
        %3368 = vrot.lane.b32.xlu0 %v3322, 126
        %v3369 = vpop.permute.xlu0 %3368
        %3370 = vrot.lane.b32.xlu0 %v3323, 126
        %v3371 = vpop.permute.xlu0 %3370
        %3372 = vrot.lane.b32.xlu0 %v3324, 126
        %v3373 = vpop.permute.xlu0 %3372
        %3374 = vrot.lane.b32.xlu0 %v3325, 126
        %v3375 = vpop.permute.xlu0 %3374
        %3376 = vrot.lane.b32.xlu0 %v3326, 126
        %v3377 = vpop.permute.xlu0 %3376
        %3378 = vrot.lane.b32.xlu0 %v3327, 126
        %v3379 = vpop.permute.xlu0 %3378
        %3380 = vrot.lane.b32.xlu0 %v3328, 126
        %v3381 = vpop.permute.xlu0 %3380
        %3382 = vrot.lane.b32.xlu0 %v3329, 126
        %v3383 = vpop.permute.xlu0 %3382
        %v3384 = vsel %vm474, %v3369, %v3371
        %v3385 = vsel %vm474, %v3371, %v3373
        %v3386 = vsel %vm474, %v3373, %v3375
        %v3387 = vsel %vm474, %v3377, %v3379
        %v3388 = vsel %vm474, %v3379, %v3381
        %v3389 = vsel %vm474, %v3381, %v3383
        %3398 = vrot.lane.b32.xlu0 %v3322, 108
        %v3399 = vpop.permute.xlu0 %3398
        %3400 = vrot.lane.b32.xlu0 %v3323, 108
        %v3401 = vpop.permute.xlu0 %3400
        %3402 = vrot.lane.b32.xlu0 %v3324, 108
        %v3403 = vpop.permute.xlu0 %3402
        %3404 = vrot.lane.b32.xlu0 %v3325, 108
        %v3405 = vpop.permute.xlu0 %3404
        %3406 = vrot.lane.b32.xlu0 %v3326, 108
        %v3407 = vpop.permute.xlu0 %3406
        %3408 = vrot.lane.b32.xlu0 %v3327, 108
        %v3409 = vpop.permute.xlu0 %3408
        %3410 = vrot.lane.b32.xlu0 %v3328, 108
        %v3411 = vpop.permute.xlu0 %3410
        %3412 = vrot.lane.b32.xlu0 %v3329, 108
        %v3413 = vpop.permute.xlu0 %3412
        %v3414 = vsel %vm522, %v3399, %v3401
        %v3415 = vsel %vm522, %v3401, %v3403
        %v3416 = vsel %vm522, %v3403, %v3405
        %v3417 = vsel %vm522, %v3407, %v3409
        %v3418 = vsel %vm522, %v3409, %v3411
        %v3419 = vsel %vm522, %v3411, %v3413
        %3428 = vrot.lane.b32.xlu0 %v3323, 107
        %v3429 = vpop.permute.xlu0 %3428
        %3430 = vrot.lane.b32.xlu0 %v3324, 107
        %v3431 = vpop.permute.xlu0 %3430
        %3432 = vrot.lane.b32.xlu0 %v3325, 107
        %v3433 = vpop.permute.xlu0 %3432
        %3434 = vrot.lane.b32.xlu0 %v3327, 107
        %v3435 = vpop.permute.xlu0 %3434
        %3436 = vrot.lane.b32.xlu0 %v3328, 107
        %v3437 = vpop.permute.xlu0 %3436
        %3438 = vrot.lane.b32.xlu0 %v3329, 107
        %v3439 = vpop.permute.xlu0 %3438
        %v3440 = vsel %vm538, %v3429, %v3431
        %v3441 = vsel %vm538, %v3431, %v3433
        %v3442 = vsel %vm538, %v3435, %v3437
        %v3443 = vsel %vm538, %v3437, %v3439
        %3452 = vrot.lane.b32.xlu0 %v3323, 106
        %v3453 = vpop.permute.xlu0 %3452
        %3454 = vrot.lane.b32.xlu0 %v3324, 106
        %v3455 = vpop.permute.xlu0 %3454
        %3456 = vrot.lane.b32.xlu0 %v3325, 106
        %v3457 = vpop.permute.xlu0 %3456
        %3458 = vrot.lane.b32.xlu0 %v3327, 106
        %v3459 = vpop.permute.xlu0 %3458
        %3460 = vrot.lane.b32.xlu0 %v3328, 106
        %v3461 = vpop.permute.xlu0 %3460
        %3462 = vrot.lane.b32.xlu0 %v3329, 106
        %v3463 = vpop.permute.xlu0 %3462
        %v3464 = vsel %vm554, %v3453, %v3455
        %v3465 = vsel %vm554, %v3455, %v3457
        %v3466 = vsel %vm554, %v3459, %v3461
        %v3467 = vsel %vm554, %v3461, %v3463
        %3476 = vrot.lane.b32.xlu0 %v3323, 88
        %v3477 = vpop.permute.xlu0 %3476
        %3478 = vrot.lane.b32.xlu0 %v3324, 88
        %v3479 = vpop.permute.xlu0 %3478
        %3480 = vrot.lane.b32.xlu0 %v3325, 88
        %v3481 = vpop.permute.xlu0 %3480
        %3482 = vrot.lane.b32.xlu0 %v3327, 88
        %v3483 = vpop.permute.xlu0 %3482
        %3484 = vrot.lane.b32.xlu0 %v3328, 88
        %v3485 = vpop.permute.xlu0 %3484
        %3486 = vrot.lane.b32.xlu0 %v3329, 88
        %v3487 = vpop.permute.xlu0 %3486
        %v3488 = vsel %vm602, %v3477, %v3479
        %v3489 = vsel %vm602, %v3479, %v3481
        %v3490 = vsel %vm602, %v3483, %v3485
        %v3491 = vsel %vm602, %v3485, %v3487
        %3500 = vrot.lane.b32.xlu0 %v3323, 87
        %v3501 = vpop.permute.xlu0 %3500
        %3502 = vrot.lane.b32.xlu0 %v3324, 87
        %v3503 = vpop.permute.xlu0 %3502
        %3504 = vrot.lane.b32.xlu0 %v3325, 87
        %v3505 = vpop.permute.xlu0 %3504
        %3506 = vrot.lane.b32.xlu0 %v3327, 87
        %v3507 = vpop.permute.xlu0 %3506
        %3508 = vrot.lane.b32.xlu0 %v3328, 87
        %v3509 = vpop.permute.xlu0 %3508
        %3510 = vrot.lane.b32.xlu0 %v3329, 87
        %v3511 = vpop.permute.xlu0 %3510
        %v3512 = vsel %vm618, %v3501, %v3503
        %v3513 = vsel %vm618, %v3503, %v3505
        %v3514 = vsel %vm618, %v3507, %v3509
        %v3515 = vsel %vm618, %v3509, %v3511
        %3524 = vrot.lane.b32.xlu0 %v3323, 86
        %v3525 = vpop.permute.xlu0 %3524
        %3526 = vrot.lane.b32.xlu0 %v3324, 86
        %v3527 = vpop.permute.xlu0 %3526
        %3528 = vrot.lane.b32.xlu0 %v3325, 86
        %v3529 = vpop.permute.xlu0 %3528
        %3530 = vrot.lane.b32.xlu0 %v3327, 86
        %v3531 = vpop.permute.xlu0 %3530
        %3532 = vrot.lane.b32.xlu0 %v3328, 86
        %v3533 = vpop.permute.xlu0 %3532
        %3534 = vrot.lane.b32.xlu0 %v3329, 86
        %v3535 = vpop.permute.xlu0 %3534
        %v3536 = vsel %vm632, %v3525, %v3527
        %v3537 = vsel %vm632, %v3527, %v3529
        %v3538 = vsel %vm632, %v3531, %v3533
        %v3539 = vsel %vm632, %v3533, %v3535
        %v3548 = vpack.c.bf16 %v3326, %v3322
        %v3549 = vpack.c.bf16 %v3327, %v3323
        %v3550 = vpack.c.bf16 %v3328, %v3324
        %v3551 = vpack.c.bf16 %v3329, %v3325
        %v3552 = vpack.c.bf16 %v3357, %v3354
        %v3553 = vpack.c.bf16 %v3358, %v3355
        %v3554 = vpack.c.bf16 %v3359, %v3356
        %v3555 = vpack.c.bf16 %v3353, %v3345
        %v3556 = vpack.c.bf16 %v3387, %v3384
        %v3557 = vpack.c.bf16 %v3388, %v3385
        %v3558 = vpack.c.bf16 %v3389, %v3386
        %v3559 = vpack.c.bf16 %v3383, %v3375
        %v3560 = vpack.c.bf16 %v3417, %v3414
        %v3561 = vpack.c.bf16 %v3418, %v3415
        %v3562 = vpack.c.bf16 %v3419, %v3416
        %v3563 = vpack.c.bf16 %v3413, %v3405
        %v3564 = vpack.c.bf16 %v3435, %v3429
        %v3565 = vpack.c.bf16 %v3442, %v3440
        %v3566 = vpack.c.bf16 %v3443, %v3441
        %v3567 = vpack.c.bf16 %v3439, %v3433
        %v3568 = vpack.c.bf16 %v3459, %v3453
        %v3569 = vpack.c.bf16 %v3466, %v3464
        %v3570 = vpack.c.bf16 %v3467, %v3465
        %v3571 = vpack.c.bf16 %v3463, %v3457
        %v3572 = vpack.c.bf16 %v3483, %v3477
        %v3573 = vpack.c.bf16 %v3490, %v3488
        %v3574 = vpack.c.bf16 %v3491, %v3489
        %v3575 = vpack.c.bf16 %v3487, %v3481
        %v3576 = vpack.c.bf16 %v3507, %v3501
        %v3577 = vpack.c.bf16 %v3514, %v3512
        %v3578 = vpack.c.bf16 %v3515, %v3513
        %v3579 = vpack.c.bf16 %v3511, %v3505
        %v3580 = vpack.c.bf16 %v3531, %v3525
        %v3581 = vpack.c.bf16 %v3538, %v3536
        %v3582 = vpack.c.bf16 %v3539, %v3537
        %v3583 = vpack.c.bf16 %v3535, %v3529
        %v3584 = vld [vmem:[%s8] sm:$0xff]
        %v3585 = vld [vmem:[%s8 + $0x8] sm:$0xff]
        %3587 = vset.pattern.permute.xlu0 5
        %3588 = vperm.xlu0 %3587, %v3584
        %v3589 = vpop.permute.xlu0 %3588
        %3592 = vset.pattern.permute.xlu0 5
        %3593 = vperm.xlu0 %3592, %v3585
        %v3594 = vpop.permute.xlu0 %3593
        %v3598 = vunpack.c.l.b16 %v3320
        %v3599 = vunpack.c.h.b16 %v3320
        %v3600 = vunpack.c.l.b16 %v3321
        %v3601 = vunpack.c.h.b16 %v3321
        %v3602 = vpack.c.b16 %v3600, %v3598
        %v3603 = vpack.c.b16 %v3601, %v3599
        %3641 = vrot.lane.b32.xlu0 %v3548, 21
        %v3642 = vpop.permute.xlu0 %3641
        %3643 = vrot.lane.b32.xlu0 %v3549, 21
        %v3644 = vpop.permute.xlu0 %3643
        %3645 = vrot.lane.b32.xlu0 %v3550, 21
        %v3646 = vpop.permute.xlu0 %3645
        %3647 = vrot.lane.b32.xlu0 %v3551, 21
        %v3648 = vpop.permute.xlu0 %3647
        %3649 = vrot.lane.b32.xlu0 %v3552, 21
        %v3650 = vpop.permute.xlu0 %3649
        %3651 = vrot.lane.b32.xlu0 %v3553, 21
        %v3652 = vpop.permute.xlu0 %3651
        %3653 = vrot.lane.b32.xlu0 %v3554, 21
        %v3654 = vpop.permute.xlu0 %3653
        %3655 = vrot.lane.b32.xlu0 %v3555, 21
        %v3656 = vpop.permute.xlu0 %3655
        %3657 = vrot.lane.b32.xlu0 %v3556, 21
        %v3658 = vpop.permute.xlu0 %3657
        %3659 = vrot.lane.b32.xlu0 %v3557, 21
        %v3660 = vpop.permute.xlu0 %3659
        %3661 = vrot.lane.b32.xlu0 %v3558, 21
        %v3662 = vpop.permute.xlu0 %3661
        %3663 = vrot.lane.b32.xlu0 %v3559, 21
        %v3664 = vpop.permute.xlu0 %3663
        %3665 = vrot.lane.b32.xlu0 %v3560, 21
        %v3666 = vpop.permute.xlu0 %3665
        %3667 = vrot.lane.b32.xlu0 %v3561, 21
        %v3668 = vpop.permute.xlu0 %3667
        %3669 = vrot.lane.b32.xlu0 %v3562, 21
        %v3670 = vpop.permute.xlu0 %3669
        %3671 = vrot.lane.b32.xlu0 %v3563, 21
        %v3672 = vpop.permute.xlu0 %3671
        %3673 = vrot.lane.b32.xlu0 %v3564, 21
        %v3674 = vpop.permute.xlu0 %3673
        %3675 = vrot.lane.b32.xlu0 %v3565, 21
        %v3676 = vpop.permute.xlu0 %3675
        %3677 = vrot.lane.b32.xlu0 %v3566, 21
        %v3678 = vpop.permute.xlu0 %3677
        %3679 = vrot.lane.b32.xlu0 %v3567, 21
        %v3680 = vpop.permute.xlu0 %3679
        %3681 = vrot.lane.b32.xlu0 %v3568, 21
        %v3682 = vpop.permute.xlu0 %3681
        %3683 = vrot.lane.b32.xlu0 %v3569, 21
        %v3684 = vpop.permute.xlu0 %3683
        %3685 = vrot.lane.b32.xlu0 %v3570, 21
        %v3686 = vpop.permute.xlu0 %3685
        %3687 = vrot.lane.b32.xlu0 %v3571, 21
        %v3688 = vpop.permute.xlu0 %3687
        %3689 = vrot.lane.b32.xlu0 %v3572, 21
        %v3690 = vpop.permute.xlu0 %3689
        %3691 = vrot.lane.b32.xlu0 %v3573, 21
        %v3692 = vpop.permute.xlu0 %3691
        %3693 = vrot.lane.b32.xlu0 %v3574, 21
        %v3694 = vpop.permute.xlu0 %3693
        %3695 = vrot.lane.b32.xlu0 %v3575, 21
        %v3696 = vpop.permute.xlu0 %3695
        %3697 = vrot.lane.b32.xlu0 %v3576, 21
        %v3698 = vpop.permute.xlu0 %3697
        %3699 = vrot.lane.b32.xlu0 %v3577, 21
        %v3700 = vpop.permute.xlu0 %3699
        %3701 = vrot.lane.b32.xlu0 %v3578, 21
        %v3702 = vpop.permute.xlu0 %3701
        %3703 = vrot.lane.b32.xlu0 %v3579, 21
        %v3704 = vpop.permute.xlu0 %3703
        %3705 = vrot.lane.b32.xlu0 %v3580, 21
        %v3706 = vpop.permute.xlu0 %3705
        %3707 = vrot.lane.b32.xlu0 %v3581, 21
        %v3708 = vpop.permute.xlu0 %3707
        %3709 = vrot.lane.b32.xlu0 %v3582, 21
        %v3710 = vpop.permute.xlu0 %3709
        %3711 = vrot.lane.b32.xlu0 %v3583, 21
        %v3712 = vpop.permute.xlu0 %3711
        %v3713 = vsel %vm2010, %v3642, %v3644
        %v3714 = vsel %vm2010, %v3644, %v3646
        %v3715 = vsel %vm2010, %v3646, %v3648
        %v3716 = vsel %vm2010, %v3650, %v3652
        %v3717 = vsel %vm2010, %v3652, %v3654
        %v3718 = vsel %vm2010, %v3654, %v3656
        %v3719 = vsel %vm2010, %v3658, %v3660
        %v3720 = vsel %vm2010, %v3660, %v3662
        %v3721 = vsel %vm2010, %v3662, %v3664
        %v3722 = vsel %vm2010, %v3666, %v3668
        %v3723 = vsel %vm2010, %v3668, %v3670
        %v3724 = vsel %vm2010, %v3670, %v3672
        %v3725 = vsel %vm2010, %v3674, %v3676
        %v3726 = vsel %vm2010, %v3676, %v3678
        %v3727 = vsel %vm2010, %v3678, %v3680
        %v3728 = vsel %vm2010, %v3682, %v3684
        %v3729 = vsel %vm2010, %v3684, %v3686
        %v3730 = vsel %vm2010, %v3686, %v3688
        %v3731 = vsel %vm2010, %v3690, %v3692
        %v3732 = vsel %vm2010, %v3692, %v3694
        %v3733 = vsel %vm2010, %v3694, %v3696
        %v3734 = vsel %vm2010, %v3698, %v3700
        %v3735 = vsel %vm2010, %v3700, %v3702
        %v3736 = vsel %vm2010, %v3702, %v3704
        %v3737 = vsel %vm2010, %v3706, %v3708
        %v3738 = vsel %vm2010, %v3708, %v3710
        %v3739 = vsel %vm2010, %v3710, %v3712
        %v3768 = vsel %vm2065, %v3603, 0
        %3770 = vmatprep.subr.bf16.mxu0 %v3735
        %3771 = vmatpush1.bf16.msra.mxu0 %v3734
        %3772 = vmatprep.subr.bf16.mxu0 %v3732
        %3773 = vmatpush1.bf16.msra.mxu0 %v3731
        %3774 = vmatprep.subr.bf16.mxu0 %v3729
        %3775 = vmatpush1.bf16.msra.mxu0 %v3728
        %3776 = vmatprep.subr.bf16.mxu0 %v3726
        %3777 = vmatpush1.bf16.msra.mxu0 %v3725
        %3778 = vmatprep.subr.bf16.mxu0 %v3723
        %3779 = vmatpush1.bf16.msra.mxu0 %v3722
        %3780 = vmatprep.subr.bf16.mxu0 %v3720
        %3781 = vmatpush1.bf16.msra.mxu0 %v3719
        %3782 = vmatprep.subr.bf16.mxu0 %v3717
        %3783 = vmatpush1.bf16.msra.mxu0 %v3716
        %3784 = vmatprep.subr.bf16.mxu0 %v3714
        %3785 = vmatpush1.bf16.msra.mxu0 %v3713
        %3786 = vmatprep.subr.bf16.mxu0 0
        %3787 = vmatpush2.bf16.msra.mxu0 0
        %3788 = vmatprep.subr.bf16.mxu0 0
        %3789 = vmatpush2.bf16.msra.mxu0 0
        %3790 = vmatprep.subr.bf16.mxu0 0
        %3791 = vmatpush2.bf16.msra.mxu0 0
        %3792 = vmatprep.subr.bf16.mxu0 0
        %3793 = vmatpush2.bf16.msra.mxu0 0
        %3794 = vmatprep.subr.bf16.mxu0 0
        %3795 = vmatpush2.bf16.msra.mxu0 0
        %3796 = vmatprep.subr.bf16.mxu0 0
        %3797 = vmatpush2.bf16.msra.mxu0 0
        %3798 = vmatprep.subr.bf16.mxu0 0
        %3799 = vmatpush2.bf16.msra.mxu0 0
        %3800 = vmatprep.subr.bf16.mxu0 %v3738
        %3801 = vmatpush2.bf16.msra.mxu0 %v3737
        %3802 = vmatprep.mubr.bf16.mxu0 %v3768
        %3803 = vmatmul.mubr.bf16.gmra.mxu0 %v3602
        %v3804 = vpop.f32.mrf.mxu0
        %v3805 = vadd.f32 %v3589, %v3804
        %v3806 = vpop.f32.mrf.mxu0
        %v3807 = vadd.f32 %v3589, %v3806
        %v3808 = vpop.f32.mrf.mxu0
        %v3809 = vadd.f32 %v3594, %v3808
        %v3810 = vpop.f32.mrf.mxu0
        %v3811 = vadd.f32 %v3594, %v3810
        %3812 = vdwg.mxu0
        %3813 = vmatprep.subr.bf16.mxu0 0
        %3814 = vmatpush1.bf16.msra.mxu0 %v3736
        %3815 = vmatprep.subr.bf16.mxu0 0
        %3816 = vmatpush1.bf16.msra.mxu0 %v3733
        %3817 = vmatprep.subr.bf16.mxu0 0
        %3818 = vmatpush1.bf16.msra.mxu0 %v3730
        %3819 = vmatprep.subr.bf16.mxu0 0
        %3820 = vmatpush1.bf16.msra.mxu0 %v3727
        %3821 = vmatprep.subr.bf16.mxu0 0
        %3822 = vmatpush1.bf16.msra.mxu0 %v3724
        %3823 = vmatprep.subr.bf16.mxu0 0
        %3824 = vmatpush1.bf16.msra.mxu0 %v3721
        %3825 = vmatprep.subr.bf16.mxu0 0
        %3826 = vmatpush1.bf16.msra.mxu0 %v3718
        %3827 = vmatprep.subr.bf16.mxu0 0
        %3828 = vmatpush1.bf16.msra.mxu0 %v3715
        %3829 = vmatprep.subr.bf16.mxu0 0
        %3830 = vmatpush2.bf16.msra.mxu0 0
        %3831 = vmatprep.subr.bf16.mxu0 0
        %3832 = vmatpush2.bf16.msra.mxu0 0
        %3833 = vmatprep.subr.bf16.mxu0 0
        %3834 = vmatpush2.bf16.msra.mxu0 0
        %3835 = vmatprep.subr.bf16.mxu0 0
        %3836 = vmatpush2.bf16.msra.mxu0 0
        %3837 = vmatprep.subr.bf16.mxu0 0
        %3838 = vmatpush2.bf16.msra.mxu0 0
        %3839 = vmatprep.subr.bf16.mxu0 0
        %3840 = vmatpush2.bf16.msra.mxu0 0
        %3841 = vmatprep.subr.bf16.mxu0 0
        %3842 = vmatpush2.bf16.msra.mxu0 0
        %3843 = vmatprep.subr.bf16.mxu0 0
        %3844 = vmatpush2.bf16.msra.mxu0 %v3739
        %3845 = vmatprep.mubr.bf16.mxu0 %v3768
        %3846 = vmatmul.mubr.bf16.gmra.mxu0 %v3602
        %v3847 = vpop.f32.mrf.mxu0
        %v3848 = vadd.f32 %v3589, %v3847
        %v3849 = vpop.f32.mrf.mxu0
        %v3850 = vpop.f32.mrf.mxu0
        %v3851 = vadd.f32 %v3594, %v3850
        %v3852 = vpop.f32.mrf.mxu0
        %3853 = vdwg.mxu0
        %vm3854 = vcmp.ge.f32.partialorder %v3805, 0.0
        %vm3855 = vcmp.ge.f32.partialorder %v3807, 0.0
        %vm3856 = vcmp.ge.f32.partialorder %v3848, 0.0
        %vm3857 = vcmp.ge.f32.partialorder %v3809, 0.0
        %vm3858 = vcmp.ge.f32.partialorder %v3811, 0.0
        %vm3859 = vcmp.ge.f32.partialorder %v3851, 0.0
        %s3860 = sld [smem:[#allocation3 + $0x5]]
        %v3861 = vstv %s3860
        %v3862 = vmul.f32 %v3861, %v3805
        %v3863 = vmul.f32 %v3861, %v3807
        %v3864 = vmul.f32 %v3861, %v3848
        %v3865 = vmul.f32 %v3861, %v3809
        %v3866 = vmul.f32 %v3861, %v3811
        %v3867 = vmul.f32 %v3861, %v3851
        %v3868 = vsel %vm3854, %v3805, %v3862
        %v3869 = vsel %vm3855, %v3807, %v3863
        %v3870 = vsel %vm3856, %v3848, %v3864
        %v3871 = vsel %vm3857, %v3809, %v3865
        %v3872 = vsel %vm3858, %v3811, %v3866
        %v3873 = vsel %vm3859, %v3851, %v3867
        %v3874 = vmul.f32 %v3868, %v1382
        %v3875 = vmul.f32 %v3869, %v1386
        %v3876 = vmul.f32 %v3870, %v1390
        %v3877 = vmul.f32 %v3871, %v1382
        %v3878 = vmul.f32 %v3872, %v1386
        %v3879 = vmul.f32 %v3873, %v1390
        %3880 = vst [vmem:[#allocation2 + $0x8] sm:$0xff] %v3874
        %3881 = vst [vmem:[#allocation2 + $0x10] sm:$0xff] %v3875
        %3882 = vst.msk [vmem:[#allocation2 + $0x18] sm:$0xff] %vm432, %v3876
        %3883 = vst [vmem:[#allocation2 + $0x30] sm:$0xff] %v3877
        %3884 = vst [vmem:[#allocation2 + $0x38] sm:$0xff] %v3878
        %3885 = vst.msk [vmem:[#allocation2 + $0x40] sm:$0xff] %vm432, %v3879
        %v3886 = vld [vmem:[%s6] sm:$0xf]
        %v3887 = vld [vmem:[%s6 + $0x4] sm:$0xf]
        %v3888 = vld [vmem:[%s6 + $0x8] sm:$0xf]
        %v3889 = vld [vmem:[%s6 + $0xc] sm:$0xf]
        %v3890 = vld [vmem:[%s6 + $0x10] sm:$0xf]
        %v3891 = vld [vmem:[%s6 + $0x14] sm:$0xf]
        %v3892 = vld [vmem:[%s6 + $0x18] sm:$0xf]
        %v3893 = vld [vmem:[#allocation2 + $0x8] sm:$0xff]
        %v3894 = vld [vmem:[#allocation2 + $0x10] sm:$0xff]
        %v3895 = vld [vmem:[#allocation2 + $0x18] sm:$0xff]
        %v3896 = vld [vmem:[#allocation2 + $0x30] sm:$0xff]
        %v3897 = vld [vmem:[#allocation2 + $0x38] sm:$0xff]
        %v3898 = vld [vmem:[#allocation2 + $0x40] sm:$0xff]
        %v3899 = vpack.c.bf16 %v3896, %v3893
        %v3900 = vpack.c.bf16 %v3897, %v3894
        %v3901 = vpack.c.bf16 %v3898, %v3895
        %v3902 = vld [vmem:[%s8] sm:$0xff]
        %v3903 = vld [vmem:[%s8 + $0x8] sm:$0xff]
        %v3904 = vld [vmem:[%s8 + $0x10] sm:$0xff]
        %v3905 = vld [vmem:[%s8 + $0x18] sm:$0xff]
        %v3906 = vld [vmem:[%s8 + $0x20] sm:$0xff]
        %v3907 = vld [vmem:[%s8 + $0x28] sm:$0xff]
        %v3908 = vld [vmem:[%s8 + $0x30] sm:$0xff]
        %3910 = vset.pattern.permute.xlu0 6
        %3911 = vperm.xlu0 %3910, %v3902
        %v3912 = vpop.permute.xlu0 %3911
        %3915 = vset.pattern.permute.xlu0 6
        %3916 = vperm.xlu0 %3915, %v3903
        %v3917 = vpop.permute.xlu0 %3916
        %3920 = vset.pattern.permute.xlu0 6
        %3921 = vperm.xlu0 %3920, %v3904
        %v3922 = vpop.permute.xlu0 %3921
        %3925 = vset.pattern.permute.xlu0 6
        %3926 = vperm.xlu0 %3925, %v3905
        %v3927 = vpop.permute.xlu0 %3926
        %3930 = vset.pattern.permute.xlu0 6
        %3931 = vperm.xlu0 %3930, %v3906
        %v3932 = vpop.permute.xlu0 %3931
        %3935 = vset.pattern.permute.xlu0 6
        %3936 = vperm.xlu0 %3935, %v3907
        %v3937 = vpop.permute.xlu0 %3936
        %3940 = vset.pattern.permute.xlu0 6
        %3941 = vperm.xlu0 %3940, %v3908
        %v3942 = vpop.permute.xlu0 %3941
        %v3951 = vunpack.c.l.b16 %v3886
        %v3952 = vunpack.c.l.b16 %v3887
        %v3953 = vunpack.c.l.b16 %v3888
        %v3954 = vunpack.c.l.b16 %v3889
        %v3955 = vunpack.c.l.b16 %v3890
        %v3956 = vunpack.c.l.b16 %v3891
        %v3957 = vunpack.c.l.b16 %v3892
        %v3958 = vpack.c.b16 %v3952, %v3951
        %v3959 = vpack.c.b16 %v3954, %v3953
        %v3960 = vpack.c.b16 %v3956, %v3955
        %v3961 = vpack.c.b16 %v3957, %v3957
        %v3963 = vsel %vm2065, %v3958, 0
        %v3966 = vsel %vm2065, %v3959, 0
        %v3969 = vsel %vm2065, %v3960, 0
        %v3972 = vsel %vm2065, %v3961, 0
        %3974 = vmatprep.subr.bf16.mxu0 0
        %3975 = vmatpush1.bf16.msra.mxu0 0
        %3976 = vmatprep.subr.bf16.mxu0 0
        %3977 = vmatpush1.bf16.msra.mxu0 0
        %3978 = vmatprep.subr.bf16.mxu0 0
        %3979 = vmatpush1.bf16.msra.mxu0 0
        %3980 = vmatprep.subr.bf16.mxu0 0
        %3981 = vmatpush1.bf16.msra.mxu0 0
        %3982 = vmatprep.subr.bf16.mxu0 0
        %3983 = vmatpush1.bf16.msra.mxu0 0
        %3984 = vmatprep.subr.bf16.mxu0 0
        %3985 = vmatpush1.bf16.msra.mxu0 0
        %3986 = vmatprep.subr.bf16.mxu0 0
        %3987 = vmatpush1.bf16.msra.mxu0 0
        %3988 = vmatprep.subr.bf16.mxu0 %v3900
        %3989 = vmatpush1.bf16.msra.mxu0 %v3899
        %3990 = vmatprep.subr.bf16.mxu0 0
        %3991 = vmatpush2.bf16.msra.mxu0 0
        %3992 = vmatprep.subr.bf16.mxu0 0
        %3993 = vmatpush2.bf16.msra.mxu0 0
        %3994 = vmatprep.subr.bf16.mxu0 0
        %3995 = vmatpush2.bf16.msra.mxu0 0
        %3996 = vmatprep.subr.bf16.mxu0 0
        %3997 = vmatpush2.bf16.msra.mxu0 0
        %3998 = vmatprep.subr.bf16.mxu0 0
        %3999 = vmatpush2.bf16.msra.mxu0 0
        %4000 = vmatprep.subr.bf16.mxu0 0
        %4001 = vmatpush2.bf16.msra.mxu0 0
        %4002 = vmatprep.subr.bf16.mxu0 0
        %4003 = vmatpush2.bf16.msra.mxu0 0
        %4004 = vmatprep.subr.bf16.mxu0 0
        %4005 = vmatpush2.bf16.msra.mxu0 0
        %4006 = vmatprep.mubr.bf16.mxu0 0
        %4007 = vmatmul.mubr.bf16.gmra.mxu0 %v3963
        %v4008 = vpop.f32.mrf.mxu0
        %v4009 = vadd.f32 %v3912, %v4008
        %v4010 = vpop.f32.mrf.mxu0
        %v4011 = vadd.f32 %v3912, %v4010
        %v4012 = vpop.f32.mrf.mxu0
        %v4013 = vadd.f32 %v3917, %v4012
        %v4014 = vpop.f32.mrf.mxu0
        %v4015 = vadd.f32 %v3917, %v4014
        %4016 = vmatprep.mubr.bf16.mxu0 0
        %4017 = vmatmul.mubr.bf16.gmra.mxu0 %v3966
        %v4018 = vpop.f32.mrf.mxu0
        %v4019 = vadd.f32 %v3922, %v4018
        %v4020 = vpop.f32.mrf.mxu0
        %v4021 = vadd.f32 %v3922, %v4020
        %v4022 = vpop.f32.mrf.mxu0
        %v4023 = vadd.f32 %v3927, %v4022
        %v4024 = vpop.f32.mrf.mxu0
        %v4025 = vadd.f32 %v3927, %v4024
        %4026 = vmatprep.mubr.bf16.mxu0 0
        %4027 = vmatmul.mubr.bf16.gmra.mxu0 %v3969
        %v4028 = vpop.f32.mrf.mxu0
        %v4029 = vadd.f32 %v3932, %v4028
        %v4030 = vpop.f32.mrf.mxu0
        %v4031 = vadd.f32 %v3932, %v4030
        %v4032 = vpop.f32.mrf.mxu0
        %v4033 = vadd.f32 %v3937, %v4032
        %v4034 = vpop.f32.mrf.mxu0
        %v4035 = vadd.f32 %v3937, %v4034
        %4036 = vmatprep.mubr.bf16.mxu0 0
        %4037 = vmatmul.mubr.bf16.gmra.mxu0 %v3972
        %v4038 = vpop.f32.mrf.mxu0
        %v4039 = vadd.f32 %v3942, %v4038
        %v4040 = vpop.f32.mrf.mxu0
        %v4041 = vadd.f32 %v3942, %v4040
        %v4042 = vpop.f32.mrf.mxu0
        %v4043 = vpop.f32.mrf.mxu0
        %4044 = vdwg.mxu0
        %4045 = vmatprep.subr.bf16.mxu0 0
        %4046 = vmatpush1.bf16.msra.mxu0 0
        %4047 = vmatprep.subr.bf16.mxu0 0
        %4048 = vmatpush1.bf16.msra.mxu0 0
        %4049 = vmatprep.subr.bf16.mxu0 0
        %4050 = vmatpush1.bf16.msra.mxu0 0
        %4051 = vmatprep.subr.bf16.mxu0 0
        %4052 = vmatpush1.bf16.msra.mxu0 0
        %4053 = vmatprep.subr.bf16.mxu0 0
        %4054 = vmatpush1.bf16.msra.mxu0 0
        %4055 = vmatprep.subr.bf16.mxu0 0
        %4056 = vmatpush1.bf16.msra.mxu0 0
        %4057 = vmatprep.subr.bf16.mxu0 0
        %4058 = vmatpush1.bf16.msra.mxu0 0
        %4059 = vmatprep.subr.bf16.mxu0 0
        %4060 = vmatpush1.bf16.msra.mxu0 %v3901
        %4061 = vmatprep.subr.bf16.mxu0 0
        %4062 = vmatpush2.bf16.msra.mxu0 0
        %4063 = vmatprep.subr.bf16.mxu0 0
        %4064 = vmatpush2.bf16.msra.mxu0 0
        %4065 = vmatprep.subr.bf16.mxu0 0
        %4066 = vmatpush2.bf16.msra.mxu0 0
        %4067 = vmatprep.subr.bf16.mxu0 0
        %4068 = vmatpush2.bf16.msra.mxu0 0
        %4069 = vmatprep.subr.bf16.mxu0 0
        %4070 = vmatpush2.bf16.msra.mxu0 0
        %4071 = vmatprep.subr.bf16.mxu0 0
        %4072 = vmatpush2.bf16.msra.mxu0 0
        %4073 = vmatprep.subr.bf16.mxu0 0
        %4074 = vmatpush2.bf16.msra.mxu0 0
        %4075 = vmatprep.subr.bf16.mxu0 0
        %4076 = vmatpush2.bf16.msra.mxu0 0
        %4077 = vmatprep.mubr.bf16.mxu0 0
        %4078 = vmatmul.mubr.bf16.gmra.mxu0 %v3963
        %v4079 = vpop.f32.mrf.mxu0
        %v4080 = vadd.f32 %v3912, %v4079
        %v4081 = vpop.f32.mrf.mxu0
        %v4082 = vpop.f32.mrf.mxu0
        %v4083 = vadd.f32 %v3917, %v4082
        %v4084 = vpop.f32.mrf.mxu0
        %4085 = vmatprep.mubr.bf16.mxu0 0
        %4086 = vmatmul.mubr.bf16.gmra.mxu0 %v3966
        %v4087 = vpop.f32.mrf.mxu0
        %v4088 = vadd.f32 %v3922, %v4087
        %v4089 = vpop.f32.mrf.mxu0
        %v4090 = vpop.f32.mrf.mxu0
        %v4091 = vadd.f32 %v3927, %v4090
        %v4092 = vpop.f32.mrf.mxu0
        %4093 = vmatprep.mubr.bf16.mxu0 0
        %4094 = vmatmul.mubr.bf16.gmra.mxu0 %v3969
        %v4095 = vpop.f32.mrf.mxu0
        %v4096 = vadd.f32 %v3932, %v4095
        %v4097 = vpop.f32.mrf.mxu0
        %v4098 = vpop.f32.mrf.mxu0
        %v4099 = vadd.f32 %v3937, %v4098
        %v4100 = vpop.f32.mrf.mxu0
        %4101 = vmatprep.mubr.bf16.mxu0 0
        %4102 = vmatmul.mubr.bf16.gmra.mxu0 %v3972
        %v4103 = vpop.f32.mrf.mxu0
        %v4104 = vadd.f32 %v3942, %v4103
        %v4105 = vpop.f32.mrf.mxu0
        %v4106 = vpop.f32.mrf.mxu0
        %v4107 = vpop.f32.mrf.mxu0
        %4108 = vdwg.mxu0
        %vm4109 = vcmp.ge.f32.partialorder %v4009, 0.0
        %vm4110 = vcmp.ge.f32.partialorder %v4011, 0.0
        %vm4111 = vcmp.ge.f32.partialorder %v4080, 0.0
        %vm4112 = vcmp.ge.f32.partialorder %v4013, 0.0
        %vm4113 = vcmp.ge.f32.partialorder %v4015, 0.0
        %vm4114 = vcmp.ge.f32.partialorder %v4083, 0.0
        %vm4115 = vcmp.ge.f32.partialorder %v4019, 0.0
        %vm4116 = vcmp.ge.f32.partialorder %v4021, 0.0
        %vm4117 = vcmp.ge.f32.partialorder %v4088, 0.0
        %vm4118 = vcmp.ge.f32.partialorder %v4023, 0.0
        %vm4119 = vcmp.ge.f32.partialorder %v4025, 0.0
        %vm4120 = vcmp.ge.f32.partialorder %v4091, 0.0
        %vm4121 = vcmp.ge.f32.partialorder %v4029, 0.0
        %vm4122 = vcmp.ge.f32.partialorder %v4031, 0.0
        %vm4123 = vcmp.ge.f32.partialorder %v4096, 0.0
        %vm4124 = vcmp.ge.f32.partialorder %v4033, 0.0
        %vm4125 = vcmp.ge.f32.partialorder %v4035, 0.0
        %vm4126 = vcmp.ge.f32.partialorder %v4099, 0.0
        %vm4127 = vcmp.ge.f32.partialorder %v4039, 0.0
        %vm4128 = vcmp.ge.f32.partialorder %v4041, 0.0
        %vm4129 = vcmp.ge.f32.partialorder %v4104, 0.0
        %s4130 = sld [smem:[#allocation3 + $0x6]]
        %v4131 = vstv %s4130
        %v4132 = vmul.f32 %v4131, %v4009
        %v4133 = vmul.f32 %v4131, %v4011
        %v4134 = vmul.f32 %v4131, %v4080
        %v4135 = vmul.f32 %v4131, %v4013
        %v4136 = vmul.f32 %v4131, %v4015
        %v4137 = vmul.f32 %v4131, %v4083
        %v4138 = vmul.f32 %v4131, %v4019
        %v4139 = vmul.f32 %v4131, %v4021
        %v4140 = vmul.f32 %v4131, %v4088
        %v4141 = vmul.f32 %v4131, %v4023
        %v4142 = vmul.f32 %v4131, %v4025
        %v4143 = vmul.f32 %v4131, %v4091
        %v4144 = vmul.f32 %v4131, %v4029
        %v4145 = vmul.f32 %v4131, %v4031
        %v4146 = vmul.f32 %v4131, %v4096
        %v4147 = vmul.f32 %v4131, %v4033
        %v4148 = vmul.f32 %v4131, %v4035
        %v4149 = vmul.f32 %v4131, %v4099
        %v4150 = vmul.f32 %v4131, %v4039
        %v4151 = vmul.f32 %v4131, %v4041
        %v4152 = vmul.f32 %v4131, %v4104
        %v4153 = vsel %vm4109, %v4009, %v4132
        %v4154 = vsel %vm4110, %v4011, %v4133
        %v4155 = vsel %vm4111, %v4080, %v4134
        %v4156 = vsel %vm4112, %v4013, %v4135
        %v4157 = vsel %vm4113, %v4015, %v4136
        %v4158 = vsel %vm4114, %v4083, %v4137
        %v4159 = vsel %vm4115, %v4019, %v4138
        %v4160 = vsel %vm4116, %v4021, %v4139
        %v4161 = vsel %vm4117, %v4088, %v4140
        %v4162 = vsel %vm4118, %v4023, %v4141
        %v4163 = vsel %vm4119, %v4025, %v4142
        %v4164 = vsel %vm4120, %v4091, %v4143
        %v4165 = vsel %vm4121, %v4029, %v4144
        %v4166 = vsel %vm4122, %v4031, %v4145
        %v4167 = vsel %vm4123, %v4096, %v4146
        %v4168 = vsel %vm4124, %v4033, %v4147
        %v4169 = vsel %vm4125, %v4035, %v4148
        %v4170 = vsel %vm4126, %v4099, %v4149
        %v4171 = vsel %vm4127, %v4039, %v4150
        %v4172 = vsel %vm4128, %v4041, %v4151
        %v4173 = vsel %vm4129, %v4104, %v4152
        %v4174 = vmul.f32 %v4153, %v1382
        %v4175 = vmul.f32 %v4154, %v1386
        %v4176 = vmul.f32 %v4155, %v1390
        %v4177 = vmul.f32 %v4156, %v1382
        %v4178 = vmul.f32 %v4157, %v1386
        %v4179 = vmul.f32 %v4158, %v1390
        %v4180 = vmul.f32 %v4159, %v1382
        %v4181 = vmul.f32 %v4160, %v1386
        %v4182 = vmul.f32 %v4161, %v1390
        %v4183 = vmul.f32 %v4162, %v1382
        %v4184 = vmul.f32 %v4163, %v1386
        %v4185 = vmul.f32 %v4164, %v1390
        %v4186 = vmul.f32 %v4165, %v1382
        %v4187 = vmul.f32 %v4166, %v1386
        %v4188 = vmul.f32 %v4167, %v1390
        %v4189 = vmul.f32 %v4168, %v1382
        %v4190 = vmul.f32 %v4169, %v1386
        %v4191 = vmul.f32 %v4170, %v1390
        %v4192 = vmul.f32 %v4171, %v1382
        %v4193 = vmul.f32 %v4172, %v1386
        %v4194 = vmul.f32 %v4173, %v1390
        %4195 = vst [vmem:[#allocation2 + $0x8] sm:$0xff] %v4174
        %4196 = vst [vmem:[#allocation2 + $0x10] sm:$0xff] %v4175
        %4197 = vst.msk [vmem:[#allocation2 + $0x18] sm:$0xff] %vm432, %v4176
        %4198 = vst [vmem:[#allocation2 + $0x30] sm:$0xff] %v4177
        %4199 = vst [vmem:[#allocation2 + $0x38] sm:$0xff] %v4178
        %4200 = vst.msk [vmem:[#allocation2 + $0x40] sm:$0xff] %vm432, %v4179
        %4201 = vst [vmem:[#allocation2 + $0x58] sm:$0xff] %v4180
        %4202 = vst [vmem:[#allocation2 + $0x60] sm:$0xff] %v4181
        %4203 = vst.msk [vmem:[#allocation2 + $0x68] sm:$0xff] %vm432, %v4182
        %4204 = vst [vmem:[#allocation2 + $0x80] sm:$0xff] %v4183
        %4205 = vst [vmem:[#allocation2 + $0x88] sm:$0xff] %v4184
        %4206 = vst.msk [vmem:[#allocation2 + $0x90] sm:$0xff] %vm432, %v4185
        %4207 = vst [vmem:[#allocation2 + $0xa8] sm:$0xff] %v4186
        %4208 = vst [vmem:[#allocation2 + $0xb0] sm:$0xff] %v4187
        %4209 = vst.msk [vmem:[#allocation2 + $0xb8] sm:$0xff] %vm432, %v4188
        %4210 = vst [vmem:[#allocation2 + $0xd0] sm:$0xff] %v4189
        %4211 = vst [vmem:[#allocation2 + $0xd8] sm:$0xff] %v4190
        %4212 = vst.msk [vmem:[#allocation2 + $0xe0] sm:$0xff] %vm432, %v4191
        %4213 = vst [vmem:[#allocation2 + $0xf8] sm:$0xff] %v4192
        %4214 = vst [vmem:[#allocation2 + $0x100] sm:$0xff] %v4193
        %4215 = vst.msk [vmem:[#allocation2 + $0x108] sm:$0xff] %vm432, %v4194
        %v4216 = vld [vmem:[#allocation10] sm:$0xff]
        %v4217 = vld [vmem:[#allocation10 + $0x8] sm:$0xff]
        %v4218 = vld [vmem:[#allocation10 + $0x10] sm:$0xff]
        %v4219 = vld [vmem:[#allocation10 + $0x18] sm:$0xff]
        %v4220 = vld [vmem:[#allocation10 + $0x20] sm:$0xff]
        %v4221 = vld [vmem:[#allocation10 + $0x28] sm:$0xf]
        %v4222 = vld [vmem:[#allocation10 + $0x2c] sm:$0x33]
        %v4223 = vld [vmem:[#allocation10 + $0x34] sm:$0x33]
        %v4224 = vld [vmem:[#allocation10 + $0x3c] sm:$0x33]
        %v4225 = vld [vmem:[#allocation10 + $0x44] sm:$0x33]
        %v4226 = vld [vmem:[#allocation10 + $0x4c] sm:$0x33]
        %v4227 = vld [vmem:[#allocation10 + $0x54] sm:$0x3]
        %v4228 = vld [vmem:[#allocation2] sm:$0xff]
        %v4229 = vld [vmem:[#allocation2 + $0x8] sm:$0xff]
        %v4230 = vld [vmem:[#allocation2 + $0x10] sm:$0xff]
        %v4231 = vld [vmem:[#allocation2 + $0x18] sm:$0xff]
        %v4232 = vld [vmem:[#allocation2 + $0x28] sm:$0xff]
        %v4233 = vld [vmem:[#allocation2 + $0x30] sm:$0xff]
        %v4234 = vld [vmem:[#allocation2 + $0x38] sm:$0xff]
        %v4235 = vld [vmem:[#allocation2 + $0x40] sm:$0xff]
        %v4236 = vld [vmem:[#allocation2 + $0x50] sm:$0xff]
        %v4237 = vld [vmem:[#allocation2 + $0x58] sm:$0xff]
        %v4238 = vld [vmem:[#allocation2 + $0x60] sm:$0xff]
        %v4239 = vld [vmem:[#allocation2 + $0x68] sm:$0xff]
        %v4240 = vld [vmem:[#allocation2 + $0x78] sm:$0xff]
        %v4241 = vld [vmem:[#allocation2 + $0x80] sm:$0xff]
        %v4242 = vld [vmem:[#allocation2 + $0x88] sm:$0xff]
        %v4243 = vld [vmem:[#allocation2 + $0x90] sm:$0xff]
        %v4244 = vld [vmem:[#allocation2 + $0xa0] sm:$0xff]
        %v4245 = vld [vmem:[#allocation2 + $0xa8] sm:$0xff]
        %v4246 = vld [vmem:[#allocation2 + $0xb0] sm:$0xff]
        %v4247 = vld [vmem:[#allocation2 + $0xb8] sm:$0xff]
        %v4248 = vld [vmem:[#allocation2 + $0xc8] sm:$0xff]
        %v4249 = vld [vmem:[#allocation2 + $0xd0] sm:$0xff]
        %v4250 = vld [vmem:[#allocation2 + $0xd8] sm:$0xff]
        %v4251 = vld [vmem:[#allocation2 + $0xe0] sm:$0xff]
        %v4252 = vld [vmem:[#allocation2 + $0xf0] sm:$0xff]
        %v4253 = vld [vmem:[#allocation2 + $0xf8] sm:$0xff]
        %v4254 = vld [vmem:[#allocation2 + $0x100] sm:$0xff]
        %v4255 = vld [vmem:[#allocation2 + $0x108] sm:$0xff]
        %4284 = vrot.lane.b32.xlu0 %v4228, 127
        %v4285 = vpop.permute.xlu0 %4284
        %4286 = vrot.lane.b32.xlu0 %v4229, 127
        %v4287 = vpop.permute.xlu0 %4286
        %4288 = vrot.lane.b32.xlu0 %v4230, 127
        %v4289 = vpop.permute.xlu0 %4288
        %4290 = vrot.lane.b32.xlu0 %v4231, 127
        %v4291 = vpop.permute.xlu0 %4290
        %4292 = vrot.lane.b32.xlu0 %v4232, 127
        %v4293 = vpop.permute.xlu0 %4292
        %4294 = vrot.lane.b32.xlu0 %v4233, 127
        %v4295 = vpop.permute.xlu0 %4294
        %4296 = vrot.lane.b32.xlu0 %v4234, 127
        %v4297 = vpop.permute.xlu0 %4296
        %4298 = vrot.lane.b32.xlu0 %v4235, 127
        %v4299 = vpop.permute.xlu0 %4298
        %4300 = vrot.lane.b32.xlu0 %v4236, 127
        %v4301 = vpop.permute.xlu0 %4300
        %4302 = vrot.lane.b32.xlu0 %v4237, 127
        %v4303 = vpop.permute.xlu0 %4302
        %4304 = vrot.lane.b32.xlu0 %v4238, 127
        %v4305 = vpop.permute.xlu0 %4304
        %4306 = vrot.lane.b32.xlu0 %v4239, 127
        %v4307 = vpop.permute.xlu0 %4306
        %4308 = vrot.lane.b32.xlu0 %v4240, 127
        %v4309 = vpop.permute.xlu0 %4308
        %4310 = vrot.lane.b32.xlu0 %v4241, 127
        %v4311 = vpop.permute.xlu0 %4310
        %4312 = vrot.lane.b32.xlu0 %v4242, 127
        %v4313 = vpop.permute.xlu0 %4312
        %4314 = vrot.lane.b32.xlu0 %v4243, 127
        %v4315 = vpop.permute.xlu0 %4314
        %4316 = vrot.lane.b32.xlu0 %v4244, 127
        %v4317 = vpop.permute.xlu0 %4316
        %4318 = vrot.lane.b32.xlu0 %v4245, 127
        %v4319 = vpop.permute.xlu0 %4318
        %4320 = vrot.lane.b32.xlu0 %v4246, 127
        %v4321 = vpop.permute.xlu0 %4320
        %4322 = vrot.lane.b32.xlu0 %v4247, 127
        %v4323 = vpop.permute.xlu0 %4322
        %4324 = vrot.lane.b32.xlu0 %v4248, 127
        %v4325 = vpop.permute.xlu0 %4324
        %4326 = vrot.lane.b32.xlu0 %v4249, 127
        %v4327 = vpop.permute.xlu0 %4326
        %4328 = vrot.lane.b32.xlu0 %v4250, 127
        %v4329 = vpop.permute.xlu0 %4328
        %4330 = vrot.lane.b32.xlu0 %v4251, 127
        %v4331 = vpop.permute.xlu0 %4330
        %4332 = vrot.lane.b32.xlu0 %v4252, 127
        %v4333 = vpop.permute.xlu0 %4332
        %4334 = vrot.lane.b32.xlu0 %v4253, 127
        %v4335 = vpop.permute.xlu0 %4334
        %4336 = vrot.lane.b32.xlu0 %v4254, 127
        %v4337 = vpop.permute.xlu0 %4336
        %4338 = vrot.lane.b32.xlu0 %v4255, 127
        %v4339 = vpop.permute.xlu0 %4338
        %v4340 = vsel %vm458, %v4285, %v4287
        %v4341 = vsel %vm458, %v4287, %v4289
        %v4342 = vsel %vm458, %v4289, %v4291
        %v4343 = vsel %vm458, %v4293, %v4295
        %v4344 = vsel %vm458, %v4295, %v4297
        %v4345 = vsel %vm458, %v4297, %v4299
        %v4346 = vsel %vm458, %v4301, %v4303
        %v4347 = vsel %vm458, %v4303, %v4305
        %v4348 = vsel %vm458, %v4305, %v4307
        %v4349 = vsel %vm458, %v4309, %v4311
        %v4350 = vsel %vm458, %v4311, %v4313
        %v4351 = vsel %vm458, %v4313, %v4315
        %v4352 = vsel %vm458, %v4317, %v4319
        %v4353 = vsel %vm458, %v4319, %v4321
        %v4354 = vsel %vm458, %v4321, %v4323
        %v4355 = vsel %vm458, %v4325, %v4327
        %v4356 = vsel %vm458, %v4327, %v4329
        %v4357 = vsel %vm458, %v4329, %v4331
        %v4358 = vsel %vm458, %v4333, %v4335
        %v4359 = vsel %vm458, %v4335, %v4337
        %v4360 = vsel %vm458, %v4337, %v4339
        %4389 = vrot.lane.b32.xlu0 %v4228, 126
        %v4390 = vpop.permute.xlu0 %4389
        %4391 = vrot.lane.b32.xlu0 %v4229, 126
        %v4392 = vpop.permute.xlu0 %4391
        %4393 = vrot.lane.b32.xlu0 %v4230, 126
        %v4394 = vpop.permute.xlu0 %4393
        %4395 = vrot.lane.b32.xlu0 %v4231, 126
        %v4396 = vpop.permute.xlu0 %4395
        %4397 = vrot.lane.b32.xlu0 %v4232, 126
        %v4398 = vpop.permute.xlu0 %4397
        %4399 = vrot.lane.b32.xlu0 %v4233, 126
        %v4400 = vpop.permute.xlu0 %4399
        %4401 = vrot.lane.b32.xlu0 %v4234, 126
        %v4402 = vpop.permute.xlu0 %4401
        %4403 = vrot.lane.b32.xlu0 %v4235, 126
        %v4404 = vpop.permute.xlu0 %4403
        %4405 = vrot.lane.b32.xlu0 %v4236, 126
        %v4406 = vpop.permute.xlu0 %4405
        %4407 = vrot.lane.b32.xlu0 %v4237, 126
        %v4408 = vpop.permute.xlu0 %4407
        %4409 = vrot.lane.b32.xlu0 %v4238, 126
        %v4410 = vpop.permute.xlu0 %4409
        %4411 = vrot.lane.b32.xlu0 %v4239, 126
        %v4412 = vpop.permute.xlu0 %4411
        %4413 = vrot.lane.b32.xlu0 %v4240, 126
        %v4414 = vpop.permute.xlu0 %4413
        %4415 = vrot.lane.b32.xlu0 %v4241, 126
        %v4416 = vpop.permute.xlu0 %4415
        %4417 = vrot.lane.b32.xlu0 %v4242, 126
        %v4418 = vpop.permute.xlu0 %4417
        %4419 = vrot.lane.b32.xlu0 %v4243, 126
        %v4420 = vpop.permute.xlu0 %4419
        %4421 = vrot.lane.b32.xlu0 %v4244, 126
        %v4422 = vpop.permute.xlu0 %4421
        %4423 = vrot.lane.b32.xlu0 %v4245, 126
        %v4424 = vpop.permute.xlu0 %4423
        %4425 = vrot.lane.b32.xlu0 %v4246, 126
        %v4426 = vpop.permute.xlu0 %4425
        %4427 = vrot.lane.b32.xlu0 %v4247, 126
        %v4428 = vpop.permute.xlu0 %4427
        %4429 = vrot.lane.b32.xlu0 %v4248, 126
        %v4430 = vpop.permute.xlu0 %4429
        %4431 = vrot.lane.b32.xlu0 %v4249, 126
        %v4432 = vpop.permute.xlu0 %4431
        %4433 = vrot.lane.b32.xlu0 %v4250, 126
        %v4434 = vpop.permute.xlu0 %4433
        %4435 = vrot.lane.b32.xlu0 %v4251, 126
        %v4436 = vpop.permute.xlu0 %4435
        %4437 = vrot.lane.b32.xlu0 %v4252, 126
        %v4438 = vpop.permute.xlu0 %4437
        %4439 = vrot.lane.b32.xlu0 %v4253, 126
        %v4440 = vpop.permute.xlu0 %4439
        %4441 = vrot.lane.b32.xlu0 %v4254, 126
        %v4442 = vpop.permute.xlu0 %4441
        %4443 = vrot.lane.b32.xlu0 %v4255, 126
        %v4444 = vpop.permute.xlu0 %4443
        %v4445 = vsel %vm474, %v4390, %v4392
        %v4446 = vsel %vm474, %v4392, %v4394
        %v4447 = vsel %vm474, %v4394, %v4396
        %v4448 = vsel %vm474, %v4398, %v4400
        %v4449 = vsel %vm474, %v4400, %v4402
        %v4450 = vsel %vm474, %v4402, %v4404
        %v4451 = vsel %vm474, %v4406, %v4408
        %v4452 = vsel %vm474, %v4408, %v4410
        %v4453 = vsel %vm474, %v4410, %v4412
        %v4454 = vsel %vm474, %v4414, %v4416
        %v4455 = vsel %vm474, %v4416, %v4418
        %v4456 = vsel %vm474, %v4418, %v4420
        %v4457 = vsel %vm474, %v4422, %v4424
        %v4458 = vsel %vm474, %v4424, %v4426
        %v4459 = vsel %vm474, %v4426, %v4428
        %v4460 = vsel %vm474, %v4430, %v4432
        %v4461 = vsel %vm474, %v4432, %v4434
        %v4462 = vsel %vm474, %v4434, %v4436
        %v4463 = vsel %vm474, %v4438, %v4440
        %v4464 = vsel %vm474, %v4440, %v4442
        %v4465 = vsel %vm474, %v4442, %v4444
        %4494 = vrot.lane.b32.xlu0 %v4228, 125
        %v4495 = vpop.permute.xlu0 %4494
        %4496 = vrot.lane.b32.xlu0 %v4229, 125
        %v4497 = vpop.permute.xlu0 %4496
        %4498 = vrot.lane.b32.xlu0 %v4230, 125
        %v4499 = vpop.permute.xlu0 %4498
        %4500 = vrot.lane.b32.xlu0 %v4231, 125
        %v4501 = vpop.permute.xlu0 %4500
        %4502 = vrot.lane.b32.xlu0 %v4232, 125
        %v4503 = vpop.permute.xlu0 %4502
        %4504 = vrot.lane.b32.xlu0 %v4233, 125
        %v4505 = vpop.permute.xlu0 %4504
        %4506 = vrot.lane.b32.xlu0 %v4234, 125
        %v4507 = vpop.permute.xlu0 %4506
        %4508 = vrot.lane.b32.xlu0 %v4235, 125
        %v4509 = vpop.permute.xlu0 %4508
        %4510 = vrot.lane.b32.xlu0 %v4236, 125
        %v4511 = vpop.permute.xlu0 %4510
        %4512 = vrot.lane.b32.xlu0 %v4237, 125
        %v4513 = vpop.permute.xlu0 %4512
        %4514 = vrot.lane.b32.xlu0 %v4238, 125
        %v4515 = vpop.permute.xlu0 %4514
        %4516 = vrot.lane.b32.xlu0 %v4239, 125
        %v4517 = vpop.permute.xlu0 %4516
        %4518 = vrot.lane.b32.xlu0 %v4240, 125
        %v4519 = vpop.permute.xlu0 %4518
        %4520 = vrot.lane.b32.xlu0 %v4241, 125
        %v4521 = vpop.permute.xlu0 %4520
        %4522 = vrot.lane.b32.xlu0 %v4242, 125
        %v4523 = vpop.permute.xlu0 %4522
        %4524 = vrot.lane.b32.xlu0 %v4243, 125
        %v4525 = vpop.permute.xlu0 %4524
        %4526 = vrot.lane.b32.xlu0 %v4244, 125
        %v4527 = vpop.permute.xlu0 %4526
        %4528 = vrot.lane.b32.xlu0 %v4245, 125
        %v4529 = vpop.permute.xlu0 %4528
        %4530 = vrot.lane.b32.xlu0 %v4246, 125
        %v4531 = vpop.permute.xlu0 %4530
        %4532 = vrot.lane.b32.xlu0 %v4247, 125
        %v4533 = vpop.permute.xlu0 %4532
        %4534 = vrot.lane.b32.xlu0 %v4248, 125
        %v4535 = vpop.permute.xlu0 %4534
        %4536 = vrot.lane.b32.xlu0 %v4249, 125
        %v4537 = vpop.permute.xlu0 %4536
        %4538 = vrot.lane.b32.xlu0 %v4250, 125
        %v4539 = vpop.permute.xlu0 %4538
        %4540 = vrot.lane.b32.xlu0 %v4251, 125
        %v4541 = vpop.permute.xlu0 %4540
        %4542 = vrot.lane.b32.xlu0 %v4252, 125
        %v4543 = vpop.permute.xlu0 %4542
        %4544 = vrot.lane.b32.xlu0 %v4253, 125
        %v4545 = vpop.permute.xlu0 %4544
        %4546 = vrot.lane.b32.xlu0 %v4254, 125
        %v4547 = vpop.permute.xlu0 %4546
        %4548 = vrot.lane.b32.xlu0 %v4255, 125
        %v4549 = vpop.permute.xlu0 %4548
        %v4550 = vsel %vm490, %v4495, %v4497
        %v4551 = vsel %vm490, %v4497, %v4499
        %v4552 = vsel %vm490, %v4499, %v4501
        %v4553 = vsel %vm490, %v4503, %v4505
        %v4554 = vsel %vm490, %v4505, %v4507
        %v4555 = vsel %vm490, %v4507, %v4509
        %v4556 = vsel %vm490, %v4511, %v4513
        %v4557 = vsel %vm490, %v4513, %v4515
        %v4558 = vsel %vm490, %v4515, %v4517
        %v4559 = vsel %vm490, %v4519, %v4521
        %v4560 = vsel %vm490, %v4521, %v4523
        %v4561 = vsel %vm490, %v4523, %v4525
        %v4562 = vsel %vm490, %v4527, %v4529
        %v4563 = vsel %vm490, %v4529, %v4531
        %v4564 = vsel %vm490, %v4531, %v4533
        %v4565 = vsel %vm490, %v4535, %v4537
        %v4566 = vsel %vm490, %v4537, %v4539
        %v4567 = vsel %vm490, %v4539, %v4541
        %v4568 = vsel %vm490, %v4543, %v4545
        %v4569 = vsel %vm490, %v4545, %v4547
        %v4570 = vsel %vm490, %v4547, %v4549
        %4599 = vrot.lane.b32.xlu0 %v4228, 124
        %v4600 = vpop.permute.xlu0 %4599
        %4601 = vrot.lane.b32.xlu0 %v4229, 124
        %v4602 = vpop.permute.xlu0 %4601
        %4603 = vrot.lane.b32.xlu0 %v4230, 124
        %v4604 = vpop.permute.xlu0 %4603
        %4605 = vrot.lane.b32.xlu0 %v4231, 124
        %v4606 = vpop.permute.xlu0 %4605
        %4607 = vrot.lane.b32.xlu0 %v4232, 124
        %v4608 = vpop.permute.xlu0 %4607
        %4609 = vrot.lane.b32.xlu0 %v4233, 124
        %v4610 = vpop.permute.xlu0 %4609
        %4611 = vrot.lane.b32.xlu0 %v4234, 124
        %v4612 = vpop.permute.xlu0 %4611
        %4613 = vrot.lane.b32.xlu0 %v4235, 124
        %v4614 = vpop.permute.xlu0 %4613
        %4615 = vrot.lane.b32.xlu0 %v4236, 124
        %v4616 = vpop.permute.xlu0 %4615
        %4617 = vrot.lane.b32.xlu0 %v4237, 124
        %v4618 = vpop.permute.xlu0 %4617
        %4619 = vrot.lane.b32.xlu0 %v4238, 124
        %v4620 = vpop.permute.xlu0 %4619
        %4621 = vrot.lane.b32.xlu0 %v4239, 124
        %v4622 = vpop.permute.xlu0 %4621
        %4623 = vrot.lane.b32.xlu0 %v4240, 124
        %v4624 = vpop.permute.xlu0 %4623
        %4625 = vrot.lane.b32.xlu0 %v4241, 124
        %v4626 = vpop.permute.xlu0 %4625
        %4627 = vrot.lane.b32.xlu0 %v4242, 124
        %v4628 = vpop.permute.xlu0 %4627
        %4629 = vrot.lane.b32.xlu0 %v4243, 124
        %v4630 = vpop.permute.xlu0 %4629
        %4631 = vrot.lane.b32.xlu0 %v4244, 124
        %v4632 = vpop.permute.xlu0 %4631
        %4633 = vrot.lane.b32.xlu0 %v4245, 124
        %v4634 = vpop.permute.xlu0 %4633
        %4635 = vrot.lane.b32.xlu0 %v4246, 124
        %v4636 = vpop.permute.xlu0 %4635
        %4637 = vrot.lane.b32.xlu0 %v4247, 124
        %v4638 = vpop.permute.xlu0 %4637
        %4639 = vrot.lane.b32.xlu0 %v4248, 124
        %v4640 = vpop.permute.xlu0 %4639
        %4641 = vrot.lane.b32.xlu0 %v4249, 124
        %v4642 = vpop.permute.xlu0 %4641
        %4643 = vrot.lane.b32.xlu0 %v4250, 124
        %v4644 = vpop.permute.xlu0 %4643
        %4645 = vrot.lane.b32.xlu0 %v4251, 124
        %v4646 = vpop.permute.xlu0 %4645
        %4647 = vrot.lane.b32.xlu0 %v4252, 124
        %v4648 = vpop.permute.xlu0 %4647
        %4649 = vrot.lane.b32.xlu0 %v4253, 124
        %v4650 = vpop.permute.xlu0 %4649
        %4651 = vrot.lane.b32.xlu0 %v4254, 124
        %v4652 = vpop.permute.xlu0 %4651
        %4653 = vrot.lane.b32.xlu0 %v4255, 124
        %v4654 = vpop.permute.xlu0 %4653
        %v4655 = vsel %vm506, %v4600, %v4602
        %v4656 = vsel %vm506, %v4602, %v4604
        %v4657 = vsel %vm506, %v4604, %v4606
        %v4658 = vsel %vm506, %v4608, %v4610
        %v4659 = vsel %vm506, %v4610, %v4612
        %v4660 = vsel %vm506, %v4612, %v4614
        %v4661 = vsel %vm506, %v4616, %v4618
        %v4662 = vsel %vm506, %v4618, %v4620
        %v4663 = vsel %vm506, %v4620, %v4622
        %v4664 = vsel %vm506, %v4624, %v4626
        %v4665 = vsel %vm506, %v4626, %v4628
        %v4666 = vsel %vm506, %v4628, %v4630
        %v4667 = vsel %vm506, %v4632, %v4634
        %v4668 = vsel %vm506, %v4634, %v4636
        %v4669 = vsel %vm506, %v4636, %v4638
        %v4670 = vsel %vm506, %v4640, %v4642
        %v4671 = vsel %vm506, %v4642, %v4644
        %v4672 = vsel %vm506, %v4644, %v4646
        %v4673 = vsel %vm506, %v4648, %v4650
        %v4674 = vsel %vm506, %v4650, %v4652
        %v4675 = vsel %vm506, %v4652, %v4654
        %4704 = vrot.lane.b32.xlu0 %v4228, 108
        %v4705 = vpop.permute.xlu0 %4704
        %4706 = vrot.lane.b32.xlu0 %v4229, 108
        %v4707 = vpop.permute.xlu0 %4706
        %4708 = vrot.lane.b32.xlu0 %v4230, 108
        %v4709 = vpop.permute.xlu0 %4708
        %4710 = vrot.lane.b32.xlu0 %v4231, 108
        %v4711 = vpop.permute.xlu0 %4710
        %4712 = vrot.lane.b32.xlu0 %v4232, 108
        %v4713 = vpop.permute.xlu0 %4712
        %4714 = vrot.lane.b32.xlu0 %v4233, 108
        %v4715 = vpop.permute.xlu0 %4714
        %4716 = vrot.lane.b32.xlu0 %v4234, 108
        %v4717 = vpop.permute.xlu0 %4716
        %4718 = vrot.lane.b32.xlu0 %v4235, 108
        %v4719 = vpop.permute.xlu0 %4718
        %4720 = vrot.lane.b32.xlu0 %v4236, 108
        %v4721 = vpop.permute.xlu0 %4720
        %4722 = vrot.lane.b32.xlu0 %v4237, 108
        %v4723 = vpop.permute.xlu0 %4722
        %4724 = vrot.lane.b32.xlu0 %v4238, 108
        %v4725 = vpop.permute.xlu0 %4724
        %4726 = vrot.lane.b32.xlu0 %v4239, 108
        %v4727 = vpop.permute.xlu0 %4726
        %4728 = vrot.lane.b32.xlu0 %v4240, 108
        %v4729 = vpop.permute.xlu0 %4728
        %4730 = vrot.lane.b32.xlu0 %v4241, 108
        %v4731 = vpop.permute.xlu0 %4730
        %4732 = vrot.lane.b32.xlu0 %v4242, 108
        %v4733 = vpop.permute.xlu0 %4732
        %4734 = vrot.lane.b32.xlu0 %v4243, 108
        %v4735 = vpop.permute.xlu0 %4734
        %4736 = vrot.lane.b32.xlu0 %v4244, 108
        %v4737 = vpop.permute.xlu0 %4736
        %4738 = vrot.lane.b32.xlu0 %v4245, 108
        %v4739 = vpop.permute.xlu0 %4738
        %4740 = vrot.lane.b32.xlu0 %v4246, 108
        %v4741 = vpop.permute.xlu0 %4740
        %4742 = vrot.lane.b32.xlu0 %v4247, 108
        %v4743 = vpop.permute.xlu0 %4742
        %4744 = vrot.lane.b32.xlu0 %v4248, 108
        %v4745 = vpop.permute.xlu0 %4744
        %4746 = vrot.lane.b32.xlu0 %v4249, 108
        %v4747 = vpop.permute.xlu0 %4746
        %4748 = vrot.lane.b32.xlu0 %v4250, 108
        %v4749 = vpop.permute.xlu0 %4748
        %4750 = vrot.lane.b32.xlu0 %v4251, 108
        %v4751 = vpop.permute.xlu0 %4750
        %4752 = vrot.lane.b32.xlu0 %v4252, 108
        %v4753 = vpop.permute.xlu0 %4752
        %4754 = vrot.lane.b32.xlu0 %v4253, 108
        %v4755 = vpop.permute.xlu0 %4754
        %4756 = vrot.lane.b32.xlu0 %v4254, 108
        %v4757 = vpop.permute.xlu0 %4756
        %4758 = vrot.lane.b32.xlu0 %v4255, 108
        %v4759 = vpop.permute.xlu0 %4758
        %v4760 = vsel %vm522, %v4705, %v4707
        %v4761 = vsel %vm522, %v4707, %v4709
        %v4762 = vsel %vm522, %v4709, %v4711
        %v4763 = vsel %vm522, %v4713, %v4715
        %v4764 = vsel %vm522, %v4715, %v4717
        %v4765 = vsel %vm522, %v4717, %v4719
        %v4766 = vsel %vm522, %v4721, %v4723
        %v4767 = vsel %vm522, %v4723, %v4725
        %v4768 = vsel %vm522, %v4725, %v4727
        %v4769 = vsel %vm522, %v4729, %v4731
        %v4770 = vsel %vm522, %v4731, %v4733
        %v4771 = vsel %vm522, %v4733, %v4735
        %v4772 = vsel %vm522, %v4737, %v4739
        %v4773 = vsel %vm522, %v4739, %v4741
        %v4774 = vsel %vm522, %v4741, %v4743
        %v4775 = vsel %vm522, %v4745, %v4747
        %v4776 = vsel %vm522, %v4747, %v4749
        %v4777 = vsel %vm522, %v4749, %v4751
        %v4778 = vsel %vm522, %v4753, %v4755
        %v4779 = vsel %vm522, %v4755, %v4757
        %v4780 = vsel %vm522, %v4757, %v4759
        %4809 = vrot.lane.b32.xlu0 %v4228, 107
        %v4810 = vpop.permute.xlu0 %4809
        %4811 = vrot.lane.b32.xlu0 %v4229, 107
        %v4812 = vpop.permute.xlu0 %4811
        %4813 = vrot.lane.b32.xlu0 %v4230, 107
        %v4814 = vpop.permute.xlu0 %4813
        %4815 = vrot.lane.b32.xlu0 %v4231, 107
        %v4816 = vpop.permute.xlu0 %4815
        %4817 = vrot.lane.b32.xlu0 %v4232, 107
        %v4818 = vpop.permute.xlu0 %4817
        %4819 = vrot.lane.b32.xlu0 %v4233, 107
        %v4820 = vpop.permute.xlu0 %4819
        %4821 = vrot.lane.b32.xlu0 %v4234, 107
        %v4822 = vpop.permute.xlu0 %4821
        %4823 = vrot.lane.b32.xlu0 %v4235, 107
        %v4824 = vpop.permute.xlu0 %4823
        %4825 = vrot.lane.b32.xlu0 %v4236, 107
        %v4826 = vpop.permute.xlu0 %4825
        %4827 = vrot.lane.b32.xlu0 %v4237, 107
        %v4828 = vpop.permute.xlu0 %4827
        %4829 = vrot.lane.b32.xlu0 %v4238, 107
        %v4830 = vpop.permute.xlu0 %4829
        %4831 = vrot.lane.b32.xlu0 %v4239, 107
        %v4832 = vpop.permute.xlu0 %4831
        %4833 = vrot.lane.b32.xlu0 %v4240, 107
        %v4834 = vpop.permute.xlu0 %4833
        %4835 = vrot.lane.b32.xlu0 %v4241, 107
        %v4836 = vpop.permute.xlu0 %4835
        %4837 = vrot.lane.b32.xlu0 %v4242, 107
        %v4838 = vpop.permute.xlu0 %4837
        %4839 = vrot.lane.b32.xlu0 %v4243, 107
        %v4840 = vpop.permute.xlu0 %4839
        %4841 = vrot.lane.b32.xlu0 %v4244, 107
        %v4842 = vpop.permute.xlu0 %4841
        %4843 = vrot.lane.b32.xlu0 %v4245, 107
        %v4844 = vpop.permute.xlu0 %4843
        %4845 = vrot.lane.b32.xlu0 %v4246, 107
        %v4846 = vpop.permute.xlu0 %4845
        %4847 = vrot.lane.b32.xlu0 %v4247, 107
        %v4848 = vpop.permute.xlu0 %4847
        %4849 = vrot.lane.b32.xlu0 %v4248, 107
        %v4850 = vpop.permute.xlu0 %4849
        %4851 = vrot.lane.b32.xlu0 %v4249, 107
        %v4852 = vpop.permute.xlu0 %4851
        %4853 = vrot.lane.b32.xlu0 %v4250, 107
        %v4854 = vpop.permute.xlu0 %4853
        %4855 = vrot.lane.b32.xlu0 %v4251, 107
        %v4856 = vpop.permute.xlu0 %4855
        %4857 = vrot.lane.b32.xlu0 %v4252, 107
        %v4858 = vpop.permute.xlu0 %4857
        %4859 = vrot.lane.b32.xlu0 %v4253, 107
        %v4860 = vpop.permute.xlu0 %4859
        %4861 = vrot.lane.b32.xlu0 %v4254, 107
        %v4862 = vpop.permute.xlu0 %4861
        %4863 = vrot.lane.b32.xlu0 %v4255, 107
        %v4864 = vpop.permute.xlu0 %4863
        %v4865 = vsel %vm538, %v4810, %v4812
        %v4866 = vsel %vm538, %v4812, %v4814
        %v4867 = vsel %vm538, %v4814, %v4816
        %v4868 = vsel %vm538, %v4818, %v4820
        %v4869 = vsel %vm538, %v4820, %v4822
        %v4870 = vsel %vm538, %v4822, %v4824
        %v4871 = vsel %vm538, %v4826, %v4828
        %v4872 = vsel %vm538, %v4828, %v4830
        %v4873 = vsel %vm538, %v4830, %v4832
        %v4874 = vsel %vm538, %v4834, %v4836
        %v4875 = vsel %vm538, %v4836, %v4838
        %v4876 = vsel %vm538, %v4838, %v4840
        %v4877 = vsel %vm538, %v4842, %v4844
        %v4878 = vsel %vm538, %v4844, %v4846
        %v4879 = vsel %vm538, %v4846, %v4848
        %v4880 = vsel %vm538, %v4850, %v4852
        %v4881 = vsel %vm538, %v4852, %v4854
        %v4882 = vsel %vm538, %v4854, %v4856
        %v4883 = vsel %vm538, %v4858, %v4860
        %v4884 = vsel %vm538, %v4860, %v4862
        %v4885 = vsel %vm538, %v4862, %v4864
        %4914 = vrot.lane.b32.xlu0 %v4228, 106
        %v4915 = vpop.permute.xlu0 %4914
        %4916 = vrot.lane.b32.xlu0 %v4229, 106
        %v4917 = vpop.permute.xlu0 %4916
        %4918 = vrot.lane.b32.xlu0 %v4230, 106
        %v4919 = vpop.permute.xlu0 %4918
        %4920 = vrot.lane.b32.xlu0 %v4231, 106
        %v4921 = vpop.permute.xlu0 %4920
        %4922 = vrot.lane.b32.xlu0 %v4232, 106
        %v4923 = vpop.permute.xlu0 %4922
        %4924 = vrot.lane.b32.xlu0 %v4233, 106
        %v4925 = vpop.permute.xlu0 %4924
        %4926 = vrot.lane.b32.xlu0 %v4234, 106
        %v4927 = vpop.permute.xlu0 %4926
        %4928 = vrot.lane.b32.xlu0 %v4235, 106
        %v4929 = vpop.permute.xlu0 %4928
        %4930 = vrot.lane.b32.xlu0 %v4236, 106
        %v4931 = vpop.permute.xlu0 %4930
        %4932 = vrot.lane.b32.xlu0 %v4237, 106
        %v4933 = vpop.permute.xlu0 %4932
        %4934 = vrot.lane.b32.xlu0 %v4238, 106
        %v4935 = vpop.permute.xlu0 %4934
        %4936 = vrot.lane.b32.xlu0 %v4239, 106
        %v4937 = vpop.permute.xlu0 %4936
        %4938 = vrot.lane.b32.xlu0 %v4240, 106
        %v4939 = vpop.permute.xlu0 %4938
        %4940 = vrot.lane.b32.xlu0 %v4241, 106
        %v4941 = vpop.permute.xlu0 %4940
        %4942 = vrot.lane.b32.xlu0 %v4242, 106
        %v4943 = vpop.permute.xlu0 %4942
        %4944 = vrot.lane.b32.xlu0 %v4243, 106
        %v4945 = vpop.permute.xlu0 %4944
        %4946 = vrot.lane.b32.xlu0 %v4244, 106
        %v4947 = vpop.permute.xlu0 %4946
        %4948 = vrot.lane.b32.xlu0 %v4245, 106
        %v4949 = vpop.permute.xlu0 %4948
        %4950 = vrot.lane.b32.xlu0 %v4246, 106
        %v4951 = vpop.permute.xlu0 %4950
        %4952 = vrot.lane.b32.xlu0 %v4247, 106
        %v4953 = vpop.permute.xlu0 %4952
        %4954 = vrot.lane.b32.xlu0 %v4248, 106
        %v4955 = vpop.permute.xlu0 %4954
        %4956 = vrot.lane.b32.xlu0 %v4249, 106
        %v4957 = vpop.permute.xlu0 %4956
        %4958 = vrot.lane.b32.xlu0 %v4250, 106
        %v4959 = vpop.permute.xlu0 %4958
        %4960 = vrot.lane.b32.xlu0 %v4251, 106
        %v4961 = vpop.permute.xlu0 %4960
        %4962 = vrot.lane.b32.xlu0 %v4252, 106
        %v4963 = vpop.permute.xlu0 %4962
        %4964 = vrot.lane.b32.xlu0 %v4253, 106
        %v4965 = vpop.permute.xlu0 %4964
        %4966 = vrot.lane.b32.xlu0 %v4254, 106
        %v4967 = vpop.permute.xlu0 %4966
        %4968 = vrot.lane.b32.xlu0 %v4255, 106
        %v4969 = vpop.permute.xlu0 %4968
        %v4970 = vsel %vm554, %v4915, %v4917
        %v4971 = vsel %vm554, %v4917, %v4919
        %v4972 = vsel %vm554, %v4919, %v4921
        %v4973 = vsel %vm554, %v4923, %v4925
        %v4974 = vsel %vm554, %v4925, %v4927
        %v4975 = vsel %vm554, %v4927, %v4929
        %v4976 = vsel %vm554, %v4931, %v4933
        %v4977 = vsel %vm554, %v4933, %v4935
        %v4978 = vsel %vm554, %v4935, %v4937
        %v4979 = vsel %vm554, %v4939, %v4941
        %v4980 = vsel %vm554, %v4941, %v4943
        %v4981 = vsel %vm554, %v4943, %v4945
        %v4982 = vsel %vm554, %v4947, %v4949
        %v4983 = vsel %vm554, %v4949, %v4951
        %v4984 = vsel %vm554, %v4951, %v4953
        %v4985 = vsel %vm554, %v4955, %v4957
        %v4986 = vsel %vm554, %v4957, %v4959
        %v4987 = vsel %vm554, %v4959, %v4961
        %v4988 = vsel %vm554, %v4963, %v4965
        %v4989 = vsel %vm554, %v4965, %v4967
        %v4990 = vsel %vm554, %v4967, %v4969
        %5019 = vrot.lane.b32.xlu0 %v4228, 105
        %v5020 = vpop.permute.xlu0 %5019
        %5021 = vrot.lane.b32.xlu0 %v4229, 105
        %v5022 = vpop.permute.xlu0 %5021
        %5023 = vrot.lane.b32.xlu0 %v4230, 105
        %v5024 = vpop.permute.xlu0 %5023
        %5025 = vrot.lane.b32.xlu0 %v4231, 105
        %v5026 = vpop.permute.xlu0 %5025
        %5027 = vrot.lane.b32.xlu0 %v4232, 105
        %v5028 = vpop.permute.xlu0 %5027
        %5029 = vrot.lane.b32.xlu0 %v4233, 105
        %v5030 = vpop.permute.xlu0 %5029
        %5031 = vrot.lane.b32.xlu0 %v4234, 105
        %v5032 = vpop.permute.xlu0 %5031
        %5033 = vrot.lane.b32.xlu0 %v4235, 105
        %v5034 = vpop.permute.xlu0 %5033
        %5035 = vrot.lane.b32.xlu0 %v4236, 105
        %v5036 = vpop.permute.xlu0 %5035
        %5037 = vrot.lane.b32.xlu0 %v4237, 105
        %v5038 = vpop.permute.xlu0 %5037
        %5039 = vrot.lane.b32.xlu0 %v4238, 105
        %v5040 = vpop.permute.xlu0 %5039
        %5041 = vrot.lane.b32.xlu0 %v4239, 105
        %v5042 = vpop.permute.xlu0 %5041
        %5043 = vrot.lane.b32.xlu0 %v4240, 105
        %v5044 = vpop.permute.xlu0 %5043
        %5045 = vrot.lane.b32.xlu0 %v4241, 105
        %v5046 = vpop.permute.xlu0 %5045
        %5047 = vrot.lane.b32.xlu0 %v4242, 105
        %v5048 = vpop.permute.xlu0 %5047
        %5049 = vrot.lane.b32.xlu0 %v4243, 105
        %v5050 = vpop.permute.xlu0 %5049
        %5051 = vrot.lane.b32.xlu0 %v4244, 105
        %v5052 = vpop.permute.xlu0 %5051
        %5053 = vrot.lane.b32.xlu0 %v4245, 105
        %v5054 = vpop.permute.xlu0 %5053
        %5055 = vrot.lane.b32.xlu0 %v4246, 105
        %v5056 = vpop.permute.xlu0 %5055
        %5057 = vrot.lane.b32.xlu0 %v4247, 105
        %v5058 = vpop.permute.xlu0 %5057
        %5059 = vrot.lane.b32.xlu0 %v4248, 105
        %v5060 = vpop.permute.xlu0 %5059
        %5061 = vrot.lane.b32.xlu0 %v4249, 105
        %v5062 = vpop.permute.xlu0 %5061
        %5063 = vrot.lane.b32.xlu0 %v4250, 105
        %v5064 = vpop.permute.xlu0 %5063
        %5065 = vrot.lane.b32.xlu0 %v4251, 105
        %v5066 = vpop.permute.xlu0 %5065
        %5067 = vrot.lane.b32.xlu0 %v4252, 105
        %v5068 = vpop.permute.xlu0 %5067
        %5069 = vrot.lane.b32.xlu0 %v4253, 105
        %v5070 = vpop.permute.xlu0 %5069
        %5071 = vrot.lane.b32.xlu0 %v4254, 105
        %v5072 = vpop.permute.xlu0 %5071
        %5073 = vrot.lane.b32.xlu0 %v4255, 105
        %v5074 = vpop.permute.xlu0 %5073
        %v5075 = vsel %vm570, %v5020, %v5022
        %v5076 = vsel %vm570, %v5022, %v5024
        %v5077 = vsel %vm570, %v5024, %v5026
        %v5078 = vsel %vm570, %v5028, %v5030
        %v5079 = vsel %vm570, %v5030, %v5032
        %v5080 = vsel %vm570, %v5032, %v5034
        %v5081 = vsel %vm570, %v5036, %v5038
        %v5082 = vsel %vm570, %v5038, %v5040
        %v5083 = vsel %vm570, %v5040, %v5042
        %v5084 = vsel %vm570, %v5044, %v5046
        %v5085 = vsel %vm570, %v5046, %v5048
        %v5086 = vsel %vm570, %v5048, %v5050
        %v5087 = vsel %vm570, %v5052, %v5054
        %v5088 = vsel %vm570, %v5054, %v5056
        %v5089 = vsel %vm570, %v5056, %v5058
        %v5090 = vsel %vm570, %v5060, %v5062
        %v5091 = vsel %vm570, %v5062, %v5064
        %v5092 = vsel %vm570, %v5064, %v5066
        %v5093 = vsel %vm570, %v5068, %v5070
        %v5094 = vsel %vm570, %v5070, %v5072
        %v5095 = vsel %vm570, %v5072, %v5074
        %5124 = vrot.lane.b32.xlu0 %v4228, 104
        %v5125 = vpop.permute.xlu0 %5124
        %5126 = vrot.lane.b32.xlu0 %v4229, 104
        %v5127 = vpop.permute.xlu0 %5126
        %5128 = vrot.lane.b32.xlu0 %v4230, 104
        %v5129 = vpop.permute.xlu0 %5128
        %5130 = vrot.lane.b32.xlu0 %v4231, 104
        %v5131 = vpop.permute.xlu0 %5130
        %5132 = vrot.lane.b32.xlu0 %v4232, 104
        %v5133 = vpop.permute.xlu0 %5132
        %5134 = vrot.lane.b32.xlu0 %v4233, 104
        %v5135 = vpop.permute.xlu0 %5134
        %5136 = vrot.lane.b32.xlu0 %v4234, 104
        %v5137 = vpop.permute.xlu0 %5136
        %5138 = vrot.lane.b32.xlu0 %v4235, 104
        %v5139 = vpop.permute.xlu0 %5138
        %5140 = vrot.lane.b32.xlu0 %v4236, 104
        %v5141 = vpop.permute.xlu0 %5140
        %5142 = vrot.lane.b32.xlu0 %v4237, 104
        %v5143 = vpop.permute.xlu0 %5142
        %5144 = vrot.lane.b32.xlu0 %v4238, 104
        %v5145 = vpop.permute.xlu0 %5144
        %5146 = vrot.lane.b32.xlu0 %v4239, 104
        %v5147 = vpop.permute.xlu0 %5146
        %5148 = vrot.lane.b32.xlu0 %v4240, 104
        %v5149 = vpop.permute.xlu0 %5148
        %5150 = vrot.lane.b32.xlu0 %v4241, 104
        %v5151 = vpop.permute.xlu0 %5150
        %5152 = vrot.lane.b32.xlu0 %v4242, 104
        %v5153 = vpop.permute.xlu0 %5152
        %5154 = vrot.lane.b32.xlu0 %v4243, 104
        %v5155 = vpop.permute.xlu0 %5154
        %5156 = vrot.lane.b32.xlu0 %v4244, 104
        %v5157 = vpop.permute.xlu0 %5156
        %5158 = vrot.lane.b32.xlu0 %v4245, 104
        %v5159 = vpop.permute.xlu0 %5158
        %5160 = vrot.lane.b32.xlu0 %v4246, 104
        %v5161 = vpop.permute.xlu0 %5160
        %5162 = vrot.lane.b32.xlu0 %v4247, 104
        %v5163 = vpop.permute.xlu0 %5162
        %5164 = vrot.lane.b32.xlu0 %v4248, 104
        %v5165 = vpop.permute.xlu0 %5164
        %5166 = vrot.lane.b32.xlu0 %v4249, 104
        %v5167 = vpop.permute.xlu0 %5166
        %5168 = vrot.lane.b32.xlu0 %v4250, 104
        %v5169 = vpop.permute.xlu0 %5168
        %5170 = vrot.lane.b32.xlu0 %v4251, 104
        %v5171 = vpop.permute.xlu0 %5170
        %5172 = vrot.lane.b32.xlu0 %v4252, 104
        %v5173 = vpop.permute.xlu0 %5172
        %5174 = vrot.lane.b32.xlu0 %v4253, 104
        %v5175 = vpop.permute.xlu0 %5174
        %5176 = vrot.lane.b32.xlu0 %v4254, 104
        %v5177 = vpop.permute.xlu0 %5176
        %5178 = vrot.lane.b32.xlu0 %v4255, 104
        %v5179 = vpop.permute.xlu0 %5178
        %v5180 = vsel %vm586, %v5125, %v5127
        %v5181 = vsel %vm586, %v5127, %v5129
        %v5182 = vsel %vm586, %v5129, %v5131
        %v5183 = vsel %vm586, %v5133, %v5135
        %v5184 = vsel %vm586, %v5135, %v5137
        %v5185 = vsel %vm586, %v5137, %v5139
        %v5186 = vsel %vm586, %v5141, %v5143
        %v5187 = vsel %vm586, %v5143, %v5145
        %v5188 = vsel %vm586, %v5145, %v5147
        %v5189 = vsel %vm586, %v5149, %v5151
        %v5190 = vsel %vm586, %v5151, %v5153
        %v5191 = vsel %vm586, %v5153, %v5155
        %v5192 = vsel %vm586, %v5157, %v5159
        %v5193 = vsel %vm586, %v5159, %v5161
        %v5194 = vsel %vm586, %v5161, %v5163
        %v5195 = vsel %vm586, %v5165, %v5167
        %v5196 = vsel %vm586, %v5167, %v5169
        %v5197 = vsel %vm586, %v5169, %v5171
        %v5198 = vsel %vm586, %v5173, %v5175
        %v5199 = vsel %vm586, %v5175, %v5177
        %v5200 = vsel %vm586, %v5177, %v5179
        %5229 = vrot.lane.b32.xlu0 %v4228, 88
        %v5230 = vpop.permute.xlu0 %5229
        %5231 = vrot.lane.b32.xlu0 %v4229, 88
        %v5232 = vpop.permute.xlu0 %5231
        %5233 = vrot.lane.b32.xlu0 %v4230, 88
        %v5234 = vpop.permute.xlu0 %5233
        %5235 = vrot.lane.b32.xlu0 %v4231, 88
        %v5236 = vpop.permute.xlu0 %5235
        %5237 = vrot.lane.b32.xlu0 %v4232, 88
        %v5238 = vpop.permute.xlu0 %5237
        %5239 = vrot.lane.b32.xlu0 %v4233, 88
        %v5240 = vpop.permute.xlu0 %5239
        %5241 = vrot.lane.b32.xlu0 %v4234, 88
        %v5242 = vpop.permute.xlu0 %5241
        %5243 = vrot.lane.b32.xlu0 %v4235, 88
        %v5244 = vpop.permute.xlu0 %5243
        %5245 = vrot.lane.b32.xlu0 %v4236, 88
        %v5246 = vpop.permute.xlu0 %5245
        %5247 = vrot.lane.b32.xlu0 %v4237, 88
        %v5248 = vpop.permute.xlu0 %5247
        %5249 = vrot.lane.b32.xlu0 %v4238, 88
        %v5250 = vpop.permute.xlu0 %5249
        %5251 = vrot.lane.b32.xlu0 %v4239, 88
        %v5252 = vpop.permute.xlu0 %5251
        %5253 = vrot.lane.b32.xlu0 %v4240, 88
        %v5254 = vpop.permute.xlu0 %5253
        %5255 = vrot.lane.b32.xlu0 %v4241, 88
        %v5256 = vpop.permute.xlu0 %5255
        %5257 = vrot.lane.b32.xlu0 %v4242, 88
        %v5258 = vpop.permute.xlu0 %5257
        %5259 = vrot.lane.b32.xlu0 %v4243, 88
        %v5260 = vpop.permute.xlu0 %5259
        %5261 = vrot.lane.b32.xlu0 %v4244, 88
        %v5262 = vpop.permute.xlu0 %5261
        %5263 = vrot.lane.b32.xlu0 %v4245, 88
        %v5264 = vpop.permute.xlu0 %5263
        %5265 = vrot.lane.b32.xlu0 %v4246, 88
        %v5266 = vpop.permute.xlu0 %5265
        %5267 = vrot.lane.b32.xlu0 %v4247, 88
        %v5268 = vpop.permute.xlu0 %5267
        %5269 = vrot.lane.b32.xlu0 %v4248, 88
        %v5270 = vpop.permute.xlu0 %5269
        %5271 = vrot.lane.b32.xlu0 %v4249, 88
        %v5272 = vpop.permute.xlu0 %5271
        %5273 = vrot.lane.b32.xlu0 %v4250, 88
        %v5274 = vpop.permute.xlu0 %5273
        %5275 = vrot.lane.b32.xlu0 %v4251, 88
        %v5276 = vpop.permute.xlu0 %5275
        %5277 = vrot.lane.b32.xlu0 %v4252, 88
        %v5278 = vpop.permute.xlu0 %5277
        %5279 = vrot.lane.b32.xlu0 %v4253, 88
        %v5280 = vpop.permute.xlu0 %5279
        %5281 = vrot.lane.b32.xlu0 %v4254, 88
        %v5282 = vpop.permute.xlu0 %5281
        %5283 = vrot.lane.b32.xlu0 %v4255, 88
        %v5284 = vpop.permute.xlu0 %5283
        %v5285 = vsel %vm602, %v5230, %v5232
        %v5286 = vsel %vm602, %v5232, %v5234
        %v5287 = vsel %vm602, %v5234, %v5236
        %v5288 = vsel %vm602, %v5238, %v5240
        %v5289 = vsel %vm602, %v5240, %v5242
        %v5290 = vsel %vm602, %v5242, %v5244
        %v5291 = vsel %vm602, %v5246, %v5248
        %v5292 = vsel %vm602, %v5248, %v5250
        %v5293 = vsel %vm602, %v5250, %v5252
        %v5294 = vsel %vm602, %v5254, %v5256
        %v5295 = vsel %vm602, %v5256, %v5258
        %v5296 = vsel %vm602, %v5258, %v5260
        %v5297 = vsel %vm602, %v5262, %v5264
        %v5298 = vsel %vm602, %v5264, %v5266
        %v5299 = vsel %vm602, %v5266, %v5268
        %v5300 = vsel %vm602, %v5270, %v5272
        %v5301 = vsel %vm602, %v5272, %v5274
        %v5302 = vsel %vm602, %v5274, %v5276
        %v5303 = vsel %vm602, %v5278, %v5280
        %v5304 = vsel %vm602, %v5280, %v5282
        %v5305 = vsel %vm602, %v5282, %v5284
        %5334 = vrot.lane.b32.xlu0 %v4228, 87
        %v5335 = vpop.permute.xlu0 %5334
        %5336 = vrot.lane.b32.xlu0 %v4229, 87
        %v5337 = vpop.permute.xlu0 %5336
        %5338 = vrot.lane.b32.xlu0 %v4230, 87
        %v5339 = vpop.permute.xlu0 %5338
        %5340 = vrot.lane.b32.xlu0 %v4231, 87
        %v5341 = vpop.permute.xlu0 %5340
        %5342 = vrot.lane.b32.xlu0 %v4232, 87
        %v5343 = vpop.permute.xlu0 %5342
        %5344 = vrot.lane.b32.xlu0 %v4233, 87
        %v5345 = vpop.permute.xlu0 %5344
        %5346 = vrot.lane.b32.xlu0 %v4234, 87
        %v5347 = vpop.permute.xlu0 %5346
        %5348 = vrot.lane.b32.xlu0 %v4235, 87
        %v5349 = vpop.permute.xlu0 %5348
        %5350 = vrot.lane.b32.xlu0 %v4236, 87
        %v5351 = vpop.permute.xlu0 %5350
        %5352 = vrot.lane.b32.xlu0 %v4237, 87
        %v5353 = vpop.permute.xlu0 %5352
        %5354 = vrot.lane.b32.xlu0 %v4238, 87
        %v5355 = vpop.permute.xlu0 %5354
        %5356 = vrot.lane.b32.xlu0 %v4239, 87
        %v5357 = vpop.permute.xlu0 %5356
        %5358 = vrot.lane.b32.xlu0 %v4240, 87
        %v5359 = vpop.permute.xlu0 %5358
        %5360 = vrot.lane.b32.xlu0 %v4241, 87
        %v5361 = vpop.permute.xlu0 %5360
        %5362 = vrot.lane.b32.xlu0 %v4242, 87
        %v5363 = vpop.permute.xlu0 %5362
        %5364 = vrot.lane.b32.xlu0 %v4243, 87
        %v5365 = vpop.permute.xlu0 %5364
        %5366 = vrot.lane.b32.xlu0 %v4244, 87
        %v5367 = vpop.permute.xlu0 %5366
        %5368 = vrot.lane.b32.xlu0 %v4245, 87
        %v5369 = vpop.permute.xlu0 %5368
        %5370 = vrot.lane.b32.xlu0 %v4246, 87
        %v5371 = vpop.permute.xlu0 %5370
        %5372 = vrot.lane.b32.xlu0 %v4247, 87
        %v5373 = vpop.permute.xlu0 %5372
        %5374 = vrot.lane.b32.xlu0 %v4248, 87
        %v5375 = vpop.permute.xlu0 %5374
        %5376 = vrot.lane.b32.xlu0 %v4249, 87
        %v5377 = vpop.permute.xlu0 %5376
        %5378 = vrot.lane.b32.xlu0 %v4250, 87
        %v5379 = vpop.permute.xlu0 %5378
        %5380 = vrot.lane.b32.xlu0 %v4251, 87
        %v5381 = vpop.permute.xlu0 %5380
        %5382 = vrot.lane.b32.xlu0 %v4252, 87
        %v5383 = vpop.permute.xlu0 %5382
        %5384 = vrot.lane.b32.xlu0 %v4253, 87
        %v5385 = vpop.permute.xlu0 %5384
        %5386 = vrot.lane.b32.xlu0 %v4254, 87
        %v5387 = vpop.permute.xlu0 %5386
        %5388 = vrot.lane.b32.xlu0 %v4255, 87
        %v5389 = vpop.permute.xlu0 %5388
        %v5390 = vsel %vm618, %v5335, %v5337
        %v5391 = vsel %vm618, %v5337, %v5339
        %v5392 = vsel %vm618, %v5339, %v5341
        %v5393 = vsel %vm618, %v5343, %v5345
        %v5394 = vsel %vm618, %v5345, %v5347
        %v5395 = vsel %vm618, %v5347, %v5349
        %v5396 = vsel %vm618, %v5351, %v5353
        %v5397 = vsel %vm618, %v5353, %v5355
        %v5398 = vsel %vm618, %v5355, %v5357
        %v5399 = vsel %vm618, %v5359, %v5361
        %v5400 = vsel %vm618, %v5361, %v5363
        %v5401 = vsel %vm618, %v5363, %v5365
        %v5402 = vsel %vm618, %v5367, %v5369
        %v5403 = vsel %vm618, %v5369, %v5371
        %v5404 = vsel %vm618, %v5371, %v5373
        %v5405 = vsel %vm618, %v5375, %v5377
        %v5406 = vsel %vm618, %v5377, %v5379
        %v5407 = vsel %vm618, %v5379, %v5381
        %v5408 = vsel %vm618, %v5383, %v5385
        %v5409 = vsel %vm618, %v5385, %v5387
        %v5410 = vsel %vm618, %v5387, %v5389
        %5439 = vrot.lane.b32.xlu0 %v4229, 86
        %v5440 = vpop.permute.xlu0 %5439
        %5441 = vrot.lane.b32.xlu0 %v4230, 86
        %v5442 = vpop.permute.xlu0 %5441
        %5443 = vrot.lane.b32.xlu0 %v4231, 86
        %v5444 = vpop.permute.xlu0 %5443
        %5445 = vrot.lane.b32.xlu0 %v4233, 86
        %v5446 = vpop.permute.xlu0 %5445
        %5447 = vrot.lane.b32.xlu0 %v4234, 86
        %v5448 = vpop.permute.xlu0 %5447
        %5449 = vrot.lane.b32.xlu0 %v4235, 86
        %v5450 = vpop.permute.xlu0 %5449
        %5451 = vrot.lane.b32.xlu0 %v4237, 86
        %v5452 = vpop.permute.xlu0 %5451
        %5453 = vrot.lane.b32.xlu0 %v4238, 86
        %v5454 = vpop.permute.xlu0 %5453
        %5455 = vrot.lane.b32.xlu0 %v4239, 86
        %v5456 = vpop.permute.xlu0 %5455
        %5457 = vrot.lane.b32.xlu0 %v4241, 86
        %v5458 = vpop.permute.xlu0 %5457
        %5459 = vrot.lane.b32.xlu0 %v4242, 86
        %v5460 = vpop.permute.xlu0 %5459
        %5461 = vrot.lane.b32.xlu0 %v4243, 86
        %v5462 = vpop.permute.xlu0 %5461
        %5463 = vrot.lane.b32.xlu0 %v4245, 86
        %v5464 = vpop.permute.xlu0 %5463
        %5465 = vrot.lane.b32.xlu0 %v4246, 86
        %v5466 = vpop.permute.xlu0 %5465
        %5467 = vrot.lane.b32.xlu0 %v4247, 86
        %v5468 = vpop.permute.xlu0 %5467
        %5469 = vrot.lane.b32.xlu0 %v4249, 86
        %v5470 = vpop.permute.xlu0 %5469
        %5471 = vrot.lane.b32.xlu0 %v4250, 86
        %v5472 = vpop.permute.xlu0 %5471
        %5473 = vrot.lane.b32.xlu0 %v4251, 86
        %v5474 = vpop.permute.xlu0 %5473
        %5475 = vrot.lane.b32.xlu0 %v4253, 86
        %v5476 = vpop.permute.xlu0 %5475
        %5477 = vrot.lane.b32.xlu0 %v4254, 86
        %v5478 = vpop.permute.xlu0 %5477
        %5479 = vrot.lane.b32.xlu0 %v4255, 86
        %v5480 = vpop.permute.xlu0 %5479
        %v5481 = vsel %vm632, %v5440, %v5442
        %v5482 = vsel %vm632, %v5442, %v5444
        %v5483 = vsel %vm632, %v5446, %v5448
        %v5484 = vsel %vm632, %v5448, %v5450
        %v5485 = vsel %vm632, %v5452, %v5454
        %v5486 = vsel %vm632, %v5454, %v5456
        %v5487 = vsel %vm632, %v5458, %v5460
        %v5488 = vsel %vm632, %v5460, %v5462
        %v5489 = vsel %vm632, %v5464, %v5466
        %v5490 = vsel %vm632, %v5466, %v5468
        %v5491 = vsel %vm632, %v5470, %v5472
        %v5492 = vsel %vm632, %v5472, %v5474
        %v5493 = vsel %vm632, %v5476, %v5478
        %v5494 = vsel %vm632, %v5478, %v5480
        %5523 = vrot.lane.b32.xlu0 %v4229, 85
        %v5524 = vpop.permute.xlu0 %5523
        %5525 = vrot.lane.b32.xlu0 %v4230, 85
        %v5526 = vpop.permute.xlu0 %5525
        %5527 = vrot.lane.b32.xlu0 %v4231, 85
        %v5528 = vpop.permute.xlu0 %5527
        %5529 = vrot.lane.b32.xlu0 %v4233, 85
        %v5530 = vpop.permute.xlu0 %5529
        %5531 = vrot.lane.b32.xlu0 %v4234, 85
        %v5532 = vpop.permute.xlu0 %5531
        %5533 = vrot.lane.b32.xlu0 %v4235, 85
        %v5534 = vpop.permute.xlu0 %5533
        %5535 = vrot.lane.b32.xlu0 %v4237, 85
        %v5536 = vpop.permute.xlu0 %5535
        %5537 = vrot.lane.b32.xlu0 %v4238, 85
        %v5538 = vpop.permute.xlu0 %5537
        %5539 = vrot.lane.b32.xlu0 %v4239, 85
        %v5540 = vpop.permute.xlu0 %5539
        %5541 = vrot.lane.b32.xlu0 %v4241, 85
        %v5542 = vpop.permute.xlu0 %5541
        %5543 = vrot.lane.b32.xlu0 %v4242, 85
        %v5544 = vpop.permute.xlu0 %5543
        %5545 = vrot.lane.b32.xlu0 %v4243, 85
        %v5546 = vpop.permute.xlu0 %5545
        %5547 = vrot.lane.b32.xlu0 %v4245, 85
        %v5548 = vpop.permute.xlu0 %5547
        %5549 = vrot.lane.b32.xlu0 %v4246, 85
        %v5550 = vpop.permute.xlu0 %5549
        %5551 = vrot.lane.b32.xlu0 %v4247, 85
        %v5552 = vpop.permute.xlu0 %5551
        %5553 = vrot.lane.b32.xlu0 %v4249, 85
        %v5554 = vpop.permute.xlu0 %5553
        %5555 = vrot.lane.b32.xlu0 %v4250, 85
        %v5556 = vpop.permute.xlu0 %5555
        %5557 = vrot.lane.b32.xlu0 %v4251, 85
        %v5558 = vpop.permute.xlu0 %5557
        %5559 = vrot.lane.b32.xlu0 %v4253, 85
        %v5560 = vpop.permute.xlu0 %5559
        %5561 = vrot.lane.b32.xlu0 %v4254, 85
        %v5562 = vpop.permute.xlu0 %5561
        %5563 = vrot.lane.b32.xlu0 %v4255, 85
        %v5564 = vpop.permute.xlu0 %5563
        %v5565 = vsel %vm645, %v5524, %v5526
        %v5566 = vsel %vm645, %v5526, %v5528
        %v5567 = vsel %vm645, %v5530, %v5532
        %v5568 = vsel %vm645, %v5532, %v5534
        %v5569 = vsel %vm645, %v5536, %v5538
        %v5570 = vsel %vm645, %v5538, %v5540
        %v5571 = vsel %vm645, %v5542, %v5544
        %v5572 = vsel %vm645, %v5544, %v5546
        %v5573 = vsel %vm645, %v5548, %v5550
        %v5574 = vsel %vm645, %v5550, %v5552
        %v5575 = vsel %vm645, %v5554, %v5556
        %v5576 = vsel %vm645, %v5556, %v5558
        %v5577 = vsel %vm645, %v5560, %v5562
        %v5578 = vsel %vm645, %v5562, %v5564
        %5607 = vrot.lane.b32.xlu0 %v4229, 84
        %v5608 = vpop.permute.xlu0 %5607
        %5609 = vrot.lane.b32.xlu0 %v4230, 84
        %v5610 = vpop.permute.xlu0 %5609
        %5611 = vrot.lane.b32.xlu0 %v4231, 84
        %v5612 = vpop.permute.xlu0 %5611
        %5613 = vrot.lane.b32.xlu0 %v4233, 84
        %v5614 = vpop.permute.xlu0 %5613
        %5615 = vrot.lane.b32.xlu0 %v4234, 84
        %v5616 = vpop.permute.xlu0 %5615
        %5617 = vrot.lane.b32.xlu0 %v4235, 84
        %v5618 = vpop.permute.xlu0 %5617
        %5619 = vrot.lane.b32.xlu0 %v4237, 84
        %v5620 = vpop.permute.xlu0 %5619
        %5621 = vrot.lane.b32.xlu0 %v4238, 84
        %v5622 = vpop.permute.xlu0 %5621
        %5623 = vrot.lane.b32.xlu0 %v4239, 84
        %v5624 = vpop.permute.xlu0 %5623
        %5625 = vrot.lane.b32.xlu0 %v4241, 84
        %v5626 = vpop.permute.xlu0 %5625
        %5627 = vrot.lane.b32.xlu0 %v4242, 84
        %v5628 = vpop.permute.xlu0 %5627
        %5629 = vrot.lane.b32.xlu0 %v4243, 84
        %v5630 = vpop.permute.xlu0 %5629
        %5631 = vrot.lane.b32.xlu0 %v4245, 84
        %v5632 = vpop.permute.xlu0 %5631
        %5633 = vrot.lane.b32.xlu0 %v4246, 84
        %v5634 = vpop.permute.xlu0 %5633
        %5635 = vrot.lane.b32.xlu0 %v4247, 84
        %v5636 = vpop.permute.xlu0 %5635
        %5637 = vrot.lane.b32.xlu0 %v4249, 84
        %v5638 = vpop.permute.xlu0 %5637
        %5639 = vrot.lane.b32.xlu0 %v4250, 84
        %v5640 = vpop.permute.xlu0 %5639
        %5641 = vrot.lane.b32.xlu0 %v4251, 84
        %v5642 = vpop.permute.xlu0 %5641
        %5643 = vrot.lane.b32.xlu0 %v4253, 84
        %v5644 = vpop.permute.xlu0 %5643
        %5645 = vrot.lane.b32.xlu0 %v4254, 84
        %v5646 = vpop.permute.xlu0 %5645
        %5647 = vrot.lane.b32.xlu0 %v4255, 84
        %v5648 = vpop.permute.xlu0 %5647
        %v5649 = vsel %vm658, %v5608, %v5610
        %v5650 = vsel %vm658, %v5610, %v5612
        %v5651 = vsel %vm658, %v5614, %v5616
        %v5652 = vsel %vm658, %v5616, %v5618
        %v5653 = vsel %vm658, %v5620, %v5622
        %v5654 = vsel %vm658, %v5622, %v5624
        %v5655 = vsel %vm658, %v5626, %v5628
        %v5656 = vsel %vm658, %v5628, %v5630
        %v5657 = vsel %vm658, %v5632, %v5634
        %v5658 = vsel %vm658, %v5634, %v5636
        %v5659 = vsel %vm658, %v5638, %v5640
        %v5660 = vsel %vm658, %v5640, %v5642
        %v5661 = vsel %vm658, %v5644, %v5646
        %v5662 = vsel %vm658, %v5646, %v5648
        %5691 = vrot.lane.b32.xlu0 %v4229, 68
        %v5692 = vpop.permute.xlu0 %5691
        %5693 = vrot.lane.b32.xlu0 %v4230, 68
        %v5694 = vpop.permute.xlu0 %5693
        %5695 = vrot.lane.b32.xlu0 %v4231, 68
        %v5696 = vpop.permute.xlu0 %5695
        %5697 = vrot.lane.b32.xlu0 %v4233, 68
        %v5698 = vpop.permute.xlu0 %5697
        %5699 = vrot.lane.b32.xlu0 %v4234, 68
        %v5700 = vpop.permute.xlu0 %5699
        %5701 = vrot.lane.b32.xlu0 %v4235, 68
        %v5702 = vpop.permute.xlu0 %5701
        %5703 = vrot.lane.b32.xlu0 %v4237, 68
        %v5704 = vpop.permute.xlu0 %5703
        %5705 = vrot.lane.b32.xlu0 %v4238, 68
        %v5706 = vpop.permute.xlu0 %5705
        %5707 = vrot.lane.b32.xlu0 %v4239, 68
        %v5708 = vpop.permute.xlu0 %5707
        %5709 = vrot.lane.b32.xlu0 %v4241, 68
        %v5710 = vpop.permute.xlu0 %5709
        %5711 = vrot.lane.b32.xlu0 %v4242, 68
        %v5712 = vpop.permute.xlu0 %5711
        %5713 = vrot.lane.b32.xlu0 %v4243, 68
        %v5714 = vpop.permute.xlu0 %5713
        %5715 = vrot.lane.b32.xlu0 %v4245, 68
        %v5716 = vpop.permute.xlu0 %5715
        %5717 = vrot.lane.b32.xlu0 %v4246, 68
        %v5718 = vpop.permute.xlu0 %5717
        %5719 = vrot.lane.b32.xlu0 %v4247, 68
        %v5720 = vpop.permute.xlu0 %5719
        %5721 = vrot.lane.b32.xlu0 %v4249, 68
        %v5722 = vpop.permute.xlu0 %5721
        %5723 = vrot.lane.b32.xlu0 %v4250, 68
        %v5724 = vpop.permute.xlu0 %5723
        %5725 = vrot.lane.b32.xlu0 %v4251, 68
        %v5726 = vpop.permute.xlu0 %5725
        %5727 = vrot.lane.b32.xlu0 %v4253, 68
        %v5728 = vpop.permute.xlu0 %5727
        %5729 = vrot.lane.b32.xlu0 %v4254, 68
        %v5730 = vpop.permute.xlu0 %5729
        %5731 = vrot.lane.b32.xlu0 %v4255, 68
        %v5732 = vpop.permute.xlu0 %5731
        %v5733 = vsel %vm671, %v5692, %v5694
        %v5734 = vsel %vm671, %v5694, %v5696
        %v5735 = vsel %vm671, %v5698, %v5700
        %v5736 = vsel %vm671, %v5700, %v5702
        %v5737 = vsel %vm671, %v5704, %v5706
        %v5738 = vsel %vm671, %v5706, %v5708
        %v5739 = vsel %vm671, %v5710, %v5712
        %v5740 = vsel %vm671, %v5712, %v5714
        %v5741 = vsel %vm671, %v5716, %v5718
        %v5742 = vsel %vm671, %v5718, %v5720
        %v5743 = vsel %vm671, %v5722, %v5724
        %v5744 = vsel %vm671, %v5724, %v5726
        %v5745 = vsel %vm671, %v5728, %v5730
        %v5746 = vsel %vm671, %v5730, %v5732
        %5775 = vrot.lane.b32.xlu0 %v4229, 109
        %v5776 = vpop.permute.xlu0 %5775
        %5777 = vrot.lane.b32.xlu0 %v4230, 109
        %v5778 = vpop.permute.xlu0 %5777
        %5779 = vrot.lane.b32.xlu0 %v4231, 109
        %v5780 = vpop.permute.xlu0 %5779
        %5781 = vrot.lane.b32.xlu0 %v4233, 109
        %v5782 = vpop.permute.xlu0 %5781
        %5783 = vrot.lane.b32.xlu0 %v4234, 109
        %v5784 = vpop.permute.xlu0 %5783
        %5785 = vrot.lane.b32.xlu0 %v4235, 109
        %v5786 = vpop.permute.xlu0 %5785
        %5787 = vrot.lane.b32.xlu0 %v4237, 109
        %v5788 = vpop.permute.xlu0 %5787
        %5789 = vrot.lane.b32.xlu0 %v4238, 109
        %v5790 = vpop.permute.xlu0 %5789
        %5791 = vrot.lane.b32.xlu0 %v4239, 109
        %v5792 = vpop.permute.xlu0 %5791
        %5793 = vrot.lane.b32.xlu0 %v4241, 109
        %v5794 = vpop.permute.xlu0 %5793
        %5795 = vrot.lane.b32.xlu0 %v4242, 109
        %v5796 = vpop.permute.xlu0 %5795
        %5797 = vrot.lane.b32.xlu0 %v4243, 109
        %v5798 = vpop.permute.xlu0 %5797
        %5799 = vrot.lane.b32.xlu0 %v4245, 109
        %v5800 = vpop.permute.xlu0 %5799
        %5801 = vrot.lane.b32.xlu0 %v4246, 109
        %v5802 = vpop.permute.xlu0 %5801
        %5803 = vrot.lane.b32.xlu0 %v4247, 109
        %v5804 = vpop.permute.xlu0 %5803
        %5805 = vrot.lane.b32.xlu0 %v4249, 109
        %v5806 = vpop.permute.xlu0 %5805
        %5807 = vrot.lane.b32.xlu0 %v4250, 109
        %v5808 = vpop.permute.xlu0 %5807
        %5809 = vrot.lane.b32.xlu0 %v4251, 109
        %v5810 = vpop.permute.xlu0 %5809
        %5811 = vrot.lane.b32.xlu0 %v4253, 109
        %v5812 = vpop.permute.xlu0 %5811
        %5813 = vrot.lane.b32.xlu0 %v4254, 109
        %v5814 = vpop.permute.xlu0 %5813
        %5815 = vrot.lane.b32.xlu0 %v4255, 109
        %v5816 = vpop.permute.xlu0 %5815
        %v5817 = vsel %vm684, %v5776, %v5778
        %v5818 = vsel %vm684, %v5778, %v5780
        %v5819 = vsel %vm684, %v5782, %v5784
        %v5820 = vsel %vm684, %v5784, %v5786
        %v5821 = vsel %vm684, %v5788, %v5790
        %v5822 = vsel %vm684, %v5790, %v5792
        %v5823 = vsel %vm684, %v5794, %v5796
        %v5824 = vsel %vm684, %v5796, %v5798
        %v5825 = vsel %vm684, %v5800, %v5802
        %v5826 = vsel %vm684, %v5802, %v5804
        %v5827 = vsel %vm684, %v5806, %v5808
        %v5828 = vsel %vm684, %v5808, %v5810
        %v5829 = vsel %vm684, %v5812, %v5814
        %v5830 = vsel %vm684, %v5814, %v5816
        %5831 = vrot.lane.b32.xlu0 %v4229, 67
        %v5832 = vpop.permute.xlu0 %5831
        %5833 = vrot.lane.b32.xlu0 %v4230, 67
        %v5834 = vpop.permute.xlu0 %5833
        %5835 = vrot.lane.b32.xlu0 %v4231, 67
        %v5836 = vpop.permute.xlu0 %5835
        %5837 = vrot.lane.b32.xlu0 %v4233, 67
        %v5838 = vpop.permute.xlu0 %5837
        %5839 = vrot.lane.b32.xlu0 %v4234, 67
        %v5840 = vpop.permute.xlu0 %5839
        %5841 = vrot.lane.b32.xlu0 %v4235, 67
        %v5842 = vpop.permute.xlu0 %5841
        %5843 = vrot.lane.b32.xlu0 %v4237, 67
        %v5844 = vpop.permute.xlu0 %5843
        %5845 = vrot.lane.b32.xlu0 %v4238, 67
        %v5846 = vpop.permute.xlu0 %5845
        %5847 = vrot.lane.b32.xlu0 %v4239, 67
        %v5848 = vpop.permute.xlu0 %5847
        %5849 = vrot.lane.b32.xlu0 %v4241, 67
        %v5850 = vpop.permute.xlu0 %5849
        %5851 = vrot.lane.b32.xlu0 %v4242, 67
        %v5852 = vpop.permute.xlu0 %5851
        %5853 = vrot.lane.b32.xlu0 %v4243, 67
        %v5854 = vpop.permute.xlu0 %5853
        %5855 = vrot.lane.b32.xlu0 %v4245, 67
        %v5856 = vpop.permute.xlu0 %5855
        %5857 = vrot.lane.b32.xlu0 %v4246, 67
        %v5858 = vpop.permute.xlu0 %5857
        %5859 = vrot.lane.b32.xlu0 %v4247, 67
        %v5860 = vpop.permute.xlu0 %5859
        %5861 = vrot.lane.b32.xlu0 %v4249, 67
        %v5862 = vpop.permute.xlu0 %5861
        %5863 = vrot.lane.b32.xlu0 %v4250, 67
        %v5864 = vpop.permute.xlu0 %5863
        %5865 = vrot.lane.b32.xlu0 %v4251, 67
        %v5866 = vpop.permute.xlu0 %5865
        %5867 = vrot.lane.b32.xlu0 %v4253, 67
        %v5868 = vpop.permute.xlu0 %5867
        %5869 = vrot.lane.b32.xlu0 %v4254, 67
        %v5870 = vpop.permute.xlu0 %5869
        %5871 = vrot.lane.b32.xlu0 %v4255, 67
        %v5872 = vpop.permute.xlu0 %5871
        %5873 = vrot.lane.b32.xlu0 %v4341, 67
        %v5874 = vpop.permute.xlu0 %5873
        %5875 = vrot.lane.b32.xlu0 %v4342, 67
        %v5876 = vpop.permute.xlu0 %5875
        %5877 = vrot.lane.b32.xlu0 %v4291, 67
        %v5878 = vpop.permute.xlu0 %5877
        %5879 = vrot.lane.b32.xlu0 %v4344, 67
        %v5880 = vpop.permute.xlu0 %5879
        %5881 = vrot.lane.b32.xlu0 %v4345, 67
        %v5882 = vpop.permute.xlu0 %5881
        %5883 = vrot.lane.b32.xlu0 %v4299, 67
        %v5884 = vpop.permute.xlu0 %5883
        %5885 = vrot.lane.b32.xlu0 %v4347, 67
        %v5886 = vpop.permute.xlu0 %5885
        %5887 = vrot.lane.b32.xlu0 %v4348, 67
        %v5888 = vpop.permute.xlu0 %5887
        %5889 = vrot.lane.b32.xlu0 %v4307, 67
        %v5890 = vpop.permute.xlu0 %5889
        %5891 = vrot.lane.b32.xlu0 %v4350, 67
        %v5892 = vpop.permute.xlu0 %5891
        %5893 = vrot.lane.b32.xlu0 %v4351, 67
        %v5894 = vpop.permute.xlu0 %5893
        %5895 = vrot.lane.b32.xlu0 %v4315, 67
        %v5896 = vpop.permute.xlu0 %5895
        %5897 = vrot.lane.b32.xlu0 %v4353, 67
        %v5898 = vpop.permute.xlu0 %5897
        %5899 = vrot.lane.b32.xlu0 %v4354, 67
        %v5900 = vpop.permute.xlu0 %5899
        %5901 = vrot.lane.b32.xlu0 %v4323, 67
        %v5902 = vpop.permute.xlu0 %5901
        %5903 = vrot.lane.b32.xlu0 %v4356, 67
        %v5904 = vpop.permute.xlu0 %5903
        %5905 = vrot.lane.b32.xlu0 %v4357, 67
        %v5906 = vpop.permute.xlu0 %5905
        %5907 = vrot.lane.b32.xlu0 %v4331, 67
        %v5908 = vpop.permute.xlu0 %5907
        %5909 = vrot.lane.b32.xlu0 %v4359, 67
        %v5910 = vpop.permute.xlu0 %5909
        %5911 = vrot.lane.b32.xlu0 %v4360, 67
        %v5912 = vpop.permute.xlu0 %5911
        %5913 = vrot.lane.b32.xlu0 %v4339, 67
        %v5914 = vpop.permute.xlu0 %5913
        %5915 = vrot.lane.b32.xlu0 %v4446, 67
        %v5916 = vpop.permute.xlu0 %5915
        %5917 = vrot.lane.b32.xlu0 %v4447, 67
        %v5918 = vpop.permute.xlu0 %5917
        %5919 = vrot.lane.b32.xlu0 %v4396, 67
        %v5920 = vpop.permute.xlu0 %5919
        %5921 = vrot.lane.b32.xlu0 %v4449, 67
        %v5922 = vpop.permute.xlu0 %5921
        %5923 = vrot.lane.b32.xlu0 %v4450, 67
        %v5924 = vpop.permute.xlu0 %5923
        %5925 = vrot.lane.b32.xlu0 %v4404, 67
        %v5926 = vpop.permute.xlu0 %5925
        %5927 = vrot.lane.b32.xlu0 %v4452, 67
        %v5928 = vpop.permute.xlu0 %5927
        %5929 = vrot.lane.b32.xlu0 %v4453, 67
        %v5930 = vpop.permute.xlu0 %5929
        %5931 = vrot.lane.b32.xlu0 %v4412, 67
        %v5932 = vpop.permute.xlu0 %5931
        %5933 = vrot.lane.b32.xlu0 %v4455, 67
        %v5934 = vpop.permute.xlu0 %5933
        %5935 = vrot.lane.b32.xlu0 %v4456, 67
        %v5936 = vpop.permute.xlu0 %5935
        %5937 = vrot.lane.b32.xlu0 %v4420, 67
        %v5938 = vpop.permute.xlu0 %5937
        %5939 = vrot.lane.b32.xlu0 %v4458, 67
        %v5940 = vpop.permute.xlu0 %5939
        %5941 = vrot.lane.b32.xlu0 %v4459, 67
        %v5942 = vpop.permute.xlu0 %5941
        %5943 = vrot.lane.b32.xlu0 %v4428, 67
        %v5944 = vpop.permute.xlu0 %5943
        %5945 = vrot.lane.b32.xlu0 %v4461, 67
        %v5946 = vpop.permute.xlu0 %5945
        %5947 = vrot.lane.b32.xlu0 %v4462, 67
        %v5948 = vpop.permute.xlu0 %5947
        %5949 = vrot.lane.b32.xlu0 %v4436, 67
        %v5950 = vpop.permute.xlu0 %5949
        %5951 = vrot.lane.b32.xlu0 %v4464, 67
        %v5952 = vpop.permute.xlu0 %5951
        %5953 = vrot.lane.b32.xlu0 %v4465, 67
        %v5954 = vpop.permute.xlu0 %5953
        %5955 = vrot.lane.b32.xlu0 %v4444, 67
        %v5956 = vpop.permute.xlu0 %5955
        %5957 = vrot.lane.b32.xlu0 %v4551, 67
        %v5958 = vpop.permute.xlu0 %5957
        %5959 = vrot.lane.b32.xlu0 %v4552, 67
        %v5960 = vpop.permute.xlu0 %5959
        %5961 = vrot.lane.b32.xlu0 %v4501, 67
        %v5962 = vpop.permute.xlu0 %5961
        %5963 = vrot.lane.b32.xlu0 %v4554, 67
        %v5964 = vpop.permute.xlu0 %5963
        %5965 = vrot.lane.b32.xlu0 %v4555, 67
        %v5966 = vpop.permute.xlu0 %5965
        %5967 = vrot.lane.b32.xlu0 %v4509, 67
        %v5968 = vpop.permute.xlu0 %5967
        %5969 = vrot.lane.b32.xlu0 %v4557, 67
        %v5970 = vpop.permute.xlu0 %5969
        %5971 = vrot.lane.b32.xlu0 %v4558, 67
        %v5972 = vpop.permute.xlu0 %5971
        %5973 = vrot.lane.b32.xlu0 %v4517, 67
        %v5974 = vpop.permute.xlu0 %5973
        %5975 = vrot.lane.b32.xlu0 %v4560, 67
        %v5976 = vpop.permute.xlu0 %5975
        %5977 = vrot.lane.b32.xlu0 %v4561, 67
        %v5978 = vpop.permute.xlu0 %5977
        %5979 = vrot.lane.b32.xlu0 %v4525, 67
        %v5980 = vpop.permute.xlu0 %5979
        %5981 = vrot.lane.b32.xlu0 %v4563, 67
        %v5982 = vpop.permute.xlu0 %5981
        %5983 = vrot.lane.b32.xlu0 %v4564, 67
        %v5984 = vpop.permute.xlu0 %5983
        %5985 = vrot.lane.b32.xlu0 %v4533, 67
        %v5986 = vpop.permute.xlu0 %5985
        %5987 = vrot.lane.b32.xlu0 %v4566, 67
        %v5988 = vpop.permute.xlu0 %5987
        %5989 = vrot.lane.b32.xlu0 %v4567, 67
        %v5990 = vpop.permute.xlu0 %5989
        %5991 = vrot.lane.b32.xlu0 %v4541, 67
        %v5992 = vpop.permute.xlu0 %5991
        %5993 = vrot.lane.b32.xlu0 %v4569, 67
        %v5994 = vpop.permute.xlu0 %5993
        %5995 = vrot.lane.b32.xlu0 %v4570, 67
        %v5996 = vpop.permute.xlu0 %5995
        %5997 = vrot.lane.b32.xlu0 %v4549, 67
        %v5998 = vpop.permute.xlu0 %5997
        %5999 = vrot.lane.b32.xlu0 %v5817, 67
        %v6000 = vpop.permute.xlu0 %5999
        %6001 = vrot.lane.b32.xlu0 %v5818, 67
        %v6002 = vpop.permute.xlu0 %6001
        %6003 = vrot.lane.b32.xlu0 %v5780, 67
        %v6004 = vpop.permute.xlu0 %6003
        %6005 = vrot.lane.b32.xlu0 %v5819, 67
        %v6006 = vpop.permute.xlu0 %6005
        %6007 = vrot.lane.b32.xlu0 %v5820, 67
        %v6008 = vpop.permute.xlu0 %6007
        %6009 = vrot.lane.b32.xlu0 %v5786, 67
        %v6010 = vpop.permute.xlu0 %6009
        %6011 = vrot.lane.b32.xlu0 %v5821, 67
        %v6012 = vpop.permute.xlu0 %6011
        %6013 = vrot.lane.b32.xlu0 %v5822, 67
        %v6014 = vpop.permute.xlu0 %6013
        %6015 = vrot.lane.b32.xlu0 %v5792, 67
        %v6016 = vpop.permute.xlu0 %6015
        %6017 = vrot.lane.b32.xlu0 %v5823, 67
        %v6018 = vpop.permute.xlu0 %6017
        %6019 = vrot.lane.b32.xlu0 %v5824, 67
        %v6020 = vpop.permute.xlu0 %6019
        %6021 = vrot.lane.b32.xlu0 %v5798, 67
        %v6022 = vpop.permute.xlu0 %6021
        %6023 = vrot.lane.b32.xlu0 %v5825, 67
        %v6024 = vpop.permute.xlu0 %6023
        %6025 = vrot.lane.b32.xlu0 %v5826, 67
        %v6026 = vpop.permute.xlu0 %6025
        %6027 = vrot.lane.b32.xlu0 %v5804, 67
        %v6028 = vpop.permute.xlu0 %6027
        %6029 = vrot.lane.b32.xlu0 %v5827, 67
        %v6030 = vpop.permute.xlu0 %6029
        %6031 = vrot.lane.b32.xlu0 %v5828, 67
        %v6032 = vpop.permute.xlu0 %6031
        %6033 = vrot.lane.b32.xlu0 %v5810, 67
        %v6034 = vpop.permute.xlu0 %6033
        %6035 = vrot.lane.b32.xlu0 %v5829, 67
        %v6036 = vpop.permute.xlu0 %6035
        %6037 = vrot.lane.b32.xlu0 %v5830, 67
        %v6038 = vpop.permute.xlu0 %6037
        %6039 = vrot.lane.b32.xlu0 %v5816, 67
        %v6040 = vpop.permute.xlu0 %6039
        %6041 = vrot.lane.b32.xlu0 %v4761, 67
        %v6042 = vpop.permute.xlu0 %6041
        %6043 = vrot.lane.b32.xlu0 %v4762, 67
        %v6044 = vpop.permute.xlu0 %6043
        %6045 = vrot.lane.b32.xlu0 %v4711, 67
        %v6046 = vpop.permute.xlu0 %6045
        %6047 = vrot.lane.b32.xlu0 %v4764, 67
        %v6048 = vpop.permute.xlu0 %6047
        %6049 = vrot.lane.b32.xlu0 %v4765, 67
        %v6050 = vpop.permute.xlu0 %6049
        %6051 = vrot.lane.b32.xlu0 %v4719, 67
        %v6052 = vpop.permute.xlu0 %6051
        %6053 = vrot.lane.b32.xlu0 %v4767, 67
        %v6054 = vpop.permute.xlu0 %6053
        %6055 = vrot.lane.b32.xlu0 %v4768, 67
        %v6056 = vpop.permute.xlu0 %6055
        %6057 = vrot.lane.b32.xlu0 %v4727, 67
        %v6058 = vpop.permute.xlu0 %6057
        %6059 = vrot.lane.b32.xlu0 %v4770, 67
        %v6060 = vpop.permute.xlu0 %6059
        %6061 = vrot.lane.b32.xlu0 %v4771, 67
        %v6062 = vpop.permute.xlu0 %6061
        %6063 = vrot.lane.b32.xlu0 %v4735, 67
        %v6064 = vpop.permute.xlu0 %6063
        %6065 = vrot.lane.b32.xlu0 %v4773, 67
        %v6066 = vpop.permute.xlu0 %6065
        %6067 = vrot.lane.b32.xlu0 %v4774, 67
        %v6068 = vpop.permute.xlu0 %6067
        %6069 = vrot.lane.b32.xlu0 %v4743, 67
        %v6070 = vpop.permute.xlu0 %6069
        %6071 = vrot.lane.b32.xlu0 %v4776, 67
        %v6072 = vpop.permute.xlu0 %6071
        %6073 = vrot.lane.b32.xlu0 %v4777, 67
        %v6074 = vpop.permute.xlu0 %6073
        %6075 = vrot.lane.b32.xlu0 %v4751, 67
        %v6076 = vpop.permute.xlu0 %6075
        %6077 = vrot.lane.b32.xlu0 %v4779, 67
        %v6078 = vpop.permute.xlu0 %6077
        %6079 = vrot.lane.b32.xlu0 %v4780, 67
        %v6080 = vpop.permute.xlu0 %6079
        %6081 = vrot.lane.b32.xlu0 %v4759, 67
        %v6082 = vpop.permute.xlu0 %6081
        %6083 = vrot.lane.b32.xlu0 %v4866, 67
        %v6084 = vpop.permute.xlu0 %6083
        %6085 = vrot.lane.b32.xlu0 %v4867, 67
        %v6086 = vpop.permute.xlu0 %6085
        %6087 = vrot.lane.b32.xlu0 %v4816, 67
        %v6088 = vpop.permute.xlu0 %6087
        %6089 = vrot.lane.b32.xlu0 %v4869, 67
        %v6090 = vpop.permute.xlu0 %6089
        %6091 = vrot.lane.b32.xlu0 %v4870, 67
        %v6092 = vpop.permute.xlu0 %6091
        %6093 = vrot.lane.b32.xlu0 %v4824, 67
        %v6094 = vpop.permute.xlu0 %6093
        %6095 = vrot.lane.b32.xlu0 %v4872, 67
        %v6096 = vpop.permute.xlu0 %6095
        %6097 = vrot.lane.b32.xlu0 %v4873, 67
        %v6098 = vpop.permute.xlu0 %6097
        %6099 = vrot.lane.b32.xlu0 %v4832, 67
        %v6100 = vpop.permute.xlu0 %6099
        %6101 = vrot.lane.b32.xlu0 %v4875, 67
        %v6102 = vpop.permute.xlu0 %6101
        %6103 = vrot.lane.b32.xlu0 %v4876, 67
        %v6104 = vpop.permute.xlu0 %6103
        %6105 = vrot.lane.b32.xlu0 %v4840, 67
        %v6106 = vpop.permute.xlu0 %6105
        %6107 = vrot.lane.b32.xlu0 %v4878, 67
        %v6108 = vpop.permute.xlu0 %6107
        %6109 = vrot.lane.b32.xlu0 %v4879, 67
        %v6110 = vpop.permute.xlu0 %6109
        %6111 = vrot.lane.b32.xlu0 %v4848, 67
        %v6112 = vpop.permute.xlu0 %6111
        %6113 = vrot.lane.b32.xlu0 %v4881, 67
        %v6114 = vpop.permute.xlu0 %6113
        %6115 = vrot.lane.b32.xlu0 %v4882, 67
        %v6116 = vpop.permute.xlu0 %6115
        %6117 = vrot.lane.b32.xlu0 %v4856, 67
        %v6118 = vpop.permute.xlu0 %6117
        %6119 = vrot.lane.b32.xlu0 %v4884, 67
        %v6120 = vpop.permute.xlu0 %6119
        %6121 = vrot.lane.b32.xlu0 %v4885, 67
        %v6122 = vpop.permute.xlu0 %6121
        %6123 = vrot.lane.b32.xlu0 %v4864, 67
        %v6124 = vpop.permute.xlu0 %6123
        %6125 = vrot.lane.b32.xlu0 %v4971, 67
        %v6126 = vpop.permute.xlu0 %6125
        %6127 = vrot.lane.b32.xlu0 %v4972, 67
        %v6128 = vpop.permute.xlu0 %6127
        %6129 = vrot.lane.b32.xlu0 %v4921, 67
        %v6130 = vpop.permute.xlu0 %6129
        %6131 = vrot.lane.b32.xlu0 %v4974, 67
        %v6132 = vpop.permute.xlu0 %6131
        %6133 = vrot.lane.b32.xlu0 %v4975, 67
        %v6134 = vpop.permute.xlu0 %6133
        %6135 = vrot.lane.b32.xlu0 %v4929, 67
        %v6136 = vpop.permute.xlu0 %6135
        %6137 = vrot.lane.b32.xlu0 %v4977, 67
        %v6138 = vpop.permute.xlu0 %6137
        %6139 = vrot.lane.b32.xlu0 %v4978, 67
        %v6140 = vpop.permute.xlu0 %6139
        %6141 = vrot.lane.b32.xlu0 %v4937, 67
        %v6142 = vpop.permute.xlu0 %6141
        %6143 = vrot.lane.b32.xlu0 %v4980, 67
        %v6144 = vpop.permute.xlu0 %6143
        %6145 = vrot.lane.b32.xlu0 %v4981, 67
        %v6146 = vpop.permute.xlu0 %6145
        %6147 = vrot.lane.b32.xlu0 %v4945, 67
        %v6148 = vpop.permute.xlu0 %6147
        %6149 = vrot.lane.b32.xlu0 %v4983, 67
        %v6150 = vpop.permute.xlu0 %6149
        %6151 = vrot.lane.b32.xlu0 %v4984, 67
        %v6152 = vpop.permute.xlu0 %6151
        %6153 = vrot.lane.b32.xlu0 %v4953, 67
        %v6154 = vpop.permute.xlu0 %6153
        %6155 = vrot.lane.b32.xlu0 %v4986, 67
        %v6156 = vpop.permute.xlu0 %6155
        %6157 = vrot.lane.b32.xlu0 %v4987, 67
        %v6158 = vpop.permute.xlu0 %6157
        %6159 = vrot.lane.b32.xlu0 %v4961, 67
        %v6160 = vpop.permute.xlu0 %6159
        %6161 = vrot.lane.b32.xlu0 %v4989, 67
        %v6162 = vpop.permute.xlu0 %6161
        %6163 = vrot.lane.b32.xlu0 %v4990, 67
        %v6164 = vpop.permute.xlu0 %6163
        %6165 = vrot.lane.b32.xlu0 %v4969, 67
        %v6166 = vpop.permute.xlu0 %6165
        %6167 = vrot.lane.b32.xlu0 %v5076, 67
        %v6168 = vpop.permute.xlu0 %6167
        %6169 = vrot.lane.b32.xlu0 %v5077, 67
        %v6170 = vpop.permute.xlu0 %6169
        %6171 = vrot.lane.b32.xlu0 %v5026, 67
        %v6172 = vpop.permute.xlu0 %6171
        %6173 = vrot.lane.b32.xlu0 %v5079, 67
        %v6174 = vpop.permute.xlu0 %6173
        %6175 = vrot.lane.b32.xlu0 %v5080, 67
        %v6176 = vpop.permute.xlu0 %6175
        %6177 = vrot.lane.b32.xlu0 %v5034, 67
        %v6178 = vpop.permute.xlu0 %6177
        %6179 = vrot.lane.b32.xlu0 %v5082, 67
        %v6180 = vpop.permute.xlu0 %6179
        %6181 = vrot.lane.b32.xlu0 %v5083, 67
        %v6182 = vpop.permute.xlu0 %6181
        %6183 = vrot.lane.b32.xlu0 %v5042, 67
        %v6184 = vpop.permute.xlu0 %6183
        %6185 = vrot.lane.b32.xlu0 %v5085, 67
        %v6186 = vpop.permute.xlu0 %6185
        %6187 = vrot.lane.b32.xlu0 %v5086, 67
        %v6188 = vpop.permute.xlu0 %6187
        %6189 = vrot.lane.b32.xlu0 %v5050, 67
        %v6190 = vpop.permute.xlu0 %6189
        %6191 = vrot.lane.b32.xlu0 %v5088, 67
        %v6192 = vpop.permute.xlu0 %6191
        %6193 = vrot.lane.b32.xlu0 %v5089, 67
        %v6194 = vpop.permute.xlu0 %6193
        %6195 = vrot.lane.b32.xlu0 %v5058, 67
        %v6196 = vpop.permute.xlu0 %6195
        %6197 = vrot.lane.b32.xlu0 %v5091, 67
        %v6198 = vpop.permute.xlu0 %6197
        %6199 = vrot.lane.b32.xlu0 %v5092, 67
        %v6200 = vpop.permute.xlu0 %6199
        %6201 = vrot.lane.b32.xlu0 %v5066, 67
        %v6202 = vpop.permute.xlu0 %6201
        %6203 = vrot.lane.b32.xlu0 %v5094, 67
        %v6204 = vpop.permute.xlu0 %6203
        %6205 = vrot.lane.b32.xlu0 %v5095, 67
        %v6206 = vpop.permute.xlu0 %6205
        %6207 = vrot.lane.b32.xlu0 %v5074, 67
        %v6208 = vpop.permute.xlu0 %6207
        %v6209 = vsel %vm741, %v5832, %v5834
        %v6210 = vsel %vm741, %v5834, %v5836
        %v6211 = vsel %vm741, %v5838, %v5840
        %v6212 = vsel %vm741, %v5840, %v5842
        %v6213 = vsel %vm741, %v5844, %v5846
        %v6214 = vsel %vm741, %v5846, %v5848
        %v6215 = vsel %vm741, %v5850, %v5852
        %v6216 = vsel %vm741, %v5852, %v5854
        %v6217 = vsel %vm741, %v5856, %v5858
        %v6218 = vsel %vm741, %v5858, %v5860
        %v6219 = vsel %vm741, %v5862, %v5864
        %v6220 = vsel %vm741, %v5864, %v5866
        %v6221 = vsel %vm741, %v5868, %v5870
        %v6222 = vsel %vm741, %v5870, %v5872
        %v6223 = vsel %vm741, %v5874, %v5876
        %v6224 = vsel %vm741, %v5876, %v5878
        %v6225 = vsel %vm741, %v5880, %v5882
        %v6226 = vsel %vm741, %v5882, %v5884
        %v6227 = vsel %vm741, %v5886, %v5888
        %v6228 = vsel %vm741, %v5888, %v5890
        %v6229 = vsel %vm741, %v5892, %v5894
        %v6230 = vsel %vm741, %v5894, %v5896
        %v6231 = vsel %vm741, %v5898, %v5900
        %v6232 = vsel %vm741, %v5900, %v5902
        %v6233 = vsel %vm741, %v5904, %v5906
        %v6234 = vsel %vm741, %v5906, %v5908
        %v6235 = vsel %vm741, %v5910, %v5912
        %v6236 = vsel %vm741, %v5912, %v5914
        %v6237 = vsel %vm741, %v5916, %v5918
        %v6238 = vsel %vm741, %v5918, %v5920
        %v6239 = vsel %vm741, %v5922, %v5924
        %v6240 = vsel %vm741, %v5924, %v5926
        %v6241 = vsel %vm741, %v5928, %v5930
        %v6242 = vsel %vm741, %v5930, %v5932
        %v6243 = vsel %vm741, %v5934, %v5936
        %v6244 = vsel %vm741, %v5936, %v5938
        %v6245 = vsel %vm741, %v5940, %v5942
        %v6246 = vsel %vm741, %v5942, %v5944
        %v6247 = vsel %vm741, %v5946, %v5948
        %v6248 = vsel %vm741, %v5948, %v5950
        %v6249 = vsel %vm741, %v5952, %v5954
        %v6250 = vsel %vm741, %v5954, %v5956
        %v6251 = vsel %vm741, %v5958, %v5960
        %v6252 = vsel %vm741, %v5960, %v5962
        %v6253 = vsel %vm741, %v5964, %v5966
        %v6254 = vsel %vm741, %v5966, %v5968
        %v6255 = vsel %vm741, %v5970, %v5972
        %v6256 = vsel %vm741, %v5972, %v5974
        %v6257 = vsel %vm741, %v5976, %v5978
        %v6258 = vsel %vm741, %v5978, %v5980
        %v6259 = vsel %vm741, %v5982, %v5984
        %v6260 = vsel %vm741, %v5984, %v5986
        %v6261 = vsel %vm741, %v5988, %v5990
        %v6262 = vsel %vm741, %v5990, %v5992
        %v6263 = vsel %vm741, %v5994, %v5996
        %v6264 = vsel %vm741, %v5996, %v5998
        %v6265 = vsel %vm741, %v6000, %v6002
        %v6266 = vsel %vm741, %v6002, %v6004
        %v6267 = vsel %vm741, %v6006, %v6008
        %v6268 = vsel %vm741, %v6008, %v6010
        %v6269 = vsel %vm741, %v6012, %v6014
        %v6270 = vsel %vm741, %v6014, %v6016
        %v6271 = vsel %vm741, %v6018, %v6020
        %v6272 = vsel %vm741, %v6020, %v6022
        %v6273 = vsel %vm741, %v6024, %v6026
        %v6274 = vsel %vm741, %v6026, %v6028
        %v6275 = vsel %vm741, %v6030, %v6032
        %v6276 = vsel %vm741, %v6032, %v6034
        %v6277 = vsel %vm741, %v6036, %v6038
        %v6278 = vsel %vm741, %v6038, %v6040
        %v6279 = vsel %vm741, %v6042, %v6044
        %v6280 = vsel %vm741, %v6044, %v6046
        %v6281 = vsel %vm741, %v6048, %v6050
        %v6282 = vsel %vm741, %v6050, %v6052
        %v6283 = vsel %vm741, %v6054, %v6056
        %v6284 = vsel %vm741, %v6056, %v6058
        %v6285 = vsel %vm741, %v6060, %v6062
        %v6286 = vsel %vm741, %v6062, %v6064
        %v6287 = vsel %vm741, %v6066, %v6068
        %v6288 = vsel %vm741, %v6068, %v6070
        %v6289 = vsel %vm741, %v6072, %v6074
        %v6290 = vsel %vm741, %v6074, %v6076
        %v6291 = vsel %vm741, %v6078, %v6080
        %v6292 = vsel %vm741, %v6080, %v6082
        %v6293 = vsel %vm741, %v6084, %v6086
        %v6294 = vsel %vm741, %v6086, %v6088
        %v6295 = vsel %vm741, %v6090, %v6092
        %v6296 = vsel %vm741, %v6092, %v6094
        %v6297 = vsel %vm741, %v6096, %v6098
        %v6298 = vsel %vm741, %v6098, %v6100
        %v6299 = vsel %vm741, %v6102, %v6104
        %v6300 = vsel %vm741, %v6104, %v6106
        %v6301 = vsel %vm741, %v6108, %v6110
        %v6302 = vsel %vm741, %v6110, %v6112
        %v6303 = vsel %vm741, %v6114, %v6116
        %v6304 = vsel %vm741, %v6116, %v6118
        %v6305 = vsel %vm741, %v6120, %v6122
        %v6306 = vsel %vm741, %v6122, %v6124
        %v6307 = vsel %vm741, %v6126, %v6128
        %v6308 = vsel %vm741, %v6128, %v6130
        %v6309 = vsel %vm741, %v6132, %v6134
        %v6310 = vsel %vm741, %v6134, %v6136
        %v6311 = vsel %vm741, %v6138, %v6140
        %v6312 = vsel %vm741, %v6140, %v6142
        %v6313 = vsel %vm741, %v6144, %v6146
        %v6314 = vsel %vm741, %v6146, %v6148
        %v6315 = vsel %vm741, %v6150, %v6152
        %v6316 = vsel %vm741, %v6152, %v6154
        %v6317 = vsel %vm741, %v6156, %v6158
        %v6318 = vsel %vm741, %v6158, %v6160
        %v6319 = vsel %vm741, %v6162, %v6164
        %v6320 = vsel %vm741, %v6164, %v6166
        %v6321 = vsel %vm741, %v6168, %v6170
        %v6322 = vsel %vm741, %v6170, %v6172
        %v6323 = vsel %vm741, %v6174, %v6176
        %v6324 = vsel %vm741, %v6176, %v6178
        %v6325 = vsel %vm741, %v6180, %v6182
        %v6326 = vsel %vm741, %v6182, %v6184
        %v6327 = vsel %vm741, %v6186, %v6188
        %v6328 = vsel %vm741, %v6188, %v6190
        %v6329 = vsel %vm741, %v6192, %v6194
        %v6330 = vsel %vm741, %v6194, %v6196
        %v6331 = vsel %vm741, %v6198, %v6200
        %v6332 = vsel %vm741, %v6200, %v6202
        %v6333 = vsel %vm741, %v6204, %v6206
        %v6334 = vsel %vm741, %v6206, %v6208
        %v6587 = vpack.c.bf16 %v4232, %v4228
        %v6588 = vpack.c.bf16 %v4233, %v4229
        %v6589 = vpack.c.bf16 %v4234, %v4230
        %v6590 = vpack.c.bf16 %v4235, %v4231
        %v6591 = vpack.c.bf16 %v4240, %v4236
        %v6592 = vpack.c.bf16 %v4241, %v4237
        %v6593 = vpack.c.bf16 %v4242, %v4238
        %v6594 = vpack.c.bf16 %v4243, %v4239
        %v6595 = vpack.c.bf16 %v4248, %v4244
        %v6596 = vpack.c.bf16 %v4249, %v4245
        %v6597 = vpack.c.bf16 %v4250, %v4246
        %v6598 = vpack.c.bf16 %v4251, %v4247
        %v6599 = vpack.c.bf16 %v4340, %v4252
        %v6600 = vpack.c.bf16 %v4341, %v4253
        %v6601 = vpack.c.bf16 %v4342, %v4254
        %v6602 = vpack.c.bf16 %v4291, %v4255
        %v6603 = vpack.c.bf16 %v4346, %v4343
        %v6604 = vpack.c.bf16 %v4347, %v4344
        %v6605 = vpack.c.bf16 %v4348, %v4345
        %v6606 = vpack.c.bf16 %v4307, %v4299
        %v6607 = vpack.c.bf16 %v4352, %v4349
        %v6608 = vpack.c.bf16 %v4353, %v4350
        %v6609 = vpack.c.bf16 %v4354, %v4351
        %v6610 = vpack.c.bf16 %v4323, %v4315
        %v6611 = vpack.c.bf16 %v4358, %v4355
        %v6612 = vpack.c.bf16 %v4359, %v4356
        %v6613 = vpack.c.bf16 %v4360, %v4357
        %v6614 = vpack.c.bf16 %v4339, %v4331
        %v6615 = vpack.c.bf16 %v4448, %v4445
        %v6616 = vpack.c.bf16 %v4449, %v4446
        %v6617 = vpack.c.bf16 %v4450, %v4447
        %v6618 = vpack.c.bf16 %v4404, %v4396
        %v6619 = vpack.c.bf16 %v4454, %v4451
        %v6620 = vpack.c.bf16 %v4455, %v4452
        %v6621 = vpack.c.bf16 %v4456, %v4453
        %v6622 = vpack.c.bf16 %v4420, %v4412
        %v6623 = vpack.c.bf16 %v4460, %v4457
        %v6624 = vpack.c.bf16 %v4461, %v4458
        %v6625 = vpack.c.bf16 %v4462, %v4459
        %v6626 = vpack.c.bf16 %v4436, %v4428
        %v6627 = vpack.c.bf16 %v4550, %v4463
        %v6628 = vpack.c.bf16 %v4551, %v4464
        %v6629 = vpack.c.bf16 %v4552, %v4465
        %v6630 = vpack.c.bf16 %v4501, %v4444
        %v6631 = vpack.c.bf16 %v4556, %v4553
        %v6632 = vpack.c.bf16 %v4557, %v4554
        %v6633 = vpack.c.bf16 %v4558, %v4555
        %v6634 = vpack.c.bf16 %v4517, %v4509
        %v6635 = vpack.c.bf16 %v4562, %v4559
        %v6636 = vpack.c.bf16 %v4563, %v4560
        %v6637 = vpack.c.bf16 %v4564, %v4561
        %v6638 = vpack.c.bf16 %v4533, %v4525
        %v6639 = vpack.c.bf16 %v4568, %v4565
        %v6640 = vpack.c.bf16 %v4569, %v4566
        %v6641 = vpack.c.bf16 %v4570, %v4567
        %v6642 = vpack.c.bf16 %v4549, %v4541
        %v6643 = vpack.c.bf16 %v4658, %v4655
        %v6644 = vpack.c.bf16 %v4659, %v4656
        %v6645 = vpack.c.bf16 %v4660, %v4657
        %v6646 = vpack.c.bf16 %v4614, %v4606
        %v6647 = vpack.c.bf16 %v4664, %v4661
        %v6648 = vpack.c.bf16 %v4665, %v4662
        %v6649 = vpack.c.bf16 %v4666, %v4663
        %v6650 = vpack.c.bf16 %v4630, %v4622
        %v6651 = vpack.c.bf16 %v4670, %v4667
        %v6652 = vpack.c.bf16 %v4671, %v4668
        %v6653 = vpack.c.bf16 %v4672, %v4669
        %v6654 = vpack.c.bf16 %v4646, %v4638
        %v6655 = vpack.c.bf16 %v4760, %v4673
        %v6656 = vpack.c.bf16 %v4761, %v4674
        %v6657 = vpack.c.bf16 %v4762, %v4675
        %v6658 = vpack.c.bf16 %v4711, %v4654
        %v6659 = vpack.c.bf16 %v4766, %v4763
        %v6660 = vpack.c.bf16 %v4767, %v4764
        %v6661 = vpack.c.bf16 %v4768, %v4765
        %v6662 = vpack.c.bf16 %v4727, %v4719
        %v6663 = vpack.c.bf16 %v4772, %v4769
        %v6664 = vpack.c.bf16 %v4773, %v4770
        %v6665 = vpack.c.bf16 %v4774, %v4771
        %v6666 = vpack.c.bf16 %v4743, %v4735
        %v6667 = vpack.c.bf16 %v4778, %v4775
        %v6668 = vpack.c.bf16 %v4779, %v4776
        %v6669 = vpack.c.bf16 %v4780, %v4777
        %v6670 = vpack.c.bf16 %v4759, %v4751
        %v6671 = vpack.c.bf16 %v4868, %v4865
        %v6672 = vpack.c.bf16 %v4869, %v4866
        %v6673 = vpack.c.bf16 %v4870, %v4867
        %v6674 = vpack.c.bf16 %v4824, %v4816
        %v6675 = vpack.c.bf16 %v4874, %v4871
        %v6676 = vpack.c.bf16 %v4875, %v4872
        %v6677 = vpack.c.bf16 %v4876, %v4873
        %v6678 = vpack.c.bf16 %v4840, %v4832
        %v6679 = vpack.c.bf16 %v4880, %v4877
        %v6680 = vpack.c.bf16 %v4881, %v4878
        %v6681 = vpack.c.bf16 %v4882, %v4879
        %v6682 = vpack.c.bf16 %v4856, %v4848
        %v6683 = vpack.c.bf16 %v4970, %v4883
        %v6684 = vpack.c.bf16 %v4971, %v4884
        %v6685 = vpack.c.bf16 %v4972, %v4885
        %v6686 = vpack.c.bf16 %v4921, %v4864
        %v6687 = vpack.c.bf16 %v4976, %v4973
        %v6688 = vpack.c.bf16 %v4977, %v4974
        %v6689 = vpack.c.bf16 %v4978, %v4975
        %v6690 = vpack.c.bf16 %v4937, %v4929
        %v6691 = vpack.c.bf16 %v4982, %v4979
        %v6692 = vpack.c.bf16 %v4983, %v4980
        %v6693 = vpack.c.bf16 %v4984, %v4981
        %v6694 = vpack.c.bf16 %v4953, %v4945
        %v6695 = vpack.c.bf16 %v4988, %v4985
        %v6696 = vpack.c.bf16 %v4989, %v4986
        %v6697 = vpack.c.bf16 %v4990, %v4987
        %v6698 = vpack.c.bf16 %v4969, %v4961
        %v6699 = vpack.c.bf16 %v5078, %v5075
        %v6700 = vpack.c.bf16 %v5079, %v5076
        %v6701 = vpack.c.bf16 %v5080, %v5077
        %v6702 = vpack.c.bf16 %v5034, %v5026
        %v6703 = vpack.c.bf16 %v5084, %v5081
        %v6704 = vpack.c.bf16 %v5085, %v5082
        %v6705 = vpack.c.bf16 %v5086, %v5083
        %v6706 = vpack.c.bf16 %v5050, %v5042
        %v6707 = vpack.c.bf16 %v5090, %v5087
        %v6708 = vpack.c.bf16 %v5091, %v5088
        %v6709 = vpack.c.bf16 %v5092, %v5089
        %v6710 = vpack.c.bf16 %v5066, %v5058
        %v6711 = vpack.c.bf16 %v5180, %v5093
        %v6712 = vpack.c.bf16 %v5181, %v5094
        %v6713 = vpack.c.bf16 %v5182, %v5095
        %v6714 = vpack.c.bf16 %v5131, %v5074
        %v6715 = vpack.c.bf16 %v5186, %v5183
        %v6716 = vpack.c.bf16 %v5187, %v5184
        %v6717 = vpack.c.bf16 %v5188, %v5185
        %v6718 = vpack.c.bf16 %v5147, %v5139
        %v6719 = vpack.c.bf16 %v5192, %v5189
        %v6720 = vpack.c.bf16 %v5193, %v5190
        %v6721 = vpack.c.bf16 %v5194, %v5191
        %v6722 = vpack.c.bf16 %v5163, %v5155
        %v6723 = vpack.c.bf16 %v5198, %v5195
        %v6724 = vpack.c.bf16 %v5199, %v5196
        %v6725 = vpack.c.bf16 %v5200, %v5197
        %v6726 = vpack.c.bf16 %v5179, %v5171
        %v6727 = vpack.c.bf16 %v5288, %v5285
        %v6728 = vpack.c.bf16 %v5289, %v5286
        %v6729 = vpack.c.bf16 %v5290, %v5287
        %v6730 = vpack.c.bf16 %v5244, %v5236
        %v6731 = vpack.c.bf16 %v5294, %v5291
        %v6732 = vpack.c.bf16 %v5295, %v5292
        %v6733 = vpack.c.bf16 %v5296, %v5293
        %v6734 = vpack.c.bf16 %v5260, %v5252
        %v6735 = vpack.c.bf16 %v5300, %v5297
        %v6736 = vpack.c.bf16 %v5301, %v5298
        %v6737 = vpack.c.bf16 %v5302, %v5299
        %v6738 = vpack.c.bf16 %v5276, %v5268
        %v6739 = vpack.c.bf16 %v5390, %v5303
        %v6740 = vpack.c.bf16 %v5391, %v5304
        %v6741 = vpack.c.bf16 %v5392, %v5305
        %v6742 = vpack.c.bf16 %v5341, %v5284
        %v6743 = vpack.c.bf16 %v5396, %v5393
        %v6744 = vpack.c.bf16 %v5397, %v5394
        %v6745 = vpack.c.bf16 %v5398, %v5395
        %v6746 = vpack.c.bf16 %v5357, %v5349
        %v6747 = vpack.c.bf16 %v5402, %v5399
        %v6748 = vpack.c.bf16 %v5403, %v5400
        %v6749 = vpack.c.bf16 %v5404, %v5401
        %v6750 = vpack.c.bf16 %v5373, %v5365
        %v6751 = vpack.c.bf16 %v5408, %v5405
        %v6752 = vpack.c.bf16 %v5409, %v5406
        %v6753 = vpack.c.bf16 %v5410, %v5407
        %v6754 = vpack.c.bf16 %v5389, %v5381
        %v6755 = vpack.c.bf16 %v5446, %v5440
        %v6756 = vpack.c.bf16 %v5483, %v5481
        %v6757 = vpack.c.bf16 %v5484, %v5482
        %v6758 = vpack.c.bf16 %v5450, %v5444
        %v6759 = vpack.c.bf16 %v5458, %v5452
        %v6760 = vpack.c.bf16 %v5487, %v5485
        %v6761 = vpack.c.bf16 %v5488, %v5486
        %v6762 = vpack.c.bf16 %v5462, %v5456
        %v6763 = vpack.c.bf16 %v5470, %v5464
        %v6764 = vpack.c.bf16 %v5491, %v5489
        %v6765 = vpack.c.bf16 %v5492, %v5490
        %v6766 = vpack.c.bf16 %v5474, %v5468
        %v6767 = vpack.c.bf16 %v5524, %v5476
        %v6768 = vpack.c.bf16 %v5565, %v5493
        %v6769 = vpack.c.bf16 %v5566, %v5494
        %v6770 = vpack.c.bf16 %v5528, %v5480
        %v6771 = vpack.c.bf16 %v5536, %v5530
        %v6772 = vpack.c.bf16 %v5569, %v5567
        %v6773 = vpack.c.bf16 %v5570, %v5568
        %v6774 = vpack.c.bf16 %v5540, %v5534
        %v6775 = vpack.c.bf16 %v5548, %v5542
        %v6776 = vpack.c.bf16 %v5573, %v5571
        %v6777 = vpack.c.bf16 %v5574, %v5572
        %v6778 = vpack.c.bf16 %v5552, %v5546
        %v6779 = vpack.c.bf16 %v5560, %v5554
        %v6780 = vpack.c.bf16 %v5577, %v5575
        %v6781 = vpack.c.bf16 %v5578, %v5576
        %v6782 = vpack.c.bf16 %v5564, %v5558
        %v6783 = vpack.c.bf16 %v5614, %v5608
        %v6784 = vpack.c.bf16 %v5651, %v5649
        %v6785 = vpack.c.bf16 %v5652, %v5650
        %v6786 = vpack.c.bf16 %v5618, %v5612
        %v6787 = vpack.c.bf16 %v5626, %v5620
        %v6788 = vpack.c.bf16 %v5655, %v5653
        %v6789 = vpack.c.bf16 %v5656, %v5654
        %v6790 = vpack.c.bf16 %v5630, %v5624
        %v6791 = vpack.c.bf16 %v5638, %v5632
        %v6792 = vpack.c.bf16 %v5659, %v5657
        %v6793 = vpack.c.bf16 %v5660, %v5658
        %v6794 = vpack.c.bf16 %v5642, %v5636
        %v6795 = vpack.c.bf16 %v5692, %v5644
        %v6796 = vpack.c.bf16 %v5733, %v5661
        %v6797 = vpack.c.bf16 %v5734, %v5662
        %v6798 = vpack.c.bf16 %v5696, %v5648
        %v6799 = vpack.c.bf16 %v5704, %v5698
        %v6800 = vpack.c.bf16 %v5737, %v5735
        %v6801 = vpack.c.bf16 %v5738, %v5736
        %v6802 = vpack.c.bf16 %v5708, %v5702
        %v6803 = vpack.c.bf16 %v5716, %v5710
        %v6804 = vpack.c.bf16 %v5741, %v5739
        %v6805 = vpack.c.bf16 %v5742, %v5740
        %v6806 = vpack.c.bf16 %v5720, %v5714
        %v6807 = vpack.c.bf16 %v5728, %v5722
        %v6808 = vpack.c.bf16 %v5745, %v5743
        %v6809 = vpack.c.bf16 %v5746, %v5744
        %v6810 = vpack.c.bf16 %v5732, %v5726
        %v6811 = vpack.c.bf16 %v5838, %v5832
        %v6812 = vpack.c.bf16 %v6211, %v6209
        %v6813 = vpack.c.bf16 %v6212, %v6210
        %v6814 = vpack.c.bf16 %v5842, %v5836
        %v6815 = vpack.c.bf16 %v5850, %v5844
        %v6816 = vpack.c.bf16 %v6215, %v6213
        %v6817 = vpack.c.bf16 %v6216, %v6214
        %v6818 = vpack.c.bf16 %v5854, %v5848
        %v6819 = vpack.c.bf16 %v5862, %v5856
        %v6820 = vpack.c.bf16 %v6219, %v6217
        %v6821 = vpack.c.bf16 %v6220, %v6218
        %v6822 = vpack.c.bf16 %v5866, %v5860
        %v6823 = vpack.c.bf16 %v5874, %v5868
        %v6824 = vpack.c.bf16 %v6223, %v6221
        %v6825 = vpack.c.bf16 %v6224, %v6222
        %v6826 = vpack.c.bf16 %v5878, %v5872
        %v6827 = vpack.c.bf16 %v5886, %v5880
        %v6828 = vpack.c.bf16 %v6227, %v6225
        %v6829 = vpack.c.bf16 %v6228, %v6226
        %v6830 = vpack.c.bf16 %v5890, %v5884
        %v6831 = vpack.c.bf16 %v5898, %v5892
        %v6832 = vpack.c.bf16 %v6231, %v6229
        %v6833 = vpack.c.bf16 %v6232, %v6230
        %v6834 = vpack.c.bf16 %v5902, %v5896
        %v6835 = vpack.c.bf16 %v5910, %v5904
        %v6836 = vpack.c.bf16 %v6235, %v6233
        %v6837 = vpack.c.bf16 %v6236, %v6234
        %v6838 = vpack.c.bf16 %v5914, %v5908
        %v6839 = vpack.c.bf16 %v5922, %v5916
        %v6840 = vpack.c.bf16 %v6239, %v6237
        %v6841 = vpack.c.bf16 %v6240, %v6238
        %v6842 = vpack.c.bf16 %v5926, %v5920
        %v6843 = vpack.c.bf16 %v5934, %v5928
        %v6844 = vpack.c.bf16 %v6243, %v6241
        %v6845 = vpack.c.bf16 %v6244, %v6242
        %v6846 = vpack.c.bf16 %v5938, %v5932
        %v6847 = vpack.c.bf16 %v5946, %v5940
        %v6848 = vpack.c.bf16 %v6247, %v6245
        %v6849 = vpack.c.bf16 %v6248, %v6246
        %v6850 = vpack.c.bf16 %v5950, %v5944
        %v6851 = vpack.c.bf16 %v5958, %v5952
        %v6852 = vpack.c.bf16 %v6251, %v6249
        %v6853 = vpack.c.bf16 %v6252, %v6250
        %v6854 = vpack.c.bf16 %v5962, %v5956
        %v6855 = vpack.c.bf16 %v5970, %v5964
        %v6856 = vpack.c.bf16 %v6255, %v6253
        %v6857 = vpack.c.bf16 %v6256, %v6254
        %v6858 = vpack.c.bf16 %v5974, %v5968
        %v6859 = vpack.c.bf16 %v5982, %v5976
        %v6860 = vpack.c.bf16 %v6259, %v6257
        %v6861 = vpack.c.bf16 %v6260, %v6258
        %v6862 = vpack.c.bf16 %v5986, %v5980
        %v6863 = vpack.c.bf16 %v5994, %v5988
        %v6864 = vpack.c.bf16 %v6263, %v6261
        %v6865 = vpack.c.bf16 %v6264, %v6262
        %v6866 = vpack.c.bf16 %v5998, %v5992
        %v6867 = vpack.c.bf16 %v6006, %v6000
        %v6868 = vpack.c.bf16 %v6267, %v6265
        %v6869 = vpack.c.bf16 %v6268, %v6266
        %v6870 = vpack.c.bf16 %v6010, %v6004
        %v6871 = vpack.c.bf16 %v6018, %v6012
        %v6872 = vpack.c.bf16 %v6271, %v6269
        %v6873 = vpack.c.bf16 %v6272, %v6270
        %v6874 = vpack.c.bf16 %v6022, %v6016
        %v6875 = vpack.c.bf16 %v6030, %v6024
        %v6876 = vpack.c.bf16 %v6275, %v6273
        %v6877 = vpack.c.bf16 %v6276, %v6274
        %v6878 = vpack.c.bf16 %v6034, %v6028
        %v6879 = vpack.c.bf16 %v6042, %v6036
        %v6880 = vpack.c.bf16 %v6279, %v6277
        %v6881 = vpack.c.bf16 %v6280, %v6278
        %v6882 = vpack.c.bf16 %v6046, %v6040
        %v6883 = vpack.c.bf16 %v6054, %v6048
        %v6884 = vpack.c.bf16 %v6283, %v6281
        %v6885 = vpack.c.bf16 %v6284, %v6282
        %v6886 = vpack.c.bf16 %v6058, %v6052
        %v6887 = vpack.c.bf16 %v6066, %v6060
        %v6888 = vpack.c.bf16 %v6287, %v6285
        %v6889 = vpack.c.bf16 %v6288, %v6286
        %v6890 = vpack.c.bf16 %v6070, %v6064
        %v6891 = vpack.c.bf16 %v6078, %v6072
        %v6892 = vpack.c.bf16 %v6291, %v6289
        %v6893 = vpack.c.bf16 %v6292, %v6290
        %v6894 = vpack.c.bf16 %v6082, %v6076
        %v6895 = vpack.c.bf16 %v6090, %v6084
        %v6896 = vpack.c.bf16 %v6295, %v6293
        %v6897 = vpack.c.bf16 %v6296, %v6294
        %v6898 = vpack.c.bf16 %v6094, %v6088
        %v6899 = vpack.c.bf16 %v6102, %v6096
        %v6900 = vpack.c.bf16 %v6299, %v6297
        %v6901 = vpack.c.bf16 %v6300, %v6298
        %v6902 = vpack.c.bf16 %v6106, %v6100
        %v6903 = vpack.c.bf16 %v6114, %v6108
        %v6904 = vpack.c.bf16 %v6303, %v6301
        %v6905 = vpack.c.bf16 %v6304, %v6302
        %v6906 = vpack.c.bf16 %v6118, %v6112
        %v6907 = vpack.c.bf16 %v6126, %v6120
        %v6908 = vpack.c.bf16 %v6307, %v6305
        %v6909 = vpack.c.bf16 %v6308, %v6306
        %v6910 = vpack.c.bf16 %v6130, %v6124
        %v6911 = vpack.c.bf16 %v6138, %v6132
        %v6912 = vpack.c.bf16 %v6311, %v6309
        %v6913 = vpack.c.bf16 %v6312, %v6310
        %v6914 = vpack.c.bf16 %v6142, %v6136
        %v6915 = vpack.c.bf16 %v6150, %v6144
        %v6916 = vpack.c.bf16 %v6315, %v6313
        %v6917 = vpack.c.bf16 %v6316, %v6314
        %v6918 = vpack.c.bf16 %v6154, %v6148
        %v6919 = vpack.c.bf16 %v6162, %v6156
        %v6920 = vpack.c.bf16 %v6319, %v6317
        %v6921 = vpack.c.bf16 %v6320, %v6318
        %v6922 = vpack.c.bf16 %v6166, %v6160
        %v6923 = vpack.c.bf16 %v6174, %v6168
        %v6924 = vpack.c.bf16 %v6323, %v6321
        %v6925 = vpack.c.bf16 %v6324, %v6322
        %v6926 = vpack.c.bf16 %v6178, %v6172
        %v6927 = vpack.c.bf16 %v6186, %v6180
        %v6928 = vpack.c.bf16 %v6327, %v6325
        %v6929 = vpack.c.bf16 %v6328, %v6326
        %v6930 = vpack.c.bf16 %v6190, %v6184
        %v6931 = vpack.c.bf16 %v6198, %v6192
        %v6932 = vpack.c.bf16 %v6331, %v6329
        %v6933 = vpack.c.bf16 %v6332, %v6330
        %v6934 = vpack.c.bf16 %v6202, %v6196
        %v6935 = vpack.c.bf16 %v6204, %v6204
        %v6936 = vpack.c.bf16 %v6333, %v6333
        %v6937 = vpack.c.bf16 %v6334, %v6334
        %v6938 = vpack.c.bf16 %v6208, %v6208
        %v6939 = vld [vmem:[%s8] sm:$0xff]
        %v6940 = vld [vmem:[%s8 + $0x8] sm:$0xf]
        %6942 = vset.pattern.permute.xlu0 7
        %6943 = vperm.xlu0 %6942, %v6939
        %v6944 = vpop.permute.xlu0 %6943
        %6947 = vset.pattern.permute.xlu0 7
        %6948 = vperm.xlu0 %6947, %v6940
        %v6949 = vpop.permute.xlu0 %6948
        %v6963 = vunpack.c.l.b16 %v4216
        %v6964 = vunpack.c.h.b16 %v4216
        %v6965 = vunpack.c.l.b16 %v4217
        %v6966 = vunpack.c.h.b16 %v4217
        %v6967 = vunpack.c.l.b16 %v4218
        %v6968 = vunpack.c.h.b16 %v4218
        %v6969 = vunpack.c.l.b16 %v4219
        %v6970 = vunpack.c.h.b16 %v4219
        %v6971 = vunpack.c.l.b16 %v4220
        %v6972 = vunpack.c.h.b16 %v4220
        %v6973 = vunpack.c.l.b16 %v4221
        %v6974 = vunpack.c.l.b16 %v4222
        %v6975 = vunpack.c.h.b16 %v4222
        %v6976 = vunpack.c.l.b16 %v4223
        %v6977 = vunpack.c.h.b16 %v4223
        %v6978 = vunpack.c.l.b16 %v4224
        %v6979 = vunpack.c.h.b16 %v4224
        %v6980 = vunpack.c.l.b16 %v4225
        %v6981 = vunpack.c.h.b16 %v4225
        %v6982 = vunpack.c.l.b16 %v4226
        %v6983 = vunpack.c.h.b16 %v4226
        %v6984 = vunpack.c.l.b16 %v4227
        %v6985 = vpack.c.b16 %v6974, %v6963
        %v6986 = vpack.c.b16 %v6975, %v6964
        %v6987 = vpack.c.b16 %v6976, %v6965
        %v6988 = vpack.c.b16 %v6977, %v6966
        %v6989 = vpack.c.b16 %v6978, %v6967
        %v6990 = vpack.c.b16 %v6979, %v6968
        %v6991 = vpack.c.b16 %v6980, %v6969
        %v6992 = vpack.c.b16 %v6981, %v6970
        %v6993 = vpack.c.b16 %v6982, %v6971
        %v6994 = vpack.c.b16 %v6983, %v6972
        %v6995 = vpack.c.b16 %v6984, %v6973
        %7358 = vrot.lane.b32.xlu0 %v6587, 42
        %v7359 = vpop.permute.xlu0 %7358
        %7360 = vrot.lane.b32.xlu0 %v6588, 42
        %v7361 = vpop.permute.xlu0 %7360
        %7362 = vrot.lane.b32.xlu0 %v6589, 42
        %v7363 = vpop.permute.xlu0 %7362
        %7364 = vrot.lane.b32.xlu0 %v6590, 42
        %v7365 = vpop.permute.xlu0 %7364
        %7366 = vrot.lane.b32.xlu0 %v6591, 42
        %v7367 = vpop.permute.xlu0 %7366
        %7368 = vrot.lane.b32.xlu0 %v6592, 42
        %v7369 = vpop.permute.xlu0 %7368
        %7370 = vrot.lane.b32.xlu0 %v6593, 42
        %v7371 = vpop.permute.xlu0 %7370
        %7372 = vrot.lane.b32.xlu0 %v6594, 42
        %v7373 = vpop.permute.xlu0 %7372
        %7374 = vrot.lane.b32.xlu0 %v6595, 42
        %v7375 = vpop.permute.xlu0 %7374
        %7376 = vrot.lane.b32.xlu0 %v6596, 42
        %v7377 = vpop.permute.xlu0 %7376
        %7378 = vrot.lane.b32.xlu0 %v6597, 42
        %v7379 = vpop.permute.xlu0 %7378
        %7380 = vrot.lane.b32.xlu0 %v6598, 42
        %v7381 = vpop.permute.xlu0 %7380
        %7382 = vrot.lane.b32.xlu0 %v6599, 42
        %v7383 = vpop.permute.xlu0 %7382
        %7384 = vrot.lane.b32.xlu0 %v6600, 42
        %v7385 = vpop.permute.xlu0 %7384
        %7386 = vrot.lane.b32.xlu0 %v6601, 42
        %v7387 = vpop.permute.xlu0 %7386
        %7388 = vrot.lane.b32.xlu0 %v6602, 42
        %v7389 = vpop.permute.xlu0 %7388
        %7390 = vrot.lane.b32.xlu0 %v6603, 42
        %v7391 = vpop.permute.xlu0 %7390
        %7392 = vrot.lane.b32.xlu0 %v6604, 42
        %v7393 = vpop.permute.xlu0 %7392
        %7394 = vrot.lane.b32.xlu0 %v6605, 42
        %v7395 = vpop.permute.xlu0 %7394
        %7396 = vrot.lane.b32.xlu0 %v6606, 42
        %v7397 = vpop.permute.xlu0 %7396
        %7398 = vrot.lane.b32.xlu0 %v6607, 42
        %v7399 = vpop.permute.xlu0 %7398
        %7400 = vrot.lane.b32.xlu0 %v6608, 42
        %v7401 = vpop.permute.xlu0 %7400
        %7402 = vrot.lane.b32.xlu0 %v6609, 42
        %v7403 = vpop.permute.xlu0 %7402
        %7404 = vrot.lane.b32.xlu0 %v6610, 42
        %v7405 = vpop.permute.xlu0 %7404
        %7406 = vrot.lane.b32.xlu0 %v6611, 42
        %v7407 = vpop.permute.xlu0 %7406
        %7408 = vrot.lane.b32.xlu0 %v6612, 42
        %v7409 = vpop.permute.xlu0 %7408
        %7410 = vrot.lane.b32.xlu0 %v6613, 42
        %v7411 = vpop.permute.xlu0 %7410
        %7412 = vrot.lane.b32.xlu0 %v6614, 42
        %v7413 = vpop.permute.xlu0 %7412
        %7414 = vrot.lane.b32.xlu0 %v6615, 42
        %v7415 = vpop.permute.xlu0 %7414
        %7416 = vrot.lane.b32.xlu0 %v6616, 42
        %v7417 = vpop.permute.xlu0 %7416
        %7418 = vrot.lane.b32.xlu0 %v6617, 42
        %v7419 = vpop.permute.xlu0 %7418
        %7420 = vrot.lane.b32.xlu0 %v6618, 42
        %v7421 = vpop.permute.xlu0 %7420
        %7422 = vrot.lane.b32.xlu0 %v6619, 42
        %v7423 = vpop.permute.xlu0 %7422
        %7424 = vrot.lane.b32.xlu0 %v6620, 42
        %v7425 = vpop.permute.xlu0 %7424
        %7426 = vrot.lane.b32.xlu0 %v6621, 42
        %v7427 = vpop.permute.xlu0 %7426
        %7428 = vrot.lane.b32.xlu0 %v6622, 42
        %v7429 = vpop.permute.xlu0 %7428
        %7430 = vrot.lane.b32.xlu0 %v6623, 42
        %v7431 = vpop.permute.xlu0 %7430
        %7432 = vrot.lane.b32.xlu0 %v6624, 42
        %v7433 = vpop.permute.xlu0 %7432
        %7434 = vrot.lane.b32.xlu0 %v6625, 42
        %v7435 = vpop.permute.xlu0 %7434
        %7436 = vrot.lane.b32.xlu0 %v6626, 42
        %v7437 = vpop.permute.xlu0 %7436
        %7438 = vrot.lane.b32.xlu0 %v6627, 42
        %v7439 = vpop.permute.xlu0 %7438
        %7440 = vrot.lane.b32.xlu0 %v6628, 42
        %v7441 = vpop.permute.xlu0 %7440
        %7442 = vrot.lane.b32.xlu0 %v6629, 42
        %v7443 = vpop.permute.xlu0 %7442
        %7444 = vrot.lane.b32.xlu0 %v6630, 42
        %v7445 = vpop.permute.xlu0 %7444
        %7446 = vrot.lane.b32.xlu0 %v6631, 42
        %v7447 = vpop.permute.xlu0 %7446
        %7448 = vrot.lane.b32.xlu0 %v6632, 42
        %v7449 = vpop.permute.xlu0 %7448
        %7450 = vrot.lane.b32.xlu0 %v6633, 42
        %v7451 = vpop.permute.xlu0 %7450
        %7452 = vrot.lane.b32.xlu0 %v6634, 42
        %v7453 = vpop.permute.xlu0 %7452
        %7454 = vrot.lane.b32.xlu0 %v6635, 42
        %v7455 = vpop.permute.xlu0 %7454
        %7456 = vrot.lane.b32.xlu0 %v6636, 42
        %v7457 = vpop.permute.xlu0 %7456
        %7458 = vrot.lane.b32.xlu0 %v6637, 42
        %v7459 = vpop.permute.xlu0 %7458
        %7460 = vrot.lane.b32.xlu0 %v6638, 42
        %v7461 = vpop.permute.xlu0 %7460
        %7462 = vrot.lane.b32.xlu0 %v6639, 42
        %v7463 = vpop.permute.xlu0 %7462
        %7464 = vrot.lane.b32.xlu0 %v6640, 42
        %v7465 = vpop.permute.xlu0 %7464
        %7466 = vrot.lane.b32.xlu0 %v6641, 42
        %v7467 = vpop.permute.xlu0 %7466
        %7468 = vrot.lane.b32.xlu0 %v6642, 42
        %v7469 = vpop.permute.xlu0 %7468
        %7470 = vrot.lane.b32.xlu0 %v6643, 42
        %v7471 = vpop.permute.xlu0 %7470
        %7472 = vrot.lane.b32.xlu0 %v6644, 42
        %v7473 = vpop.permute.xlu0 %7472
        %7474 = vrot.lane.b32.xlu0 %v6645, 42
        %v7475 = vpop.permute.xlu0 %7474
        %7476 = vrot.lane.b32.xlu0 %v6646, 42
        %v7477 = vpop.permute.xlu0 %7476
        %7478 = vrot.lane.b32.xlu0 %v6647, 42
        %v7479 = vpop.permute.xlu0 %7478
        %7480 = vrot.lane.b32.xlu0 %v6648, 42
        %v7481 = vpop.permute.xlu0 %7480
        %7482 = vrot.lane.b32.xlu0 %v6649, 42
        %v7483 = vpop.permute.xlu0 %7482
        %7484 = vrot.lane.b32.xlu0 %v6650, 42
        %v7485 = vpop.permute.xlu0 %7484
        %7486 = vrot.lane.b32.xlu0 %v6651, 42
        %v7487 = vpop.permute.xlu0 %7486
        %7488 = vrot.lane.b32.xlu0 %v6652, 42
        %v7489 = vpop.permute.xlu0 %7488
        %7490 = vrot.lane.b32.xlu0 %v6653, 42
        %v7491 = vpop.permute.xlu0 %7490
        %7492 = vrot.lane.b32.xlu0 %v6654, 42
        %v7493 = vpop.permute.xlu0 %7492
        %7494 = vrot.lane.b32.xlu0 %v6655, 42
        %v7495 = vpop.permute.xlu0 %7494
        %7496 = vrot.lane.b32.xlu0 %v6656, 42
        %v7497 = vpop.permute.xlu0 %7496
        %7498 = vrot.lane.b32.xlu0 %v6657, 42
        %v7499 = vpop.permute.xlu0 %7498
        %7500 = vrot.lane.b32.xlu0 %v6658, 42
        %v7501 = vpop.permute.xlu0 %7500
        %7502 = vrot.lane.b32.xlu0 %v6659, 42
        %v7503 = vpop.permute.xlu0 %7502
        %7504 = vrot.lane.b32.xlu0 %v6660, 42
        %v7505 = vpop.permute.xlu0 %7504
        %7506 = vrot.lane.b32.xlu0 %v6661, 42
        %v7507 = vpop.permute.xlu0 %7506
        %7508 = vrot.lane.b32.xlu0 %v6662, 42
        %v7509 = vpop.permute.xlu0 %7508
        %7510 = vrot.lane.b32.xlu0 %v6663, 42
        %v7511 = vpop.permute.xlu0 %7510
        %7512 = vrot.lane.b32.xlu0 %v6664, 42
        %v7513 = vpop.permute.xlu0 %7512
        %7514 = vrot.lane.b32.xlu0 %v6665, 42
        %v7515 = vpop.permute.xlu0 %7514
        %7516 = vrot.lane.b32.xlu0 %v6666, 42
        %v7517 = vpop.permute.xlu0 %7516
        %7518 = vrot.lane.b32.xlu0 %v6667, 42
        %v7519 = vpop.permute.xlu0 %7518
        %7520 = vrot.lane.b32.xlu0 %v6668, 42
        %v7521 = vpop.permute.xlu0 %7520
        %7522 = vrot.lane.b32.xlu0 %v6669, 42
        %v7523 = vpop.permute.xlu0 %7522
        %7524 = vrot.lane.b32.xlu0 %v6670, 42
        %v7525 = vpop.permute.xlu0 %7524
        %7526 = vrot.lane.b32.xlu0 %v6671, 42
        %v7527 = vpop.permute.xlu0 %7526
        %7528 = vrot.lane.b32.xlu0 %v6672, 42
        %v7529 = vpop.permute.xlu0 %7528
        %7530 = vrot.lane.b32.xlu0 %v6673, 42
        %v7531 = vpop.permute.xlu0 %7530
        %7532 = vrot.lane.b32.xlu0 %v6674, 42
        %v7533 = vpop.permute.xlu0 %7532
        %7534 = vrot.lane.b32.xlu0 %v6675, 42
        %v7535 = vpop.permute.xlu0 %7534
        %7536 = vrot.lane.b32.xlu0 %v6676, 42
        %v7537 = vpop.permute.xlu0 %7536
        %7538 = vrot.lane.b32.xlu0 %v6677, 42
        %v7539 = vpop.permute.xlu0 %7538
        %7540 = vrot.lane.b32.xlu0 %v6678, 42
        %v7541 = vpop.permute.xlu0 %7540
        %7542 = vrot.lane.b32.xlu0 %v6679, 42
        %v7543 = vpop.permute.xlu0 %7542
        %7544 = vrot.lane.b32.xlu0 %v6680, 42
        %v7545 = vpop.permute.xlu0 %7544
        %7546 = vrot.lane.b32.xlu0 %v6681, 42
        %v7547 = vpop.permute.xlu0 %7546
        %7548 = vrot.lane.b32.xlu0 %v6682, 42
        %v7549 = vpop.permute.xlu0 %7548
        %7550 = vrot.lane.b32.xlu0 %v6683, 42
        %v7551 = vpop.permute.xlu0 %7550
        %7552 = vrot.lane.b32.xlu0 %v6684, 42
        %v7553 = vpop.permute.xlu0 %7552
        %7554 = vrot.lane.b32.xlu0 %v6685, 42
        %v7555 = vpop.permute.xlu0 %7554
        %7556 = vrot.lane.b32.xlu0 %v6686, 42
        %v7557 = vpop.permute.xlu0 %7556
        %7558 = vrot.lane.b32.xlu0 %v6687, 42
        %v7559 = vpop.permute.xlu0 %7558
        %7560 = vrot.lane.b32.xlu0 %v6688, 42
        %v7561 = vpop.permute.xlu0 %7560
        %7562 = vrot.lane.b32.xlu0 %v6689, 42
        %v7563 = vpop.permute.xlu0 %7562
        %7564 = vrot.lane.b32.xlu0 %v6690, 42
        %v7565 = vpop.permute.xlu0 %7564
        %7566 = vrot.lane.b32.xlu0 %v6691, 42
        %v7567 = vpop.permute.xlu0 %7566
        %7568 = vrot.lane.b32.xlu0 %v6692, 42
        %v7569 = vpop.permute.xlu0 %7568
        %7570 = vrot.lane.b32.xlu0 %v6693, 42
        %v7571 = vpop.permute.xlu0 %7570
        %7572 = vrot.lane.b32.xlu0 %v6694, 42
        %v7573 = vpop.permute.xlu0 %7572
        %7574 = vrot.lane.b32.xlu0 %v6695, 42
        %v7575 = vpop.permute.xlu0 %7574
        %7576 = vrot.lane.b32.xlu0 %v6696, 42
        %v7577 = vpop.permute.xlu0 %7576
        %7578 = vrot.lane.b32.xlu0 %v6697, 42
        %v7579 = vpop.permute.xlu0 %7578
        %7580 = vrot.lane.b32.xlu0 %v6698, 42
        %v7581 = vpop.permute.xlu0 %7580
        %7582 = vrot.lane.b32.xlu0 %v6699, 42
        %v7583 = vpop.permute.xlu0 %7582
        %7584 = vrot.lane.b32.xlu0 %v6700, 42
        %v7585 = vpop.permute.xlu0 %7584
        %7586 = vrot.lane.b32.xlu0 %v6701, 42
        %v7587 = vpop.permute.xlu0 %7586
        %7588 = vrot.lane.b32.xlu0 %v6702, 42
        %v7589 = vpop.permute.xlu0 %7588
        %7590 = vrot.lane.b32.xlu0 %v6703, 42
        %v7591 = vpop.permute.xlu0 %7590
        %7592 = vrot.lane.b32.xlu0 %v6704, 42
        %v7593 = vpop.permute.xlu0 %7592
        %7594 = vrot.lane.b32.xlu0 %v6705, 42
        %v7595 = vpop.permute.xlu0 %7594
        %7596 = vrot.lane.b32.xlu0 %v6706, 42
        %v7597 = vpop.permute.xlu0 %7596
        %7598 = vrot.lane.b32.xlu0 %v6707, 42
        %v7599 = vpop.permute.xlu0 %7598
        %7600 = vrot.lane.b32.xlu0 %v6708, 42
        %v7601 = vpop.permute.xlu0 %7600
        %7602 = vrot.lane.b32.xlu0 %v6709, 42
        %v7603 = vpop.permute.xlu0 %7602
        %7604 = vrot.lane.b32.xlu0 %v6710, 42
        %v7605 = vpop.permute.xlu0 %7604
        %7606 = vrot.lane.b32.xlu0 %v6711, 42
        %v7607 = vpop.permute.xlu0 %7606
        %7608 = vrot.lane.b32.xlu0 %v6712, 42
        %v7609 = vpop.permute.xlu0 %7608
        %7610 = vrot.lane.b32.xlu0 %v6713, 42
        %v7611 = vpop.permute.xlu0 %7610
        %7612 = vrot.lane.b32.xlu0 %v6714, 42
        %v7613 = vpop.permute.xlu0 %7612
        %7614 = vrot.lane.b32.xlu0 %v6715, 42
        %v7615 = vpop.permute.xlu0 %7614
        %7616 = vrot.lane.b32.xlu0 %v6716, 42
        %v7617 = vpop.permute.xlu0 %7616
        %7618 = vrot.lane.b32.xlu0 %v6717, 42
        %v7619 = vpop.permute.xlu0 %7618
        %7620 = vrot.lane.b32.xlu0 %v6718, 42
        %v7621 = vpop.permute.xlu0 %7620
        %7622 = vrot.lane.b32.xlu0 %v6719, 42
        %v7623 = vpop.permute.xlu0 %7622
        %7624 = vrot.lane.b32.xlu0 %v6720, 42
        %v7625 = vpop.permute.xlu0 %7624
        %7626 = vrot.lane.b32.xlu0 %v6721, 42
        %v7627 = vpop.permute.xlu0 %7626
        %7628 = vrot.lane.b32.xlu0 %v6722, 42
        %v7629 = vpop.permute.xlu0 %7628
        %7630 = vrot.lane.b32.xlu0 %v6723, 42
        %v7631 = vpop.permute.xlu0 %7630
        %7632 = vrot.lane.b32.xlu0 %v6724, 42
        %v7633 = vpop.permute.xlu0 %7632
        %7634 = vrot.lane.b32.xlu0 %v6725, 42
        %v7635 = vpop.permute.xlu0 %7634
        %7636 = vrot.lane.b32.xlu0 %v6726, 42
        %v7637 = vpop.permute.xlu0 %7636
        %7638 = vrot.lane.b32.xlu0 %v6727, 42
        %v7639 = vpop.permute.xlu0 %7638
        %7640 = vrot.lane.b32.xlu0 %v6728, 42
        %v7641 = vpop.permute.xlu0 %7640
        %7642 = vrot.lane.b32.xlu0 %v6729, 42
        %v7643 = vpop.permute.xlu0 %7642
        %7644 = vrot.lane.b32.xlu0 %v6730, 42
        %v7645 = vpop.permute.xlu0 %7644
        %7646 = vrot.lane.b32.xlu0 %v6731, 42
        %v7647 = vpop.permute.xlu0 %7646
        %7648 = vrot.lane.b32.xlu0 %v6732, 42
        %v7649 = vpop.permute.xlu0 %7648
        %7650 = vrot.lane.b32.xlu0 %v6733, 42
        %v7651 = vpop.permute.xlu0 %7650
        %7652 = vrot.lane.b32.xlu0 %v6734, 42
        %v7653 = vpop.permute.xlu0 %7652
        %7654 = vrot.lane.b32.xlu0 %v6735, 42
        %v7655 = vpop.permute.xlu0 %7654
        %7656 = vrot.lane.b32.xlu0 %v6736, 42
        %v7657 = vpop.permute.xlu0 %7656
        %7658 = vrot.lane.b32.xlu0 %v6737, 42
        %v7659 = vpop.permute.xlu0 %7658
        %7660 = vrot.lane.b32.xlu0 %v6738, 42
        %v7661 = vpop.permute.xlu0 %7660
        %7662 = vrot.lane.b32.xlu0 %v6739, 42
        %v7663 = vpop.permute.xlu0 %7662
        %7664 = vrot.lane.b32.xlu0 %v6740, 42
        %v7665 = vpop.permute.xlu0 %7664
        %7666 = vrot.lane.b32.xlu0 %v6741, 42
        %v7667 = vpop.permute.xlu0 %7666
        %7668 = vrot.lane.b32.xlu0 %v6742, 42
        %v7669 = vpop.permute.xlu0 %7668
        %7670 = vrot.lane.b32.xlu0 %v6743, 42
        %v7671 = vpop.permute.xlu0 %7670
        %7672 = vrot.lane.b32.xlu0 %v6744, 42
        %v7673 = vpop.permute.xlu0 %7672
        %7674 = vrot.lane.b32.xlu0 %v6745, 42
        %v7675 = vpop.permute.xlu0 %7674
        %7676 = vrot.lane.b32.xlu0 %v6746, 42
        %v7677 = vpop.permute.xlu0 %7676
        %7678 = vrot.lane.b32.xlu0 %v6747, 42
        %v7679 = vpop.permute.xlu0 %7678
        %7680 = vrot.lane.b32.xlu0 %v6748, 42
        %v7681 = vpop.permute.xlu0 %7680
        %7682 = vrot.lane.b32.xlu0 %v6749, 42
        %v7683 = vpop.permute.xlu0 %7682
        %7684 = vrot.lane.b32.xlu0 %v6750, 42
        %v7685 = vpop.permute.xlu0 %7684
        %7686 = vrot.lane.b32.xlu0 %v6751, 42
        %v7687 = vpop.permute.xlu0 %7686
        %7688 = vrot.lane.b32.xlu0 %v6752, 42
        %v7689 = vpop.permute.xlu0 %7688
        %7690 = vrot.lane.b32.xlu0 %v6753, 42
        %v7691 = vpop.permute.xlu0 %7690
        %7692 = vrot.lane.b32.xlu0 %v6754, 42
        %v7693 = vpop.permute.xlu0 %7692
        %7694 = vrot.lane.b32.xlu0 %v6755, 42
        %v7695 = vpop.permute.xlu0 %7694
        %7696 = vrot.lane.b32.xlu0 %v6756, 42
        %v7697 = vpop.permute.xlu0 %7696
        %7698 = vrot.lane.b32.xlu0 %v6757, 42
        %v7699 = vpop.permute.xlu0 %7698
        %7700 = vrot.lane.b32.xlu0 %v6758, 42
        %v7701 = vpop.permute.xlu0 %7700
        %7702 = vrot.lane.b32.xlu0 %v6759, 42
        %v7703 = vpop.permute.xlu0 %7702
        %7704 = vrot.lane.b32.xlu0 %v6760, 42
        %v7705 = vpop.permute.xlu0 %7704
        %7706 = vrot.lane.b32.xlu0 %v6761, 42
        %v7707 = vpop.permute.xlu0 %7706
        %7708 = vrot.lane.b32.xlu0 %v6762, 42
        %v7709 = vpop.permute.xlu0 %7708
        %7710 = vrot.lane.b32.xlu0 %v6763, 42
        %v7711 = vpop.permute.xlu0 %7710
        %7712 = vrot.lane.b32.xlu0 %v6764, 42
        %v7713 = vpop.permute.xlu0 %7712
        %7714 = vrot.lane.b32.xlu0 %v6765, 42
        %v7715 = vpop.permute.xlu0 %7714
        %7716 = vrot.lane.b32.xlu0 %v6766, 42
        %v7717 = vpop.permute.xlu0 %7716
        %7718 = vrot.lane.b32.xlu0 %v6767, 42
        %v7719 = vpop.permute.xlu0 %7718
        %7720 = vrot.lane.b32.xlu0 %v6768, 42
        %v7721 = vpop.permute.xlu0 %7720
        %7722 = vrot.lane.b32.xlu0 %v6769, 42
        %v7723 = vpop.permute.xlu0 %7722
        %7724 = vrot.lane.b32.xlu0 %v6770, 42
        %v7725 = vpop.permute.xlu0 %7724
        %7726 = vrot.lane.b32.xlu0 %v6771, 42
        %v7727 = vpop.permute.xlu0 %7726
        %7728 = vrot.lane.b32.xlu0 %v6772, 42
        %v7729 = vpop.permute.xlu0 %7728
        %7730 = vrot.lane.b32.xlu0 %v6773, 42
        %v7731 = vpop.permute.xlu0 %7730
        %7732 = vrot.lane.b32.xlu0 %v6774, 42
        %v7733 = vpop.permute.xlu0 %7732
        %7734 = vrot.lane.b32.xlu0 %v6775, 42
        %v7735 = vpop.permute.xlu0 %7734
        %7736 = vrot.lane.b32.xlu0 %v6776, 42
        %v7737 = vpop.permute.xlu0 %7736
        %7738 = vrot.lane.b32.xlu0 %v6777, 42
        %v7739 = vpop.permute.xlu0 %7738
        %7740 = vrot.lane.b32.xlu0 %v6778, 42
        %v7741 = vpop.permute.xlu0 %7740
        %7742 = vrot.lane.b32.xlu0 %v6779, 42
        %v7743 = vpop.permute.xlu0 %7742
        %7744 = vrot.lane.b32.xlu0 %v6780, 42
        %v7745 = vpop.permute.xlu0 %7744
        %7746 = vrot.lane.b32.xlu0 %v6781, 42
        %v7747 = vpop.permute.xlu0 %7746
        %7748 = vrot.lane.b32.xlu0 %v6782, 42
        %v7749 = vpop.permute.xlu0 %7748
        %7750 = vrot.lane.b32.xlu0 %v6783, 42
        %v7751 = vpop.permute.xlu0 %7750
        %7752 = vrot.lane.b32.xlu0 %v6784, 42
        %v7753 = vpop.permute.xlu0 %7752
        %7754 = vrot.lane.b32.xlu0 %v6785, 42
        %v7755 = vpop.permute.xlu0 %7754
        %7756 = vrot.lane.b32.xlu0 %v6786, 42
        %v7757 = vpop.permute.xlu0 %7756
        %7758 = vrot.lane.b32.xlu0 %v6787, 42
        %v7759 = vpop.permute.xlu0 %7758
        %7760 = vrot.lane.b32.xlu0 %v6788, 42
        %v7761 = vpop.permute.xlu0 %7760
        %7762 = vrot.lane.b32.xlu0 %v6789, 42
        %v7763 = vpop.permute.xlu0 %7762
        %7764 = vrot.lane.b32.xlu0 %v6790, 42
        %v7765 = vpop.permute.xlu0 %7764
        %7766 = vrot.lane.b32.xlu0 %v6791, 42
        %v7767 = vpop.permute.xlu0 %7766
        %7768 = vrot.lane.b32.xlu0 %v6792, 42
        %v7769 = vpop.permute.xlu0 %7768
        %7770 = vrot.lane.b32.xlu0 %v6793, 42
        %v7771 = vpop.permute.xlu0 %7770
        %7772 = vrot.lane.b32.xlu0 %v6794, 42
        %v7773 = vpop.permute.xlu0 %7772
        %7774 = vrot.lane.b32.xlu0 %v6795, 42
        %v7775 = vpop.permute.xlu0 %7774
        %7776 = vrot.lane.b32.xlu0 %v6796, 42
        %v7777 = vpop.permute.xlu0 %7776
        %7778 = vrot.lane.b32.xlu0 %v6797, 42
        %v7779 = vpop.permute.xlu0 %7778
        %7780 = vrot.lane.b32.xlu0 %v6798, 42
        %v7781 = vpop.permute.xlu0 %7780
        %7782 = vrot.lane.b32.xlu0 %v6799, 42
        %v7783 = vpop.permute.xlu0 %7782
        %7784 = vrot.lane.b32.xlu0 %v6800, 42
        %v7785 = vpop.permute.xlu0 %7784
        %7786 = vrot.lane.b32.xlu0 %v6801, 42
        %v7787 = vpop.permute.xlu0 %7786
        %7788 = vrot.lane.b32.xlu0 %v6802, 42
        %v7789 = vpop.permute.xlu0 %7788
        %7790 = vrot.lane.b32.xlu0 %v6803, 42
        %v7791 = vpop.permute.xlu0 %7790
        %7792 = vrot.lane.b32.xlu0 %v6804, 42
        %v7793 = vpop.permute.xlu0 %7792
        %7794 = vrot.lane.b32.xlu0 %v6805, 42
        %v7795 = vpop.permute.xlu0 %7794
        %7796 = vrot.lane.b32.xlu0 %v6806, 42
        %v7797 = vpop.permute.xlu0 %7796
        %7798 = vrot.lane.b32.xlu0 %v6807, 42
        %v7799 = vpop.permute.xlu0 %7798
        %7800 = vrot.lane.b32.xlu0 %v6808, 42
        %v7801 = vpop.permute.xlu0 %7800
        %7802 = vrot.lane.b32.xlu0 %v6809, 42
        %v7803 = vpop.permute.xlu0 %7802
        %7804 = vrot.lane.b32.xlu0 %v6810, 42
        %v7805 = vpop.permute.xlu0 %7804
        %7806 = vrot.lane.b32.xlu0 %v6811, 42
        %v7807 = vpop.permute.xlu0 %7806
        %7808 = vrot.lane.b32.xlu0 %v6812, 42
        %v7809 = vpop.permute.xlu0 %7808
        %7810 = vrot.lane.b32.xlu0 %v6813, 42
        %v7811 = vpop.permute.xlu0 %7810
        %7812 = vrot.lane.b32.xlu0 %v6814, 42
        %v7813 = vpop.permute.xlu0 %7812
        %7814 = vrot.lane.b32.xlu0 %v6815, 42
        %v7815 = vpop.permute.xlu0 %7814
        %7816 = vrot.lane.b32.xlu0 %v6816, 42
        %v7817 = vpop.permute.xlu0 %7816
        %7818 = vrot.lane.b32.xlu0 %v6817, 42
        %v7819 = vpop.permute.xlu0 %7818
        %7820 = vrot.lane.b32.xlu0 %v6818, 42
        %v7821 = vpop.permute.xlu0 %7820
        %7822 = vrot.lane.b32.xlu0 %v6819, 42
        %v7823 = vpop.permute.xlu0 %7822
        %7824 = vrot.lane.b32.xlu0 %v6820, 42
        %v7825 = vpop.permute.xlu0 %7824
        %7826 = vrot.lane.b32.xlu0 %v6821, 42
        %v7827 = vpop.permute.xlu0 %7826
        %7828 = vrot.lane.b32.xlu0 %v6822, 42
        %v7829 = vpop.permute.xlu0 %7828
        %7830 = vrot.lane.b32.xlu0 %v6823, 42
        %v7831 = vpop.permute.xlu0 %7830
        %7832 = vrot.lane.b32.xlu0 %v6824, 42
        %v7833 = vpop.permute.xlu0 %7832
        %7834 = vrot.lane.b32.xlu0 %v6825, 42
        %v7835 = vpop.permute.xlu0 %7834
        %7836 = vrot.lane.b32.xlu0 %v6826, 42
        %v7837 = vpop.permute.xlu0 %7836
        %7838 = vrot.lane.b32.xlu0 %v6827, 42
        %v7839 = vpop.permute.xlu0 %7838
        %7840 = vrot.lane.b32.xlu0 %v6828, 42
        %v7841 = vpop.permute.xlu0 %7840
        %7842 = vrot.lane.b32.xlu0 %v6829, 42
        %v7843 = vpop.permute.xlu0 %7842
        %7844 = vrot.lane.b32.xlu0 %v6830, 42
        %v7845 = vpop.permute.xlu0 %7844
        %7846 = vrot.lane.b32.xlu0 %v6831, 42
        %v7847 = vpop.permute.xlu0 %7846
        %7848 = vrot.lane.b32.xlu0 %v6832, 42
        %v7849 = vpop.permute.xlu0 %7848
        %7850 = vrot.lane.b32.xlu0 %v6833, 42
        %v7851 = vpop.permute.xlu0 %7850
        %7852 = vrot.lane.b32.xlu0 %v6834, 42
        %v7853 = vpop.permute.xlu0 %7852
        %7854 = vrot.lane.b32.xlu0 %v6835, 42
        %v7855 = vpop.permute.xlu0 %7854
        %7856 = vrot.lane.b32.xlu0 %v6836, 42
        %v7857 = vpop.permute.xlu0 %7856
        %7858 = vrot.lane.b32.xlu0 %v6837, 42
        %v7859 = vpop.permute.xlu0 %7858
        %7860 = vrot.lane.b32.xlu0 %v6838, 42
        %v7861 = vpop.permute.xlu0 %7860
        %7862 = vrot.lane.b32.xlu0 %v6839, 42
        %v7863 = vpop.permute.xlu0 %7862
        %7864 = vrot.lane.b32.xlu0 %v6840, 42
        %v7865 = vpop.permute.xlu0 %7864
        %7866 = vrot.lane.b32.xlu0 %v6841, 42
        %v7867 = vpop.permute.xlu0 %7866
        %7868 = vrot.lane.b32.xlu0 %v6842, 42
        %v7869 = vpop.permute.xlu0 %7868
        %7870 = vrot.lane.b32.xlu0 %v6843, 42
        %v7871 = vpop.permute.xlu0 %7870
        %7872 = vrot.lane.b32.xlu0 %v6844, 42
        %v7873 = vpop.permute.xlu0 %7872
        %7874 = vrot.lane.b32.xlu0 %v6845, 42
        %v7875 = vpop.permute.xlu0 %7874
        %7876 = vrot.lane.b32.xlu0 %v6846, 42
        %v7877 = vpop.permute.xlu0 %7876
        %7878 = vrot.lane.b32.xlu0 %v6847, 42
        %v7879 = vpop.permute.xlu0 %7878
        %7880 = vrot.lane.b32.xlu0 %v6848, 42
        %v7881 = vpop.permute.xlu0 %7880
        %7882 = vrot.lane.b32.xlu0 %v6849, 42
        %v7883 = vpop.permute.xlu0 %7882
        %7884 = vrot.lane.b32.xlu0 %v6850, 42
        %v7885 = vpop.permute.xlu0 %7884
        %7886 = vrot.lane.b32.xlu0 %v6851, 42
        %v7887 = vpop.permute.xlu0 %7886
        %7888 = vrot.lane.b32.xlu0 %v6852, 42
        %v7889 = vpop.permute.xlu0 %7888
        %7890 = vrot.lane.b32.xlu0 %v6853, 42
        %v7891 = vpop.permute.xlu0 %7890
        %7892 = vrot.lane.b32.xlu0 %v6854, 42
        %v7893 = vpop.permute.xlu0 %7892
        %7894 = vrot.lane.b32.xlu0 %v6855, 42
        %v7895 = vpop.permute.xlu0 %7894
        %7896 = vrot.lane.b32.xlu0 %v6856, 42
        %v7897 = vpop.permute.xlu0 %7896
        %7898 = vrot.lane.b32.xlu0 %v6857, 42
        %v7899 = vpop.permute.xlu0 %7898
        %7900 = vrot.lane.b32.xlu0 %v6858, 42
        %v7901 = vpop.permute.xlu0 %7900
        %7902 = vrot.lane.b32.xlu0 %v6859, 42
        %v7903 = vpop.permute.xlu0 %7902
        %7904 = vrot.lane.b32.xlu0 %v6860, 42
        %v7905 = vpop.permute.xlu0 %7904
        %7906 = vrot.lane.b32.xlu0 %v6861, 42
        %v7907 = vpop.permute.xlu0 %7906
        %7908 = vrot.lane.b32.xlu0 %v6862, 42
        %v7909 = vpop.permute.xlu0 %7908
        %7910 = vrot.lane.b32.xlu0 %v6863, 42
        %v7911 = vpop.permute.xlu0 %7910
        %7912 = vrot.lane.b32.xlu0 %v6864, 42
        %v7913 = vpop.permute.xlu0 %7912
        %7914 = vrot.lane.b32.xlu0 %v6865, 42
        %v7915 = vpop.permute.xlu0 %7914
        %7916 = vrot.lane.b32.xlu0 %v6866, 42
        %v7917 = vpop.permute.xlu0 %7916
        %7918 = vrot.lane.b32.xlu0 %v6867, 42
        %v7919 = vpop.permute.xlu0 %7918
        %7920 = vrot.lane.b32.xlu0 %v6868, 42
        %v7921 = vpop.permute.xlu0 %7920
        %7922 = vrot.lane.b32.xlu0 %v6869, 42
        %v7923 = vpop.permute.xlu0 %7922
        %7924 = vrot.lane.b32.xlu0 %v6870, 42
        %v7925 = vpop.permute.xlu0 %7924
        %7926 = vrot.lane.b32.xlu0 %v6871, 42
        %v7927 = vpop.permute.xlu0 %7926
        %7928 = vrot.lane.b32.xlu0 %v6872, 42
        %v7929 = vpop.permute.xlu0 %7928
        %7930 = vrot.lane.b32.xlu0 %v6873, 42
        %v7931 = vpop.permute.xlu0 %7930
        %7932 = vrot.lane.b32.xlu0 %v6874, 42
        %v7933 = vpop.permute.xlu0 %7932
        %7934 = vrot.lane.b32.xlu0 %v6875, 42
        %v7935 = vpop.permute.xlu0 %7934
        %7936 = vrot.lane.b32.xlu0 %v6876, 42
        %v7937 = vpop.permute.xlu0 %7936
        %7938 = vrot.lane.b32.xlu0 %v6877, 42
        %v7939 = vpop.permute.xlu0 %7938
        %7940 = vrot.lane.b32.xlu0 %v6878, 42
        %v7941 = vpop.permute.xlu0 %7940
        %7942 = vrot.lane.b32.xlu0 %v6879, 42
        %v7943 = vpop.permute.xlu0 %7942
        %7944 = vrot.lane.b32.xlu0 %v6880, 42
        %v7945 = vpop.permute.xlu0 %7944
        %7946 = vrot.lane.b32.xlu0 %v6881, 42
        %v7947 = vpop.permute.xlu0 %7946
        %7948 = vrot.lane.b32.xlu0 %v6882, 42
        %v7949 = vpop.permute.xlu0 %7948
        %7950 = vrot.lane.b32.xlu0 %v6883, 42
        %v7951 = vpop.permute.xlu0 %7950
        %7952 = vrot.lane.b32.xlu0 %v6884, 42
        %v7953 = vpop.permute.xlu0 %7952
        %7954 = vrot.lane.b32.xlu0 %v6885, 42
        %v7955 = vpop.permute.xlu0 %7954
        %7956 = vrot.lane.b32.xlu0 %v6886, 42
        %v7957 = vpop.permute.xlu0 %7956
        %7958 = vrot.lane.b32.xlu0 %v6887, 42
        %v7959 = vpop.permute.xlu0 %7958
        %7960 = vrot.lane.b32.xlu0 %v6888, 42
        %v7961 = vpop.permute.xlu0 %7960
        %7962 = vrot.lane.b32.xlu0 %v6889, 42
        %v7963 = vpop.permute.xlu0 %7962
        %7964 = vrot.lane.b32.xlu0 %v6890, 42
        %v7965 = vpop.permute.xlu0 %7964
        %7966 = vrot.lane.b32.xlu0 %v6891, 42
        %v7967 = vpop.permute.xlu0 %7966
        %7968 = vrot.lane.b32.xlu0 %v6892, 42
        %v7969 = vpop.permute.xlu0 %7968
        %7970 = vrot.lane.b32.xlu0 %v6893, 42
        %v7971 = vpop.permute.xlu0 %7970
        %7972 = vrot.lane.b32.xlu0 %v6894, 42
        %v7973 = vpop.permute.xlu0 %7972
        %7974 = vrot.lane.b32.xlu0 %v6895, 42
        %v7975 = vpop.permute.xlu0 %7974
        %7976 = vrot.lane.b32.xlu0 %v6896, 42
        %v7977 = vpop.permute.xlu0 %7976
        %7978 = vrot.lane.b32.xlu0 %v6897, 42
        %v7979 = vpop.permute.xlu0 %7978
        %7980 = vrot.lane.b32.xlu0 %v6898, 42
        %v7981 = vpop.permute.xlu0 %7980
        %7982 = vrot.lane.b32.xlu0 %v6899, 42
        %v7983 = vpop.permute.xlu0 %7982
        %7984 = vrot.lane.b32.xlu0 %v6900, 42
        %v7985 = vpop.permute.xlu0 %7984
        %7986 = vrot.lane.b32.xlu0 %v6901, 42
        %v7987 = vpop.permute.xlu0 %7986
        %7988 = vrot.lane.b32.xlu0 %v6902, 42
        %v7989 = vpop.permute.xlu0 %7988
        %7990 = vrot.lane.b32.xlu0 %v6903, 42
        %v7991 = vpop.permute.xlu0 %7990
        %7992 = vrot.lane.b32.xlu0 %v6904, 42
        %v7993 = vpop.permute.xlu0 %7992
        %7994 = vrot.lane.b32.xlu0 %v6905, 42
        %v7995 = vpop.permute.xlu0 %7994
        %7996 = vrot.lane.b32.xlu0 %v6906, 42
        %v7997 = vpop.permute.xlu0 %7996
        %7998 = vrot.lane.b32.xlu0 %v6907, 42
        %v7999 = vpop.permute.xlu0 %7998
        %8000 = vrot.lane.b32.xlu0 %v6908, 42
        %v8001 = vpop.permute.xlu0 %8000
        %8002 = vrot.lane.b32.xlu0 %v6909, 42
        %v8003 = vpop.permute.xlu0 %8002
        %8004 = vrot.lane.b32.xlu0 %v6910, 42
        %v8005 = vpop.permute.xlu0 %8004
        %8006 = vrot.lane.b32.xlu0 %v6911, 42
        %v8007 = vpop.permute.xlu0 %8006
        %8008 = vrot.lane.b32.xlu0 %v6912, 42
        %v8009 = vpop.permute.xlu0 %8008
        %8010 = vrot.lane.b32.xlu0 %v6913, 42
        %v8011 = vpop.permute.xlu0 %8010
        %8012 = vrot.lane.b32.xlu0 %v6914, 42
        %v8013 = vpop.permute.xlu0 %8012
        %8014 = vrot.lane.b32.xlu0 %v6915, 42
        %v8015 = vpop.permute.xlu0 %8014
        %8016 = vrot.lane.b32.xlu0 %v6916, 42
        %v8017 = vpop.permute.xlu0 %8016
        %8018 = vrot.lane.b32.xlu0 %v6917, 42
        %v8019 = vpop.permute.xlu0 %8018
        %8020 = vrot.lane.b32.xlu0 %v6918, 42
        %v8021 = vpop.permute.xlu0 %8020
        %8022 = vrot.lane.b32.xlu0 %v6919, 42
        %v8023 = vpop.permute.xlu0 %8022
        %8024 = vrot.lane.b32.xlu0 %v6920, 42
        %v8025 = vpop.permute.xlu0 %8024
        %8026 = vrot.lane.b32.xlu0 %v6921, 42
        %v8027 = vpop.permute.xlu0 %8026
        %8028 = vrot.lane.b32.xlu0 %v6922, 42
        %v8029 = vpop.permute.xlu0 %8028
        %8030 = vrot.lane.b32.xlu0 %v6923, 42
        %v8031 = vpop.permute.xlu0 %8030
        %8032 = vrot.lane.b32.xlu0 %v6924, 42
        %v8033 = vpop.permute.xlu0 %8032
        %8034 = vrot.lane.b32.xlu0 %v6925, 42
        %v8035 = vpop.permute.xlu0 %8034
        %8036 = vrot.lane.b32.xlu0 %v6926, 42
        %v8037 = vpop.permute.xlu0 %8036
        %8038 = vrot.lane.b32.xlu0 %v6927, 42
        %v8039 = vpop.permute.xlu0 %8038
        %8040 = vrot.lane.b32.xlu0 %v6928, 42
        %v8041 = vpop.permute.xlu0 %8040
        %8042 = vrot.lane.b32.xlu0 %v6929, 42
        %v8043 = vpop.permute.xlu0 %8042
        %8044 = vrot.lane.b32.xlu0 %v6930, 42
        %v8045 = vpop.permute.xlu0 %8044
        %8046 = vrot.lane.b32.xlu0 %v6931, 42
        %v8047 = vpop.permute.xlu0 %8046
        %8048 = vrot.lane.b32.xlu0 %v6932, 42
        %v8049 = vpop.permute.xlu0 %8048
        %8050 = vrot.lane.b32.xlu0 %v6933, 42
        %v8051 = vpop.permute.xlu0 %8050
        %8052 = vrot.lane.b32.xlu0 %v6934, 42
        %v8053 = vpop.permute.xlu0 %8052
        %8054 = vrot.lane.b32.xlu0 %v6935, 42
        %v8055 = vpop.permute.xlu0 %8054
        %8056 = vrot.lane.b32.xlu0 %v6936, 42
        %v8057 = vpop.permute.xlu0 %8056
        %8058 = vrot.lane.b32.xlu0 %v6937, 42
        %v8059 = vpop.permute.xlu0 %8058
        %8060 = vrot.lane.b32.xlu0 %v6938, 42
        %v8061 = vpop.permute.xlu0 %8060
        %v8062 = vsel %vm1079, %v7359, %v7361
        %v8063 = vsel %vm1079, %v7361, %v7363
        %v8064 = vsel %vm1079, %v7363, %v7365
        %v8065 = vsel %vm1079, %v7367, %v7369
        %v8066 = vsel %vm1079, %v7369, %v7371
        %v8067 = vsel %vm1079, %v7371, %v7373
        %v8068 = vsel %vm1079, %v7375, %v7377
        %v8069 = vsel %vm1079, %v7377, %v7379
        %v8070 = vsel %vm1079, %v7379, %v7381
        %v8071 = vsel %vm1079, %v7383, %v7385
        %v8072 = vsel %vm1079, %v7385, %v7387
        %v8073 = vsel %vm1079, %v7387, %v7389
        %v8074 = vsel %vm1079, %v7391, %v7393
        %v8075 = vsel %vm1079, %v7393, %v7395
        %v8076 = vsel %vm1079, %v7395, %v7397
        %v8077 = vsel %vm1079, %v7399, %v7401
        %v8078 = vsel %vm1079, %v7401, %v7403
        %v8079 = vsel %vm1079, %v7403, %v7405
        %v8080 = vsel %vm1079, %v7407, %v7409
        %v8081 = vsel %vm1079, %v7409, %v7411
        %v8082 = vsel %vm1079, %v7411, %v7413
        %v8083 = vsel %vm1079, %v7415, %v7417
        %v8084 = vsel %vm1079, %v7417, %v7419
        %v8085 = vsel %vm1079, %v7419, %v7421
        %v8086 = vsel %vm1079, %v7423, %v7425
        %v8087 = vsel %vm1079, %v7425, %v7427
        %v8088 = vsel %vm1079, %v7427, %v7429
        %v8089 = vsel %vm1079, %v7431, %v7433
        %v8090 = vsel %vm1079, %v7433, %v7435
        %v8091 = vsel %vm1079, %v7435, %v7437
        %v8092 = vsel %vm1079, %v7439, %v7441
        %v8093 = vsel %vm1079, %v7441, %v7443
        %v8094 = vsel %vm1079, %v7443, %v7445
        %v8095 = vsel %vm1079, %v7447, %v7449
        %v8096 = vsel %vm1079, %v7449, %v7451
        %v8097 = vsel %vm1079, %v7451, %v7453
        %v8098 = vsel %vm1079, %v7455, %v7457
        %v8099 = vsel %vm1079, %v7457, %v7459
        %v8100 = vsel %vm1079, %v7459, %v7461
        %v8101 = vsel %vm1079, %v7463, %v7465
        %v8102 = vsel %vm1079, %v7465, %v7467
        %v8103 = vsel %vm1079, %v7467, %v7469
        %v8104 = vsel %vm1079, %v7471, %v7473
        %v8105 = vsel %vm1079, %v7473, %v7475
        %v8106 = vsel %vm1079, %v7475, %v7477
        %v8107 = vsel %vm1079, %v7479, %v7481
        %v8108 = vsel %vm1079, %v7481, %v7483
        %v8109 = vsel %vm1079, %v7483, %v7485
        %v8110 = vsel %vm1079, %v7487, %v7489
        %v8111 = vsel %vm1079, %v7489, %v7491
        %v8112 = vsel %vm1079, %v7491, %v7493
        %v8113 = vsel %vm1079, %v7495, %v7497
        %v8114 = vsel %vm1079, %v7497, %v7499
        %v8115 = vsel %vm1079, %v7499, %v7501
        %v8116 = vsel %vm1079, %v7503, %v7505
        %v8117 = vsel %vm1079, %v7505, %v7507
        %v8118 = vsel %vm1079, %v7507, %v7509
        %v8119 = vsel %vm1079, %v7511, %v7513
        %v8120 = vsel %vm1079, %v7513, %v7515
        %v8121 = vsel %vm1079, %v7515, %v7517
        %v8122 = vsel %vm1079, %v7519, %v7521
        %v8123 = vsel %vm1079, %v7521, %v7523
        %v8124 = vsel %vm1079, %v7523, %v7525
        %v8125 = vsel %vm1079, %v7527, %v7529
        %v8126 = vsel %vm1079, %v7529, %v7531
        %v8127 = vsel %vm1079, %v7531, %v7533
        %v8128 = vsel %vm1079, %v7535, %v7537
        %v8129 = vsel %vm1079, %v7537, %v7539
        %v8130 = vsel %vm1079, %v7539, %v7541
        %v8131 = vsel %vm1079, %v7543, %v7545
        %v8132 = vsel %vm1079, %v7545, %v7547
        %v8133 = vsel %vm1079, %v7547, %v7549
        %v8134 = vsel %vm1079, %v7551, %v7553
        %v8135 = vsel %vm1079, %v7553, %v7555
        %v8136 = vsel %vm1079, %v7555, %v7557
        %v8137 = vsel %vm1079, %v7559, %v7561
        %v8138 = vsel %vm1079, %v7561, %v7563
        %v8139 = vsel %vm1079, %v7563, %v7565
        %v8140 = vsel %vm1079, %v7567, %v7569
        %v8141 = vsel %vm1079, %v7569, %v7571
        %v8142 = vsel %vm1079, %v7571, %v7573
        %v8143 = vsel %vm1079, %v7575, %v7577
        %v8144 = vsel %vm1079, %v7577, %v7579
        %v8145 = vsel %vm1079, %v7579, %v7581
        %v8146 = vsel %vm1079, %v7583, %v7585
        %v8147 = vsel %vm1079, %v7585, %v7587
        %v8148 = vsel %vm1079, %v7587, %v7589
        %v8149 = vsel %vm1079, %v7591, %v7593
        %v8150 = vsel %vm1079, %v7593, %v7595
        %v8151 = vsel %vm1079, %v7595, %v7597
        %v8152 = vsel %vm1079, %v7599, %v7601
        %v8153 = vsel %vm1079, %v7601, %v7603
        %v8154 = vsel %vm1079, %v7603, %v7605
        %v8155 = vsel %vm1079, %v7607, %v7609
        %v8156 = vsel %vm1079, %v7609, %v7611
        %v8157 = vsel %vm1079, %v7611, %v7613
        %v8158 = vsel %vm1079, %v7615, %v7617
        %v8159 = vsel %vm1079, %v7617, %v7619
        %v8160 = vsel %vm1079, %v7619, %v7621
        %v8161 = vsel %vm1079, %v7623, %v7625
        %v8162 = vsel %vm1079, %v7625, %v7627
        %v8163 = vsel %vm1079, %v7627, %v7629
        %v8164 = vsel %vm1079, %v7631, %v7633
        %v8165 = vsel %vm1079, %v7633, %v7635
        %v8166 = vsel %vm1079, %v7635, %v7637
        %v8167 = vsel %vm1079, %v7639, %v7641
        %v8168 = vsel %vm1079, %v7641, %v7643
        %v8169 = vsel %vm1079, %v7643, %v7645
        %v8170 = vsel %vm1079, %v7647, %v7649
        %v8171 = vsel %vm1079, %v7649, %v7651
        %v8172 = vsel %vm1079, %v7651, %v7653
        %v8173 = vsel %vm1079, %v7655, %v7657
        %v8174 = vsel %vm1079, %v7657, %v7659
        %v8175 = vsel %vm1079, %v7659, %v7661
        %v8176 = vsel %vm1079, %v7663, %v7665
        %v8177 = vsel %vm1079, %v7665, %v7667
        %v8178 = vsel %vm1079, %v7667, %v7669
        %v8179 = vsel %vm1079, %v7671, %v7673
        %v8180 = vsel %vm1079, %v7673, %v7675
        %v8181 = vsel %vm1079, %v7675, %v7677
        %v8182 = vsel %vm1079, %v7679, %v7681
        %v8183 = vsel %vm1079, %v7681, %v7683
        %v8184 = vsel %vm1079, %v7683, %v7685
        %v8185 = vsel %vm1079, %v7687, %v7689
        %v8186 = vsel %vm1079, %v7689, %v7691
        %v8187 = vsel %vm1079, %v7691, %v7693
        %v8188 = vsel %vm1079, %v7695, %v7697
        %v8189 = vsel %vm1079, %v7697, %v7699
        %v8190 = vsel %vm1079, %v7699, %v7701
        %v8191 = vsel %vm1079, %v7703, %v7705
        %v8192 = vsel %vm1079, %v7705, %v7707
        %v8193 = vsel %vm1079, %v7707, %v7709
        %v8194 = vsel %vm1079, %v7711, %v7713
        %v8195 = vsel %vm1079, %v7713, %v7715
        %v8196 = vsel %vm1079, %v7715, %v7717
        %v8197 = vsel %vm1079, %v7719, %v7721
        %v8198 = vsel %vm1079, %v7721, %v7723
        %v8199 = vsel %vm1079, %v7723, %v7725
        %v8200 = vsel %vm1079, %v7727, %v7729
        %v8201 = vsel %vm1079, %v7729, %v7731
        %v8202 = vsel %vm1079, %v7731, %v7733
        %v8203 = vsel %vm1079, %v7735, %v7737
        %v8204 = vsel %vm1079, %v7737, %v7739
        %v8205 = vsel %vm1079, %v7739, %v7741
        %v8206 = vsel %vm1079, %v7743, %v7745
        %v8207 = vsel %vm1079, %v7745, %v7747
        %v8208 = vsel %vm1079, %v7747, %v7749
        %v8209 = vsel %vm1079, %v7751, %v7753
        %v8210 = vsel %vm1079, %v7753, %v7755
        %v8211 = vsel %vm1079, %v7755, %v7757
        %v8212 = vsel %vm1079, %v7759, %v7761
        %v8213 = vsel %vm1079, %v7761, %v7763
        %v8214 = vsel %vm1079, %v7763, %v7765
        %v8215 = vsel %vm1079, %v7767, %v7769
        %v8216 = vsel %vm1079, %v7769, %v7771
        %v8217 = vsel %vm1079, %v7771, %v7773
        %v8218 = vsel %vm1079, %v7775, %v7777
        %v8219 = vsel %vm1079, %v7777, %v7779
        %v8220 = vsel %vm1079, %v7779, %v7781
        %v8221 = vsel %vm1079, %v7783, %v7785
        %v8222 = vsel %vm1079, %v7785, %v7787
        %v8223 = vsel %vm1079, %v7787, %v7789
        %v8224 = vsel %vm1079, %v7791, %v7793
        %v8225 = vsel %vm1079, %v7793, %v7795
        %v8226 = vsel %vm1079, %v7795, %v7797
        %v8227 = vsel %vm1079, %v7799, %v7801
        %v8228 = vsel %vm1079, %v7801, %v7803
        %v8229 = vsel %vm1079, %v7803, %v7805
        %v8230 = vsel %vm1079, %v7807, %v7809
        %v8231 = vsel %vm1079, %v7809, %v7811
        %v8232 = vsel %vm1079, %v7811, %v7813
        %v8233 = vsel %vm1079, %v7815, %v7817
        %v8234 = vsel %vm1079, %v7817, %v7819
        %v8235 = vsel %vm1079, %v7819, %v7821
        %v8236 = vsel %vm1079, %v7823, %v7825
        %v8237 = vsel %vm1079, %v7825, %v7827
        %v8238 = vsel %vm1079, %v7827, %v7829
        %v8239 = vsel %vm1079, %v7831, %v7833
        %v8240 = vsel %vm1079, %v7833, %v7835
        %v8241 = vsel %vm1079, %v7835, %v7837
        %v8242 = vsel %vm1079, %v7839, %v7841
        %v8243 = vsel %vm1079, %v7841, %v7843
        %v8244 = vsel %vm1079, %v7843, %v7845
        %v8245 = vsel %vm1079, %v7847, %v7849
        %v8246 = vsel %vm1079, %v7849, %v7851
        %v8247 = vsel %vm1079, %v7851, %v7853
        %v8248 = vsel %vm1079, %v7855, %v7857
        %v8249 = vsel %vm1079, %v7857, %v7859
        %v8250 = vsel %vm1079, %v7859, %v7861
        %v8251 = vsel %vm1079, %v7863, %v7865
        %v8252 = vsel %vm1079, %v7865, %v7867
        %v8253 = vsel %vm1079, %v7867, %v7869
        %v8254 = vsel %vm1079, %v7871, %v7873
        %v8255 = vsel %vm1079, %v7873, %v7875
        %v8256 = vsel %vm1079, %v7875, %v7877
        %v8257 = vsel %vm1079, %v7879, %v7881
        %v8258 = vsel %vm1079, %v7881, %v7883
        %v8259 = vsel %vm1079, %v7883, %v7885
        %v8260 = vsel %vm1079, %v7887, %v7889
        %v8261 = vsel %vm1079, %v7889, %v7891
        %v8262 = vsel %vm1079, %v7891, %v7893
        %v8263 = vsel %vm1079, %v7895, %v7897
        %v8264 = vsel %vm1079, %v7897, %v7899
        %v8265 = vsel %vm1079, %v7899, %v7901
        %v8266 = vsel %vm1079, %v7903, %v7905
        %v8267 = vsel %vm1079, %v7905, %v7907
        %v8268 = vsel %vm1079, %v7907, %v7909
        %v8269 = vsel %vm1079, %v7911, %v7913
        %v8270 = vsel %vm1079, %v7913, %v7915
        %v8271 = vsel %vm1079, %v7915, %v7917
        %v8272 = vsel %vm1079, %v7919, %v7921
        %v8273 = vsel %vm1079, %v7921, %v7923
        %v8274 = vsel %vm1079, %v7923, %v7925
        %v8275 = vsel %vm1079, %v7927, %v7929
        %v8276 = vsel %vm1079, %v7929, %v7931
        %v8277 = vsel %vm1079, %v7931, %v7933
        %v8278 = vsel %vm1079, %v7935, %v7937
        %v8279 = vsel %vm1079, %v7937, %v7939
        %v8280 = vsel %vm1079, %v7939, %v7941
        %v8281 = vsel %vm1079, %v7943, %v7945
        %v8282 = vsel %vm1079, %v7945, %v7947
        %v8283 = vsel %vm1079, %v7947, %v7949
        %v8284 = vsel %vm1079, %v7951, %v7953
        %v8285 = vsel %vm1079, %v7953, %v7955
        %v8286 = vsel %vm1079, %v7955, %v7957
        %v8287 = vsel %vm1079, %v7959, %v7961
        %v8288 = vsel %vm1079, %v7961, %v7963
        %v8289 = vsel %vm1079, %v7963, %v7965
        %v8290 = vsel %vm1079, %v7967, %v7969
        %v8291 = vsel %vm1079, %v7969, %v7971
        %v8292 = vsel %vm1079, %v7971, %v7973
        %v8293 = vsel %vm1079, %v7975, %v7977
        %v8294 = vsel %vm1079, %v7977, %v7979
        %v8295 = vsel %vm1079, %v7979, %v7981
        %v8296 = vsel %vm1079, %v7983, %v7985
        %v8297 = vsel %vm1079, %v7985, %v7987
        %v8298 = vsel %vm1079, %v7987, %v7989
        %v8299 = vsel %vm1079, %v7991, %v7993
        %v8300 = vsel %vm1079, %v7993, %v7995
        %v8301 = vsel %vm1079, %v7995, %v7997
        %v8302 = vsel %vm1079, %v7999, %v8001
        %v8303 = vsel %vm1079, %v8001, %v8003
        %v8304 = vsel %vm1079, %v8003, %v8005
        %v8305 = vsel %vm1079, %v8007, %v8009
        %v8306 = vsel %vm1079, %v8009, %v8011
        %v8307 = vsel %vm1079, %v8011, %v8013
        %v8308 = vsel %vm1079, %v8015, %v8017
        %v8309 = vsel %vm1079, %v8017, %v8019
        %v8310 = vsel %vm1079, %v8019, %v8021
        %v8311 = vsel %vm1079, %v8023, %v8025
        %v8312 = vsel %vm1079, %v8025, %v8027
        %v8313 = vsel %vm1079, %v8027, %v8029
        %v8314 = vsel %vm1079, %v8031, %v8033
        %v8315 = vsel %vm1079, %v8033, %v8035
        %v8316 = vsel %vm1079, %v8035, %v8037
        %v8317 = vsel %vm1079, %v8039, %v8041
        %v8318 = vsel %vm1079, %v8041, %v8043
        %v8319 = vsel %vm1079, %v8043, %v8045
        %v8320 = vsel %vm1079, %v8047, %v8049
        %v8321 = vsel %vm1079, %v8049, %v8051
        %v8322 = vsel %vm1079, %v8051, %v8053
        %v8323 = vsel %vm1079, %v8055, %v8057
        %v8324 = vsel %vm1079, %v8057, %v8059
        %v8325 = vsel %vm1079, %v8059, %v8061
        %vm8587 = vcmask 982016
        %v8589 = vsel %vm8587, %v6995, 0
        %v8592 = vsel %vm1168, %v8323, 0
        %v8595 = vsel %vm1168, %v8324, 0
        %v8598 = vsel %vm1168, %v8325, 0
        %8600 = vmatprep.subr.bf16.mxu0 %v8084
        %8601 = vmatpush1.bf16.msra.mxu0 %v8083
        %8602 = vmatprep.subr.bf16.mxu0 %v8081
        %8603 = vmatpush1.bf16.msra.mxu0 %v8080
        %8604 = vmatprep.subr.bf16.mxu0 %v8078
        %8605 = vmatpush1.bf16.msra.mxu0 %v8077
        %8606 = vmatprep.subr.bf16.mxu0 %v8075
        %8607 = vmatpush1.bf16.msra.mxu0 %v8074
        %8608 = vmatprep.subr.bf16.mxu0 %v8072
        %8609 = vmatpush1.bf16.msra.mxu0 %v8071
        %8610 = vmatprep.subr.bf16.mxu0 %v8069
        %8611 = vmatpush1.bf16.msra.mxu0 %v8068
        %8612 = vmatprep.subr.bf16.mxu0 %v8066
        %8613 = vmatpush1.bf16.msra.mxu0 %v8065
        %8614 = vmatprep.subr.bf16.mxu0 %v8063
        %8615 = vmatpush1.bf16.msra.mxu0 %v8062
        %8616 = vmatprep.subr.bf16.mxu0 %v8108
        %8617 = vmatpush2.bf16.msra.mxu0 %v8107
        %8618 = vmatprep.subr.bf16.mxu0 %v8105
        %8619 = vmatpush2.bf16.msra.mxu0 %v8104
        %8620 = vmatprep.subr.bf16.mxu0 %v8102
        %8621 = vmatpush2.bf16.msra.mxu0 %v8101
        %8622 = vmatprep.subr.bf16.mxu0 %v8099
        %8623 = vmatpush2.bf16.msra.mxu0 %v8098
        %8624 = vmatprep.subr.bf16.mxu0 %v8096
        %8625 = vmatpush2.bf16.msra.mxu0 %v8095
        %8626 = vmatprep.subr.bf16.mxu0 %v8093
        %8627 = vmatpush2.bf16.msra.mxu0 %v8092
        %8628 = vmatprep.subr.bf16.mxu0 %v8090
        %8629 = vmatpush2.bf16.msra.mxu0 %v8089
        %8630 = vmatprep.subr.bf16.mxu0 %v8087
        %8631 = vmatpush2.bf16.msra.mxu0 %v8086
        %8632 = vmatprep.mubr.bf16.mxu0 %v6986
        %8633 = vmatmul.mubr.bf16.gmra.mxu0 %v6985
        %v8634 = vpop.f32.mrf.mxu0
        %v8635 = vadd.f32 %v6944, %v8634
        %v8636 = vpop.f32.mrf.mxu0
        %v8637 = vadd.f32 %v6944, %v8636
        %v8638 = vpop.f32.mrf.mxu0
        %v8639 = vadd.f32 %v6949, %v8638
        %v8640 = vpop.f32.mrf.mxu0
        %v8641 = vadd.f32 %v6949, %v8640
        %8642 = vdwg.mxu0
        %8643 = vmatprep.subr.bf16.mxu0 %v8132
        %8644 = vmatpush1.bf16.msra.mxu0 %v8131
        %8645 = vmatprep.subr.bf16.mxu0 %v8129
        %8646 = vmatpush1.bf16.msra.mxu0 %v8128
        %8647 = vmatprep.subr.bf16.mxu0 %v8126
        %8648 = vmatpush1.bf16.msra.mxu0 %v8125
        %8649 = vmatprep.subr.bf16.mxu0 %v8123
        %8650 = vmatpush1.bf16.msra.mxu0 %v8122
        %8651 = vmatprep.subr.bf16.mxu0 %v8120
        %8652 = vmatpush1.bf16.msra.mxu0 %v8119
        %8653 = vmatprep.subr.bf16.mxu0 %v8117
        %8654 = vmatpush1.bf16.msra.mxu0 %v8116
        %8655 = vmatprep.subr.bf16.mxu0 %v8114
        %8656 = vmatpush1.bf16.msra.mxu0 %v8113
        %8657 = vmatprep.subr.bf16.mxu0 %v8111
        %8658 = vmatpush1.bf16.msra.mxu0 %v8110
        %8659 = vmatprep.subr.bf16.mxu0 %v8156
        %8660 = vmatpush2.bf16.msra.mxu0 %v8155
        %8661 = vmatprep.subr.bf16.mxu0 %v8153
        %8662 = vmatpush2.bf16.msra.mxu0 %v8152
        %8663 = vmatprep.subr.bf16.mxu0 %v8150
        %8664 = vmatpush2.bf16.msra.mxu0 %v8149
        %8665 = vmatprep.subr.bf16.mxu0 %v8147
        %8666 = vmatpush2.bf16.msra.mxu0 %v8146
        %8667 = vmatprep.subr.bf16.mxu0 %v8144
        %8668 = vmatpush2.bf16.msra.mxu0 %v8143
        %8669 = vmatprep.subr.bf16.mxu0 %v8141
        %8670 = vmatpush2.bf16.msra.mxu0 %v8140
        %8671 = vmatprep.subr.bf16.mxu0 %v8138
        %8672 = vmatpush2.bf16.msra.mxu0 %v8137
        %8673 = vmatprep.subr.bf16.mxu0 %v8135
        %8674 = vmatpush2.bf16.msra.mxu0 %v8134
        %8675 = vmatprep.mubr.bf16.mxu0 %v6988
        %8676 = vmatmul.mubr.bf16.gmra.mxu0 %v6987
        %v8677 = vpop.f32.mrf.mxu0
        %v8678 = vadd.f32 %v8635, %v8677
        %v8679 = vpop.f32.mrf.mxu0
        %v8680 = vadd.f32 %v8637, %v8679
        %v8681 = vpop.f32.mrf.mxu0
        %v8682 = vadd.f32 %v8639, %v8681
        %v8683 = vpop.f32.mrf.mxu0
        %v8684 = vadd.f32 %v8641, %v8683
        %8685 = vdwg.mxu0
        %8686 = vmatprep.subr.bf16.mxu0 %v8180
        %8687 = vmatpush1.bf16.msra.mxu0 %v8179
        %8688 = vmatprep.subr.bf16.mxu0 %v8177
        %8689 = vmatpush1.bf16.msra.mxu0 %v8176
        %8690 = vmatprep.subr.bf16.mxu0 %v8174
        %8691 = vmatpush1.bf16.msra.mxu0 %v8173
        %8692 = vmatprep.subr.bf16.mxu0 %v8171
        %8693 = vmatpush1.bf16.msra.mxu0 %v8170
        %8694 = vmatprep.subr.bf16.mxu0 %v8168
        %8695 = vmatpush1.bf16.msra.mxu0 %v8167
        %8696 = vmatprep.subr.bf16.mxu0 %v8165
        %8697 = vmatpush1.bf16.msra.mxu0 %v8164
        %8698 = vmatprep.subr.bf16.mxu0 %v8162
        %8699 = vmatpush1.bf16.msra.mxu0 %v8161
        %8700 = vmatprep.subr.bf16.mxu0 %v8159
        %8701 = vmatpush1.bf16.msra.mxu0 %v8158
        %8702 = vmatprep.subr.bf16.mxu0 %v8204
        %8703 = vmatpush2.bf16.msra.mxu0 %v8203
        %8704 = vmatprep.subr.bf16.mxu0 %v8201
        %8705 = vmatpush2.bf16.msra.mxu0 %v8200
        %8706 = vmatprep.subr.bf16.mxu0 %v8198
        %8707 = vmatpush2.bf16.msra.mxu0 %v8197
        %8708 = vmatprep.subr.bf16.mxu0 %v8195
        %8709 = vmatpush2.bf16.msra.mxu0 %v8194
        %8710 = vmatprep.subr.bf16.mxu0 %v8192
        %8711 = vmatpush2.bf16.msra.mxu0 %v8191
        %8712 = vmatprep.subr.bf16.mxu0 %v8189
        %8713 = vmatpush2.bf16.msra.mxu0 %v8188
        %8714 = vmatprep.subr.bf16.mxu0 %v8186
        %8715 = vmatpush2.bf16.msra.mxu0 %v8185
        %8716 = vmatprep.subr.bf16.mxu0 %v8183
        %8717 = vmatpush2.bf16.msra.mxu0 %v8182
        %8718 = vmatprep.mubr.bf16.mxu0 %v6990
        %8719 = vmatmul.mubr.bf16.gmra.mxu0 %v6989
        %v8720 = vpop.f32.mrf.mxu0
        %v8721 = vadd.f32 %v8678, %v8720
        %v8722 = vpop.f32.mrf.mxu0
        %v8723 = vadd.f32 %v8680, %v8722
        %v8724 = vpop.f32.mrf.mxu0
        %v8725 = vadd.f32 %v8682, %v8724
        %v8726 = vpop.f32.mrf.mxu0
        %v8727 = vadd.f32 %v8684, %v8726
        %8728 = vdwg.mxu0
        %8729 = vmatprep.subr.bf16.mxu0 %v8228
        %8730 = vmatpush1.bf16.msra.mxu0 %v8227
        %8731 = vmatprep.subr.bf16.mxu0 %v8225
        %8732 = vmatpush1.bf16.msra.mxu0 %v8224
        %8733 = vmatprep.subr.bf16.mxu0 %v8222
        %8734 = vmatpush1.bf16.msra.mxu0 %v8221
        %8735 = vmatprep.subr.bf16.mxu0 %v8219
        %8736 = vmatpush1.bf16.msra.mxu0 %v8218
        %8737 = vmatprep.subr.bf16.mxu0 %v8216
        %8738 = vmatpush1.bf16.msra.mxu0 %v8215
        %8739 = vmatprep.subr.bf16.mxu0 %v8213
        %8740 = vmatpush1.bf16.msra.mxu0 %v8212
        %8741 = vmatprep.subr.bf16.mxu0 %v8210
        %8742 = vmatpush1.bf16.msra.mxu0 %v8209
        %8743 = vmatprep.subr.bf16.mxu0 %v8207
        %8744 = vmatpush1.bf16.msra.mxu0 %v8206
        %8745 = vmatprep.subr.bf16.mxu0 %v8252
        %8746 = vmatpush2.bf16.msra.mxu0 %v8251
        %8747 = vmatprep.subr.bf16.mxu0 %v8249
        %8748 = vmatpush2.bf16.msra.mxu0 %v8248
        %8749 = vmatprep.subr.bf16.mxu0 %v8246
        %8750 = vmatpush2.bf16.msra.mxu0 %v8245
        %8751 = vmatprep.subr.bf16.mxu0 %v8243
        %8752 = vmatpush2.bf16.msra.mxu0 %v8242
        %8753 = vmatprep.subr.bf16.mxu0 %v8240
        %8754 = vmatpush2.bf16.msra.mxu0 %v8239
        %8755 = vmatprep.subr.bf16.mxu0 %v8237
        %8756 = vmatpush2.bf16.msra.mxu0 %v8236
        %8757 = vmatprep.subr.bf16.mxu0 %v8234
        %8758 = vmatpush2.bf16.msra.mxu0 %v8233
        %8759 = vmatprep.subr.bf16.mxu0 %v8231
        %8760 = vmatpush2.bf16.msra.mxu0 %v8230
        %8761 = vmatprep.mubr.bf16.mxu0 %v6992
        %8762 = vmatmul.mubr.bf16.gmra.mxu0 %v6991
        %v8763 = vpop.f32.mrf.mxu0
        %v8764 = vadd.f32 %v8721, %v8763
        %v8765 = vpop.f32.mrf.mxu0
        %v8766 = vadd.f32 %v8723, %v8765
        %v8767 = vpop.f32.mrf.mxu0
        %v8768 = vadd.f32 %v8725, %v8767
        %v8769 = vpop.f32.mrf.mxu0
        %v8770 = vadd.f32 %v8727, %v8769
        %8771 = vdwg.mxu0
        %8772 = vmatprep.subr.bf16.mxu0 %v8276
        %8773 = vmatpush1.bf16.msra.mxu0 %v8275
        %8774 = vmatprep.subr.bf16.mxu0 %v8273
        %8775 = vmatpush1.bf16.msra.mxu0 %v8272
        %8776 = vmatprep.subr.bf16.mxu0 %v8270
        %8777 = vmatpush1.bf16.msra.mxu0 %v8269
        %8778 = vmatprep.subr.bf16.mxu0 %v8267
        %8779 = vmatpush1.bf16.msra.mxu0 %v8266
        %8780 = vmatprep.subr.bf16.mxu0 %v8264
        %8781 = vmatpush1.bf16.msra.mxu0 %v8263
        %8782 = vmatprep.subr.bf16.mxu0 %v8261
        %8783 = vmatpush1.bf16.msra.mxu0 %v8260
        %8784 = vmatprep.subr.bf16.mxu0 %v8258
        %8785 = vmatpush1.bf16.msra.mxu0 %v8257
        %8786 = vmatprep.subr.bf16.mxu0 %v8255
        %8787 = vmatpush1.bf16.msra.mxu0 %v8254
        %8788 = vmatprep.subr.bf16.mxu0 %v8300
        %8789 = vmatpush2.bf16.msra.mxu0 %v8299
        %8790 = vmatprep.subr.bf16.mxu0 %v8297
        %8791 = vmatpush2.bf16.msra.mxu0 %v8296
        %8792 = vmatprep.subr.bf16.mxu0 %v8294
        %8793 = vmatpush2.bf16.msra.mxu0 %v8293
        %8794 = vmatprep.subr.bf16.mxu0 %v8291
        %8795 = vmatpush2.bf16.msra.mxu0 %v8290
        %8796 = vmatprep.subr.bf16.mxu0 %v8288
        %8797 = vmatpush2.bf16.msra.mxu0 %v8287
        %8798 = vmatprep.subr.bf16.mxu0 %v8285
        %8799 = vmatpush2.bf16.msra.mxu0 %v8284
        %8800 = vmatprep.subr.bf16.mxu0 %v8282
        %8801 = vmatpush2.bf16.msra.mxu0 %v8281
        %8802 = vmatprep.subr.bf16.mxu0 %v8279
        %8803 = vmatpush2.bf16.msra.mxu0 %v8278
        %8804 = vmatprep.mubr.bf16.mxu0 %v6994
        %8805 = vmatmul.mubr.bf16.gmra.mxu0 %v6993
        %v8806 = vpop.f32.mrf.mxu0
        %v8807 = vadd.f32 %v8764, %v8806
        %v8808 = vpop.f32.mrf.mxu0
        %v8809 = vadd.f32 %v8766, %v8808
        %v8810 = vpop.f32.mrf.mxu0
        %v8811 = vadd.f32 %v8768, %v8810
        %v8812 = vpop.f32.mrf.mxu0
        %v8813 = vadd.f32 %v8770, %v8812
        %8814 = vdwg.mxu0
        %8815 = vmatprep.subr.bf16.mxu0 %v8595
        %8816 = vmatpush1.bf16.msra.mxu0 %v8592
        %8817 = vmatprep.subr.bf16.mxu0 %v8321
        %8818 = vmatpush1.bf16.msra.mxu0 %v8320
        %8819 = vmatprep.subr.bf16.mxu0 %v8318
        %8820 = vmatpush1.bf16.msra.mxu0 %v8317
        %8821 = vmatprep.subr.bf16.mxu0 %v8315
        %8822 = vmatpush1.bf16.msra.mxu0 %v8314
        %8823 = vmatprep.subr.bf16.mxu0 %v8312
        %8824 = vmatpush1.bf16.msra.mxu0 %v8311
        %8825 = vmatprep.subr.bf16.mxu0 %v8309
        %8826 = vmatpush1.bf16.msra.mxu0 %v8308
        %8827 = vmatprep.subr.bf16.mxu0 %v8306
        %8828 = vmatpush1.bf16.msra.mxu0 %v8305
        %8829 = vmatprep.subr.bf16.mxu0 %v8303
        %8830 = vmatpush1.bf16.msra.mxu0 %v8302
        %8831 = vmatprep.subr.bf16.mxu0 0
        %8832 = vmatpush2.bf16.msra.mxu0 0
        %8833 = vmatprep.subr.bf16.mxu0 0
        %8834 = vmatpush2.bf16.msra.mxu0 0
        %8835 = vmatprep.subr.bf16.mxu0 0
        %8836 = vmatpush2.bf16.msra.mxu0 0
        %8837 = vmatprep.subr.bf16.mxu0 0
        %8838 = vmatpush2.bf16.msra.mxu0 0
        %8839 = vmatprep.subr.bf16.mxu0 0
        %8840 = vmatpush2.bf16.msra.mxu0 0
        %8841 = vmatprep.subr.bf16.mxu0 0
        %8842 = vmatpush2.bf16.msra.mxu0 0
        %8843 = vmatprep.subr.bf16.mxu0 0
        %8844 = vmatpush2.bf16.msra.mxu0 0
        %8845 = vmatprep.subr.bf16.mxu0 0
        %8846 = vmatpush2.bf16.msra.mxu0 0
        %8847 = vmatprep.mubr.bf16.mxu0 0
        %8848 = vmatmul.mubr.bf16.gmra.mxu0 %v8589
        %v8849 = vpop.f32.mrf.mxu0
        %v8850 = vadd.f32 %v8807, %v8849
        %v8851 = vpop.f32.mrf.mxu0
        %v8852 = vadd.f32 %v8809, %v8851
        %v8853 = vpop.f32.mrf.mxu0
        %v8854 = vadd.f32 %v8811, %v8853
        %v8855 = vpop.f32.mrf.mxu0
        %v8856 = vadd.f32 %v8813, %v8855
        %8857 = vdwg.mxu0
        %8858 = vmatprep.subr.bf16.mxu0 0
        %8859 = vmatpush1.bf16.msra.mxu0 %v8085
        %8860 = vmatprep.subr.bf16.mxu0 0
        %8861 = vmatpush1.bf16.msra.mxu0 %v8082
        %8862 = vmatprep.subr.bf16.mxu0 0
        %8863 = vmatpush1.bf16.msra.mxu0 %v8079
        %8864 = vmatprep.subr.bf16.mxu0 0
        %8865 = vmatpush1.bf16.msra.mxu0 %v8076
        %8866 = vmatprep.subr.bf16.mxu0 0
        %8867 = vmatpush1.bf16.msra.mxu0 %v8073
        %8868 = vmatprep.subr.bf16.mxu0 0
        %8869 = vmatpush1.bf16.msra.mxu0 %v8070
        %8870 = vmatprep.subr.bf16.mxu0 0
        %8871 = vmatpush1.bf16.msra.mxu0 %v8067
        %8872 = vmatprep.subr.bf16.mxu0 0
        %8873 = vmatpush1.bf16.msra.mxu0 %v8064
        %8874 = vmatprep.subr.bf16.mxu0 0
        %8875 = vmatpush2.bf16.msra.mxu0 %v8109
        %8876 = vmatprep.subr.bf16.mxu0 0
        %8877 = vmatpush2.bf16.msra.mxu0 %v8106
        %8878 = vmatprep.subr.bf16.mxu0 0
        %8879 = vmatpush2.bf16.msra.mxu0 %v8103
        %8880 = vmatprep.subr.bf16.mxu0 0
        %8881 = vmatpush2.bf16.msra.mxu0 %v8100
        %8882 = vmatprep.subr.bf16.mxu0 0
        %8883 = vmatpush2.bf16.msra.mxu0 %v8097
        %8884 = vmatprep.subr.bf16.mxu0 0
        %8885 = vmatpush2.bf16.msra.mxu0 %v8094
        %8886 = vmatprep.subr.bf16.mxu0 0
        %8887 = vmatpush2.bf16.msra.mxu0 %v8091
        %8888 = vmatprep.subr.bf16.mxu0 0
        %8889 = vmatpush2.bf16.msra.mxu0 %v8088
        %8890 = vmatprep.mubr.bf16.mxu0 %v6986
        %8891 = vmatmul.mubr.bf16.gmra.mxu0 %v6985
        %v8892 = vpop.f32.mrf.mxu0
        %v8893 = vadd.f32 %v6944, %v8892
        %v8894 = vpop.f32.mrf.mxu0
        %v8895 = vpop.f32.mrf.mxu0
        %v8896 = vadd.f32 %v6949, %v8895
        %v8897 = vpop.f32.mrf.mxu0
        %8898 = vdwg.mxu0
        %8899 = vmatprep.subr.bf16.mxu0 0
        %8900 = vmatpush1.bf16.msra.mxu0 %v8133
        %8901 = vmatprep.subr.bf16.mxu0 0
        %8902 = vmatpush1.bf16.msra.mxu0 %v8130
        %8903 = vmatprep.subr.bf16.mxu0 0
        %8904 = vmatpush1.bf16.msra.mxu0 %v8127
        %8905 = vmatprep.subr.bf16.mxu0 0
        %8906 = vmatpush1.bf16.msra.mxu0 %v8124
        %8907 = vmatprep.subr.bf16.mxu0 0
        %8908 = vmatpush1.bf16.msra.mxu0 %v8121
        %8909 = vmatprep.subr.bf16.mxu0 0
        %8910 = vmatpush1.bf16.msra.mxu0 %v8118
        %8911 = vmatprep.subr.bf16.mxu0 0
        %8912 = vmatpush1.bf16.msra.mxu0 %v8115
        %8913 = vmatprep.subr.bf16.mxu0 0
        %8914 = vmatpush1.bf16.msra.mxu0 %v8112
        %8915 = vmatprep.subr.bf16.mxu0 0
        %8916 = vmatpush2.bf16.msra.mxu0 %v8157
        %8917 = vmatprep.subr.bf16.mxu0 0
        %8918 = vmatpush2.bf16.msra.mxu0 %v8154
        %8919 = vmatprep.subr.bf16.mxu0 0
        %8920 = vmatpush2.bf16.msra.mxu0 %v8151
        %8921 = vmatprep.subr.bf16.mxu0 0
        %8922 = vmatpush2.bf16.msra.mxu0 %v8148
        %8923 = vmatprep.subr.bf16.mxu0 0
        %8924 = vmatpush2.bf16.msra.mxu0 %v8145
        %8925 = vmatprep.subr.bf16.mxu0 0
        %8926 = vmatpush2.bf16.msra.mxu0 %v8142
        %8927 = vmatprep.subr.bf16.mxu0 0
        %8928 = vmatpush2.bf16.msra.mxu0 %v8139
        %8929 = vmatprep.subr.bf16.mxu0 0
        %8930 = vmatpush2.bf16.msra.mxu0 %v8136
        %8931 = vmatprep.mubr.bf16.mxu0 %v6988
        %8932 = vmatmul.mubr.bf16.gmra.mxu0 %v6987
        %v8933 = vpop.f32.mrf.mxu0
        %v8934 = vadd.f32 %v8893, %v8933
        %v8935 = vpop.f32.mrf.mxu0
        %v8936 = vpop.f32.mrf.mxu0
        %v8937 = vadd.f32 %v8896, %v8936
        %v8938 = vpop.f32.mrf.mxu0
        %8939 = vdwg.mxu0
        %8940 = vmatprep.subr.bf16.mxu0 0
        %8941 = vmatpush1.bf16.msra.mxu0 %v8181
        %8942 = vmatprep.subr.bf16.mxu0 0
        %8943 = vmatpush1.bf16.msra.mxu0 %v8178
        %8944 = vmatprep.subr.bf16.mxu0 0
        %8945 = vmatpush1.bf16.msra.mxu0 %v8175
        %8946 = vmatprep.subr.bf16.mxu0 0
        %8947 = vmatpush1.bf16.msra.mxu0 %v8172
        %8948 = vmatprep.subr.bf16.mxu0 0
        %8949 = vmatpush1.bf16.msra.mxu0 %v8169
        %8950 = vmatprep.subr.bf16.mxu0 0
        %8951 = vmatpush1.bf16.msra.mxu0 %v8166
        %8952 = vmatprep.subr.bf16.mxu0 0
        %8953 = vmatpush1.bf16.msra.mxu0 %v8163
        %8954 = vmatprep.subr.bf16.mxu0 0
        %8955 = vmatpush1.bf16.msra.mxu0 %v8160
        %8956 = vmatprep.subr.bf16.mxu0 0
        %8957 = vmatpush2.bf16.msra.mxu0 %v8205
        %8958 = vmatprep.subr.bf16.mxu0 0
        %8959 = vmatpush2.bf16.msra.mxu0 %v8202
        %8960 = vmatprep.subr.bf16.mxu0 0
        %8961 = vmatpush2.bf16.msra.mxu0 %v8199
        %8962 = vmatprep.subr.bf16.mxu0 0
        %8963 = vmatpush2.bf16.msra.mxu0 %v8196
        %8964 = vmatprep.subr.bf16.mxu0 0
        %8965 = vmatpush2.bf16.msra.mxu0 %v8193
        %8966 = vmatprep.subr.bf16.mxu0 0
        %8967 = vmatpush2.bf16.msra.mxu0 %v8190
        %8968 = vmatprep.subr.bf16.mxu0 0
        %8969 = vmatpush2.bf16.msra.mxu0 %v8187
        %8970 = vmatprep.subr.bf16.mxu0 0
        %8971 = vmatpush2.bf16.msra.mxu0 %v8184
        %8972 = vmatprep.mubr.bf16.mxu0 %v6990
        %8973 = vmatmul.mubr.bf16.gmra.mxu0 %v6989
        %v8974 = vpop.f32.mrf.mxu0
        %v8975 = vadd.f32 %v8934, %v8974
        %v8976 = vpop.f32.mrf.mxu0
        %v8977 = vpop.f32.mrf.mxu0
        %v8978 = vadd.f32 %v8937, %v8977
        %v8979 = vpop.f32.mrf.mxu0
        %8980 = vdwg.mxu0
        %8981 = vmatprep.subr.bf16.mxu0 0
        %8982 = vmatpush1.bf16.msra.mxu0 %v8229
        %8983 = vmatprep.subr.bf16.mxu0 0
        %8984 = vmatpush1.bf16.msra.mxu0 %v8226
        %8985 = vmatprep.subr.bf16.mxu0 0
        %8986 = vmatpush1.bf16.msra.mxu0 %v8223
        %8987 = vmatprep.subr.bf16.mxu0 0
        %8988 = vmatpush1.bf16.msra.mxu0 %v8220
        %8989 = vmatprep.subr.bf16.mxu0 0
        %8990 = vmatpush1.bf16.msra.mxu0 %v8217
        %8991 = vmatprep.subr.bf16.mxu0 0
        %8992 = vmatpush1.bf16.msra.mxu0 %v8214
        %8993 = vmatprep.subr.bf16.mxu0 0
        %8994 = vmatpush1.bf16.msra.mxu0 %v8211
        %8995 = vmatprep.subr.bf16.mxu0 0
        %8996 = vmatpush1.bf16.msra.mxu0 %v8208
        %8997 = vmatprep.subr.bf16.mxu0 0
        %8998 = vmatpush2.bf16.msra.mxu0 %v8253
        %8999 = vmatprep.subr.bf16.mxu0 0
        %9000 = vmatpush2.bf16.msra.mxu0 %v8250
        %9001 = vmatprep.subr.bf16.mxu0 0
        %9002 = vmatpush2.bf16.msra.mxu0 %v8247
        %9003 = vmatprep.subr.bf16.mxu0 0
        %9004 = vmatpush2.bf16.msra.mxu0 %v8244
        %9005 = vmatprep.subr.bf16.mxu0 0
        %9006 = vmatpush2.bf16.msra.mxu0 %v8241
        %9007 = vmatprep.subr.bf16.mxu0 0
        %9008 = vmatpush2.bf16.msra.mxu0 %v8238
        %9009 = vmatprep.subr.bf16.mxu0 0
        %9010 = vmatpush2.bf16.msra.mxu0 %v8235
        %9011 = vmatprep.subr.bf16.mxu0 0
        %9012 = vmatpush2.bf16.msra.mxu0 %v8232
        %9013 = vmatprep.mubr.bf16.mxu0 %v6992
        %9014 = vmatmul.mubr.bf16.gmra.mxu0 %v6991
        %v9015 = vpop.f32.mrf.mxu0
        %v9016 = vadd.f32 %v8975, %v9015
        %v9017 = vpop.f32.mrf.mxu0
        %v9018 = vpop.f32.mrf.mxu0
        %v9019 = vadd.f32 %v8978, %v9018
        %v9020 = vpop.f32.mrf.mxu0
        %9021 = vdwg.mxu0
        %9022 = vmatprep.subr.bf16.mxu0 0
        %9023 = vmatpush1.bf16.msra.mxu0 %v8277
        %9024 = vmatprep.subr.bf16.mxu0 0
        %9025 = vmatpush1.bf16.msra.mxu0 %v8274
        %9026 = vmatprep.subr.bf16.mxu0 0
        %9027 = vmatpush1.bf16.msra.mxu0 %v8271
        %9028 = vmatprep.subr.bf16.mxu0 0
        %9029 = vmatpush1.bf16.msra.mxu0 %v8268
        %9030 = vmatprep.subr.bf16.mxu0 0
        %9031 = vmatpush1.bf16.msra.mxu0 %v8265
        %9032 = vmatprep.subr.bf16.mxu0 0
        %9033 = vmatpush1.bf16.msra.mxu0 %v8262
        %9034 = vmatprep.subr.bf16.mxu0 0
        %9035 = vmatpush1.bf16.msra.mxu0 %v8259
        %9036 = vmatprep.subr.bf16.mxu0 0
        %9037 = vmatpush1.bf16.msra.mxu0 %v8256
        %9038 = vmatprep.subr.bf16.mxu0 0
        %9039 = vmatpush2.bf16.msra.mxu0 %v8301
        %9040 = vmatprep.subr.bf16.mxu0 0
        %9041 = vmatpush2.bf16.msra.mxu0 %v8298
        %9042 = vmatprep.subr.bf16.mxu0 0
        %9043 = vmatpush2.bf16.msra.mxu0 %v8295
        %9044 = vmatprep.subr.bf16.mxu0 0
        %9045 = vmatpush2.bf16.msra.mxu0 %v8292
        %9046 = vmatprep.subr.bf16.mxu0 0
        %9047 = vmatpush2.bf16.msra.mxu0 %v8289
        %9048 = vmatprep.subr.bf16.mxu0 0
        %9049 = vmatpush2.bf16.msra.mxu0 %v8286
        %9050 = vmatprep.subr.bf16.mxu0 0
        %9051 = vmatpush2.bf16.msra.mxu0 %v8283
        %9052 = vmatprep.subr.bf16.mxu0 0
        %9053 = vmatpush2.bf16.msra.mxu0 %v8280
        %9054 = vmatprep.mubr.bf16.mxu0 %v6994
        %9055 = vmatmul.mubr.bf16.gmra.mxu0 %v6993
        %v9056 = vpop.f32.mrf.mxu0
        %v9057 = vadd.f32 %v9016, %v9056
        %v9058 = vpop.f32.mrf.mxu0
        %v9059 = vpop.f32.mrf.mxu0
        %v9060 = vadd.f32 %v9019, %v9059
        %v9061 = vpop.f32.mrf.mxu0
        %9062 = vdwg.mxu0
        %9063 = vmatprep.subr.bf16.mxu0 0
        %9064 = vmatpush1.bf16.msra.mxu0 %v8598
        %9065 = vmatprep.subr.bf16.mxu0 0
        %9066 = vmatpush1.bf16.msra.mxu0 %v8322
        %9067 = vmatprep.subr.bf16.mxu0 0
        %9068 = vmatpush1.bf16.msra.mxu0 %v8319
        %9069 = vmatprep.subr.bf16.mxu0 0
        %9070 = vmatpush1.bf16.msra.mxu0 %v8316
        %9071 = vmatprep.subr.bf16.mxu0 0
        %9072 = vmatpush1.bf16.msra.mxu0 %v8313
        %9073 = vmatprep.subr.bf16.mxu0 0
        %9074 = vmatpush1.bf16.msra.mxu0 %v8310
        %9075 = vmatprep.subr.bf16.mxu0 0
        %9076 = vmatpush1.bf16.msra.mxu0 %v8307
        %9077 = vmatprep.subr.bf16.mxu0 0
        %9078 = vmatpush1.bf16.msra.mxu0 %v8304
        %9079 = vmatprep.subr.bf16.mxu0 0
        %9080 = vmatpush2.bf16.msra.mxu0 0
        %9081 = vmatprep.subr.bf16.mxu0 0
        %9082 = vmatpush2.bf16.msra.mxu0 0
        %9083 = vmatprep.subr.bf16.mxu0 0
        %9084 = vmatpush2.bf16.msra.mxu0 0
        %9085 = vmatprep.subr.bf16.mxu0 0
        %9086 = vmatpush2.bf16.msra.mxu0 0
        %9087 = vmatprep.subr.bf16.mxu0 0
        %9088 = vmatpush2.bf16.msra.mxu0 0
        %9089 = vmatprep.subr.bf16.mxu0 0
        %9090 = vmatpush2.bf16.msra.mxu0 0
        %9091 = vmatprep.subr.bf16.mxu0 0
        %9092 = vmatpush2.bf16.msra.mxu0 0
        %9093 = vmatprep.subr.bf16.mxu0 0
        %9094 = vmatpush2.bf16.msra.mxu0 0
        %9095 = vmatprep.mubr.bf16.mxu0 0
        %9096 = vmatmul.mubr.bf16.gmra.mxu0 %v8589
        %v9097 = vpop.f32.mrf.mxu0
        %v9098 = vadd.f32 %v9057, %v9097
        %v9099 = vpop.f32.mrf.mxu0
        %v9100 = vpop.f32.mrf.mxu0
        %v9101 = vadd.f32 %v9060, %v9100
        %v9102 = vpop.f32.mrf.mxu0
        %9103 = vdwg.mxu0
        %9104 = vst [vmem:[%s403] sm:$0xff] %v8850
        %9105 = vst [vmem:[%s403 + $0x8] sm:$0xff] %v8852
        %9106 = vst.msk [vmem:[%s403 + $0x10] sm:$0xff] %vm432, %v9098
        %9107 = vst [vmem:[%s403 + $0x18] sm:$0xf] %v8854
        %9108 = vst [vmem:[%s403 + $0x20] sm:$0xf] %v8856
        %vm9109 = vcmask 519168
        %9110 = vst.msk [vmem:[%s403 + $0x28] sm:$0xf] %vm9109, %v9101
        %p9111 = scmp.lt.s32.totalorder %s24, 1
        %s9112 = scalar_select %p9111, %s24, 1
        %s9113 = smul.addr %s9112, 6
        %s9114 = smul.addr %s9113, 8
        %s9115 = scalar_lea.vmem %s9, %s9114
        // Predicated region
        $region77: #{fsrcnn_forward.1} parent=55 // pred_check
          %p9116 = pneg %p236
        $region78: #{fsrcnn_forward.1} parent=55 // pred_check_branch
          %9118 = sbr.rel (%p9116) target = $region80
        $region79: #{fsrcnn_forward.1} parent=55 // pred_region
          _
        $region80: #{fsrcnn_forward.1} parent=55 // pred_fallthru
          _
      $region56: #{fsrcnn_forward.1} parent=5 // pred_fallthru
        _
      %p9119 = scmp.le.s32.totalorder 2, %s19
      // Predicated region
      $region81: #{fsrcnn_forward.1} parent=5 // pred_check
        %p9120 = pneg %p9119
      $region82: #{fsrcnn_forward.1} parent=5 // pred_check_branch
        %9122 = sbr.rel (%p9120) target = $region84
      $region83: #{fsrcnn_forward.1} parent=5 // pred_region
        %s9123 = ssub.s32 %s19, 2
        // Predicated region
        $region85: #{fsrcnn_forward.1} parent=83 // pred_check
          %p9124 = pneg %p242
        $region86: #{fsrcnn_forward.1} parent=83 // pred_check_branch
          %9126 = sbr.rel (%p9124) target = $region88
        $region87: #{fsrcnn_forward.1} parent=83 // pred_region
          %p9127 = scmp.lt.s32.totalorder %s25, 1
          %s9128 = scalar_select %p9127, %s25, 1
          %s9129 = smul.addr %s9128, 6
          %s9130 = smul.addr %s9129, 8
          %s9131 = scalar_lea.vmem %s9, %s9130
        $region88: #{fsrcnn_forward.1} parent=83 // pred_fallthru
          _
      $region84: #{fsrcnn_forward.1} parent=5 // pred_fallthru
        _
    $region6: #{fsrcnn_forward.1} parent=1 // loop_footer
      %s23 = sadd.s32 1, %s19
    $region7: #{fsrcnn_forward.1} parent=1 // loop_footer_branch
      %18 = sbr.rel target = $region3
    $region8: #{fsrcnn_forward.1} parent=1 // loop_exit
      _
    %9132 = vsyncpa [#allocation4], 1
    %s9133 = scalar_lea.sflag [#allocation4], 1
    %9134 = vsyncpa %s9133, 1
    %9135 = vsyncpa [#allocation8], 1
    %9136 = vsyncpa [#allocation11], 1
    %9137 = vsyncpa [#allocation5], 1
    %s9138 = scalar_lea.sflag [#allocation5], 1
    %9139 = vsyncpa %s9138, 1

</llo_original>
